<compile_context>
chip_gen: v7x
topology: tpu7x:2x2x1
jax: 0.10.0
libtpu: 0.0.40
codegen_flags: <defaults>
</compile_context>

<pallas_src>
import math
from functools import partial

import jax
import jax.numpy as jnp
from jax.experimental import pallas as pl
from jax.experimental.pallas import tpu as pltpu


def _layer_norm(x, gamma, beta, eps=1e-5):
    mu = jnp.mean(x, axis=-1, keepdims=True)
    var = jnp.mean((x - mu) ** 2, axis=-1, keepdims=True)
    return (x - mu) * jax.lax.rsqrt(var + eps) * gamma + beta


def encoder_kernel(x_ref,
                   wq_ref, wk_ref, wv_ref, bq_ref, bk_ref, bv_ref,
                   wo_ref, bo_ref,
                   w1_ref, b1_ref, w2_ref, b2_ref,
                   g1_ref, be1_ref, g2_ref, be2_ref, g3_ref, be3_ref,
                   o_ref,
                   qh_scr, kh_scr, vh_scr, x1_scr, acc_scr,
                   *, num_heads):
    f = pl.program_id(1)
    nf = pl.num_programs(1)
    BN, S, E = x_ref.shape
    H = num_heads
    dh = E // H
    R = BN * S
    cdt = wq_ref.dtype                    # bf16 compute dtype for MXU inputs

    # ---- attention + residual + norm1: once per batch block (first FF tile) ----
    @pl.when(f == 0)
    def _attention_and_norm1():
        x = x_ref[...].reshape(R, E)      # rows in (b, s) order; leading-dim reshape
        xc = x.astype(cdt)

        # Per-head QKV projections against wrapper-pre-split (H, E, dh) weights:
        # full-width-E contraction, no lane slicing of activations.  Results go
        # straight into head-stacked scratch so per-head temporaries don't pile up.
        for h in range(H):
            qh = jnp.dot(xc, wq_ref[h], preferred_element_type=jnp.float32) + bq_ref[h]
            kh = jnp.dot(xc, wk_ref[h], preferred_element_type=jnp.float32) + bk_ref[h]
            vh = jnp.dot(xc, wv_ref[h], preferred_element_type=jnp.float32) + bv_ref[h]
            qh_scr[h] = qh.reshape(BN, S, dh).astype(cdt)     # single bf16 cast
            kh_scr[h] = kh.reshape(BN, S, dh).astype(cdt)
            vh_scr[h] = vh.reshape(BN, S, dh).astype(cdt)

        # One batched einsum over all (head, batch) pairs for scores and PV.
        q_all = qh_scr[...].reshape(H * BN, S, dh)
        k_all = kh_scr[...].reshape(H * BN, S, dh)
        v_all = vh_scr[...].reshape(H * BN, S, dh)
        s = jnp.einsum("bqd,bkd->bqk", q_all, k_all,
                       preferred_element_type=jnp.float32)
        s = s - jnp.max(s, axis=-1, keepdims=True)
        p = jnp.exp(s)
        p = p * pl.reciprocal(jnp.sum(p, axis=-1, keepdims=True), approx=True)
        o_all = jnp.einsum("bqk,bkd->bqd", p.astype(cdt), v_all,
                           preferred_element_type=jnp.float32)     # (H*BN, S, dh)

        # Output projection: one batched einsum + head-sum (Wo pre-split per head).
        # TODO(synk): chunk heads here if H*R*E f32 ever threatens VMEM.
        o_heads = o_all.reshape(H, R, dh).astype(cdt)
        ctx = jnp.einsum("hrd,hde->hre", o_heads, wo_ref[...],
                         preferred_element_type=jnp.float32)
        attn = jnp.sum(ctx, axis=0) + bo_ref[...]

        x1_scr[...] = _layer_norm(x + attn, g1_ref[...], be1_ref[...])
        acc_scr[...] = jnp.zeros_like(acc_scr)

    # ---- FFN tile f: linear1 slab -> relu -> accumulate linear2 partial ----
    h1 = jnp.dot(x1_scr[...].astype(cdt), w1_ref[...],
                 preferred_element_type=jnp.float32) + b1_ref[...]
    h1 = jnp.maximum(h1, 0.0).astype(cdt)            # keep h1 in bf16
    acc_scr[...] += jnp.dot(h1, w2_ref[...], preferred_element_type=jnp.float32)

    # ---- residual + norm2, then the module's outer layernorm (last FF tile) ----
    @pl.when(f == nf - 1)
    def _finalize():
        x = x_ref[...].reshape(R, E)
        ff = acc_scr[...] + b2_ref[...]
        x2 = _layer_norm(x1_scr[...] + ff, g2_ref[...], be2_ref[...])
        out = _layer_norm(x + x2, g3_ref[...], be3_ref[...])
        o_ref[...] = out.reshape(BN, S, E)


# ------------------------------ wrapper helpers ------------------------------
def _tpu_vmem_bytes(default=64 * 1024 * 1024):
    try:
        return int(pltpu.get_tpu_info().vmem_capacity_bytes)
    except Exception:
        return default


def _choose_block_n(N, S, target_rows):
    """Divisor of N: prefer >=2 grid steps (v7x dual TC) and 128/256-aligned rows."""
    divisors = [d for d in range(1, N + 1) if N % d == 0]
    cands = ([d for d in divisors if d < N and d * S <= target_rows]
             or [d for d in divisors if d * S <= target_rows]
             or [1])

    def score(d):
        rows = d * S
        return (rows % 256 == 0, rows % 128 == 0, rows)

    return max(cands, key=score)


def _choose_ff_tile(FF, target=512):
    """Largest divisor of FF that is a multiple of 128 (else FF itself) and <= target."""
    divisors = [d for d in range(1, FF + 1) if FF % d == 0 and d <= target]
    aligned = [d for d in divisors if d % 128 == 0]
    return max(aligned or divisors or [FF])


def transformer_encoder_forward(inputs, params, num_heads,
                                compute_dtype=jnp.bfloat16):
    """inputs: (S, N, E) float32, like the PyTorch module (batch_first=False)."""
    S, N, E = inputs.shape
    H = num_heads
    assert E % H == 0, "embed_dim must be divisible by num_heads"
    dh = E // H
    FF = params["linear1_weight"].shape[0]

    phys_vmem = _tpu_vmem_bytes()
    # ~48 MiB on v7x (64 MiB physical), ~96 MiB on v5e/v6e (128 MiB physical).
    vmem_limit = int(min(phys_vmem * 3 // 4, 100 * 1024 * 1024))
    target_rows = 1024 if phys_vmem >= 96 * 1024 * 1024 else 256

    block_n = _choose_block_n(N, S, target_rows)
    tff = _choose_ff_tile(FF)
    grid = (N // block_n, FF // tff)

    # One HBM transpose in (and one out) so in-kernel row flattening is a pure
    # leading-dim reshape.  TODO(synk): emitting the output directly in (S,N,E)
    # order would need an in-kernel (bn,S) transpose Mosaic may not lower.
    x = jnp.transpose(inputs, (1, 0, 2))                   # (N, S, E)

    scale = 1.0 / math.sqrt(dh)
    w_in = params["in_proj_weight"]                        # (3E, E)
    b_in = params["in_proj_bias"]                          # (3E,)

    def per_head_w(w, s=1.0):   # torch (E_out, E_in) -> (H, E_in, dh)
        return (w.T * s).reshape(E, H, dh).transpose(1, 0, 2).astype(compute_dtype)

    def per_head_b(b, s=1.0):
        return (b * s).reshape(H, 1, dh).astype(jnp.float32)

    wq_ = per_head_w(w_in[0:E], scale)                     # 1/sqrt(dh) folded in
    wk_ = per_head_w(w_in[E:2 * E])
    wv_ = per_head_w(w_in[2 * E:3 * E])
    bq_ = per_head_b(b_in[0:E], scale)
    bk_ = per_head_b(b_in[E:2 * E])
    bv_ = per_head_b(b_in[2 * E:3 * E])
    wo_ = params["out_proj_weight"].T.reshape(H, dh, E).astype(compute_dtype)
    bo_ = params["out_proj_bias"].reshape(1, E).astype(jnp.float32)
    w1_ = params["linear1_weight"].T.astype(compute_dtype)            # (E, FF)
    b1_ = params["linear1_bias"].reshape(1, FF).astype(jnp.float32)
    w2_ = params["linear2_weight"].T.astype(compute_dtype)            # (FF, E)
    b2_ = params["linear2_bias"].reshape(1, E).astype(jnp.float32)
    g1_ = params["norm1_weight"].reshape(1, E).astype(jnp.float32)
    be1_ = params["norm1_bias"].reshape(1, E).astype(jnp.float32)
    g2_ = params["norm2_weight"].reshape(1, E).astype(jnp.float32)
    be2_ = params["norm2_bias"].reshape(1, E).astype(jnp.float32)
    g3_ = params["outer_ln_weight"].reshape(1, E).astype(jnp.float32)
    be3_ = params["outer_ln_bias"].reshape(1, E).astype(jnp.float32)

    const_args = (wq_, wk_, wv_, bq_, bk_, bv_, wo_, bo_)
    tail_const_args = (b2_, g1_, be1_, g2_, be2_, g3_, be3_)

    def build(single_buffer_weights):
        def const_spec(a):
            zeros = (0,) * a.ndim
            if single_buffer_weights:
                # Constant index map -> second buffer is pure waste; single-buffer.
                return pl.BlockSpec(a.shape, lambda b, f, _z=zeros: _z,
                                    pipeline_mode=pl.Buffered(1))
            return pl.BlockSpec(a.shape, lambda b, f, _z=zeros: _z)

        in_specs = ([pl.BlockSpec((block_n, S, E), lambda b, f: (b, 0, 0))]
                    + [const_spec(a) for a in const_args]
                    + [pl.BlockSpec((E, tff), lambda b, f: (0, f)),     # w1 FF tile
                       pl.BlockSpec((1, tff), lambda b, f: (0, f)),     # b1 FF tile
                       pl.BlockSpec((tff, E), lambda b, f: (f, 0))]     # w2 FF tile
                    + [const_spec(a) for a in tail_const_args])

        return pl.pallas_call(
            partial(encoder_kernel, num_heads=H),
            out_shape=jax.ShapeDtypeStruct((N, S, E), jnp.float32),
            grid=grid,
            in_specs=in_specs,
            out_specs=pl.BlockSpec((block_n, S, E), lambda b, f: (b, 0, 0)),
            scratch_shapes=[
                pltpu.VMEM((H, block_n, S, dh), compute_dtype),   # q heads
                pltpu.VMEM((H, block_n, S, dh), compute_dtype),   # k heads
                pltpu.VMEM((H, block_n, S, dh), compute_dtype),   # v heads
                pltpu.VMEM((block_n * S, E), jnp.float32),        # x1 (post-norm1)
                pltpu.VMEM((block_n * S, E), jnp.float32),        # FFN accumulator
            ],
            compiler_params=pltpu.CompilerParams(
                dimension_semantics=("parallel", "arbitrary"),
                vmem_limit_bytes=vmem_limit),
        )

    args = (x, *const_args, w1_, b1_, w2_, *tail_const_args)
    try:
        out = build(True)(*args)
    except Exception:
        # Fallback if this JAX version rejects pipeline_mode=pl.Buffered(1).
        out = build(False)(*args)
    return jnp.transpose(out, (1, 0, 2))                   # back to (S, N, E)


# -------------------- pure-JAX reference (for correctness check) --------------------
def reference_forward(inputs, params, num_heads):
    S, N, E = inputs.shape
    dh = E // num_heads
    x = inputs.astype(jnp.float32)

    def ln(y, g, b):
        mu = jnp.mean(y, axis=-1, keepdims=True)
        var = jnp.mean((y - mu) ** 2, axis=-1, keepdims=True)
        return (y - mu) / jnp.sqrt(var + 1e-5) * g + b

    qkv = jnp.einsum("snE,FE->snF", x, params["in_proj_weight"]) + params["in_proj_bias"]
    q, k, v = jnp.split(qkv, 3, axis=-1)
    q = q.reshape(S, N, num_heads, dh)
    k = k.reshape(S, N, num_heads, dh)
    v = v.reshape(S, N, num_heads, dh)
    s = jnp.einsum("snhd,tnhd->nhst", q, k) / math.sqrt(dh)
    p = jax.nn.softmax(s, axis=-1)
    a = jnp.einsum("nhst,tnhd->snhd", p, v).reshape(S, N, E)
    a = jnp.einsum("snE,FE->snF", a, params["out_proj_weight"]) + params["out_proj_bias"]
    x1 = ln(x + a, params["norm1_weight"], params["norm1_bias"])
    h1 = jax.nn.relu(jnp.einsum("snE,FE->snF", x1, params["linear1_weight"])
                     + params["linear1_bias"])
    ff = jnp.einsum("snF,EF->snE", h1, params["linear2_weight"]) + params["linear2_bias"]
    x2 = ln(x1 + ff, params["norm2_weight"], params["norm2_bias"])
    return ln(x + x2, params["outer_ln_weight"], params["outer_ln_bias"])


def init_params(key, embed_dim, ff_dim):
    ks = jax.random.split(key, 8)
    scale = 0.05
    return {
        "in_proj_weight": scale * jax.random.normal(ks[0], (3 * embed_dim, embed_dim), jnp.float32),
        "in_proj_bias": scale * jax.random.normal(ks[1], (3 * embed_dim,), jnp.float32),
        "out_proj_weight": scale * jax.random.normal(ks[2], (embed_dim, embed_dim), jnp.float32),
        "out_proj_bias": scale * jax.random.normal(ks[3], (embed_dim,), jnp.float32),
        "linear1_weight": scale * jax.random.normal(ks[4], (ff_dim, embed_dim), jnp.float32),
        "linear1_bias": scale * jax.random.normal(ks[5], (ff_dim,), jnp.float32),
        "linear2_weight": scale * jax.random.normal(ks[6], (embed_dim, ff_dim), jnp.float32),
        "linear2_bias": scale * jax.random.normal(ks[7], (embed_dim,), jnp.float32),
        "norm1_weight": jnp.ones((embed_dim,), jnp.float32),
        "norm1_bias": jnp.zeros((embed_dim,), jnp.float32),
        "norm2_weight": jnp.ones((embed_dim,), jnp.float32),
        "norm2_bias": jnp.zeros((embed_dim,), jnp.float32),
        "outer_ln_weight": jnp.ones((embed_dim,), jnp.float32),
        "outer_ln_bias": jnp.zeros((embed_dim,), jnp.float32),
    }


if __name__ == "__main__":
    S, N, E, H, FF = 8, 2, 32, 4, 64   # seq, batch, embed_dim, num_heads, ff_dim

    key = jax.random.PRNGKey(0)
    k_in, k_par = jax.random.split(key)
    inputs = jax.random.normal(k_in, (S, N, E), jnp.float32)   # (seq, batch, embed)
    params = init_params(k_par, E, FF)

    out = transformer_encoder_forward(inputs, params, H)
    out = jax.block_until_ready(out)

    ref = jax.block_until_ready(reference_forward(inputs, params, H))
    assert out.shape == (S, N, E)
    assert jnp.allclose(out, ref, rtol=2e-2, atol=2e-2), "mismatch vs pure-JAX reference"

    print("KERNEL_OK")
</pallas_src>

<mosaic_0001>
module attributes {stable_mosaic.version = 11 : i64} {
  func.func @encoder_kernel(%arg0: i32, %arg1: i32, %arg2: memref<1x8x32xf32, #tpu.memory_space<vmem>>, %arg3: memref<4x32x8xbf16, #tpu.memory_space<vmem>>, %arg4: memref<4x32x8xbf16, #tpu.memory_space<vmem>>, %arg5: memref<4x32x8xbf16, #tpu.memory_space<vmem>>, %arg6: memref<4x1x8xf32, #tpu.memory_space<vmem>>, %arg7: memref<4x1x8xf32, #tpu.memory_space<vmem>>, %arg8: memref<4x1x8xf32, #tpu.memory_space<vmem>>, %arg9: memref<4x8x32xbf16, #tpu.memory_space<vmem>>, %arg10: memref<1x32xf32, #tpu.memory_space<vmem>>, %arg11: memref<32x64xbf16, #tpu.memory_space<vmem>>, %arg12: memref<1x64xf32, #tpu.memory_space<vmem>>, %arg13: memref<64x32xbf16, #tpu.memory_space<vmem>>, %arg14: memref<1x32xf32, #tpu.memory_space<vmem>>, %arg15: memref<1x32xf32, #tpu.memory_space<vmem>>, %arg16: memref<1x32xf32, #tpu.memory_space<vmem>>, %arg17: memref<1x32xf32, #tpu.memory_space<vmem>>, %arg18: memref<1x32xf32, #tpu.memory_space<vmem>>, %arg19: memref<1x32xf32, #tpu.memory_space<vmem>>, %arg20: memref<1x32xf32, #tpu.memory_space<vmem>>, %arg21: memref<1x8x32xf32, #tpu.memory_space<vmem>>, %arg22: memref<4x1x8x8xbf16, #tpu.memory_space<vmem>>, %arg23: memref<4x1x8x8xbf16, #tpu.memory_space<vmem>>, %arg24: memref<4x1x8x8xbf16, #tpu.memory_space<vmem>>, %arg25: memref<8x32xf32, #tpu.memory_space<vmem>>, %arg26: memref<8x32xf32, #tpu.memory_space<vmem>>) attributes {dimension_semantics = [#tpu.dimension_semantics<parallel>, #tpu.dimension_semantics<arbitrary>], iteration_bounds = array<i64: 2, 1>, scalar_prefetch = 0 : i64, scratch_operands = 5 : i64, tpu.core_type = #tpu.core_type<tc>, window_params = [{transform_indices = @transform_0, window_bounds = array<i64: 1, 8, 32>}, {pipeline_mode = #tpu.pipeline_mode<synchronous>, transform_indices = @transform_1, window_bounds = array<i64: 4, 32, 8>}, {pipeline_mode = #tpu.pipeline_mode<synchronous>, transform_indices = @transform_2, window_bounds = array<i64: 4, 32, 8>}, {pipeline_mode = #tpu.pipeline_mode<synchronous>, transform_indices = @transform_3, window_bounds = array<i64: 4, 32, 8>}, {pipeline_mode = #tpu.pipeline_mode<synchronous>, transform_indices = @transform_4, window_bounds = array<i64: 4, 1, 8>}, {pipeline_mode = #tpu.pipeline_mode<synchronous>, transform_indices = @transform_5, window_bounds = array<i64: 4, 1, 8>}, {pipeline_mode = #tpu.pipeline_mode<synchronous>, transform_indices = @transform_6, window_bounds = array<i64: 4, 1, 8>}, {pipeline_mode = #tpu.pipeline_mode<synchronous>, transform_indices = @transform_7, window_bounds = array<i64: 4, 8, 32>}, {pipeline_mode = #tpu.pipeline_mode<synchronous>, transform_indices = @transform_8, window_bounds = array<i64: 1, 32>}, {transform_indices = @transform_9, window_bounds = array<i64: 32, 64>}, {transform_indices = @transform_10, window_bounds = array<i64: 1, 64>}, {transform_indices = @transform_11, window_bounds = array<i64: 64, 32>}, {pipeline_mode = #tpu.pipeline_mode<synchronous>, transform_indices = @transform_12, window_bounds = array<i64: 1, 32>}, {pipeline_mode = #tpu.pipeline_mode<synchronous>, transform_indices = @transform_13, window_bounds = array<i64: 1, 32>}, {pipeline_mode = #tpu.pipeline_mode<synchronous>, transform_indices = @transform_14, window_bounds = array<i64: 1, 32>}, {pipeline_mode = #tpu.pipeline_mode<synchronous>, transform_indices = @transform_15, window_bounds = array<i64: 1, 32>}, {pipeline_mode = #tpu.pipeline_mode<synchronous>, transform_indices = @transform_16, window_bounds = array<i64: 1, 32>}, {pipeline_mode = #tpu.pipeline_mode<synchronous>, transform_indices = @transform_17, window_bounds = array<i64: 1, 32>}, {pipeline_mode = #tpu.pipeline_mode<synchronous>, transform_indices = @transform_18, window_bounds = array<i64: 1, 32>}, {transform_indices = @transform_19, window_bounds = array<i64: 1, 8, 32>}]} {
    %c0_i32 = arith.constant 0 : i32
    %0 = arith.cmpi eq, %arg1, %c0_i32 : i32
    %1 = arith.extui %0 : i1 to i32
    %c0_i32_0 = arith.constant 0 : i32
    %2 = arith.cmpi ne, %1, %c0_i32_0 : i32
    scf.if %2 {
      %c0_16 = arith.constant 0 : index
      %c0_17 = arith.constant 0 : index
      %c0_18 = arith.constant 0 : index
      %21 = vector.load %arg2[%c0_16, %c0_17, %c0_18] : memref<1x8x32xf32, #tpu.memory_space<vmem>>, vector<1x8x32xf32>
      %22 = vector.shape_cast %21 : vector<1x8x32xf32> to vector<8x32xf32>
      %23 = arith.truncf %22 : vector<8x32xf32> to vector<8x32xbf16>
      %c0_19 = arith.constant 0 : index
      %c0_20 = arith.constant 0 : index
      %c0_21 = arith.constant 0 : index
      %24 = vector.load %arg3[%c0_19, %c0_20, %c0_21] : memref<4x32x8xbf16, #tpu.memory_space<vmem>>, vector<1x32x8xbf16>
      %25 = vector.shape_cast %24 : vector<1x32x8xbf16> to vector<32x8xbf16>
      %cst_22 = arith.constant dense<0.000000e+00> : vector<8x8xf32>
      %26 = tpu.matmul %23, %25, %cst_22 {dimension_numbers = #tpu.dot_dimension_numbers<[1], [0], [0], [1], [0, 0, 1, 1], [], []>} : vector<8x32xbf16>, vector<32x8xbf16>, vector<8x8xf32> -> vector<8x8xf32>
      %c0_23 = arith.constant 0 : index
      %c0_24 = arith.constant 0 : index
      %c0_25 = arith.constant 0 : index
      %27 = vector.load %arg6[%c0_23, %c0_24, %c0_25] : memref<4x1x8xf32, #tpu.memory_space<vmem>>, vector<1x1x8xf32>
      %28 = vector.shape_cast %27 : vector<1x1x8xf32> to vector<1x8xf32>
      %29 = vector.broadcast %28 : vector<1x8xf32> to vector<8x8xf32>
      %30 = arith.addf %26, %29 : vector<8x8xf32>
      %c0_26 = arith.constant 0 : index
      %c0_27 = arith.constant 0 : index
      %c0_28 = arith.constant 0 : index
      %31 = vector.load %arg4[%c0_26, %c0_27, %c0_28] : memref<4x32x8xbf16, #tpu.memory_space<vmem>>, vector<1x32x8xbf16>
      %32 = vector.shape_cast %31 : vector<1x32x8xbf16> to vector<32x8xbf16>
      %cst_29 = arith.constant dense<0.000000e+00> : vector<8x8xf32>
      %33 = tpu.matmul %23, %32, %cst_29 {dimension_numbers = #tpu.dot_dimension_numbers<[1], [0], [0], [1], [0, 0, 1, 1], [], []>} : vector<8x32xbf16>, vector<32x8xbf16>, vector<8x8xf32> -> vector<8x8xf32>
      %c0_30 = arith.constant 0 : index
      %c0_31 = arith.constant 0 : index
      %c0_32 = arith.constant 0 : index
      %34 = vector.load %arg7[%c0_30, %c0_31, %c0_32] : memref<4x1x8xf32, #tpu.memory_space<vmem>>, vector<1x1x8xf32>
      %35 = vector.shape_cast %34 : vector<1x1x8xf32> to vector<1x8xf32>
      %36 = vector.broadcast %35 : vector<1x8xf32> to vector<8x8xf32>
      %37 = arith.addf %33, %36 : vector<8x8xf32>
      %c0_33 = arith.constant 0 : index
      %c0_34 = arith.constant 0 : index
      %c0_35 = arith.constant 0 : index
      %38 = vector.load %arg5[%c0_33, %c0_34, %c0_35] : memref<4x32x8xbf16, #tpu.memory_space<vmem>>, vector<1x32x8xbf16>
      %39 = vector.shape_cast %38 : vector<1x32x8xbf16> to vector<32x8xbf16>
      %cst_36 = arith.constant dense<0.000000e+00> : vector<8x8xf32>
      %40 = tpu.matmul %23, %39, %cst_36 {dimension_numbers = #tpu.dot_dimension_numbers<[1], [0], [0], [1], [0, 0, 1, 1], [], []>} : vector<8x32xbf16>, vector<32x8xbf16>, vector<8x8xf32> -> vector<8x8xf32>
      %c0_37 = arith.constant 0 : index
      %c0_38 = arith.constant 0 : index
      %c0_39 = arith.constant 0 : index
      %41 = vector.load %arg8[%c0_37, %c0_38, %c0_39] : memref<4x1x8xf32, #tpu.memory_space<vmem>>, vector<1x1x8xf32>
      %42 = vector.shape_cast %41 : vector<1x1x8xf32> to vector<1x8xf32>
      %43 = vector.broadcast %42 : vector<1x8xf32> to vector<8x8xf32>
      %44 = arith.addf %40, %43 : vector<8x8xf32>
      %45 = vector.shape_cast %30 : vector<8x8xf32> to vector<1x8x8xf32>
      %46 = arith.truncf %45 : vector<1x8x8xf32> to vector<1x8x8xbf16>
      %c0_40 = arith.constant 0 : index
      %c0_41 = arith.constant 0 : index
      %c0_42 = arith.constant 0 : index
      %c0_43 = arith.constant 0 : index
      %47 = vector.load %arg22[%c0_40, %c0_41, %c0_42, %c0_43] : memref<4x1x8x8xbf16, #tpu.memory_space<vmem>>, vector<1x1x8x8xbf16>
      %48 = vector.shape_cast %47 : vector<1x1x8x8xbf16> to vector<1x8x8xbf16>
      %49 = vector.shape_cast %46 : vector<1x8x8xbf16> to vector<1x1x8x8xbf16>
      tpu.vector_store %arg22[%c0_40, %c0_41, %c0_42, %c0_43], %49 {strides = array<i32>} : memref<4x1x8x8xbf16, #tpu.memory_space<vmem>>, vector<1x1x8x8xbf16>,
      %50 = vector.shape_cast %37 : vector<8x8xf32> to vector<1x8x8xf32>
      %51 = arith.truncf %50 : vector<1x8x8xf32> to vector<1x8x8xbf16>
      %c0_44 = arith.constant 0 : index
      %c0_45 = arith.constant 0 : index
      %c0_46 = arith.constant 0 : index
      %c0_47 = arith.constant 0 : index
      %52 = vector.load %arg23[%c0_44, %c0_45, %c0_46, %c0_47] : memref<4x1x8x8xbf16, #tpu.memory_space<vmem>>, vector<1x1x8x8xbf16>
      %53 = vector.shape_cast %52 : vector<1x1x8x8xbf16> to vector<1x8x8xbf16>
      %54 = vector.shape_cast %51 : vector<1x8x8xbf16> to vector<1x1x8x8xbf16>
      tpu.vector_store %arg23[%c0_44, %c0_45, %c0_46, %c0_47], %54 {strides = array<i32>} : memref<4x1x8x8xbf16, #tpu.memory_space<vmem>>, vector<1x1x8x8xbf16>,
      %55 = vector.shape_cast %44 : vector<8x8xf32> to vector<1x8x8xf32>
      %56 = arith.truncf %55 : vector<1x8x8xf32> to vector<1x8x8xbf16>
      %c0_48 = arith.constant 0 : index
      %c0_49 = arith.constant 0 : index
      %c0_50 = arith.constant 0 : index
      %c0_51 = arith.constant 0 : index
      %57 = vector.load %arg24[%c0_48, %c0_49, %c0_50, %c0_51] : memref<4x1x8x8xbf16, #tpu.memory_space<vmem>>, vector<1x1x8x8xbf16>
      %58 = vector.shape_cast %57 : vector<1x1x8x8xbf16> to vector<1x8x8xbf16>
      %59 = vector.shape_cast %56 : vector<1x8x8xbf16> to vector<1x1x8x8xbf16>
      tpu.vector_store %arg24[%c0_48, %c0_49, %c0_50, %c0_51], %59 {strides = array<i32>} : memref<4x1x8x8xbf16, #tpu.memory_space<vmem>>, vector<1x1x8x8xbf16>,
      %c1 = arith.constant 1 : index
      %c0_52 = arith.constant 0 : index
      %c0_53 = arith.constant 0 : index
      %60 = vector.load %arg3[%c1, %c0_52, %c0_53] : memref<4x32x8xbf16, #tpu.memory_space<vmem>>, vector<1x32x8xbf16>
      %61 = vector.shape_cast %60 : vector<1x32x8xbf16> to vector<32x8xbf16>
      %cst_54 = arith.constant dense<0.000000e+00> : vector<8x8xf32>
      %62 = tpu.matmul %23, %61, %cst_54 {dimension_numbers = #tpu.dot_dimension_numbers<[1], [0], [0], [1], [0, 0, 1, 1], [], []>} : vector<8x32xbf16>, vector<32x8xbf16>, vector<8x8xf32> -> vector<8x8xf32>
      %c1_55 = arith.constant 1 : index
      %c0_56 = arith.constant 0 : index
      %c0_57 = arith.constant 0 : index
      %63 = vector.load %arg6[%c1_55, %c0_56, %c0_57] : memref<4x1x8xf32, #tpu.memory_space<vmem>>, vector<1x1x8xf32>
      %64 = vector.shape_cast %63 : vector<1x1x8xf32> to vector<1x8xf32>
      %65 = vector.broadcast %64 : vector<1x8xf32> to vector<8x8xf32>
      %66 = arith.addf %62, %65 : vector<8x8xf32>
      %c1_58 = arith.constant 1 : index
      %c0_59 = arith.constant 0 : index
      %c0_60 = arith.constant 0 : index
      %67 = vector.load %arg4[%c1_58, %c0_59, %c0_60] : memref<4x32x8xbf16, #tpu.memory_space<vmem>>, vector<1x32x8xbf16>
      %68 = vector.shape_cast %67 : vector<1x32x8xbf16> to vector<32x8xbf16>
      %cst_61 = arith.constant dense<0.000000e+00> : vector<8x8xf32>
      %69 = tpu.matmul %23, %68, %cst_61 {dimension_numbers = #tpu.dot_dimension_numbers<[1], [0], [0], [1], [0, 0, 1, 1], [], []>} : vector<8x32xbf16>, vector<32x8xbf16>, vector<8x8xf32> -> vector<8x8xf32>
      %c1_62 = arith.constant 1 : index
      %c0_63 = arith.constant 0 : index
      %c0_64 = arith.constant 0 : index
      %70 = vector.load %arg7[%c1_62, %c0_63, %c0_64] : memref<4x1x8xf32, #tpu.memory_space<vmem>>, vector<1x1x8xf32>
      %71 = vector.shape_cast %70 : vector<1x1x8xf32> to vector<1x8xf32>
      %72 = vector.broadcast %71 : vector<1x8xf32> to vector<8x8xf32>
      %73 = arith.addf %69, %72 : vector<8x8xf32>
      %c1_65 = arith.constant 1 : index
      %c0_66 = arith.constant 0 : index
      %c0_67 = arith.constant 0 : index
      %74 = vector.load %arg5[%c1_65, %c0_66, %c0_67] : memref<4x32x8xbf16, #tpu.memory_space<vmem>>, vector<1x32x8xbf16>
      %75 = vector.shape_cast %74 : vector<1x32x8xbf16> to vector<32x8xbf16>
      %cst_68 = arith.constant dense<0.000000e+00> : vector<8x8xf32>
      %76 = tpu.matmul %23, %75, %cst_68 {dimension_numbers = #tpu.dot_dimension_numbers<[1], [0], [0], [1], [0, 0, 1, 1], [], []>} : vector<8x32xbf16>, vector<32x8xbf16>, vector<8x8xf32> -> vector<8x8xf32>
      %c1_69 = arith.constant 1 : index
      %c0_70 = arith.constant 0 : index
      %c0_71 = arith.constant 0 : index
      %77 = vector.load %arg8[%c1_69, %c0_70, %c0_71] : memref<4x1x8xf32, #tpu.memory_space<vmem>>, vector<1x1x8xf32>
      %78 = vector.shape_cast %77 : vector<1x1x8xf32> to vector<1x8xf32>
      %79 = vector.broadcast %78 : vector<1x8xf32> to vector<8x8xf32>
      %80 = arith.addf %76, %79 : vector<8x8xf32>
      %81 = vector.shape_cast %66 : vector<8x8xf32> to vector<1x8x8xf32>
      %82 = arith.truncf %81 : vector<1x8x8xf32> to vector<1x8x8xbf16>
      %c1_72 = arith.constant 1 : index
      %c0_73 = arith.constant 0 : index
      %c0_74 = arith.constant 0 : index
      %c0_75 = arith.constant 0 : index
      %83 = vector.load %arg22[%c1_72, %c0_73, %c0_74, %c0_75] : memref<4x1x8x8xbf16, #tpu.memory_space<vmem>>, vector<1x1x8x8xbf16>
      %84 = vector.shape_cast %83 : vector<1x1x8x8xbf16> to vector<1x8x8xbf16>
      %85 = vector.shape_cast %82 : vector<1x8x8xbf16> to vector<1x1x8x8xbf16>
      tpu.vector_store %arg22[%c1_72, %c0_73, %c0_74, %c0_75], %85 {strides = array<i32>} : memref<4x1x8x8xbf16, #tpu.memory_space<vmem>>, vector<1x1x8x8xbf16>,
      %86 = vector.shape_cast %73 : vector<8x8xf32> to vector<1x8x8xf32>
      %87 = arith.truncf %86 : vector<1x8x8xf32> to vector<1x8x8xbf16>
      %c1_76 = arith.constant 1 : index
      %c0_77 = arith.constant 0 : index
      %c0_78 = arith.constant 0 : index
      %c0_79 = arith.constant 0 : index
      %88 = vector.load %arg23[%c1_76, %c0_77, %c0_78, %c0_79] : memref<4x1x8x8xbf16, #tpu.memory_space<vmem>>, vector<1x1x8x8xbf16>
      %89 = vector.shape_cast %88 : vector<1x1x8x8xbf16> to vector<1x8x8xbf16>
      %90 = vector.shape_cast %87 : vector<1x8x8xbf16> to vector<1x1x8x8xbf16>
      tpu.vector_store %arg23[%c1_76, %c0_77, %c0_78, %c0_79], %90 {strides = array<i32>} : memref<4x1x8x8xbf16, #tpu.memory_space<vmem>>, vector<1x1x8x8xbf16>,
      %91 = vector.shape_cast %80 : vector<8x8xf32> to vector<1x8x8xf32>
      %92 = arith.truncf %91 : vector<1x8x8xf32> to vector<1x8x8xbf16>
      %c1_80 = arith.constant 1 : index
      %c0_81 = arith.constant 0 : index
      %c0_82 = arith.constant 0 : index
      %c0_83 = arith.constant 0 : index
      %93 = vector.load %arg24[%c1_80, %c0_81, %c0_82, %c0_83] : memref<4x1x8x8xbf16, #tpu.memory_space<vmem>>, vector<1x1x8x8xbf16>
      %94 = vector.shape_cast %93 : vector<1x1x8x8xbf16> to vector<1x8x8xbf16>
      %95 = vector.shape_cast %92 : vector<1x8x8xbf16> to vector<1x1x8x8xbf16>
      tpu.vector_store %arg24[%c1_80, %c0_81, %c0_82, %c0_83], %95 {strides = array<i32>} : memref<4x1x8x8xbf16, #tpu.memory_space<vmem>>, vector<1x1x8x8xbf16>,
      %c2 = arith.constant 2 : index
      %c0_84 = arith.constant 0 : index
      %c0_85 = arith.constant 0 : index
      %96 = vector.load %arg3[%c2, %c0_84, %c0_85] : memref<4x32x8xbf16, #tpu.memory_space<vmem>>, vector<1x32x8xbf16>
      %97 = vector.shape_cast %96 : vector<1x32x8xbf16> to vector<32x8xbf16>
      %cst_86 = arith.constant dense<0.000000e+00> : vector<8x8xf32>
      %98 = tpu.matmul %23, %97, %cst_86 {dimension_numbers = #tpu.dot_dimension_numbers<[1], [0], [0], [1], [0, 0, 1, 1], [], []>} : vector<8x32xbf16>, vector<32x8xbf16>, vector<8x8xf32> -> vector<8x8xf32>
      %c2_87 = arith.constant 2 : index
      %c0_88 = arith.constant 0 : index
      %c0_89 = arith.constant 0 : index
      %99 = vector.load %arg6[%c2_87, %c0_88, %c0_89] : memref<4x1x8xf32, #tpu.memory_space<vmem>>, vector<1x1x8xf32>
      %100 = vector.shape_cast %99 : vector<1x1x8xf32> to vector<1x8xf32>
      %101 = vector.broadcast %100 : vector<1x8xf32> to vector<8x8xf32>
      %102 = arith.addf %98, %101 : vector<8x8xf32>
      %c2_90 = arith.constant 2 : index
      %c0_91 = arith.constant 0 : index
      %c0_92 = arith.constant 0 : index
      %103 = vector.load %arg4[%c2_90, %c0_91, %c0_92] : memref<4x32x8xbf16, #tpu.memory_space<vmem>>, vector<1x32x8xbf16>
      %104 = vector.shape_cast %103 : vector<1x32x8xbf16> to vector<32x8xbf16>
      %cst_93 = arith.constant dense<0.000000e+00> : vector<8x8xf32>
      %105 = tpu.matmul %23, %104, %cst_93 {dimension_numbers = #tpu.dot_dimension_numbers<[1], [0], [0], [1], [0, 0, 1, 1], [], []>} : vector<8x32xbf16>, vector<32x8xbf16>, vector<8x8xf32> -> vector<8x8xf32>
      %c2_94 = arith.constant 2 : index
      %c0_95 = arith.constant 0 : index
      %c0_96 = arith.constant 0 : index
      %106 = vector.load %arg7[%c2_94, %c0_95, %c0_96] : memref<4x1x8xf32, #tpu.memory_space<vmem>>, vector<1x1x8xf32>
      %107 = vector.shape_cast %106 : vector<1x1x8xf32> to vector<1x8xf32>
      %108 = vector.broadcast %107 : vector<1x8xf32> to vector<8x8xf32>
      %109 = arith.addf %105, %108 : vector<8x8xf32>
      %c2_97 = arith.constant 2 : index
      %c0_98 = arith.constant 0 : index
      %c0_99 = arith.constant 0 : index
      %110 = vector.load %arg5[%c2_97, %c0_98, %c0_99] : memref<4x32x8xbf16, #tpu.memory_space<vmem>>, vector<1x32x8xbf16>
      %111 = vector.shape_cast %110 : vector<1x32x8xbf16> to vector<32x8xbf16>
      %cst_100 = arith.constant dense<0.000000e+00> : vector<8x8xf32>
      %112 = tpu.matmul %23, %111, %cst_100 {dimension_numbers = #tpu.dot_dimension_numbers<[1], [0], [0], [1], [0, 0, 1, 1], [], []>} : vector<8x32xbf16>, vector<32x8xbf16>, vector<8x8xf32> -> vector<8x8xf32>
      %c2_101 = arith.constant 2 : index
      %c0_102 = arith.constant 0 : index
      %c0_103 = arith.constant 0 : index
      %113 = vector.load %arg8[%c2_101, %c0_102, %c0_103] : memref<4x1x8xf32, #tpu.memory_space<vmem>>, vector<1x1x8xf32>
      %114 = vector.shape_cast %113 : vector<1x1x8xf32> to vector<1x8xf32>
      %115 = vector.broadcast %114 : vector<1x8xf32> to vector<8x8xf32>
      %116 = arith.addf %112, %115 : vector<8x8xf32>
      %117 = vector.shape_cast %102 : vector<8x8xf32> to vector<1x8x8xf32>
      %118 = arith.truncf %117 : vector<1x8x8xf32> to vector<1x8x8xbf16>
      %c2_104 = arith.constant 2 : index
      %c0_105 = arith.constant 0 : index
      %c0_106 = arith.constant 0 : index
      %c0_107 = arith.constant 0 : index
      %119 = vector.load %arg22[%c2_104, %c0_105, %c0_106, %c0_107] : memref<4x1x8x8xbf16, #tpu.memory_space<vmem>>, vector<1x1x8x8xbf16>
      %120 = vector.shape_cast %119 : vector<1x1x8x8xbf16> to vector<1x8x8xbf16>
      %121 = vector.shape_cast %118 : vector<1x8x8xbf16> to vector<1x1x8x8xbf16>
      tpu.vector_store %arg22[%c2_104, %c0_105, %c0_106, %c0_107], %121 {strides = array<i32>} : memref<4x1x8x8xbf16, #tpu.memory_space<vmem>>, vector<1x1x8x8xbf16>,
      %122 = vector.shape_cast %109 : vector<8x8xf32> to vector<1x8x8xf32>
      %123 = arith.truncf %122 : vector<1x8x8xf32> to vector<1x8x8xbf16>
      %c2_108 = arith.constant 2 : index
      %c0_109 = arith.constant 0 : index
      %c0_110 = arith.constant 0 : index
      %c0_111 = arith.constant 0 : index
      %124 = vector.load %arg23[%c2_108, %c0_109, %c0_110, %c0_111] : memref<4x1x8x8xbf16, #tpu.memory_space<vmem>>, vector<1x1x8x8xbf16>
      %125 = vector.shape_cast %124 : vector<1x1x8x8xbf16> to vector<1x8x8xbf16>
      %126 = vector.shape_cast %123 : vector<1x8x8xbf16> to vector<1x1x8x8xbf16>
      tpu.vector_store %arg23[%c2_108, %c0_109, %c0_110, %c0_111], %126 {strides = array<i32>} : memref<4x1x8x8xbf16, #tpu.memory_space<vmem>>, vector<1x1x8x8xbf16>,
      %127 = vector.shape_cast %116 : vector<8x8xf32> to vector<1x8x8xf32>
      %128 = arith.truncf %127 : vector<1x8x8xf32> to vector<1x8x8xbf16>
      %c2_112 = arith.constant 2 : index
      %c0_113 = arith.constant 0 : index
      %c0_114 = arith.constant 0 : index
      %c0_115 = arith.constant 0 : index
      %129 = vector.load %arg24[%c2_112, %c0_113, %c0_114, %c0_115] : memref<4x1x8x8xbf16, #tpu.memory_space<vmem>>, vector<1x1x8x8xbf16>
      %130 = vector.shape_cast %129 : vector<1x1x8x8xbf16> to vector<1x8x8xbf16>
      %131 = vector.shape_cast %128 : vector<1x8x8xbf16> to vector<1x1x8x8xbf16>
      tpu.vector_store %arg24[%c2_112, %c0_113, %c0_114, %c0_115], %131 {strides = array<i32>} : memref<4x1x8x8xbf16, #tpu.memory_space<vmem>>, vector<1x1x8x8xbf16>,
      %c3 = arith.constant 3 : index
      %c0_116 = arith.constant 0 : index
      %c0_117 = arith.constant 0 : index
      %132 = vector.load %arg3[%c3, %c0_116, %c0_117] : memref<4x32x8xbf16, #tpu.memory_space<vmem>>, vector<1x32x8xbf16>
      %133 = vector.shape_cast %132 : vector<1x32x8xbf16> to vector<32x8xbf16>
      %cst_118 = arith.constant dense<0.000000e+00> : vector<8x8xf32>
      %134 = tpu.matmul %23, %133, %cst_118 {dimension_numbers = #tpu.dot_dimension_numbers<[1], [0], [0], [1], [0, 0, 1, 1], [], []>} : vector<8x32xbf16>, vector<32x8xbf16>, vector<8x8xf32> -> vector<8x8xf32>
      %c3_119 = arith.constant 3 : index
      %c0_120 = arith.constant 0 : index
      %c0_121 = arith.constant 0 : index
      %135 = vector.load %arg6[%c3_119, %c0_120, %c0_121] : memref<4x1x8xf32, #tpu.memory_space<vmem>>, vector<1x1x8xf32>
      %136 = vector.shape_cast %135 : vector<1x1x8xf32> to vector<1x8xf32>
      %137 = vector.broadcast %136 : vector<1x8xf32> to vector<8x8xf32>
      %138 = arith.addf %134, %137 : vector<8x8xf32>
      %c3_122 = arith.constant 3 : index
      %c0_123 = arith.constant 0 : index
      %c0_124 = arith.constant 0 : index
      %139 = vector.load %arg4[%c3_122, %c0_123, %c0_124] : memref<4x32x8xbf16, #tpu.memory_space<vmem>>, vector<1x32x8xbf16>
      %140 = vector.shape_cast %139 : vector<1x32x8xbf16> to vector<32x8xbf16>
      %cst_125 = arith.constant dense<0.000000e+00> : vector<8x8xf32>
      %141 = tpu.matmul %23, %140, %cst_125 {dimension_numbers = #tpu.dot_dimension_numbers<[1], [0], [0], [1], [0, 0, 1, 1], [], []>} : vector<8x32xbf16>, vector<32x8xbf16>, vector<8x8xf32> -> vector<8x8xf32>
      %c3_126 = arith.constant 3 : index
      %c0_127 = arith.constant 0 : index
      %c0_128 = arith.constant 0 : index
      %142 = vector.load %arg7[%c3_126, %c0_127, %c0_128] : memref<4x1x8xf32, #tpu.memory_space<vmem>>, vector<1x1x8xf32>
      %143 = vector.shape_cast %142 : vector<1x1x8xf32> to vector<1x8xf32>
      %144 = vector.broadcast %143 : vector<1x8xf32> to vector<8x8xf32>
      %145 = arith.addf %141, %144 : vector<8x8xf32>
      %c3_129 = arith.constant 3 : index
      %c0_130 = arith.constant 0 : index
      %c0_131 = arith.constant 0 : index
      %146 = vector.load %arg5[%c3_129, %c0_130, %c0_131] : memref<4x32x8xbf16, #tpu.memory_space<vmem>>, vector<1x32x8xbf16>
      %147 = vector.shape_cast %146 : vector<1x32x8xbf16> to vector<32x8xbf16>
      %cst_132 = arith.constant dense<0.000000e+00> : vector<8x8xf32>
      %148 = tpu.matmul %23, %147, %cst_132 {dimension_numbers = #tpu.dot_dimension_numbers<[1], [0], [0], [1], [0, 0, 1, 1], [], []>} : vector<8x32xbf16>, vector<32x8xbf16>, vector<8x8xf32> -> vector<8x8xf32>
      %c3_133 = arith.constant 3 : index
      %c0_134 = arith.constant 0 : index
      %c0_135 = arith.constant 0 : index
      %149 = vector.load %arg8[%c3_133, %c0_134, %c0_135] : memref<4x1x8xf32, #tpu.memory_space<vmem>>, vector<1x1x8xf32>
      %150 = vector.shape_cast %149 : vector<1x1x8xf32> to vector<1x8xf32>
      %151 = vector.broadcast %150 : vector<1x8xf32> to vector<8x8xf32>
      %152 = arith.addf %148, %151 : vector<8x8xf32>
      %153 = vector.shape_cast %138 : vector<8x8xf32> to vector<1x8x8xf32>
      %154 = arith.truncf %153 : vector<1x8x8xf32> to vector<1x8x8xbf16>
      %c3_136 = arith.constant 3 : index
      %c0_137 = arith.constant 0 : index
      %c0_138 = arith.constant 0 : index
      %c0_139 = arith.constant 0 : index
      %155 = vector.load %arg22[%c3_136, %c0_137, %c0_138, %c0_139] : memref<4x1x8x8xbf16, #tpu.memory_space<vmem>>, vector<1x1x8x8xbf16>
      %156 = vector.shape_cast %155 : vector<1x1x8x8xbf16> to vector<1x8x8xbf16>
      %157 = vector.shape_cast %154 : vector<1x8x8xbf16> to vector<1x1x8x8xbf16>
      tpu.vector_store %arg22[%c3_136, %c0_137, %c0_138, %c0_139], %157 {strides = array<i32>} : memref<4x1x8x8xbf16, #tpu.memory_space<vmem>>, vector<1x1x8x8xbf16>,
      %158 = vector.shape_cast %145 : vector<8x8xf32> to vector<1x8x8xf32>
      %159 = arith.truncf %158 : vector<1x8x8xf32> to vector<1x8x8xbf16>
      %c3_140 = arith.constant 3 : index
      %c0_141 = arith.constant 0 : index
      %c0_142 = arith.constant 0 : index
      %c0_143 = arith.constant 0 : index
      %160 = vector.load %arg23[%c3_140, %c0_141, %c0_142, %c0_143] : memref<4x1x8x8xbf16, #tpu.memory_space<vmem>>, vector<1x1x8x8xbf16>
      %161 = vector.shape_cast %160 : vector<1x1x8x8xbf16> to vector<1x8x8xbf16>
      %162 = vector.shape_cast %159 : vector<1x8x8xbf16> to vector<1x1x8x8xbf16>
      tpu.vector_store %arg23[%c3_140, %c0_141, %c0_142, %c0_143], %162 {strides = array<i32>} : memref<4x1x8x8xbf16, #tpu.memory_space<vmem>>, vector<1x1x8x8xbf16>,
      %163 = vector.shape_cast %152 : vector<8x8xf32> to vector<1x8x8xf32>
      %164 = arith.truncf %163 : vector<1x8x8xf32> to vector<1x8x8xbf16>
      %c3_144 = arith.constant 3 : index
      %c0_145 = arith.constant 0 : index
      %c0_146 = arith.constant 0 : index
      %c0_147 = arith.constant 0 : index
      %165 = vector.load %arg24[%c3_144, %c0_145, %c0_146, %c0_147] : memref<4x1x8x8xbf16, #tpu.memory_space<vmem>>, vector<1x1x8x8xbf16>
      %166 = vector.shape_cast %165 : vector<1x1x8x8xbf16> to vector<1x8x8xbf16>
      %167 = vector.shape_cast %164 : vector<1x8x8xbf16> to vector<1x1x8x8xbf16>
      tpu.vector_store %arg24[%c3_144, %c0_145, %c0_146, %c0_147], %167 {strides = array<i32>} : memref<4x1x8x8xbf16, #tpu.memory_space<vmem>>, vector<1x1x8x8xbf16>,
      %c0_148 = arith.constant 0 : index
      %c0_149 = arith.constant 0 : index
      %c0_150 = arith.constant 0 : index
      %c0_151 = arith.constant 0 : index
      %168 = vector.load %arg22[%c0_148, %c0_149, %c0_150, %c0_151] : memref<4x1x8x8xbf16, #tpu.memory_space<vmem>>, vector<4x1x8x8xbf16>
      %169 = vector.shape_cast %168 : vector<4x1x8x8xbf16> to vector<4x8x8xbf16>
      %c0_152 = arith.constant 0 : index
      %c0_153 = arith.constant 0 : index
      %c0_154 = arith.constant 0 : index
      %c0_155 = arith.constant 0 : index
      %170 = vector.load %arg23[%c0_152, %c0_153, %c0_154, %c0_155] : memref<4x1x8x8xbf16, #tpu.memory_space<vmem>>, vector<4x1x8x8xbf16>
      %171 = vector.shape_cast %170 : vector<4x1x8x8xbf16> to vector<4x8x8xbf16>
      %c0_156 = arith.constant 0 : index
      %c0_157 = arith.constant 0 : index
      %c0_158 = arith.constant 0 : index
      %c0_159 = arith.constant 0 : index
      %172 = vector.load %arg24[%c0_156, %c0_157, %c0_158, %c0_159] : memref<4x1x8x8xbf16, #tpu.memory_space<vmem>>, vector<4x1x8x8xbf16>
      %173 = vector.shape_cast %172 : vector<4x1x8x8xbf16> to vector<4x8x8xbf16>
      "tpu.trace_start"() <{level = 10 : i32, message = "bqd,bkd->bqk"}> : () -> ()
      %cst_160 = arith.constant dense<0.000000e+00> : vector<4x8x8xf32>
      %174 = tpu.matmul %169, %171, %cst_160 {dimension_numbers = #tpu.dot_dimension_numbers<[2], [2], [1], [1], [0, 0, 0, 1, 1, 1], [0], [0]>} : vector<4x8x8xbf16>, vector<4x8x8xbf16>, vector<4x8x8xf32> -> vector<4x8x8xf32>
      "tpu.trace_stop"() : () -> ()
      %cst_161 = arith.constant dense<0xFF800000> : vector<4x8xf32>
      %175 = vector.multi_reduction <maximumf>, %174, %cst_161 [2] : vector<4x8x8xf32> to vector<4x8xf32>
      %176 = vector.shape_cast %175 : vector<4x8xf32> to vector<4x8x1xf32>
      %177 = vector.broadcast %176 : vector<4x8x1xf32> to vector<4x8x8xf32>
      %178 = arith.subf %174, %177 : vector<4x8x8xf32>
      %179 = math.exp %178 : vector<4x8x8xf32>
      %cst_162 = arith.constant dense<0.000000e+00> : vector<4x8xf32>
      %180 = vector.multi_reduction <add>, %179, %cst_162 [2] : vector<4x8x8xf32> to vector<4x8xf32>
      %181 = vector.shape_cast %180 : vector<4x8xf32> to vector<4x8x1xf32>
      %182 = tpu.reciprocal %181 {approx = true} : vector<4x8x1xf32> -> vector<4x8x1xf32>
      %183 = vector.broadcast %182 : vector<4x8x1xf32> to vector<4x8x8xf32>
      %184 = arith.mulf %179, %183 : vector<4x8x8xf32>
      %185 = arith.truncf %184 : vector<4x8x8xf32> to vector<4x8x8xbf16>
      "tpu.trace_start"() <{level = 10 : i32, message = "bqk,bkd->bqd"}> : () -> ()
      %cst_163 = arith.constant dense<0.000000e+00> : vector<4x8x8xf32>
      %186 = tpu.matmul %185, %173, %cst_163 {dimension_numbers = #tpu.dot_dimension_numbers<[2], [1], [1], [2], [0, 0, 0, 1, 1, 2], [0], [0]>} : vector<4x8x8xbf16>, vector<4x8x8xbf16>, vector<4x8x8xf32> -> vector<4x8x8xf32>
      "tpu.trace_stop"() : () -> ()
      %187 = arith.truncf %186 : vector<4x8x8xf32> to vector<4x8x8xbf16>
      %c0_164 = arith.constant 0 : index
      %c0_165 = arith.constant 0 : index
      %c0_166 = arith.constant 0 : index
      %188 = vector.load %arg9[%c0_164, %c0_165, %c0_166] : memref<4x8x32xbf16, #tpu.memory_space<vmem>>, vector<4x8x32xbf16>
      "tpu.trace_start"() <{level = 10 : i32, message = "hrd,hde->hre"}> : () -> ()
      %cst_167 = arith.constant dense<0.000000e+00> : vector<4x8x32xf32>
      %189 = tpu.matmul %187, %188, %cst_167 {dimension_numbers = #tpu.dot_dimension_numbers<[2], [1], [1], [2], [0, 0, 0, 1, 1, 2], [0], [0]>} : vector<4x8x8xbf16>, vector<4x8x32xbf16>, vector<4x8x32xf32> -> vector<4x8x32xf32>
      "tpu.trace_stop"() : () -> ()
      %cst_168 = arith.constant dense<0.000000e+00> : vector<8x32xf32>
      %190 = vector.multi_reduction <add>, %189, %cst_168 [0] : vector<4x8x32xf32> to vector<8x32xf32>
      %c0_169 = arith.constant 0 : index
      %c0_170 = arith.constant 0 : index
      %191 = vector.load %arg10[%c0_169, %c0_170] : memref<1x32xf32, #tpu.memory_space<vmem>>, vector<1x32xf32>
      %192 = vector.broadcast %191 : vector<1x32xf32> to vector<8x32xf32>
      %193 = arith.addf %190, %192 : vector<8x32xf32>
      %194 = arith.addf %22, %193 : vector<8x32xf32>
      %c0_171 = arith.constant 0 : index
      %c0_172 = arith.constant 0 : index
      %195 = vector.load %arg15[%c0_171, %c0_172] : memref<1x32xf32, #tpu.memory_space<vmem>>, vector<1x32xf32>
      %c0_173 = arith.constant 0 : index
      %c0_174 = arith.constant 0 : index
      %196 = vector.load %arg16[%c0_173, %c0_174] : memref<1x32xf32, #tpu.memory_space<vmem>>, vector<1x32xf32>
      %cst_175 = arith.constant dense<0.000000e+00> : vector<8xf32>
      %197 = vector.multi_reduction <add>, %194, %cst_175 [1] : vector<8x32xf32> to vector<8xf32>
      %198 = vector.shape_cast %197 : vector<8xf32> to vector<8x1xf32>
      %cst_176 = arith.constant 3.200000e+01 : f32
      %199 = vector.broadcast %cst_176 : f32 to vector<8x1xf32>
      %200 = arith.divf %198, %199 : vector<8x1xf32>
      %201 = vector.broadcast %200 : vector<8x1xf32> to vector<8x32xf32>
      %202 = arith.subf %194, %201 : vector<8x32xf32>
      %203 = arith.mulf %202, %202 : vector<8x32xf32>
      %cst_177 = arith.constant dense<0.000000e+00> : vector<8xf32>
      %204 = vector.multi_reduction <add>, %203, %cst_177 [1] : vector<8x32xf32> to vector<8xf32>
      %205 = vector.shape_cast %204 : vector<8xf32> to vector<8x1xf32>
      %cst_178 = arith.constant 3.200000e+01 : f32
      %206 = vector.broadcast %cst_178 : f32 to vector<8x1xf32>
      %207 = arith.divf %205, %206 : vector<8x1xf32>
      %208 = vector.broadcast %200 : vector<8x1xf32> to vector<8x32xf32>
      %209 = arith.subf %194, %208 : vector<8x32xf32>
      %cst_179 = arith.constant 9.99999974E-6 : f32
      %210 = vector.broadcast %cst_179 : f32 to vector<8x1xf32>
      %211 = arith.addf %207, %210 : vector<8x1xf32>
      %212 = math.rsqrt %211 : vector<8x1xf32>
      %213 = vector.broadcast %212 : vector<8x1xf32> to vector<8x32xf32>
      %214 = arith.mulf %209, %213 : vector<8x32xf32>
      %215 = vector.broadcast %195 : vector<1x32xf32> to vector<8x32xf32>
      %216 = arith.mulf %214, %215 : vector<8x32xf32>
      %217 = vector.broadcast %196 : vector<1x32xf32> to vector<8x32xf32>
      %218 = arith.addf %216, %217 : vector<8x32xf32>
      %c0_180 = arith.constant 0 : index
      %c0_181 = arith.constant 0 : index
      %219 = vector.load %arg25[%c0_180, %c0_181] : memref<8x32xf32, #tpu.memory_space<vmem>>, vector<8x32xf32>
      tpu.vector_store %arg25[%c0_180, %c0_181], %218 {strides = array<i32>} : memref<8x32xf32, #tpu.memory_space<vmem>>, vector<8x32xf32>,
      %cst_182 = arith.constant 0.000000e+00 : f32
      %220 = vector.broadcast %cst_182 : f32 to vector<8x32xf32>
      %c0_183 = arith.constant 0 : index
      %c0_184 = arith.constant 0 : index
      %221 = vector.load %arg26[%c0_183, %c0_184] : memref<8x32xf32, #tpu.memory_space<vmem>>, vector<8x32xf32>
      tpu.vector_store %arg26[%c0_183, %c0_184], %220 {strides = array<i32>} : memref<8x32xf32, #tpu.memory_space<vmem>>, vector<8x32xf32>,
    } else {
    }
    %c0 = arith.constant 0 : index
    %c0_1 = arith.constant 0 : index
    %3 = vector.load %arg25[%c0, %c0_1] : memref<8x32xf32, #tpu.memory_space<vmem>>, vector<8x32xf32>
    %4 = arith.truncf %3 : vector<8x32xf32> to vector<8x32xbf16>
    %c0_2 = arith.constant 0 : index
    %c0_3 = arith.constant 0 : index
    %5 = vector.load %arg11[%c0_2, %c0_3] : memref<32x64xbf16, #tpu.memory_space<vmem>>, vector<32x64xbf16>
    %cst = arith.constant dense<0.000000e+00> : vector<8x64xf32>
    %6 = tpu.matmul %4, %5, %cst {dimension_numbers = #tpu.dot_dimension_numbers<[1], [0], [0], [1], [0, 0, 1, 1], [], []>} : vector<8x32xbf16>, vector<32x64xbf16>, vector<8x64xf32> -> vector<8x64xf32>
    %c0_4 = arith.constant 0 : index
    %c0_5 = arith.constant 0 : index
    %7 = vector.load %arg12[%c0_4, %c0_5] : memref<1x64xf32, #tpu.memory_space<vmem>>, vector<1x64xf32>
    %8 = vector.broadcast %7 : vector<1x64xf32> to vector<8x64xf32>
    %9 = arith.addf %6, %8 : vector<8x64xf32>
    %cst_6 = arith.constant 0.000000e+00 : f32
    %10 = vector.broadcast %cst_6 : f32 to vector<8x64xf32>
    %11 = arith.maximumf %9, %10 : vector<8x64xf32>
    %12 = arith.truncf %11 : vector<8x64xf32> to vector<8x64xbf16>
    %c0_7 = arith.constant 0 : index
    %c0_8 = arith.constant 0 : index
    %13 = vector.load %arg26[%c0_7, %c0_8] : memref<8x32xf32, #tpu.memory_space<vmem>>, vector<8x32xf32>
    %c0_9 = arith.constant 0 : index
    %c0_10 = arith.constant 0 : index
    %14 = vector.load %arg13[%c0_9, %c0_10] : memref<64x32xbf16, #tpu.memory_space<vmem>>, vector<64x32xbf16>
    %cst_11 = arith.constant dense<0.000000e+00> : vector<8x32xf32>
    %15 = tpu.matmul %12, %14, %cst_11 {dimension_numbers = #tpu.dot_dimension_numbers<[1], [0], [0], [1], [0, 0, 1, 1], [], []>} : vector<8x64xbf16>, vector<64x32xbf16>, vector<8x32xf32> -> vector<8x32xf32>
    %16 = arith.addf %13, %15 : vector<8x32xf32>
    %c0_12 = arith.constant 0 : index
    %c0_13 = arith.constant 0 : index
    %17 = vector.load %arg26[%c0_12, %c0_13] : memref<8x32xf32, #tpu.memory_space<vmem>>, vector<8x32xf32>
    tpu.vector_store %arg26[%c0_12, %c0_13], %16 {strides = array<i32>} : memref<8x32xf32, #tpu.memory_space<vmem>>, vector<8x32xf32>,
    %c0_i32_14 = arith.constant 0 : i32
    %18 = arith.cmpi eq, %arg1, %c0_i32_14 : i32
    %19 = arith.extui %18 : i1 to i32
    %c0_i32_15 = arith.constant 0 : i32
    %20 = arith.cmpi ne, %19, %c0_i32_15 : i32
    scf.if %20 {
      %c0_16 = arith.constant 0 : index
      %c0_17 = arith.constant 0 : index
      %c0_18 = arith.constant 0 : index
      %21 = vector.load %arg2[%c0_16, %c0_17, %c0_18] : memref<1x8x32xf32, #tpu.memory_space<vmem>>, vector<1x8x32xf32>
      %22 = vector.shape_cast %21 : vector<1x8x32xf32> to vector<8x32xf32>
      %c0_19 = arith.constant 0 : index
      %c0_20 = arith.constant 0 : index
      %23 = vector.load %arg26[%c0_19, %c0_20] : memref<8x32xf32, #tpu.memory_space<vmem>>, vector<8x32xf32>
      %c0_21 = arith.constant 0 : index
      %c0_22 = arith.constant 0 : index
      %24 = vector.load %arg14[%c0_21, %c0_22] : memref<1x32xf32, #tpu.memory_space<vmem>>, vector<1x32xf32>
      %25 = vector.broadcast %24 : vector<1x32xf32> to vector<8x32xf32>
      %26 = arith.addf %23, %25 : vector<8x32xf32>
      %c0_23 = arith.constant 0 : index
      %c0_24 = arith.constant 0 : index
      %27 = vector.load %arg25[%c0_23, %c0_24] : memref<8x32xf32, #tpu.memory_space<vmem>>, vector<8x32xf32>
      %28 = arith.addf %27, %26 : vector<8x32xf32>
      %c0_25 = arith.constant 0 : index
      %c0_26 = arith.constant 0 : index
      %29 = vector.load %arg17[%c0_25, %c0_26] : memref<1x32xf32, #tpu.memory_space<vmem>>, vector<1x32xf32>
      %c0_27 = arith.constant 0 : index
      %c0_28 = arith.constant 0 : index
      %30 = vector.load %arg18[%c0_27, %c0_28] : memref<1x32xf32, #tpu.memory_space<vmem>>, vector<1x32xf32>
      %cst_29 = arith.constant dense<0.000000e+00> : vector<8xf32>
      %31 = vector.multi_reduction <add>, %28, %cst_29 [1] : vector<8x32xf32> to vector<8xf32>
      %32 = vector.shape_cast %31 : vector<8xf32> to vector<8x1xf32>
      %cst_30 = arith.constant 3.200000e+01 : f32
      %33 = vector.broadcast %cst_30 : f32 to vector<8x1xf32>
      %34 = arith.divf %32, %33 : vector<8x1xf32>
      %35 = vector.broadcast %34 : vector<8x1xf32> to vector<8x32xf32>
      %36 = arith.subf %28, %35 : vector<8x32xf32>
      %37 = arith.mulf %36, %36 : vector<8x32xf32>
      %cst_31 = arith.constant dense<0.000000e+00> : vector<8xf32>
      %38 = vector.multi_reduction <add>, %37, %cst_31 [1] : vector<8x32xf32> to vector<8xf32>
      %39 = vector.shape_cast %38 : vector<8xf32> to vector<8x1xf32>
      %cst_32 = arith.constant 3.200000e+01 : f32
      %40 = vector.broadcast %cst_32 : f32 to vector<8x1xf32>
      %41 = arith.divf %39, %40 : vector<8x1xf32>
      %42 = vector.broadcast %34 : vector<8x1xf32> to vector<8x32xf32>
      %43 = arith.subf %28, %42 : vector<8x32xf32>
      %cst_33 = arith.constant 9.99999974E-6 : f32
      %44 = vector.broadcast %cst_33 : f32 to vector<8x1xf32>
      %45 = arith.addf %41, %44 : vector<8x1xf32>
      %46 = math.rsqrt %45 : vector<8x1xf32>
      %47 = vector.broadcast %46 : vector<8x1xf32> to vector<8x32xf32>
      %48 = arith.mulf %43, %47 : vector<8x32xf32>
      %49 = vector.broadcast %29 : vector<1x32xf32> to vector<8x32xf32>
      %50 = arith.mulf %48, %49 : vector<8x32xf32>
      %51 = vector.broadcast %30 : vector<1x32xf32> to vector<8x32xf32>
      %52 = arith.addf %50, %51 : vector<8x32xf32>
      %53 = arith.addf %22, %52 : vector<8x32xf32>
      %c0_34 = arith.constant 0 : index
      %c0_35 = arith.constant 0 : index
      %54 = vector.load %arg19[%c0_34, %c0_35] : memref<1x32xf32, #tpu.memory_space<vmem>>, vector<1x32xf32>
      %c0_36 = arith.constant 0 : index
      %c0_37 = arith.constant 0 : index
      %55 = vector.load %arg20[%c0_36, %c0_37] : memref<1x32xf32, #tpu.memory_space<vmem>>, vector<1x32xf32>
      %cst_38 = arith.constant dense<0.000000e+00> : vector<8xf32>
      %56 = vector.multi_reduction <add>, %53, %cst_38 [1] : vector<8x32xf32> to vector<8xf32>
      %57 = vector.shape_cast %56 : vector<8xf32> to vector<8x1xf32>
      %cst_39 = arith.constant 3.200000e+01 : f32
      %58 = vector.broadcast %cst_39 : f32 to vector<8x1xf32>
      %59 = arith.divf %57, %58 : vector<8x1xf32>
      %60 = vector.broadcast %59 : vector<8x1xf32> to vector<8x32xf32>
      %61 = arith.subf %53, %60 : vector<8x32xf32>
      %62 = arith.mulf %61, %61 : vector<8x32xf32>
      %cst_40 = arith.constant dense<0.000000e+00> : vector<8xf32>
      %63 = vector.multi_reduction <add>, %62, %cst_40 [1] : vector<8x32xf32> to vector<8xf32>
      %64 = vector.shape_cast %63 : vector<8xf32> to vector<8x1xf32>
      %cst_41 = arith.constant 3.200000e+01 : f32
      %65 = vector.broadcast %cst_41 : f32 to vector<8x1xf32>
      %66 = arith.divf %64, %65 : vector<8x1xf32>
      %67 = vector.broadcast %59 : vector<8x1xf32> to vector<8x32xf32>
      %68 = arith.subf %53, %67 : vector<8x32xf32>
      %cst_42 = arith.constant 9.99999974E-6 : f32
      %69 = vector.broadcast %cst_42 : f32 to vector<8x1xf32>
      %70 = arith.addf %66, %69 : vector<8x1xf32>
      %71 = math.rsqrt %70 : vector<8x1xf32>
      %72 = vector.broadcast %71 : vector<8x1xf32> to vector<8x32xf32>
      %73 = arith.mulf %68, %72 : vector<8x32xf32>
      %74 = vector.broadcast %54 : vector<1x32xf32> to vector<8x32xf32>
      %75 = arith.mulf %73, %74 : vector<8x32xf32>
      %76 = vector.broadcast %55 : vector<1x32xf32> to vector<8x32xf32>
      %77 = arith.addf %75, %76 : vector<8x32xf32>
      %78 = vector.shape_cast %77 : vector<8x32xf32> to vector<1x8x32xf32>
      %c0_43 = arith.constant 0 : index
      %c0_44 = arith.constant 0 : index
      %c0_45 = arith.constant 0 : index
      %79 = vector.load %arg21[%c0_43, %c0_44, %c0_45] : memref<1x8x32xf32, #tpu.memory_space<vmem>>, vector<1x8x32xf32>
      tpu.vector_store %arg21[%c0_43, %c0_44, %c0_45], %78 {strides = array<i32>} : memref<1x8x32xf32, #tpu.memory_space<vmem>>, vector<1x8x32xf32>,
    } else {
    }
    return
  }
  func.func @transform_0(%arg0: i32, %arg1: i32) -> (i32, i32, i32) {
    %c0_i32 = arith.constant 0 : i32
    %c0_i32_0 = arith.constant 0 : i32
    %c0_i32_1 = arith.constant 0 : i32
    return %arg0, %c0_i32, %c0_i32_0 : i32, i32, i32
  }
  func.func @transform_1(%arg0: i32, %arg1: i32) -> (i32, i32, i32) {
    %c0_i32 = arith.constant 0 : i32
    %c0_i32_0 = arith.constant 0 : i32
    %c0_i32_1 = arith.constant 0 : i32
    %c0_i32_2 = arith.constant 0 : i32
    return %c0_i32, %c0_i32_0, %c0_i32_1 : i32, i32, i32
  }
  func.func @transform_2(%arg0: i32, %arg1: i32) -> (i32, i32, i32) {
    %c0_i32 = arith.constant 0 : i32
    %c0_i32_0 = arith.constant 0 : i32
    %c0_i32_1 = arith.constant 0 : i32
    %c0_i32_2 = arith.constant 0 : i32
    return %c0_i32, %c0_i32_0, %c0_i32_1 : i32, i32, i32
  }
  func.func @transform_3(%arg0: i32, %arg1: i32) -> (i32, i32, i32) {
    %c0_i32 = arith.constant 0 : i32
    %c0_i32_0 = arith.constant 0 : i32
    %c0_i32_1 = arith.constant 0 : i32
    %c0_i32_2 = arith.constant 0 : i32
    return %c0_i32, %c0_i32_0, %c0_i32_1 : i32, i32, i32
  }
  func.func @transform_4(%arg0: i32, %arg1: i32) -> (i32, i32, i32) {
    %c0_i32 = arith.constant 0 : i32
    %c0_i32_0 = arith.constant 0 : i32
    %c0_i32_1 = arith.constant 0 : i32
    %c0_i32_2 = arith.constant 0 : i32
    return %c0_i32, %c0_i32_0, %c0_i32_1 : i32, i32, i32
  }
  func.func @transform_5(%arg0: i32, %arg1: i32) -> (i32, i32, i32) {
    %c0_i32 = arith.constant 0 : i32
    %c0_i32_0 = arith.constant 0 : i32
    %c0_i32_1 = arith.constant 0 : i32
    %c0_i32_2 = arith.constant 0 : i32
    return %c0_i32, %c0_i32_0, %c0_i32_1 : i32, i32, i32
  }
  func.func @transform_6(%arg0: i32, %arg1: i32) -> (i32, i32, i32) {
    %c0_i32 = arith.constant 0 : i32
    %c0_i32_0 = arith.constant 0 : i32
    %c0_i32_1 = arith.constant 0 : i32
    %c0_i32_2 = arith.constant 0 : i32
    return %c0_i32, %c0_i32_0, %c0_i32_1 : i32, i32, i32
  }
  func.func @transform_7(%arg0: i32, %arg1: i32) -> (i32, i32, i32) {
    %c0_i32 = arith.constant 0 : i32
    %c0_i32_0 = arith.constant 0 : i32
    %c0_i32_1 = arith.constant 0 : i32
    %c0_i32_2 = arith.constant 0 : i32
    return %c0_i32, %c0_i32_0, %c0_i32_1 : i32, i32, i32
  }
  func.func @transform_8(%arg0: i32, %arg1: i32) -> (i32, i32) {
    %c0_i32 = arith.constant 0 : i32
    %c0_i32_0 = arith.constant 0 : i32
    %c0_i32_1 = arith.constant 0 : i32
    return %c0_i32, %c0_i32_0 : i32, i32
  }
  func.func @transform_9(%arg0: i32, %arg1: i32) -> (i32, i32) {
    %c0_i32 = arith.constant 0 : i32
    %c0_i32_0 = arith.constant 0 : i32
    return %c0_i32, %arg1 : i32, i32
  }
  func.func @transform_10(%arg0: i32, %arg1: i32) -> (i32, i32) {
    %c0_i32 = arith.constant 0 : i32
    %c0_i32_0 = arith.constant 0 : i32
    return %c0_i32, %arg1 : i32, i32
  }
  func.func @transform_11(%arg0: i32, %arg1: i32) -> (i32, i32) {
    %c0_i32 = arith.constant 0 : i32
    %c0_i32_0 = arith.constant 0 : i32
    return %arg1, %c0_i32 : i32, i32
  }
  func.func @transform_12(%arg0: i32, %arg1: i32) -> (i32, i32) {
    %c0_i32 = arith.constant 0 : i32
    %c0_i32_0 = arith.constant 0 : i32
    %c0_i32_1 = arith.constant 0 : i32
    return %c0_i32, %c0_i32_0 : i32, i32
  }
  func.func @transform_13(%arg0: i32, %arg1: i32) -> (i32, i32) {
    %c0_i32 = arith.constant 0 : i32
    %c0_i32_0 = arith.constant 0 : i32
    %c0_i32_1 = arith.constant 0 : i32
    return %c0_i32, %c0_i32_0 : i32, i32
  }
  func.func @transform_14(%arg0: i32, %arg1: i32) -> (i32, i32) {
    %c0_i32 = arith.constant 0 : i32
    %c0_i32_0 = arith.constant 0 : i32
    %c0_i32_1 = arith.constant 0 : i32
    return %c0_i32, %c0_i32_0 : i32, i32
  }
  func.func @transform_15(%arg0: i32, %arg1: i32) -> (i32, i32) {
    %c0_i32 = arith.constant 0 : i32
    %c0_i32_0 = arith.constant 0 : i32
    %c0_i32_1 = arith.constant 0 : i32
    return %c0_i32, %c0_i32_0 : i32, i32
  }
  func.func @transform_16(%arg0: i32, %arg1: i32) -> (i32, i32) {
    %c0_i32 = arith.constant 0 : i32
    %c0_i32_0 = arith.constant 0 : i32
    %c0_i32_1 = arith.constant 0 : i32
    return %c0_i32, %c0_i32_0 : i32, i32
  }
  func.func @transform_17(%arg0: i32, %arg1: i32) -> (i32, i32) {
    %c0_i32 = arith.constant 0 : i32
    %c0_i32_0 = arith.constant 0 : i32
    %c0_i32_1 = arith.constant 0 : i32
    return %c0_i32, %c0_i32_0 : i32, i32
  }
  func.func @transform_18(%arg0: i32, %arg1: i32) -> (i32, i32) {
    %c0_i32 = arith.constant 0 : i32
    %c0_i32_0 = arith.constant 0 : i32
    %c0_i32_1 = arith.constant 0 : i32
    return %c0_i32, %c0_i32_0 : i32, i32
  }
  func.func @transform_19(%arg0: i32, %arg1: i32) -> (i32, i32, i32) {
    %c0_i32 = arith.constant 0 : i32
    %c0_i32_0 = arith.constant 0 : i32
    %c0_i32_1 = arith.constant 0 : i32
    return %arg0, %c0_i32, %c0_i32_0 : i32, i32, i32
  }
}

module attributes {stable_mosaic.version = 11 : i64} {
  func.func @encoder_kernel(%arg0: i32, %arg1: i32, %arg2: memref<1x8x32xf32, #tpu.memory_space<vmem>>, %arg3: memref<4x32x8xbf16, #tpu.memory_space<vmem>>, %arg4: memref<4x32x8xbf16, #tpu.memory_space<vmem>>, %arg5: memref<4x32x8xbf16, #tpu.memory_space<vmem>>, %arg6: memref<4x1x8xf32, #tpu.memory_space<vmem>>, %arg7: memref<4x1x8xf32, #tpu.memory_space<vmem>>, %arg8: memref<4x1x8xf32, #tpu.memory_space<vmem>>, %arg9: memref<4x8x32xbf16, #tpu.memory_space<vmem>>, %arg10: memref<1x32xf32, #tpu.memory_space<vmem>>, %arg11: memref<32x64xbf16, #tpu.memory_space<vmem>>, %arg12: memref<1x64xf32, #tpu.memory_space<vmem>>, %arg13: memref<64x32xbf16, #tpu.memory_space<vmem>>, %arg14: memref<1x32xf32, #tpu.memory_space<vmem>>, %arg15: memref<1x32xf32, #tpu.memory_space<vmem>>, %arg16: memref<1x32xf32, #tpu.memory_space<vmem>>, %arg17: memref<1x32xf32, #tpu.memory_space<vmem>>, %arg18: memref<1x32xf32, #tpu.memory_space<vmem>>, %arg19: memref<1x32xf32, #tpu.memory_space<vmem>>, %arg20: memref<1x32xf32, #tpu.memory_space<vmem>>, %arg21: memref<1x8x32xf32, #tpu.memory_space<vmem>>, %arg22: memref<4x1x8x8xbf16, #tpu.memory_space<vmem>>, %arg23: memref<4x1x8x8xbf16, #tpu.memory_space<vmem>>, %arg24: memref<4x1x8x8xbf16, #tpu.memory_space<vmem>>, %arg25: memref<8x32xf32, #tpu.memory_space<vmem>>, %arg26: memref<8x32xf32, #tpu.memory_space<vmem>>) attributes {dimension_semantics = [#tpu.dimension_semantics<parallel>, #tpu.dimension_semantics<arbitrary>], iteration_bounds = array<i64: 2, 1>, scalar_prefetch = 0 : i64, scratch_operands = 5 : i64, tpu.core_type = #tpu.core_type<tc>, window_params = [{transform_indices = @transform_0, window_bounds = array<i64: 1, 8, 32>}, {pipeline_mode = #tpu.pipeline_mode<synchronous>, transform_indices = @transform_1, window_bounds = array<i64: 4, 32, 8>}, {pipeline_mode = #tpu.pipeline_mode<synchronous>, transform_indices = @transform_2, window_bounds = array<i64: 4, 32, 8>}, {pipeline_mode = #tpu.pipeline_mode<synchronous>, transform_indices = @transform_3, window_bounds = array<i64: 4, 32, 8>}, {pipeline_mode = #tpu.pipeline_mode<synchronous>, transform_indices = @transform_4, window_bounds = array<i64: 4, 1, 8>}, {pipeline_mode = #tpu.pipeline_mode<synchronous>, transform_indices = @transform_5, window_bounds = array<i64: 4, 1, 8>}, {pipeline_mode = #tpu.pipeline_mode<synchronous>, transform_indices = @transform_6, window_bounds = array<i64: 4, 1, 8>}, {pipeline_mode = #tpu.pipeline_mode<synchronous>, transform_indices = @transform_7, window_bounds = array<i64: 4, 8, 32>}, {pipeline_mode = #tpu.pipeline_mode<synchronous>, transform_indices = @transform_8, window_bounds = array<i64: 1, 32>}, {transform_indices = @transform_9, window_bounds = array<i64: 32, 64>}, {transform_indices = @transform_10, window_bounds = array<i64: 1, 64>}, {transform_indices = @transform_11, window_bounds = array<i64: 64, 32>}, {pipeline_mode = #tpu.pipeline_mode<synchronous>, transform_indices = @transform_12, window_bounds = array<i64: 1, 32>}, {pipeline_mode = #tpu.pipeline_mode<synchronous>, transform_indices = @transform_13, window_bounds = array<i64: 1, 32>}, {pipeline_mode = #tpu.pipeline_mode<synchronous>, transform_indices = @transform_14, window_bounds = array<i64: 1, 32>}, {pipeline_mode = #tpu.pipeline_mode<synchronous>, transform_indices = @transform_15, window_bounds = array<i64: 1, 32>}, {pipeline_mode = #tpu.pipeline_mode<synchronous>, transform_indices = @transform_16, window_bounds = array<i64: 1, 32>}, {pipeline_mode = #tpu.pipeline_mode<synchronous>, transform_indices = @transform_17, window_bounds = array<i64: 1, 32>}, {pipeline_mode = #tpu.pipeline_mode<synchronous>, transform_indices = @transform_18, window_bounds = array<i64: 1, 32>}, {transform_indices = @transform_19, window_bounds = array<i64: 1, 8, 32>}]} {
    %c0_i32 = arith.constant 0 : i32
    %0 = arith.cmpi eq, %arg1, %c0_i32 : i32
    %1 = arith.extui %0 : i1 to i32
    %c0_i32_0 = arith.constant 0 : i32
    %2 = arith.cmpi ne, %1, %c0_i32_0 : i32
    scf.if %2 {
      %c0_16 = arith.constant 0 : index
      %c0_17 = arith.constant 0 : index
      %c0_18 = arith.constant 0 : index
      %21 = vector.load %arg2[%c0_16, %c0_17, %c0_18] : memref<1x8x32xf32, #tpu.memory_space<vmem>>, vector<1x8x32xf32>
      %22 = vector.shape_cast %21 : vector<1x8x32xf32> to vector<8x32xf32>
      %23 = arith.truncf %22 : vector<8x32xf32> to vector<8x32xbf16>
      %c0_19 = arith.constant 0 : index
      %c0_20 = arith.constant 0 : index
      %c0_21 = arith.constant 0 : index
      %24 = vector.load %arg3[%c0_19, %c0_20, %c0_21] : memref<4x32x8xbf16, #tpu.memory_space<vmem>>, vector<1x32x8xbf16>
      %25 = vector.shape_cast %24 : vector<1x32x8xbf16> to vector<32x8xbf16>
      %cst_22 = arith.constant dense<0.000000e+00> : vector<8x8xf32>
      %26 = tpu.matmul %23, %25, %cst_22 {dimension_numbers = #tpu.dot_dimension_numbers<[1], [0], [0], [1], [0, 0, 1, 1], [], []>} : vector<8x32xbf16>, vector<32x8xbf16>, vector<8x8xf32> -> vector<8x8xf32>
      %c0_23 = arith.constant 0 : index
      %c0_24 = arith.constant 0 : index
      %c0_25 = arith.constant 0 : index
      %27 = vector.load %arg6[%c0_23, %c0_24, %c0_25] : memref<4x1x8xf32, #tpu.memory_space<vmem>>, vector<1x1x8xf32>
      %28 = vector.shape_cast %27 : vector<1x1x8xf32> to vector<1x8xf32>
      %29 = vector.broadcast %28 : vector<1x8xf32> to vector<8x8xf32>
      %30 = arith.addf %26, %29 : vector<8x8xf32>
      %c0_26 = arith.constant 0 : index
      %c0_27 = arith.constant 0 : index
      %c0_28 = arith.constant 0 : index
      %31 = vector.load %arg4[%c0_26, %c0_27, %c0_28] : memref<4x32x8xbf16, #tpu.memory_space<vmem>>, vector<1x32x8xbf16>
      %32 = vector.shape_cast %31 : vector<1x32x8xbf16> to vector<32x8xbf16>
      %cst_29 = arith.constant dense<0.000000e+00> : vector<8x8xf32>
      %33 = tpu.matmul %23, %32, %cst_29 {dimension_numbers = #tpu.dot_dimension_numbers<[1], [0], [0], [1], [0, 0, 1, 1], [], []>} : vector<8x32xbf16>, vector<32x8xbf16>, vector<8x8xf32> -> vector<8x8xf32>
      %c0_30 = arith.constant 0 : index
      %c0_31 = arith.constant 0 : index
      %c0_32 = arith.constant 0 : index
      %34 = vector.load %arg7[%c0_30, %c0_31, %c0_32] : memref<4x1x8xf32, #tpu.memory_space<vmem>>, vector<1x1x8xf32>
      %35 = vector.shape_cast %34 : vector<1x1x8xf32> to vector<1x8xf32>
      %36 = vector.broadcast %35 : vector<1x8xf32> to vector<8x8xf32>
      %37 = arith.addf %33, %36 : vector<8x8xf32>
      %c0_33 = arith.constant 0 : index
      %c0_34 = arith.constant 0 : index
      %c0_35 = arith.constant 0 : index
      %38 = vector.load %arg5[%c0_33, %c0_34, %c0_35] : memref<4x32x8xbf16, #tpu.memory_space<vmem>>, vector<1x32x8xbf16>
      %39 = vector.shape_cast %38 : vector<1x32x8xbf16> to vector<32x8xbf16>
      %cst_36 = arith.constant dense<0.000000e+00> : vector<8x8xf32>
      %40 = tpu.matmul %23, %39, %cst_36 {dimension_numbers = #tpu.dot_dimension_numbers<[1], [0], [0], [1], [0, 0, 1, 1], [], []>} : vector<8x32xbf16>, vector<32x8xbf16>, vector<8x8xf32> -> vector<8x8xf32>
      %c0_37 = arith.constant 0 : index
      %c0_38 = arith.constant 0 : index
      %c0_39 = arith.constant 0 : index
      %41 = vector.load %arg8[%c0_37, %c0_38, %c0_39] : memref<4x1x8xf32, #tpu.memory_space<vmem>>, vector<1x1x8xf32>
      %42 = vector.shape_cast %41 : vector<1x1x8xf32> to vector<1x8xf32>
      %43 = vector.broadcast %42 : vector<1x8xf32> to vector<8x8xf32>
      %44 = arith.addf %40, %43 : vector<8x8xf32>
      %45 = vector.shape_cast %30 : vector<8x8xf32> to vector<1x8x8xf32>
      %46 = arith.truncf %45 : vector<1x8x8xf32> to vector<1x8x8xbf16>
      %c0_40 = arith.constant 0 : index
      %c0_41 = arith.constant 0 : index
      %c0_42 = arith.constant 0 : index
      %c0_43 = arith.constant 0 : index
      %47 = vector.load %arg22[%c0_40, %c0_41, %c0_42, %c0_43] : memref<4x1x8x8xbf16, #tpu.memory_space<vmem>>, vector<1x1x8x8xbf16>
      %48 = vector.shape_cast %47 : vector<1x1x8x8xbf16> to vector<1x8x8xbf16>
      %49 = vector.shape_cast %46 : vector<1x8x8xbf16> to vector<1x1x8x8xbf16>
      tpu.vector_store %arg22[%c0_40, %c0_41, %c0_42, %c0_43], %49 {strides = array<i32>} : memref<4x1x8x8xbf16, #tpu.memory_space<vmem>>, vector<1x1x8x8xbf16>,
      %50 = vector.shape_cast %37 : vector<8x8xf32> to vector<1x8x8xf32>
      %51 = arith.truncf %50 : vector<1x8x8xf32> to vector<1x8x8xbf16>
      %c0_44 = arith.constant 0 : index
      %c0_45 = arith.constant 0 : index
      %c0_46 = arith.constant 0 : index
      %c0_47 = arith.constant 0 : index
      %52 = vector.load %arg23[%c0_44, %c0_45, %c0_46, %c0_47] : memref<4x1x8x8xbf16, #tpu.memory_space<vmem>>, vector<1x1x8x8xbf16>
      %53 = vector.shape_cast %52 : vector<1x1x8x8xbf16> to vector<1x8x8xbf16>
      %54 = vector.shape_cast %51 : vector<1x8x8xbf16> to vector<1x1x8x8xbf16>
      tpu.vector_store %arg23[%c0_44, %c0_45, %c0_46, %c0_47], %54 {strides = array<i32>} : memref<4x1x8x8xbf16, #tpu.memory_space<vmem>>, vector<1x1x8x8xbf16>,
      %55 = vector.shape_cast %44 : vector<8x8xf32> to vector<1x8x8xf32>
      %56 = arith.truncf %55 : vector<1x8x8xf32> to vector<1x8x8xbf16>
      %c0_48 = arith.constant 0 : index
      %c0_49 = arith.constant 0 : index
      %c0_50 = arith.constant 0 : index
      %c0_51 = arith.constant 0 : index
      %57 = vector.load %arg24[%c0_48, %c0_49, %c0_50, %c0_51] : memref<4x1x8x8xbf16, #tpu.memory_space<vmem>>, vector<1x1x8x8xbf16>
      %58 = vector.shape_cast %57 : vector<1x1x8x8xbf16> to vector<1x8x8xbf16>
      %59 = vector.shape_cast %56 : vector<1x8x8xbf16> to vector<1x1x8x8xbf16>
      tpu.vector_store %arg24[%c0_48, %c0_49, %c0_50, %c0_51], %59 {strides = array<i32>} : memref<4x1x8x8xbf16, #tpu.memory_space<vmem>>, vector<1x1x8x8xbf16>,
      %c1 = arith.constant 1 : index
      %c0_52 = arith.constant 0 : index
      %c0_53 = arith.constant 0 : index
      %60 = vector.load %arg3[%c1, %c0_52, %c0_53] : memref<4x32x8xbf16, #tpu.memory_space<vmem>>, vector<1x32x8xbf16>
      %61 = vector.shape_cast %60 : vector<1x32x8xbf16> to vector<32x8xbf16>
      %cst_54 = arith.constant dense<0.000000e+00> : vector<8x8xf32>
      %62 = tpu.matmul %23, %61, %cst_54 {dimension_numbers = #tpu.dot_dimension_numbers<[1], [0], [0], [1], [0, 0, 1, 1], [], []>} : vector<8x32xbf16>, vector<32x8xbf16>, vector<8x8xf32> -> vector<8x8xf32>
      %c1_55 = arith.constant 1 : index
      %c0_56 = arith.constant 0 : index
      %c0_57 = arith.constant 0 : index
      %63 = vector.load %arg6[%c1_55, %c0_56, %c0_57] : memref<4x1x8xf32, #tpu.memory_space<vmem>>, vector<1x1x8xf32>
      %64 = vector.shape_cast %63 : vector<1x1x8xf32> to vector<1x8xf32>
      %65 = vector.broadcast %64 : vector<1x8xf32> to vector<8x8xf32>
      %66 = arith.addf %62, %65 : vector<8x8xf32>
      %c1_58 = arith.constant 1 : index
      %c0_59 = arith.constant 0 : index
      %c0_60 = arith.constant 0 : index
      %67 = vector.load %arg4[%c1_58, %c0_59, %c0_60] : memref<4x32x8xbf16, #tpu.memory_space<vmem>>, vector<1x32x8xbf16>
      %68 = vector.shape_cast %67 : vector<1x32x8xbf16> to vector<32x8xbf16>
      %cst_61 = arith.constant dense<0.000000e+00> : vector<8x8xf32>
      %69 = tpu.matmul %23, %68, %cst_61 {dimension_numbers = #tpu.dot_dimension_numbers<[1], [0], [0], [1], [0, 0, 1, 1], [], []>} : vector<8x32xbf16>, vector<32x8xbf16>, vector<8x8xf32> -> vector<8x8xf32>
      %c1_62 = arith.constant 1 : index
      %c0_63 = arith.constant 0 : index
      %c0_64 = arith.constant 0 : index
      %70 = vector.load %arg7[%c1_62, %c0_63, %c0_64] : memref<4x1x8xf32, #tpu.memory_space<vmem>>, vector<1x1x8xf32>
      %71 = vector.shape_cast %70 : vector<1x1x8xf32> to vector<1x8xf32>
      %72 = vector.broadcast %71 : vector<1x8xf32> to vector<8x8xf32>
      %73 = arith.addf %69, %72 : vector<8x8xf32>
      %c1_65 = arith.constant 1 : index
      %c0_66 = arith.constant 0 : index
      %c0_67 = arith.constant 0 : index
      %74 = vector.load %arg5[%c1_65, %c0_66, %c0_67] : memref<4x32x8xbf16, #tpu.memory_space<vmem>>, vector<1x32x8xbf16>
      %75 = vector.shape_cast %74 : vector<1x32x8xbf16> to vector<32x8xbf16>
      %cst_68 = arith.constant dense<0.000000e+00> : vector<8x8xf32>
      %76 = tpu.matmul %23, %75, %cst_68 {dimension_numbers = #tpu.dot_dimension_numbers<[1], [0], [0], [1], [0, 0, 1, 1], [], []>} : vector<8x32xbf16>, vector<32x8xbf16>, vector<8x8xf32> -> vector<8x8xf32>
      %c1_69 = arith.constant 1 : index
      %c0_70 = arith.constant 0 : index
      %c0_71 = arith.constant 0 : index
      %77 = vector.load %arg8[%c1_69, %c0_70, %c0_71] : memref<4x1x8xf32, #tpu.memory_space<vmem>>, vector<1x1x8xf32>
      %78 = vector.shape_cast %77 : vector<1x1x8xf32> to vector<1x8xf32>
      %79 = vector.broadcast %78 : vector<1x8xf32> to vector<8x8xf32>
      %80 = arith.addf %76, %79 : vector<8x8xf32>
      %81 = vector.shape_cast %66 : vector<8x8xf32> to vector<1x8x8xf32>
      %82 = arith.truncf %81 : vector<1x8x8xf32> to vector<1x8x8xbf16>
      %c1_72 = arith.constant 1 : index
      %c0_73 = arith.constant 0 : index
      %c0_74 = arith.constant 0 : index
      %c0_75 = arith.constant 0 : index
      %83 = vector.load %arg22[%c1_72, %c0_73, %c0_74, %c0_75] : memref<4x1x8x8xbf16, #tpu.memory_space<vmem>>, vector<1x1x8x8xbf16>
      %84 = vector.shape_cast %83 : vector<1x1x8x8xbf16> to vector<1x8x8xbf16>
      %85 = vector.shape_cast %82 : vector<1x8x8xbf16> to vector<1x1x8x8xbf16>
      tpu.vector_store %arg22[%c1_72, %c0_73, %c0_74, %c0_75], %85 {strides = array<i32>} : memref<4x1x8x8xbf16, #tpu.memory_space<vmem>>, vector<1x1x8x8xbf16>,
      %86 = vector.shape_cast %73 : vector<8x8xf32> to vector<1x8x8xf32>
      %87 = arith.truncf %86 : vector<1x8x8xf32> to vector<1x8x8xbf16>
      %c1_76 = arith.constant 1 : index
      %c0_77 = arith.constant 0 : index
      %c0_78 = arith.constant 0 : index
      %c0_79 = arith.constant 0 : index
      %88 = vector.load %arg23[%c1_76, %c0_77, %c0_78, %c0_79] : memref<4x1x8x8xbf16, #tpu.memory_space<vmem>>, vector<1x1x8x8xbf16>
      %89 = vector.shape_cast %88 : vector<1x1x8x8xbf16> to vector<1x8x8xbf16>
      %90 = vector.shape_cast %87 : vector<1x8x8xbf16> to vector<1x1x8x8xbf16>
      tpu.vector_store %arg23[%c1_76, %c0_77, %c0_78, %c0_79], %90 {strides = array<i32>} : memref<4x1x8x8xbf16, #tpu.memory_space<vmem>>, vector<1x1x8x8xbf16>,
      %91 = vector.shape_cast %80 : vector<8x8xf32> to vector<1x8x8xf32>
      %92 = arith.truncf %91 : vector<1x8x8xf32> to vector<1x8x8xbf16>
      %c1_80 = arith.constant 1 : index
      %c0_81 = arith.constant 0 : index
      %c0_82 = arith.constant 0 : index
      %c0_83 = arith.constant 0 : index
      %93 = vector.load %arg24[%c1_80, %c0_81, %c0_82, %c0_83] : memref<4x1x8x8xbf16, #tpu.memory_space<vmem>>, vector<1x1x8x8xbf16>
      %94 = vector.shape_cast %93 : vector<1x1x8x8xbf16> to vector<1x8x8xbf16>
      %95 = vector.shape_cast %92 : vector<1x8x8xbf16> to vector<1x1x8x8xbf16>
      tpu.vector_store %arg24[%c1_80, %c0_81, %c0_82, %c0_83], %95 {strides = array<i32>} : memref<4x1x8x8xbf16, #tpu.memory_space<vmem>>, vector<1x1x8x8xbf16>,
      %c2 = arith.constant 2 : index
      %c0_84 = arith.constant 0 : index
      %c0_85 = arith.constant 0 : index
      %96 = vector.load %arg3[%c2, %c0_84, %c0_85] : memref<4x32x8xbf16, #tpu.memory_space<vmem>>, vector<1x32x8xbf16>
      %97 = vector.shape_cast %96 : vector<1x32x8xbf16> to vector<32x8xbf16>
      %cst_86 = arith.constant dense<0.000000e+00> : vector<8x8xf32>
      %98 = tpu.matmul %23, %97, %cst_86 {dimension_numbers = #tpu.dot_dimension_numbers<[1], [0], [0], [1], [0, 0, 1, 1], [], []>} : vector<8x32xbf16>, vector<32x8xbf16>, vector<8x8xf32> -> vector<8x8xf32>
      %c2_87 = arith.constant 2 : index
      %c0_88 = arith.constant 0 : index
      %c0_89 = arith.constant 0 : index
      %99 = vector.load %arg6[%c2_87, %c0_88, %c0_89] : memref<4x1x8xf32, #tpu.memory_space<vmem>>, vector<1x1x8xf32>
      %100 = vector.shape_cast %99 : vector<1x1x8xf32> to vector<1x8xf32>
      %101 = vector.broadcast %100 : vector<1x8xf32> to vector<8x8xf32>
      %102 = arith.addf %98, %101 : vector<8x8xf32>
      %c2_90 = arith.constant 2 : index
      %c0_91 = arith.constant 0 : index
      %c0_92 = arith.constant 0 : index
      %103 = vector.load %arg4[%c2_90, %c0_91, %c0_92] : memref<4x32x8xbf16, #tpu.memory_space<vmem>>, vector<1x32x8xbf16>
      %104 = vector.shape_cast %103 : vector<1x32x8xbf16> to vector<32x8xbf16>
      %cst_93 = arith.constant dense<0.000000e+00> : vector<8x8xf32>
      %105 = tpu.matmul %23, %104, %cst_93 {dimension_numbers = #tpu.dot_dimension_numbers<[1], [0], [0], [1], [0, 0, 1, 1], [], []>} : vector<8x32xbf16>, vector<32x8xbf16>, vector<8x8xf32> -> vector<8x8xf32>
      %c2_94 = arith.constant 2 : index
      %c0_95 = arith.constant 0 : index
      %c0_96 = arith.constant 0 : index
      %106 = vector.load %arg7[%c2_94, %c0_95, %c0_96] : memref<4x1x8xf32, #tpu.memory_space<vmem>>, vector<1x1x8xf32>
      %107 = vector.shape_cast %106 : vector<1x1x8xf32> to vector<1x8xf32>
      %108 = vector.broadcast %107 : vector<1x8xf32> to vector<8x8xf32>
      %109 = arith.addf %105, %108 : vector<8x8xf32>
      %c2_97 = arith.constant 2 : index
      %c0_98 = arith.constant 0 : index
      %c0_99 = arith.constant 0 : index
      %110 = vector.load %arg5[%c2_97, %c0_98, %c0_99] : memref<4x32x8xbf16, #tpu.memory_space<vmem>>, vector<1x32x8xbf16>
      %111 = vector.shape_cast %110 : vector<1x32x8xbf16> to vector<32x8xbf16>
      %cst_100 = arith.constant dense<0.000000e+00> : vector<8x8xf32>
      %112 = tpu.matmul %23, %111, %cst_100 {dimension_numbers = #tpu.dot_dimension_numbers<[1], [0], [0], [1], [0, 0, 1, 1], [], []>} : vector<8x32xbf16>, vector<32x8xbf16>, vector<8x8xf32> -> vector<8x8xf32>
      %c2_101 = arith.constant 2 : index
      %c0_102 = arith.constant 0 : index
      %c0_103 = arith.constant 0 : index
      %113 = vector.load %arg8[%c2_101, %c0_102, %c0_103] : memref<4x1x8xf32, #tpu.memory_space<vmem>>, vector<1x1x8xf32>
      %114 = vector.shape_cast %113 : vector<1x1x8xf32> to vector<1x8xf32>
      %115 = vector.broadcast %114 : vector<1x8xf32> to vector<8x8xf32>
      %116 = arith.addf %112, %115 : vector<8x8xf32>
      %117 = vector.shape_cast %102 : vector<8x8xf32> to vector<1x8x8xf32>
      %118 = arith.truncf %117 : vector<1x8x8xf32> to vector<1x8x8xbf16>
      %c2_104 = arith.constant 2 : index
      %c0_105 = arith.constant 0 : index
      %c0_106 = arith.constant 0 : index
      %c0_107 = arith.constant 0 : index
      %119 = vector.load %arg22[%c2_104, %c0_105, %c0_106, %c0_107] : memref<4x1x8x8xbf16, #tpu.memory_space<vmem>>, vector<1x1x8x8xbf16>
      %120 = vector.shape_cast %119 : vector<1x1x8x8xbf16> to vector<1x8x8xbf16>
      %121 = vector.shape_cast %118 : vector<1x8x8xbf16> to vector<1x1x8x8xbf16>
      tpu.vector_store %arg22[%c2_104, %c0_105, %c0_106, %c0_107], %121 {strides = array<i32>} : memref<4x1x8x8xbf16, #tpu.memory_space<vmem>>, vector<1x1x8x8xbf16>,
      %122 = vector.shape_cast %109 : vector<8x8xf32> to vector<1x8x8xf32>
      %123 = arith.truncf %122 : vector<1x8x8xf32> to vector<1x8x8xbf16>
      %c2_108 = arith.constant 2 : index
      %c0_109 = arith.constant 0 : index
      %c0_110 = arith.constant 0 : index
      %c0_111 = arith.constant 0 : index
      %124 = vector.load %arg23[%c2_108, %c0_109, %c0_110, %c0_111] : memref<4x1x8x8xbf16, #tpu.memory_space<vmem>>, vector<1x1x8x8xbf16>
      %125 = vector.shape_cast %124 : vector<1x1x8x8xbf16> to vector<1x8x8xbf16>
      %126 = vector.shape_cast %123 : vector<1x8x8xbf16> to vector<1x1x8x8xbf16>
      tpu.vector_store %arg23[%c2_108, %c0_109, %c0_110, %c0_111], %126 {strides = array<i32>} : memref<4x1x8x8xbf16, #tpu.memory_space<vmem>>, vector<1x1x8x8xbf16>,
      %127 = vector.shape_cast %116 : vector<8x8xf32> to vector<1x8x8xf32>
      %128 = arith.truncf %127 : vector<1x8x8xf32> to vector<1x8x8xbf16>
      %c2_112 = arith.constant 2 : index
      %c0_113 = arith.constant 0 : index
      %c0_114 = arith.constant 0 : index
      %c0_115 = arith.constant 0 : index
      %129 = vector.load %arg24[%c2_112, %c0_113, %c0_114, %c0_115] : memref<4x1x8x8xbf16, #tpu.memory_space<vmem>>, vector<1x1x8x8xbf16>
      %130 = vector.shape_cast %129 : vector<1x1x8x8xbf16> to vector<1x8x8xbf16>
      %131 = vector.shape_cast %128 : vector<1x8x8xbf16> to vector<1x1x8x8xbf16>
      tpu.vector_store %arg24[%c2_112, %c0_113, %c0_114, %c0_115], %131 {strides = array<i32>} : memref<4x1x8x8xbf16, #tpu.memory_space<vmem>>, vector<1x1x8x8xbf16>,
      %c3 = arith.constant 3 : index
      %c0_116 = arith.constant 0 : index
      %c0_117 = arith.constant 0 : index
      %132 = vector.load %arg3[%c3, %c0_116, %c0_117] : memref<4x32x8xbf16, #tpu.memory_space<vmem>>, vector<1x32x8xbf16>
      %133 = vector.shape_cast %132 : vector<1x32x8xbf16> to vector<32x8xbf16>
      %cst_118 = arith.constant dense<0.000000e+00> : vector<8x8xf32>
      %134 = tpu.matmul %23, %133, %cst_118 {dimension_numbers = #tpu.dot_dimension_numbers<[1], [0], [0], [1], [0, 0, 1, 1], [], []>} : vector<8x32xbf16>, vector<32x8xbf16>, vector<8x8xf32> -> vector<8x8xf32>
      %c3_119 = arith.constant 3 : index
      %c0_120 = arith.constant 0 : index
      %c0_121 = arith.constant 0 : index
      %135 = vector.load %arg6[%c3_119, %c0_120, %c0_121] : memref<4x1x8xf32, #tpu.memory_space<vmem>>, vector<1x1x8xf32>
      %136 = vector.shape_cast %135 : vector<1x1x8xf32> to vector<1x8xf32>
      %137 = vector.broadcast %136 : vector<1x8xf32> to vector<8x8xf32>
      %138 = arith.addf %134, %137 : vector<8x8xf32>
      %c3_122 = arith.constant 3 : index
      %c0_123 = arith.constant 0 : index
      %c0_124 = arith.constant 0 : index
      %139 = vector.load %arg4[%c3_122, %c0_123, %c0_124] : memref<4x32x8xbf16, #tpu.memory_space<vmem>>, vector<1x32x8xbf16>
      %140 = vector.shape_cast %139 : vector<1x32x8xbf16> to vector<32x8xbf16>
      %cst_125 = arith.constant dense<0.000000e+00> : vector<8x8xf32>
      %141 = tpu.matmul %23, %140, %cst_125 {dimension_numbers = #tpu.dot_dimension_numbers<[1], [0], [0], [1], [0, 0, 1, 1], [], []>} : vector<8x32xbf16>, vector<32x8xbf16>, vector<8x8xf32> -> vector<8x8xf32>
      %c3_126 = arith.constant 3 : index
      %c0_127 = arith.constant 0 : index
      %c0_128 = arith.constant 0 : index
      %142 = vector.load %arg7[%c3_126, %c0_127, %c0_128] : memref<4x1x8xf32, #tpu.memory_space<vmem>>, vector<1x1x8xf32>
      %143 = vector.shape_cast %142 : vector<1x1x8xf32> to vector<1x8xf32>
      %144 = vector.broadcast %143 : vector<1x8xf32> to vector<8x8xf32>
      %145 = arith.addf %141, %144 : vector<8x8xf32>
      %c3_129 = arith.constant 3 : index
      %c0_130 = arith.constant 0 : index
      %c0_131 = arith.constant 0 : index
      %146 = vector.load %arg5[%c3_129, %c0_130, %c0_131] : memref<4x32x8xbf16, #tpu.memory_space<vmem>>, vector<1x32x8xbf16>
      %147 = vector.shape_cast %146 : vector<1x32x8xbf16> to vector<32x8xbf16>
      %cst_132 = arith.constant dense<0.000000e+00> : vector<8x8xf32>
      %148 = tpu.matmul %23, %147, %cst_132 {dimension_numbers = #tpu.dot_dimension_numbers<[1], [0], [0], [1], [0, 0, 1, 1], [], []>} : vector<8x32xbf16>, vector<32x8xbf16>, vector<8x8xf32> -> vector<8x8xf32>
      %c3_133 = arith.constant 3 : index
      %c0_134 = arith.constant 0 : index
      %c0_135 = arith.constant 0 : index
      %149 = vector.load %arg8[%c3_133, %c0_134, %c0_135] : memref<4x1x8xf32, #tpu.memory_space<vmem>>, vector<1x1x8xf32>
      %150 = vector.shape_cast %149 : vector<1x1x8xf32> to vector<1x8xf32>
      %151 = vector.broadcast %150 : vector<1x8xf32> to vector<8x8xf32>
      %152 = arith.addf %148, %151 : vector<8x8xf32>
      %153 = vector.shape_cast %138 : vector<8x8xf32> to vector<1x8x8xf32>
      %154 = arith.truncf %153 : vector<1x8x8xf32> to vector<1x8x8xbf16>
      %c3_136 = arith.constant 3 : index
      %c0_137 = arith.constant 0 : index
      %c0_138 = arith.constant 0 : index
      %c0_139 = arith.constant 0 : index
      %155 = vector.load %arg22[%c3_136, %c0_137, %c0_138, %c0_139] : memref<4x1x8x8xbf16, #tpu.memory_space<vmem>>, vector<1x1x8x8xbf16>
      %156 = vector.shape_cast %155 : vector<1x1x8x8xbf16> to vector<1x8x8xbf16>
      %157 = vector.shape_cast %154 : vector<1x8x8xbf16> to vector<1x1x8x8xbf16>
      tpu.vector_store %arg22[%c3_136, %c0_137, %c0_138, %c0_139], %157 {strides = array<i32>} : memref<4x1x8x8xbf16, #tpu.memory_space<vmem>>, vector<1x1x8x8xbf16>,
      %158 = vector.shape_cast %145 : vector<8x8xf32> to vector<1x8x8xf32>
      %159 = arith.truncf %158 : vector<1x8x8xf32> to vector<1x8x8xbf16>
      %c3_140 = arith.constant 3 : index
      %c0_141 = arith.constant 0 : index
      %c0_142 = arith.constant 0 : index
      %c0_143 = arith.constant 0 : index
      %160 = vector.load %arg23[%c3_140, %c0_141, %c0_142, %c0_143] : memref<4x1x8x8xbf16, #tpu.memory_space<vmem>>, vector<1x1x8x8xbf16>
      %161 = vector.shape_cast %160 : vector<1x1x8x8xbf16> to vector<1x8x8xbf16>
      %162 = vector.shape_cast %159 : vector<1x8x8xbf16> to vector<1x1x8x8xbf16>
      tpu.vector_store %arg23[%c3_140, %c0_141, %c0_142, %c0_143], %162 {strides = array<i32>} : memref<4x1x8x8xbf16, #tpu.memory_space<vmem>>, vector<1x1x8x8xbf16>,
      %163 = vector.shape_cast %152 : vector<8x8xf32> to vector<1x8x8xf32>
      %164 = arith.truncf %163 : vector<1x8x8xf32> to vector<1x8x8xbf16>
      %c3_144 = arith.constant 3 : index
      %c0_145 = arith.constant 0 : index
      %c0_146 = arith.constant 0 : index
      %c0_147 = arith.constant 0 : index
      %165 = vector.load %arg24[%c3_144, %c0_145, %c0_146, %c0_147] : memref<4x1x8x8xbf16, #tpu.memory_space<vmem>>, vector<1x1x8x8xbf16>
      %166 = vector.shape_cast %165 : vector<1x1x8x8xbf16> to vector<1x8x8xbf16>
      %167 = vector.shape_cast %164 : vector<1x8x8xbf16> to vector<1x1x8x8xbf16>
      tpu.vector_store %arg24[%c3_144, %c0_145, %c0_146, %c0_147], %167 {strides = array<i32>} : memref<4x1x8x8xbf16, #tpu.memory_space<vmem>>, vector<1x1x8x8xbf16>,
      %c0_148 = arith.constant 0 : index
      %c0_149 = arith.constant 0 : index
      %c0_150 = arith.constant 0 : index
      %c0_151 = arith.constant 0 : index
      %168 = vector.load %arg22[%c0_148, %c0_149, %c0_150, %c0_151] : memref<4x1x8x8xbf16, #tpu.memory_space<vmem>>, vector<4x1x8x8xbf16>
      %169 = vector.shape_cast %168 : vector<4x1x8x8xbf16> to vector<4x8x8xbf16>
      %c0_152 = arith.constant 0 : index
      %c0_153 = arith.constant 0 : index
      %c0_154 = arith.constant 0 : index
      %c0_155 = arith.constant 0 : index
      %170 = vector.load %arg23[%c0_152, %c0_153, %c0_154, %c0_155] : memref<4x1x8x8xbf16, #tpu.memory_space<vmem>>, vector<4x1x8x8xbf16>
      %171 = vector.shape_cast %170 : vector<4x1x8x8xbf16> to vector<4x8x8xbf16>
      %c0_156 = arith.constant 0 : index
      %c0_157 = arith.constant 0 : index
      %c0_158 = arith.constant 0 : index
      %c0_159 = arith.constant 0 : index
      %172 = vector.load %arg24[%c0_156, %c0_157, %c0_158, %c0_159] : memref<4x1x8x8xbf16, #tpu.memory_space<vmem>>, vector<4x1x8x8xbf16>
      %173 = vector.shape_cast %172 : vector<4x1x8x8xbf16> to vector<4x8x8xbf16>
      "tpu.trace_start"() <{level = 10 : i32, message = "bqd,bkd->bqk"}> : () -> ()
      %cst_160 = arith.constant dense<0.000000e+00> : vector<4x8x8xf32>
      %174 = tpu.matmul %169, %171, %cst_160 {dimension_numbers = #tpu.dot_dimension_numbers<[2], [2], [1], [1], [0, 0, 0, 1, 1, 1], [0], [0]>} : vector<4x8x8xbf16>, vector<4x8x8xbf16>, vector<4x8x8xf32> -> vector<4x8x8xf32>
      "tpu.trace_stop"() : () -> ()
      %cst_161 = arith.constant dense<0xFF800000> : vector<4x8xf32>
      %175 = vector.multi_reduction <maximumf>, %174, %cst_161 [2] : vector<4x8x8xf32> to vector<4x8xf32>
      %176 = vector.shape_cast %175 : vector<4x8xf32> to vector<4x8x1xf32>
      %177 = vector.broadcast %176 : vector<4x8x1xf32> to vector<4x8x8xf32>
      %178 = arith.subf %174, %177 : vector<4x8x8xf32>
      %179 = math.exp %178 : vector<4x8x8xf32>
      %cst_162 = arith.constant dense<0.000000e+00> : vector<4x8xf32>
      %180 = vector.multi_reduction <add>, %179, %cst_162 [2] : vector<4x8x8xf32> to vector<4x8xf32>
      %181 = vector.shape_cast %180 : vector<4x8xf32> to vector<4x8x1xf32>
      %182 = tpu.reciprocal %181 {approx = true} : vector<4x8x1xf32> -> vector<4x8x1xf32>
      %183 = vector.broadcast %182 : vector<4x8x1xf32> to vector<4x8x8xf32>
      %184 = arith.mulf %179, %183 : vector<4x8x8xf32>
      %185 = arith.truncf %184 : vector<4x8x8xf32> to vector<4x8x8xbf16>
      "tpu.trace_start"() <{level = 10 : i32, message = "bqk,bkd->bqd"}> : () -> ()
      %cst_163 = arith.constant dense<0.000000e+00> : vector<4x8x8xf32>
      %186 = tpu.matmul %185, %173, %cst_163 {dimension_numbers = #tpu.dot_dimension_numbers<[2], [1], [1], [2], [0, 0, 0, 1, 1, 2], [0], [0]>} : vector<4x8x8xbf16>, vector<4x8x8xbf16>, vector<4x8x8xf32> -> vector<4x8x8xf32>
      "tpu.trace_stop"() : () -> ()
      %187 = arith.truncf %186 : vector<4x8x8xf32> to vector<4x8x8xbf16>
      %c0_164 = arith.constant 0 : index
      %c0_165 = arith.constant 0 : index
      %c0_166 = arith.constant 0 : index
      %188 = vector.load %arg9[%c0_164, %c0_165, %c0_166] : memref<4x8x32xbf16, #tpu.memory_space<vmem>>, vector<4x8x32xbf16>
      "tpu.trace_start"() <{level = 10 : i32, message = "hrd,hde->hre"}> : () -> ()
      %cst_167 = arith.constant dense<0.000000e+00> : vector<4x8x32xf32>
      %189 = tpu.matmul %187, %188, %cst_167 {dimension_numbers = #tpu.dot_dimension_numbers<[2], [1], [1], [2], [0, 0, 0, 1, 1, 2], [0], [0]>} : vector<4x8x8xbf16>, vector<4x8x32xbf16>, vector<4x8x32xf32> -> vector<4x8x32xf32>
      "tpu.trace_stop"() : () -> ()
      %cst_168 = arith.constant dense<0.000000e+00> : vector<8x32xf32>
      %190 = vector.multi_reduction <add>, %189, %cst_168 [0] : vector<4x8x32xf32> to vector<8x32xf32>
      %c0_169 = arith.constant 0 : index
      %c0_170 = arith.constant 0 : index
      %191 = vector.load %arg10[%c0_169, %c0_170] : memref<1x32xf32, #tpu.memory_space<vmem>>, vector<1x32xf32>
      %192 = vector.broadcast %191 : vector<1x32xf32> to vector<8x32xf32>
      %193 = arith.addf %190, %192 : vector<8x32xf32>
      %194 = arith.addf %22, %193 : vector<8x32xf32>
      %c0_171 = arith.constant 0 : index
      %c0_172 = arith.constant 0 : index
      %195 = vector.load %arg15[%c0_171, %c0_172] : memref<1x32xf32, #tpu.memory_space<vmem>>, vector<1x32xf32>
      %c0_173 = arith.constant 0 : index
      %c0_174 = arith.constant 0 : index
      %196 = vector.load %arg16[%c0_173, %c0_174] : memref<1x32xf32, #tpu.memory_space<vmem>>, vector<1x32xf32>
      %cst_175 = arith.constant dense<0.000000e+00> : vector<8xf32>
      %197 = vector.multi_reduction <add>, %194, %cst_175 [1] : vector<8x32xf32> to vector<8xf32>
      %198 = vector.shape_cast %197 : vector<8xf32> to vector<8x1xf32>
      %cst_176 = arith.constant 3.200000e+01 : f32
      %199 = vector.broadcast %cst_176 : f32 to vector<8x1xf32>
      %200 = arith.divf %198, %199 : vector<8x1xf32>
      %201 = vector.broadcast %200 : vector<8x1xf32> to vector<8x32xf32>
      %202 = arith.subf %194, %201 : vector<8x32xf32>
      %203 = arith.mulf %202, %202 : vector<8x32xf32>
      %cst_177 = arith.constant dense<0.000000e+00> : vector<8xf32>
      %204 = vector.multi_reduction <add>, %203, %cst_177 [1] : vector<8x32xf32> to vector<8xf32>
      %205 = vector.shape_cast %204 : vector<8xf32> to vector<8x1xf32>
      %cst_178 = arith.constant 3.200000e+01 : f32
      %206 = vector.broadcast %cst_178 : f32 to vector<8x1xf32>
      %207 = arith.divf %205, %206 : vector<8x1xf32>
      %208 = vector.broadcast %200 : vector<8x1xf32> to vector<8x32xf32>
      %209 = arith.subf %194, %208 : vector<8x32xf32>
      %cst_179 = arith.constant 9.99999974E-6 : f32
      %210 = vector.broadcast %cst_179 : f32 to vector<8x1xf32>
      %211 = arith.addf %207, %210 : vector<8x1xf32>
      %212 = math.rsqrt %211 : vector<8x1xf32>
      %213 = vector.broadcast %212 : vector<8x1xf32> to vector<8x32xf32>
      %214 = arith.mulf %209, %213 : vector<8x32xf32>
      %215 = vector.broadcast %195 : vector<1x32xf32> to vector<8x32xf32>
      %216 = arith.mulf %214, %215 : vector<8x32xf32>
      %217 = vector.broadcast %196 : vector<1x32xf32> to vector<8x32xf32>
      %218 = arith.addf %216, %217 : vector<8x32xf32>
      %c0_180 = arith.constant 0 : index
      %c0_181 = arith.constant 0 : index
      %219 = vector.load %arg25[%c0_180, %c0_181] : memref<8x32xf32, #tpu.memory_space<vmem>>, vector<8x32xf32>
      tpu.vector_store %arg25[%c0_180, %c0_181], %218 {strides = array<i32>} : memref<8x32xf32, #tpu.memory_space<vmem>>, vector<8x32xf32>,
      %cst_182 = arith.constant 0.000000e+00 : f32
      %220 = vector.broadcast %cst_182 : f32 to vector<8x32xf32>
      %c0_183 = arith.constant 0 : index
      %c0_184 = arith.constant 0 : index
      %221 = vector.load %arg26[%c0_183, %c0_184] : memref<8x32xf32, #tpu.memory_space<vmem>>, vector<8x32xf32>
      tpu.vector_store %arg26[%c0_183, %c0_184], %220 {strides = array<i32>} : memref<8x32xf32, #tpu.memory_space<vmem>>, vector<8x32xf32>,
    } else {
    }
    %c0 = arith.constant 0 : index
    %c0_1 = arith.constant 0 : index
    %3 = vector.load %arg25[%c0, %c0_1] : memref<8x32xf32, #tpu.memory_space<vmem>>, vector<8x32xf32>
    %4 = arith.truncf %3 : vector<8x32xf32> to vector<8x32xbf16>
    %c0_2 = arith.constant 0 : index
    %c0_3 = arith.constant 0 : index
    %5 = vector.load %arg11[%c0_2, %c0_3] : memref<32x64xbf16, #tpu.memory_space<vmem>>, vector<32x64xbf16>
    %cst = arith.constant dense<0.000000e+00> : vector<8x64xf32>
    %6 = tpu.matmul %4, %5, %cst {dimension_numbers = #tpu.dot_dimension_numbers<[1], [0], [0], [1], [0, 0, 1, 1], [], []>} : vector<8x32xbf16>, vector<32x64xbf16>, vector<8x64xf32> -> vector<8x64xf32>
    %c0_4 = arith.constant 0 : index
    %c0_5 = arith.constant 0 : index
    %7 = vector.load %arg12[%c0_4, %c0_5] : memref<1x64xf32, #tpu.memory_space<vmem>>, vector<1x64xf32>
    %8 = vector.broadcast %7 : vector<1x64xf32> to vector<8x64xf32>
    %9 = arith.addf %6, %8 : vector<8x64xf32>
    %cst_6 = arith.constant 0.000000e+00 : f32
    %10 = vector.broadcast %cst_6 : f32 to vector<8x64xf32>
    %11 = arith.maximumf %9, %10 : vector<8x64xf32>
    %12 = arith.truncf %11 : vector<8x64xf32> to vector<8x64xbf16>
    %c0_7 = arith.constant 0 : index
    %c0_8 = arith.constant 0 : index
    %13 = vector.load %arg26[%c0_7, %c0_8] : memref<8x32xf32, #tpu.memory_space<vmem>>, vector<8x32xf32>
    %c0_9 = arith.constant 0 : index
    %c0_10 = arith.constant 0 : index
    %14 = vector.load %arg13[%c0_9, %c0_10] : memref<64x32xbf16, #tpu.memory_space<vmem>>, vector<64x32xbf16>
    %cst_11 = arith.constant dense<0.000000e+00> : vector<8x32xf32>
    %15 = tpu.matmul %12, %14, %cst_11 {dimension_numbers = #tpu.dot_dimension_numbers<[1], [0], [0], [1], [0, 0, 1, 1], [], []>} : vector<8x64xbf16>, vector<64x32xbf16>, vector<8x32xf32> -> vector<8x32xf32>
    %16 = arith.addf %13, %15 : vector<8x32xf32>
    %c0_12 = arith.constant 0 : index
    %c0_13 = arith.constant 0 : index
    %17 = vector.load %arg26[%c0_12, %c0_13] : memref<8x32xf32, #tpu.memory_space<vmem>>, vector<8x32xf32>
    tpu.vector_store %arg26[%c0_12, %c0_13], %16 {strides = array<i32>} : memref<8x32xf32, #tpu.memory_space<vmem>>, vector<8x32xf32>,
    %c0_i32_14 = arith.constant 0 : i32
    %18 = arith.cmpi eq, %arg1, %c0_i32_14 : i32
    %19 = arith.extui %18 : i1 to i32
    %c0_i32_15 = arith.constant 0 : i32
    %20 = arith.cmpi ne, %19, %c0_i32_15 : i32
    scf.if %20 {
      %c0_16 = arith.constant 0 : index
      %c0_17 = arith.constant 0 : index
      %c0_18 = arith.constant 0 : index
      %21 = vector.load %arg2[%c0_16, %c0_17, %c0_18] : memref<1x8x32xf32, #tpu.memory_space<vmem>>, vector<1x8x32xf32>
      %22 = vector.shape_cast %21 : vector<1x8x32xf32> to vector<8x32xf32>
      %c0_19 = arith.constant 0 : index
      %c0_20 = arith.constant 0 : index
      %23 = vector.load %arg26[%c0_19, %c0_20] : memref<8x32xf32, #tpu.memory_space<vmem>>, vector<8x32xf32>
      %c0_21 = arith.constant 0 : index
      %c0_22 = arith.constant 0 : index
      %24 = vector.load %arg14[%c0_21, %c0_22] : memref<1x32xf32, #tpu.memory_space<vmem>>, vector<1x32xf32>
      %25 = vector.broadcast %24 : vector<1x32xf32> to vector<8x32xf32>
      %26 = arith.addf %23, %25 : vector<8x32xf32>
      %c0_23 = arith.constant 0 : index
      %c0_24 = arith.constant 0 : index
      %27 = vector.load %arg25[%c0_23, %c0_24] : memref<8x32xf32, #tpu.memory_space<vmem>>, vector<8x32xf32>
      %28 = arith.addf %27, %26 : vector<8x32xf32>
      %c0_25 = arith.constant 0 : index
      %c0_26 = arith.constant 0 : index
      %29 = vector.load %arg17[%c0_25, %c0_26] : memref<1x32xf32, #tpu.memory_space<vmem>>, vector<1x32xf32>
      %c0_27 = arith.constant 0 : index
      %c0_28 = arith.constant 0 : index
      %30 = vector.load %arg18[%c0_27, %c0_28] : memref<1x32xf32, #tpu.memory_space<vmem>>, vector<1x32xf32>
      %cst_29 = arith.constant dense<0.000000e+00> : vector<8xf32>
      %31 = vector.multi_reduction <add>, %28, %cst_29 [1] : vector<8x32xf32> to vector<8xf32>
      %32 = vector.shape_cast %31 : vector<8xf32> to vector<8x1xf32>
      %cst_30 = arith.constant 3.200000e+01 : f32
      %33 = vector.broadcast %cst_30 : f32 to vector<8x1xf32>
      %34 = arith.divf %32, %33 : vector<8x1xf32>
      %35 = vector.broadcast %34 : vector<8x1xf32> to vector<8x32xf32>
      %36 = arith.subf %28, %35 : vector<8x32xf32>
      %37 = arith.mulf %36, %36 : vector<8x32xf32>
      %cst_31 = arith.constant dense<0.000000e+00> : vector<8xf32>
      %38 = vector.multi_reduction <add>, %37, %cst_31 [1] : vector<8x32xf32> to vector<8xf32>
      %39 = vector.shape_cast %38 : vector<8xf32> to vector<8x1xf32>
      %cst_32 = arith.constant 3.200000e+01 : f32
      %40 = vector.broadcast %cst_32 : f32 to vector<8x1xf32>
      %41 = arith.divf %39, %40 : vector<8x1xf32>
      %42 = vector.broadcast %34 : vector<8x1xf32> to vector<8x32xf32>
      %43 = arith.subf %28, %42 : vector<8x32xf32>
      %cst_33 = arith.constant 9.99999974E-6 : f32
      %44 = vector.broadcast %cst_33 : f32 to vector<8x1xf32>
      %45 = arith.addf %41, %44 : vector<8x1xf32>
      %46 = math.rsqrt %45 : vector<8x1xf32>
      %47 = vector.broadcast %46 : vector<8x1xf32> to vector<8x32xf32>
      %48 = arith.mulf %43, %47 : vector<8x32xf32>
      %49 = vector.broadcast %29 : vector<1x32xf32> to vector<8x32xf32>
      %50 = arith.mulf %48, %49 : vector<8x32xf32>
      %51 = vector.broadcast %30 : vector<1x32xf32> to vector<8x32xf32>
      %52 = arith.addf %50, %51 : vector<8x32xf32>
      %53 = arith.addf %22, %52 : vector<8x32xf32>
      %c0_34 = arith.constant 0 : index
      %c0_35 = arith.constant 0 : index
      %54 = vector.load %arg19[%c0_34, %c0_35] : memref<1x32xf32, #tpu.memory_space<vmem>>, vector<1x32xf32>
      %c0_36 = arith.constant 0 : index
      %c0_37 = arith.constant 0 : index
      %55 = vector.load %arg20[%c0_36, %c0_37] : memref<1x32xf32, #tpu.memory_space<vmem>>, vector<1x32xf32>
      %cst_38 = arith.constant dense<0.000000e+00> : vector<8xf32>
      %56 = vector.multi_reduction <add>, %53, %cst_38 [1] : vector<8x32xf32> to vector<8xf32>
      %57 = vector.shape_cast %56 : vector<8xf32> to vector<8x1xf32>
      %cst_39 = arith.constant 3.200000e+01 : f32
      %58 = vector.broadcast %cst_39 : f32 to vector<8x1xf32>
      %59 = arith.divf %57, %58 : vector<8x1xf32>
      %60 = vector.broadcast %59 : vector<8x1xf32> to vector<8x32xf32>
      %61 = arith.subf %53, %60 : vector<8x32xf32>
      %62 = arith.mulf %61, %61 : vector<8x32xf32>
      %cst_40 = arith.constant dense<0.000000e+00> : vector<8xf32>
      %63 = vector.multi_reduction <add>, %62, %cst_40 [1] : vector<8x32xf32> to vector<8xf32>
      %64 = vector.shape_cast %63 : vector<8xf32> to vector<8x1xf32>
      %cst_41 = arith.constant 3.200000e+01 : f32
      %65 = vector.broadcast %cst_41 : f32 to vector<8x1xf32>
      %66 = arith.divf %64, %65 : vector<8x1xf32>
      %67 = vector.broadcast %59 : vector<8x1xf32> to vector<8x32xf32>
      %68 = arith.subf %53, %67 : vector<8x32xf32>
      %cst_42 = arith.constant 9.99999974E-6 : f32
      %69 = vector.broadcast %cst_42 : f32 to vector<8x1xf32>
      %70 = arith.addf %66, %69 : vector<8x1xf32>
      %71 = math.rsqrt %70 : vector<8x1xf32>
      %72 = vector.broadcast %71 : vector<8x1xf32> to vector<8x32xf32>
      %73 = arith.mulf %68, %72 : vector<8x32xf32>
      %74 = vector.broadcast %54 : vector<1x32xf32> to vector<8x32xf32>
      %75 = arith.mulf %73, %74 : vector<8x32xf32>
      %76 = vector.broadcast %55 : vector<1x32xf32> to vector<8x32xf32>
      %77 = arith.addf %75, %76 : vector<8x32xf32>
      %78 = vector.shape_cast %77 : vector<8x32xf32> to vector<1x8x32xf32>
      %c0_43 = arith.constant 0 : index
      %c0_44 = arith.constant 0 : index
      %c0_45 = arith.constant 0 : index
      %79 = vector.load %arg21[%c0_43, %c0_44, %c0_45] : memref<1x8x32xf32, #tpu.memory_space<vmem>>, vector<1x8x32xf32>
      tpu.vector_store %arg21[%c0_43, %c0_44, %c0_45], %78 {strides = array<i32>} : memref<1x8x32xf32, #tpu.memory_space<vmem>>, vector<1x8x32xf32>,
    } else {
    }
    return
  }
  func.func @transform_0(%arg0: i32, %arg1: i32) -> (i32, i32, i32) {
    %c0_i32 = arith.constant 0 : i32
    %c0_i32_0 = arith.constant 0 : i32
    %c0_i32_1 = arith.constant 0 : i32
    return %arg0, %c0_i32, %c0_i32_0 : i32, i32, i32
  }
  func.func @transform_1(%arg0: i32, %arg1: i32) -> (i32, i32, i32) {
    %c0_i32 = arith.constant 0 : i32
    %c0_i32_0 = arith.constant 0 : i32
    %c0_i32_1 = arith.constant 0 : i32
    %c0_i32_2 = arith.constant 0 : i32
    return %c0_i32, %c0_i32_0, %c0_i32_1 : i32, i32, i32
  }
  func.func @transform_2(%arg0: i32, %arg1: i32) -> (i32, i32, i32) {
    %c0_i32 = arith.constant 0 : i32
    %c0_i32_0 = arith.constant 0 : i32
    %c0_i32_1 = arith.constant 0 : i32
    %c0_i32_2 = arith.constant 0 : i32
    return %c0_i32, %c0_i32_0, %c0_i32_1 : i32, i32, i32
  }
  func.func @transform_3(%arg0: i32, %arg1: i32) -> (i32, i32, i32) {
    %c0_i32 = arith.constant 0 : i32
    %c0_i32_0 = arith.constant 0 : i32
    %c0_i32_1 = arith.constant 0 : i32
    %c0_i32_2 = arith.constant 0 : i32
    return %c0_i32, %c0_i32_0, %c0_i32_1 : i32, i32, i32
  }
  func.func @transform_4(%arg0: i32, %arg1: i32) -> (i32, i32, i32) {
    %c0_i32 = arith.constant 0 : i32
    %c0_i32_0 = arith.constant 0 : i32
    %c0_i32_1 = arith.constant 0 : i32
    %c0_i32_2 = arith.constant 0 : i32
    return %c0_i32, %c0_i32_0, %c0_i32_1 : i32, i32, i32
  }
  func.func @transform_5(%arg0: i32, %arg1: i32) -> (i32, i32, i32) {
    %c0_i32 = arith.constant 0 : i32
    %c0_i32_0 = arith.constant 0 : i32
    %c0_i32_1 = arith.constant 0 : i32
    %c0_i32_2 = arith.constant 0 : i32
    return %c0_i32, %c0_i32_0, %c0_i32_1 : i32, i32, i32
  }
  func.func @transform_6(%arg0: i32, %arg1: i32) -> (i32, i32, i32) {
    %c0_i32 = arith.constant 0 : i32
    %c0_i32_0 = arith.constant 0 : i32
    %c0_i32_1 = arith.constant 0 : i32
    %c0_i32_2 = arith.constant 0 : i32
    return %c0_i32, %c0_i32_0, %c0_i32_1 : i32, i32, i32
  }
  func.func @transform_7(%arg0: i32, %arg1: i32) -> (i32, i32, i32) {
    %c0_i32 = arith.constant 0 : i32
    %c0_i32_0 = arith.constant 0 : i32
    %c0_i32_1 = arith.constant 0 : i32
    %c0_i32_2 = arith.constant 0 : i32
    return %c0_i32, %c0_i32_0, %c0_i32_1 : i32, i32, i32
  }
  func.func @transform_8(%arg0: i32, %arg1: i32) -> (i32, i32) {
    %c0_i32 = arith.constant 0 : i32
    %c0_i32_0 = arith.constant 0 : i32
    %c0_i32_1 = arith.constant 0 : i32
    return %c0_i32, %c0_i32_0 : i32, i32
  }
  func.func @transform_9(%arg0: i32, %arg1: i32) -> (i32, i32) {
    %c0_i32 = arith.constant 0 : i32
    %c0_i32_0 = arith.constant 0 : i32
    return %c0_i32, %arg1 : i32, i32
  }
  func.func @transform_10(%arg0: i32, %arg1: i32) -> (i32, i32) {
    %c0_i32 = arith.constant 0 : i32
    %c0_i32_0 = arith.constant 0 : i32
    return %c0_i32, %arg1 : i32, i32
  }
  func.func @transform_11(%arg0: i32, %arg1: i32) -> (i32, i32) {
    %c0_i32 = arith.constant 0 : i32
    %c0_i32_0 = arith.constant 0 : i32
    return %arg1, %c0_i32 : i32, i32
  }
  func.func @transform_12(%arg0: i32, %arg1: i32) -> (i32, i32) {
    %c0_i32 = arith.constant 0 : i32
    %c0_i32_0 = arith.constant 0 : i32
    %c0_i32_1 = arith.constant 0 : i32
    return %c0_i32, %c0_i32_0 : i32, i32
  }
  func.func @transform_13(%arg0: i32, %arg1: i32) -> (i32, i32) {
    %c0_i32 = arith.constant 0 : i32
    %c0_i32_0 = arith.constant 0 : i32
    %c0_i32_1 = arith.constant 0 : i32
    return %c0_i32, %c0_i32_0 : i32, i32
  }
  func.func @transform_14(%arg0: i32, %arg1: i32) -> (i32, i32) {
    %c0_i32 = arith.constant 0 : i32
    %c0_i32_0 = arith.constant 0 : i32
    %c0_i32_1 = arith.constant 0 : i32
    return %c0_i32, %c0_i32_0 : i32, i32
  }
  func.func @transform_15(%arg0: i32, %arg1: i32) -> (i32, i32) {
    %c0_i32 = arith.constant 0 : i32
    %c0_i32_0 = arith.constant 0 : i32
    %c0_i32_1 = arith.constant 0 : i32
    return %c0_i32, %c0_i32_0 : i32, i32
  }
  func.func @transform_16(%arg0: i32, %arg1: i32) -> (i32, i32) {
    %c0_i32 = arith.constant 0 : i32
    %c0_i32_0 = arith.constant 0 : i32
    %c0_i32_1 = arith.constant 0 : i32
    return %c0_i32, %c0_i32_0 : i32, i32
  }
  func.func @transform_17(%arg0: i32, %arg1: i32) -> (i32, i32) {
    %c0_i32 = arith.constant 0 : i32
    %c0_i32_0 = arith.constant 0 : i32
    %c0_i32_1 = arith.constant 0 : i32
    return %c0_i32, %c0_i32_0 : i32, i32
  }
  func.func @transform_18(%arg0: i32, %arg1: i32) -> (i32, i32) {
    %c0_i32 = arith.constant 0 : i32
    %c0_i32_0 = arith.constant 0 : i32
    %c0_i32_1 = arith.constant 0 : i32
    return %c0_i32, %c0_i32_0 : i32, i32
  }
  func.func @transform_19(%arg0: i32, %arg1: i32) -> (i32, i32, i32) {
    %c0_i32 = arith.constant 0 : i32
    %c0_i32_0 = arith.constant 0 : i32
    %c0_i32_1 = arith.constant 0 : i32
    return %arg0, %c0_i32, %c0_i32_0 : i32, i32, i32
  }
}

</mosaic_0001>

<llo_original>
// kernel: tpu_custom_call.1
$region0: #{tpu_custom_call.1}
  #allocation0 [shape = 'u32[]', space=smem, size = 0x4, offset = 0x4, fixed_abs, tag = 'smem constant byte address 0x4 - core index']
  #allocation1 [shape = 'u32[144,128]{1,0:T(1,128)}', space=vmem, size = 0x12000, scoped, tag = 'internal scratch']
  #allocation2 [shape = 'bf16[4,1,8,8]{3,2,1,0:T(8,128)(2,1)}', space=vmem, size = 0x2000, scoped, tag = 'scratch operand']
  #allocation3 [shape = 'bf16[4,1,8,8]{3,2,1,0:T(8,128)(2,1)}', space=vmem, size = 0x2000, scoped, tag = 'scratch operand']
  #allocation4 [shape = 'bf16[4,1,8,8]{3,2,1,0:T(8,128)(2,1)}', space=vmem, size = 0x2000, scoped, tag = 'scratch operand']
  #allocation5 [shape = 'f32[8,32]{1,0:T(8,128)}', space=vmem, size = 0x1000, scoped, tag = 'scratch operand']
  #allocation6 [shape = 'f32[8,32]{1,0:T(8,128)}', space=vmem, size = 0x1000, scoped, tag = 'scratch operand']
  %s0 = inlined_call_operand.vmem [shape: f32[2,8,32], index: 0, kind: input, shape index: {}]
  %s1 = inlined_call_operand.vmem [shape: bf16[4,32,8], index: 1, kind: input, shape index: {}]
  %s2 = inlined_call_operand.vmem [shape: bf16[4,32,8], index: 2, kind: input, shape index: {}]
  %s3 = inlined_call_operand.vmem [shape: bf16[4,32,8], index: 3, kind: input, shape index: {}]
  %s4 = inlined_call_operand.vmem [shape: f32[4,1,8], index: 4, kind: input, shape index: {}]
  %s5 = inlined_call_operand.vmem [shape: f32[4,1,8], index: 5, kind: input, shape index: {}]
  %s6 = inlined_call_operand.vmem [shape: f32[4,1,8], index: 6, kind: input, shape index: {}]
  %s7 = inlined_call_operand.vmem [shape: bf16[4,8,32], index: 7, kind: input, shape index: {}]
  %s8 = inlined_call_operand.vmem [shape: f32[1,32], index: 8, kind: input, shape index: {}]
  %s9 = inlined_call_operand.vmem [shape: bf16[32,64], index: 9, kind: input, shape index: {}]
  %s10 = inlined_call_operand.vmem [shape: f32[1,64], index: 10, kind: input, shape index: {}]
  %s11 = inlined_call_operand.vmem [shape: bf16[64,32], index: 11, kind: input, shape index: {}]
  %s12 = inlined_call_operand.vmem [shape: f32[1,32], index: 12, kind: input, shape index: {}]
  %s13 = inlined_call_operand.vmem [shape: f32[1,32], index: 13, kind: input, shape index: {}]
  %s14 = inlined_call_operand.vmem [shape: f32[1,32], index: 14, kind: input, shape index: {}]
  %s15 = inlined_call_operand.vmem [shape: f32[1,32], index: 15, kind: input, shape index: {}]
  %s16 = inlined_call_operand.vmem [shape: f32[1,32], index: 16, kind: input, shape index: {}]
  %s17 = inlined_call_operand.vmem [shape: f32[1,32], index: 17, kind: input, shape index: {}]
  %s18 = inlined_call_operand.vmem [shape: f32[1,32], index: 18, kind: input, shape index: {}]
  %s19 = inlined_call_operand.hbm [shape: f32[2,8,32], index: 19, kind: output, shape index: {}]
  %s20 = sld [smem:[#allocation0]]
  $region117: #{tpu_custom_call.1} parent=0
    _
  %s22 = ssub.s32 1, %s20
  %s23 = scalar_select 0, %s22, %s20
  $region1: #{tpu_custom_call.1} parent=0
    #allocation7 [shape = 'u8[8192]{0}', space=vmem, size = 0x2000, scoped, tag = 'output window, operand 0']
    #allocation8 [shape = 's32[2]{0}', space=sflag, size = 0x8, scoped, tag = 'scoped memory for tpu_custom_call.1']
    %24 = vsyncpa [#allocation8], 0
    %s25 = scalar_lea.sflag [#allocation8], 1
    %26 = vsyncpa %s25, 0
    loop: start=0, step=1, limit=4
    $region2: #{tpu_custom_call.1} parent=1 // loop_pre_header
      _
    $region3: #{tpu_custom_call.1} parent=1 // loop_header
      %s28 = sphi 0, %s32
      %p29 = scmp.ge.s32.totalorder %s28, 4
      %s35 = sphi 0, %s47
      %s36 = sphi 0, %s43
      %s37 = sphi 0, %s35
      %s38 = sphi 0, %s36
      %s39 = sphi 0, %s37
      %s40 = sphi 0, %s38
      %s50 = sphi 0, %s52
      %s53 = sphi 0, %s50
      %s54 = sphi 0, %s53
      %s70 = sphi 0, %s54
      %s74 = sphi 0, %s74
      %s76 = sphi 0, %s74
      %s77 = sphi 0, %s76
      %s91 = sphi 0, %s77
      %s95 = sphi 0, %s95
      %s97 = sphi 0, %s95
      %s98 = sphi 0, %s97
      %s112 = sphi 0, %s98
      %s116 = sphi 0, %s116
      %s118 = sphi 0, %s116
      %s119 = sphi 0, %s118
      %s133 = sphi 0, %s119
      %s137 = sphi 0, %s137
      %s139 = sphi 0, %s137
      %s140 = sphi 0, %s139
      %s154 = sphi 0, %s140
      %s158 = sphi 0, %s158
      %s160 = sphi 0, %s158
      %s161 = sphi 0, %s160
      %s175 = sphi 0, %s161
      %s179 = sphi 0, %s179
      %s181 = sphi 0, %s179
      %s182 = sphi 0, %s181
      %s196 = sphi 0, %s182
      %s200 = sphi 0, %s200
      %s202 = sphi 0, %s200
      %s203 = sphi 0, %s202
      %s217 = sphi 0, %s203
      %s221 = sphi 0, %s221
      %s223 = sphi 0, %s221
      %s224 = sphi 0, %s223
      %s238 = sphi 0, %s224
      %s244 = sphi 0, %s246
      %s247 = sphi 0, %s244
      %s248 = sphi 0, %s247
      %s264 = sphi 0, %s248
      %s270 = sphi 0, %s272
      %s273 = sphi 0, %s270
      %s274 = sphi 0, %s273
      %s290 = sphi 0, %s274
      %s296 = sphi 0, %s298
      %s299 = sphi 0, %s296
      %s300 = sphi 0, %s299
      %s316 = sphi 0, %s300
      %s320 = sphi 0, %s320
      %s322 = sphi 0, %s320
      %s323 = sphi 0, %s322
      %s337 = sphi 0, %s323
      %s341 = sphi 0, %s341
      %s343 = sphi 0, %s341
      %s344 = sphi 0, %s343
      %s358 = sphi 0, %s344
      %s362 = sphi 0, %s362
      %s364 = sphi 0, %s362
      %s365 = sphi 0, %s364
      %s379 = sphi 0, %s365
      %s383 = sphi 0, %s383
      %s385 = sphi 0, %s383
      %s386 = sphi 0, %s385
      %s400 = sphi 0, %s386
      %s404 = sphi 0, %s404
      %s406 = sphi 0, %s404
      %s407 = sphi 0, %s406
      %s421 = sphi 0, %s407
      %s425 = sphi 0, %s425
      %s427 = sphi 0, %s425
      %s428 = sphi 0, %s427
      %s442 = sphi 0, %s428
      %s446 = sphi 0, %s446
      %s448 = sphi 0, %s446
      %s449 = sphi 0, %s448
      %s463 = sphi 0, %s449
      %s469 = sphi 0, %s471
      %s472 = sphi 0, %s469
      %s473 = sphi 0, %s472
      %s489 = sphi 0, %s473
    $region4: #{tpu_custom_call.1} parent=1 // loop_header_branch
      %31 = sbr.rel (%p29) target = $region8
    $region5: #{tpu_custom_call.1} parent=1 // loop_body
      %s33 = ssub.s32 %s28, 1
      %s34 = ssub.s32 %s28, 2
      %s41 = sadd.s32 1, %s36
      %p42 = scmp.ge.s32.totalorder %s41, 1
      %s43 = scalar_select %p42, 0, %s41
      %s44 = sadd.s32 1, %s35
      %s45 = scalar_select %p42, %s44, %s35
      %p46 = scmp.ge.s32.totalorder %s45, 2
      %s47 = scalar_select %p46, 0, %s45
      %s48 = ssub.s32 %s35, %s47
      %p49 = scmp.eq.s32.totalorder %s48, 0
      %s51 = sadd.s32 %s50, 1
      %s52 = scalar_select %p49, %s50, %s51
      %p55 = pneg %p49
      %p56 = scmp.eq.s32.totalorder %s28, 1
      %p57 = por %p55, %p56
      %p58 = scmp.ne.s32.totalorder %s50, %s53
      %p59 = scmp.eq.s32.totalorder %s28, 0
      %p60 = por %p58, %p59
      %p61 = scmp.ne.s32.totalorder %s50, %s53
      %p62 = scmp.eq.s32.totalorder %s33, 1
      %p63 = por %p61, %p62
      %p64 = scmp.ne.s32.totalorder %s53, %s54
      %p65 = scmp.eq.s32.totalorder %s33, 0
      %p66 = por %p64, %p65
      %p67 = scmp.ne.s32.totalorder %s53, %s54
      %p68 = scmp.eq.s32.totalorder %s34, 1
      %p69 = por %p67, %p68
      %p71 = scmp.ne.s32.totalorder %s54, %s70
      %p72 = scmp.eq.s32.totalorder %s34, 0
      %p73 = por %p71, %p72
      %s75 = sadd.s32 %s74, 1
      %p78 = scmp.eq.s32.totalorder %s28, 1
      %p79 = scmp.ne.s32.totalorder %s74, %s76
      %p80 = scmp.eq.s32.totalorder %s28, 0
      %p81 = por %p79, %p80
      %p82 = scmp.ne.s32.totalorder %s74, %s76
      %p83 = scmp.eq.s32.totalorder %s33, 1
      %p84 = por %p82, %p83
      %p85 = scmp.ne.s32.totalorder %s76, %s77
      %p86 = scmp.eq.s32.totalorder %s33, 0
      %p87 = por %p85, %p86
      %p88 = scmp.ne.s32.totalorder %s76, %s77
      %p89 = scmp.eq.s32.totalorder %s34, 1
      %p90 = por %p88, %p89
      %p92 = scmp.ne.s32.totalorder %s77, %s91
      %p93 = scmp.eq.s32.totalorder %s34, 0
      %p94 = por %p92, %p93
      %s96 = sadd.s32 %s95, 1
      %p99 = scmp.eq.s32.totalorder %s28, 1
      %p100 = scmp.ne.s32.totalorder %s95, %s97
      %p101 = scmp.eq.s32.totalorder %s28, 0
      %p102 = por %p100, %p101
      %p103 = scmp.ne.s32.totalorder %s95, %s97
      %p104 = scmp.eq.s32.totalorder %s33, 1
      %p105 = por %p103, %p104
      %p106 = scmp.ne.s32.totalorder %s97, %s98
      %p107 = scmp.eq.s32.totalorder %s33, 0
      %p108 = por %p106, %p107
      %p109 = scmp.ne.s32.totalorder %s97, %s98
      %p110 = scmp.eq.s32.totalorder %s34, 1
      %p111 = por %p109, %p110
      %p113 = scmp.ne.s32.totalorder %s98, %s112
      %p114 = scmp.eq.s32.totalorder %s34, 0
      %p115 = por %p113, %p114
      %s117 = sadd.s32 %s116, 1
      %p120 = scmp.eq.s32.totalorder %s28, 1
      %p121 = scmp.ne.s32.totalorder %s116, %s118
      %p122 = scmp.eq.s32.totalorder %s28, 0
      %p123 = por %p121, %p122
      %p124 = scmp.ne.s32.totalorder %s116, %s118
      %p125 = scmp.eq.s32.totalorder %s33, 1
      %p126 = por %p124, %p125
      %p127 = scmp.ne.s32.totalorder %s118, %s119
      %p128 = scmp.eq.s32.totalorder %s33, 0
      %p129 = por %p127, %p128
      %p130 = scmp.ne.s32.totalorder %s118, %s119
      %p131 = scmp.eq.s32.totalorder %s34, 1
      %p132 = por %p130, %p131
      %p134 = scmp.ne.s32.totalorder %s119, %s133
      %p135 = scmp.eq.s32.totalorder %s34, 0
      %p136 = por %p134, %p135
      %s138 = sadd.s32 %s137, 1
      %p141 = scmp.eq.s32.totalorder %s28, 1
      %p142 = scmp.ne.s32.totalorder %s137, %s139
      %p143 = scmp.eq.s32.totalorder %s28, 0
      %p144 = por %p142, %p143
      %p145 = scmp.ne.s32.totalorder %s137, %s139
      %p146 = scmp.eq.s32.totalorder %s33, 1
      %p147 = por %p145, %p146
      %p148 = scmp.ne.s32.totalorder %s139, %s140
      %p149 = scmp.eq.s32.totalorder %s33, 0
      %p150 = por %p148, %p149
      %p151 = scmp.ne.s32.totalorder %s139, %s140
      %p152 = scmp.eq.s32.totalorder %s34, 1
      %p153 = por %p151, %p152
      %p155 = scmp.ne.s32.totalorder %s140, %s154
      %p156 = scmp.eq.s32.totalorder %s34, 0
      %p157 = por %p155, %p156
      %s159 = sadd.s32 %s158, 1
      %p162 = scmp.eq.s32.totalorder %s28, 1
      %p163 = scmp.ne.s32.totalorder %s158, %s160
      %p164 = scmp.eq.s32.totalorder %s28, 0
      %p165 = por %p163, %p164
      %p166 = scmp.ne.s32.totalorder %s158, %s160
      %p167 = scmp.eq.s32.totalorder %s33, 1
      %p168 = por %p166, %p167
      %p169 = scmp.ne.s32.totalorder %s160, %s161
      %p170 = scmp.eq.s32.totalorder %s33, 0
      %p171 = por %p169, %p170
      %p172 = scmp.ne.s32.totalorder %s160, %s161
      %p173 = scmp.eq.s32.totalorder %s34, 1
      %p174 = por %p172, %p173
      %p176 = scmp.ne.s32.totalorder %s161, %s175
      %p177 = scmp.eq.s32.totalorder %s34, 0
      %p178 = por %p176, %p177
      %s180 = sadd.s32 %s179, 1
      %p183 = scmp.eq.s32.totalorder %s28, 1
      %p184 = scmp.ne.s32.totalorder %s179, %s181
      %p185 = scmp.eq.s32.totalorder %s28, 0
      %p186 = por %p184, %p185
      %p187 = scmp.ne.s32.totalorder %s179, %s181
      %p188 = scmp.eq.s32.totalorder %s33, 1
      %p189 = por %p187, %p188
      %p190 = scmp.ne.s32.totalorder %s181, %s182
      %p191 = scmp.eq.s32.totalorder %s33, 0
      %p192 = por %p190, %p191
      %p193 = scmp.ne.s32.totalorder %s181, %s182
      %p194 = scmp.eq.s32.totalorder %s34, 1
      %p195 = por %p193, %p194
      %p197 = scmp.ne.s32.totalorder %s182, %s196
      %p198 = scmp.eq.s32.totalorder %s34, 0
      %p199 = por %p197, %p198
      %s201 = sadd.s32 %s200, 1
      %p204 = scmp.eq.s32.totalorder %s28, 1
      %p205 = scmp.ne.s32.totalorder %s200, %s202
      %p206 = scmp.eq.s32.totalorder %s28, 0
      %p207 = por %p205, %p206
      %p208 = scmp.ne.s32.totalorder %s200, %s202
      %p209 = scmp.eq.s32.totalorder %s33, 1
      %p210 = por %p208, %p209
      %p211 = scmp.ne.s32.totalorder %s202, %s203
      %p212 = scmp.eq.s32.totalorder %s33, 0
      %p213 = por %p211, %p212
      %p214 = scmp.ne.s32.totalorder %s202, %s203
      %p215 = scmp.eq.s32.totalorder %s34, 1
      %p216 = por %p214, %p215
      %p218 = scmp.ne.s32.totalorder %s203, %s217
      %p219 = scmp.eq.s32.totalorder %s34, 0
      %p220 = por %p218, %p219
      %s222 = sadd.s32 %s221, 1
      %p225 = scmp.eq.s32.totalorder %s28, 1
      %p226 = scmp.ne.s32.totalorder %s221, %s223
      %p227 = scmp.eq.s32.totalorder %s28, 0
      %p228 = por %p226, %p227
      %p229 = scmp.ne.s32.totalorder %s221, %s223
      %p230 = scmp.eq.s32.totalorder %s33, 1
      %p231 = por %p229, %p230
      %p232 = scmp.ne.s32.totalorder %s223, %s224
      %p233 = scmp.eq.s32.totalorder %s33, 0
      %p234 = por %p232, %p233
      %p235 = scmp.ne.s32.totalorder %s223, %s224
      %p236 = scmp.eq.s32.totalorder %s34, 1
      %p237 = por %p235, %p236
      %p239 = scmp.ne.s32.totalorder %s224, %s238
      %p240 = scmp.eq.s32.totalorder %s34, 0
      %p241 = por %p239, %p240
      %s242 = ssub.s32 %s36, %s43
      %p243 = scmp.eq.s32.totalorder %s242, 0
      %s245 = sadd.s32 %s244, 1
      %s246 = scalar_select %p243, %s244, %s245
      %p249 = pneg %p243
      %p250 = scmp.eq.s32.totalorder %s28, 1
      %p251 = por %p249, %p250
      %p252 = scmp.ne.s32.totalorder %s244, %s247
      %p253 = scmp.eq.s32.totalorder %s28, 0
      %p254 = por %p252, %p253
      %p255 = scmp.ne.s32.totalorder %s244, %s247
      %p256 = scmp.eq.s32.totalorder %s33, 1
      %p257 = por %p255, %p256
      %p258 = scmp.ne.s32.totalorder %s247, %s248
      %p259 = scmp.eq.s32.totalorder %s33, 0
      %p260 = por %p258, %p259
      %p261 = scmp.ne.s32.totalorder %s247, %s248
      %p262 = scmp.eq.s32.totalorder %s34, 1
      %p263 = por %p261, %p262
      %p265 = scmp.ne.s32.totalorder %s248, %s264
      %p266 = scmp.eq.s32.totalorder %s34, 0
      %p267 = por %p265, %p266
      %s268 = ssub.s32 %s36, %s43
      %p269 = scmp.eq.s32.totalorder %s268, 0
      %s271 = sadd.s32 %s270, 1
      %s272 = scalar_select %p269, %s270, %s271
      %p275 = pneg %p269
      %p276 = scmp.eq.s32.totalorder %s28, 1
      %p277 = por %p275, %p276
      %p278 = scmp.ne.s32.totalorder %s270, %s273
      %p279 = scmp.eq.s32.totalorder %s28, 0
      %p280 = por %p278, %p279
      %p281 = scmp.ne.s32.totalorder %s270, %s273
      %p282 = scmp.eq.s32.totalorder %s33, 1
      %p283 = por %p281, %p282
      %p284 = scmp.ne.s32.totalorder %s273, %s274
      %p285 = scmp.eq.s32.totalorder %s33, 0
      %p286 = por %p284, %p285
      %p287 = scmp.ne.s32.totalorder %s273, %s274
      %p288 = scmp.eq.s32.totalorder %s34, 1
      %p289 = por %p287, %p288
      %p291 = scmp.ne.s32.totalorder %s274, %s290
      %p292 = scmp.eq.s32.totalorder %s34, 0
      %p293 = por %p291, %p292
      %s294 = ssub.s32 %s36, %s43
      %p295 = scmp.eq.s32.totalorder %s294, 0
      %s297 = sadd.s32 %s296, 1
      %s298 = scalar_select %p295, %s296, %s297
      %p301 = pneg %p295
      %p302 = scmp.eq.s32.totalorder %s28, 1
      %p303 = por %p301, %p302
      %p304 = scmp.ne.s32.totalorder %s296, %s299
      %p305 = scmp.eq.s32.totalorder %s28, 0
      %p306 = por %p304, %p305
      %p307 = scmp.ne.s32.totalorder %s296, %s299
      %p308 = scmp.eq.s32.totalorder %s33, 1
      %p309 = por %p307, %p308
      %p310 = scmp.ne.s32.totalorder %s299, %s300
      %p311 = scmp.eq.s32.totalorder %s33, 0
      %p312 = por %p310, %p311
      %p313 = scmp.ne.s32.totalorder %s299, %s300
      %p314 = scmp.eq.s32.totalorder %s34, 1
      %p315 = por %p313, %p314
      %p317 = scmp.ne.s32.totalorder %s300, %s316
      %p318 = scmp.eq.s32.totalorder %s34, 0
      %p319 = por %p317, %p318
      %s321 = sadd.s32 %s320, 1
      %p324 = scmp.eq.s32.totalorder %s28, 1
      %p325 = scmp.ne.s32.totalorder %s320, %s322
      %p326 = scmp.eq.s32.totalorder %s28, 0
      %p327 = por %p325, %p326
      %p328 = scmp.ne.s32.totalorder %s320, %s322
      %p329 = scmp.eq.s32.totalorder %s33, 1
      %p330 = por %p328, %p329
      %p331 = scmp.ne.s32.totalorder %s322, %s323
      %p332 = scmp.eq.s32.totalorder %s33, 0
      %p333 = por %p331, %p332
      %p334 = scmp.ne.s32.totalorder %s322, %s323
      %p335 = scmp.eq.s32.totalorder %s34, 1
      %p336 = por %p334, %p335
      %p338 = scmp.ne.s32.totalorder %s323, %s337
      %p339 = scmp.eq.s32.totalorder %s34, 0
      %p340 = por %p338, %p339
      %s342 = sadd.s32 %s341, 1
      %p345 = scmp.eq.s32.totalorder %s28, 1
      %p346 = scmp.ne.s32.totalorder %s341, %s343
      %p347 = scmp.eq.s32.totalorder %s28, 0
      %p348 = por %p346, %p347
      %p349 = scmp.ne.s32.totalorder %s341, %s343
      %p350 = scmp.eq.s32.totalorder %s33, 1
      %p351 = por %p349, %p350
      %p352 = scmp.ne.s32.totalorder %s343, %s344
      %p353 = scmp.eq.s32.totalorder %s33, 0
      %p354 = por %p352, %p353
      %p355 = scmp.ne.s32.totalorder %s343, %s344
      %p356 = scmp.eq.s32.totalorder %s34, 1
      %p357 = por %p355, %p356
      %p359 = scmp.ne.s32.totalorder %s344, %s358
      %p360 = scmp.eq.s32.totalorder %s34, 0
      %p361 = por %p359, %p360
      %s363 = sadd.s32 %s362, 1
      %p366 = scmp.eq.s32.totalorder %s28, 1
      %p367 = scmp.ne.s32.totalorder %s362, %s364
      %p368 = scmp.eq.s32.totalorder %s28, 0
      %p369 = por %p367, %p368
      %p370 = scmp.ne.s32.totalorder %s362, %s364
      %p371 = scmp.eq.s32.totalorder %s33, 1
      %p372 = por %p370, %p371
      %p373 = scmp.ne.s32.totalorder %s364, %s365
      %p374 = scmp.eq.s32.totalorder %s33, 0
      %p375 = por %p373, %p374
      %p376 = scmp.ne.s32.totalorder %s364, %s365
      %p377 = scmp.eq.s32.totalorder %s34, 1
      %p378 = por %p376, %p377
      %p380 = scmp.ne.s32.totalorder %s365, %s379
      %p381 = scmp.eq.s32.totalorder %s34, 0
      %p382 = por %p380, %p381
      %s384 = sadd.s32 %s383, 1
      %p387 = scmp.eq.s32.totalorder %s28, 1
      %p388 = scmp.ne.s32.totalorder %s383, %s385
      %p389 = scmp.eq.s32.totalorder %s28, 0
      %p390 = por %p388, %p389
      %p391 = scmp.ne.s32.totalorder %s383, %s385
      %p392 = scmp.eq.s32.totalorder %s33, 1
      %p393 = por %p391, %p392
      %p394 = scmp.ne.s32.totalorder %s385, %s386
      %p395 = scmp.eq.s32.totalorder %s33, 0
      %p396 = por %p394, %p395
      %p397 = scmp.ne.s32.totalorder %s385, %s386
      %p398 = scmp.eq.s32.totalorder %s34, 1
      %p399 = por %p397, %p398
      %p401 = scmp.ne.s32.totalorder %s386, %s400
      %p402 = scmp.eq.s32.totalorder %s34, 0
      %p403 = por %p401, %p402
      %s405 = sadd.s32 %s404, 1
      %p408 = scmp.eq.s32.totalorder %s28, 1
      %p409 = scmp.ne.s32.totalorder %s404, %s406
      %p410 = scmp.eq.s32.totalorder %s28, 0
      %p411 = por %p409, %p410
      %p412 = scmp.ne.s32.totalorder %s404, %s406
      %p413 = scmp.eq.s32.totalorder %s33, 1
      %p414 = por %p412, %p413
      %p415 = scmp.ne.s32.totalorder %s406, %s407
      %p416 = scmp.eq.s32.totalorder %s33, 0
      %p417 = por %p415, %p416
      %p418 = scmp.ne.s32.totalorder %s406, %s407
      %p419 = scmp.eq.s32.totalorder %s34, 1
      %p420 = por %p418, %p419
      %p422 = scmp.ne.s32.totalorder %s407, %s421
      %p423 = scmp.eq.s32.totalorder %s34, 0
      %p424 = por %p422, %p423
      %s426 = sadd.s32 %s425, 1
      %p429 = scmp.eq.s32.totalorder %s28, 1
      %p430 = scmp.ne.s32.totalorder %s425, %s427
      %p431 = scmp.eq.s32.totalorder %s28, 0
      %p432 = por %p430, %p431
      %p433 = scmp.ne.s32.totalorder %s425, %s427
      %p434 = scmp.eq.s32.totalorder %s33, 1
      %p435 = por %p433, %p434
      %p436 = scmp.ne.s32.totalorder %s427, %s428
      %p437 = scmp.eq.s32.totalorder %s33, 0
      %p438 = por %p436, %p437
      %p439 = scmp.ne.s32.totalorder %s427, %s428
      %p440 = scmp.eq.s32.totalorder %s34, 1
      %p441 = por %p439, %p440
      %p443 = scmp.ne.s32.totalorder %s428, %s442
      %p444 = scmp.eq.s32.totalorder %s34, 0
      %p445 = por %p443, %p444
      %s447 = sadd.s32 %s446, 1
      %p450 = scmp.eq.s32.totalorder %s28, 1
      %p451 = scmp.ne.s32.totalorder %s446, %s448
      %p452 = scmp.eq.s32.totalorder %s28, 0
      %p453 = por %p451, %p452
      %p454 = scmp.ne.s32.totalorder %s446, %s448
      %p455 = scmp.eq.s32.totalorder %s33, 1
      %p456 = por %p454, %p455
      %p457 = scmp.ne.s32.totalorder %s448, %s449
      %p458 = scmp.eq.s32.totalorder %s33, 0
      %p459 = por %p457, %p458
      %p460 = scmp.ne.s32.totalorder %s448, %s449
      %p461 = scmp.eq.s32.totalorder %s34, 1
      %p462 = por %p460, %p461
      %p464 = scmp.ne.s32.totalorder %s449, %s463
      %p465 = scmp.eq.s32.totalorder %s34, 0
      %p466 = por %p464, %p465
      %s467 = ssub.s32 %s35, %s47
      %p468 = scmp.eq.s32.totalorder %s467, 0
      %s470 = sadd.s32 %s469, 1
      %s471 = scalar_select %p468, %s469, %s470
      %p474 = pneg %p468
      %p475 = scmp.eq.s32.totalorder %s28, 1
      %p476 = por %p474, %p475
      %p477 = scmp.ne.s32.totalorder %s469, %s472
      %p478 = scmp.eq.s32.totalorder %s28, 0
      %p479 = por %p477, %p478
      %p480 = scmp.ne.s32.totalorder %s469, %s472
      %p481 = scmp.eq.s32.totalorder %s33, 1
      %p482 = por %p480, %p481
      %p483 = scmp.ne.s32.totalorder %s472, %s473
      %p484 = scmp.eq.s32.totalorder %s33, 0
      %p485 = por %p483, %p484
      %p486 = scmp.ne.s32.totalorder %s472, %s473
      %p487 = scmp.eq.s32.totalorder %s34, 1
      %p488 = por %p486, %p487
      %p490 = scmp.ne.s32.totalorder %s473, %s489
      %p491 = scmp.eq.s32.totalorder %s34, 0
      %p492 = por %p490, %p491
      %p493 = scmp.le.s32.totalorder 1, %s28
      %p494 = scmp.lt.s32.totalorder %s28, 3
      %p495 = pnand %p493, %p494
      %p496 = pneg %p495
      // Predicated region
      $region9: #{tpu_custom_call.1} parent=5 // pred_check
        _
      $region10: #{tpu_custom_call.1} parent=5 // pred_check_branch
        %498 = sbr.rel (%p495) target = $region12
      $region11: #{tpu_custom_call.1} parent=5 // pred_region
        %s499 = ssub.s32 %s28, 1
        // Predicated region
        $region13: #{tpu_custom_call.1} parent=11 // pred_check
          %p500 = pneg %p87
        $region14: #{tpu_custom_call.1} parent=11 // pred_check_branch
          %502 = sbr.rel (%p500) target = $region16
        $region15: #{tpu_custom_call.1} parent=11 // pred_region
          _
        $region16: #{tpu_custom_call.1} parent=11 // pred_fallthru
          _
        // Predicated region
        $region17: #{tpu_custom_call.1} parent=11 // pred_check
          %p503 = pneg %p108
        $region18: #{tpu_custom_call.1} parent=11 // pred_check_branch
          %505 = sbr.rel (%p503) target = $region20
        $region19: #{tpu_custom_call.1} parent=11 // pred_region
          _
        $region20: #{tpu_custom_call.1} parent=11 // pred_fallthru
          _
        // Predicated region
        $region21: #{tpu_custom_call.1} parent=11 // pred_check
          %p506 = pneg %p129
        $region22: #{tpu_custom_call.1} parent=11 // pred_check_branch
          %508 = sbr.rel (%p506) target = $region24
        $region23: #{tpu_custom_call.1} parent=11 // pred_region
          _
        $region24: #{tpu_custom_call.1} parent=11 // pred_fallthru
          _
        // Predicated region
        $region25: #{tpu_custom_call.1} parent=11 // pred_check
          %p509 = pneg %p150
        $region26: #{tpu_custom_call.1} parent=11 // pred_check_branch
          %511 = sbr.rel (%p509) target = $region28
        $region27: #{tpu_custom_call.1} parent=11 // pred_region
          _
        $region28: #{tpu_custom_call.1} parent=11 // pred_fallthru
          _
        // Predicated region
        $region29: #{tpu_custom_call.1} parent=11 // pred_check
          %p512 = pneg %p171
        $region30: #{tpu_custom_call.1} parent=11 // pred_check_branch
          %514 = sbr.rel (%p512) target = $region32
        $region31: #{tpu_custom_call.1} parent=11 // pred_region
          _
        $region32: #{tpu_custom_call.1} parent=11 // pred_fallthru
          _
        // Predicated region
        $region33: #{tpu_custom_call.1} parent=11 // pred_check
          %p515 = pneg %p192
        $region34: #{tpu_custom_call.1} parent=11 // pred_check_branch
          %517 = sbr.rel (%p515) target = $region36
        $region35: #{tpu_custom_call.1} parent=11 // pred_region
          _
        $region36: #{tpu_custom_call.1} parent=11 // pred_fallthru
          _
        // Predicated region
        $region37: #{tpu_custom_call.1} parent=11 // pred_check
          %p518 = pneg %p213
        $region38: #{tpu_custom_call.1} parent=11 // pred_check_branch
          %520 = sbr.rel (%p518) target = $region40
        $region39: #{tpu_custom_call.1} parent=11 // pred_region
          _
        $region40: #{tpu_custom_call.1} parent=11 // pred_fallthru
          _
        // Predicated region
        $region41: #{tpu_custom_call.1} parent=11 // pred_check
          %p521 = pneg %p234
        $region42: #{tpu_custom_call.1} parent=11 // pred_check_branch
          %523 = sbr.rel (%p521) target = $region44
        $region43: #{tpu_custom_call.1} parent=11 // pred_region
          _
        $region44: #{tpu_custom_call.1} parent=11 // pred_fallthru
          _
        // Predicated region
        $region45: #{tpu_custom_call.1} parent=11 // pred_check
          %p524 = pneg %p260
        $region46: #{tpu_custom_call.1} parent=11 // pred_check_branch
          %526 = sbr.rel (%p524) target = $region48
        $region47: #{tpu_custom_call.1} parent=11 // pred_region
          %p527 = scmp.lt.s32.totalorder %s38, 0
          %s528 = scalar_select %p527, %s38, 0
          %s529 = smul.addr %s528, 4
          %s530 = scalar_lea.vmem %s9, %s529
        $region48: #{tpu_custom_call.1} parent=11 // pred_fallthru
          _
        // Predicated region
        $region49: #{tpu_custom_call.1} parent=11 // pred_check
          %p531 = pneg %p286
        $region50: #{tpu_custom_call.1} parent=11 // pred_check_branch
          %533 = sbr.rel (%p531) target = $region52
        $region51: #{tpu_custom_call.1} parent=11 // pred_region
          %p534 = scmp.lt.s32.totalorder %s38, 0
          %s535 = scalar_select %p534, %s38, 0
          %s536 = scalar_lea.vmem %s10, %s535
        $region52: #{tpu_custom_call.1} parent=11 // pred_fallthru
          _
        // Predicated region
        $region53: #{tpu_custom_call.1} parent=11 // pred_check
          %p537 = pneg %p312
        $region54: #{tpu_custom_call.1} parent=11 // pred_check_branch
          %539 = sbr.rel (%p537) target = $region56
        $region55: #{tpu_custom_call.1} parent=11 // pred_region
          %s540 = smul.u32 8, %s38
          %p541 = scmp.lt.s32.totalorder %s540, 7
          %s542 = scalar_select %p541, %s540, 7
          %s543 = smul.addr %s542, 4
          %s544 = scalar_lea.vmem %s11, %s543
          %s545 = smul.u32 8, %s38
        $region56: #{tpu_custom_call.1} parent=11 // pred_fallthru
          _
        // Predicated region
        $region57: #{tpu_custom_call.1} parent=11 // pred_check
          %p546 = pneg %p333
        $region58: #{tpu_custom_call.1} parent=11 // pred_check_branch
          %548 = sbr.rel (%p546) target = $region60
        $region59: #{tpu_custom_call.1} parent=11 // pred_region
          _
        $region60: #{tpu_custom_call.1} parent=11 // pred_fallthru
          _
        // Predicated region
        $region61: #{tpu_custom_call.1} parent=11 // pred_check
          %p549 = pneg %p354
        $region62: #{tpu_custom_call.1} parent=11 // pred_check_branch
          %551 = sbr.rel (%p549) target = $region64
        $region63: #{tpu_custom_call.1} parent=11 // pred_region
          _
        $region64: #{tpu_custom_call.1} parent=11 // pred_fallthru
          _
        // Predicated region
        $region65: #{tpu_custom_call.1} parent=11 // pred_check
          %p552 = pneg %p375
        $region66: #{tpu_custom_call.1} parent=11 // pred_check_branch
          %554 = sbr.rel (%p552) target = $region68
        $region67: #{tpu_custom_call.1} parent=11 // pred_region
          _
        $region68: #{tpu_custom_call.1} parent=11 // pred_fallthru
          _
        // Predicated region
        $region69: #{tpu_custom_call.1} parent=11 // pred_check
          %p555 = pneg %p396
        $region70: #{tpu_custom_call.1} parent=11 // pred_check_branch
          %557 = sbr.rel (%p555) target = $region72
        $region71: #{tpu_custom_call.1} parent=11 // pred_region
          _
        $region72: #{tpu_custom_call.1} parent=11 // pred_fallthru
          _
        // Predicated region
        $region73: #{tpu_custom_call.1} parent=11 // pred_check
          %p558 = pneg %p417
        $region74: #{tpu_custom_call.1} parent=11 // pred_check_branch
          %560 = sbr.rel (%p558) target = $region76
        $region75: #{tpu_custom_call.1} parent=11 // pred_region
          _
        $region76: #{tpu_custom_call.1} parent=11 // pred_fallthru
          _
        // Predicated region
        $region77: #{tpu_custom_call.1} parent=11 // pred_check
          %p561 = pneg %p438
        $region78: #{tpu_custom_call.1} parent=11 // pred_check_branch
          %563 = sbr.rel (%p561) target = $region80
        $region79: #{tpu_custom_call.1} parent=11 // pred_region
          _
        $region80: #{tpu_custom_call.1} parent=11 // pred_fallthru
          _
        // Predicated region
        $region81: #{tpu_custom_call.1} parent=11 // pred_check
          %p564 = pneg %p459
        $region82: #{tpu_custom_call.1} parent=11 // pred_check_branch
          %566 = sbr.rel (%p564) target = $region84
        $region83: #{tpu_custom_call.1} parent=11 // pred_region
          _
        $region84: #{tpu_custom_call.1} parent=11 // pred_fallthru
          _
      $region12: #{tpu_custom_call.1} parent=5 // pred_fallthru
        _
      %p567 = scmp.lt.s32.totalorder %s28, 2
      // Predicated region
      $region85: #{tpu_custom_call.1} parent=5 // pred_check
        %p568 = pneg %p567
      $region86: #{tpu_custom_call.1} parent=5 // pred_check_branch
        %570 = sbr.rel (%p568) target = $region88
      $region87: #{tpu_custom_call.1} parent=5 // pred_region
        // Predicated region
        $region89: #{tpu_custom_call.1} parent=87 // pred_check
          %p571 = pneg %p60
        $region90: #{tpu_custom_call.1} parent=87 // pred_check_branch
          %573 = sbr.rel (%p571) target = $region92
        $region91: #{tpu_custom_call.1} parent=87 // pred_region
          %p574 = scmp.lt.s32.totalorder %s35, 1
          %s575 = scalar_select %p574, %s35, 1
          %s576 = smul.addr %s575, 8
          %s577 = scalar_lea.vmem %s0, %s576
        $region92: #{tpu_custom_call.1} parent=87 // pred_fallthru
          _
      $region88: #{tpu_custom_call.1} parent=5 // pred_fallthru
        _
      %p578 = scmp.le.s32.totalorder 1, %s28
      %p579 = scmp.lt.s32.totalorder %s28, 3
      %p580 = pnand %p578, %p579
      %p581 = pneg %p580
      // Predicated region
      $region93: #{tpu_custom_call.1} parent=5 // pred_check
        _
      $region94: #{tpu_custom_call.1} parent=5 // pred_check_branch
        %583 = sbr.rel (%p580) target = $region96
      $region95: #{tpu_custom_call.1} parent=5 // pred_region
        %s584 = ssub.s32 %s28, 1
        %p585 = scmp.lt.s32.totalorder %s37, 1
        %s586 = scalar_select %p585, %s37, 1
        %s587 = smul.addr %s586, 8
        %s588 = scalar_lea.vmem %s0, %s587
        %p589 = pneg %p66
        %p590 = pneg %p63
        %p591 = pneg %p87
        %p592 = pneg %p84
        %p593 = pneg %p108
        %p594 = pneg %p105
        %p595 = pneg %p129
        %p596 = pneg %p126
        %p597 = pneg %p150
        %p598 = pneg %p147
        %p599 = pneg %p171
        %p600 = pneg %p168
        %p601 = pneg %p192
        %p602 = pneg %p189
        %p603 = pneg %p213
        %p604 = pneg %p210
        %p605 = pneg %p234
        %p606 = pneg %p231
        %p607 = scmp.lt.s32.totalorder %s38, 0
        %s608 = scalar_select %p607, %s38, 0
        %s609 = smul.addr %s608, 4
        %s610 = scalar_lea.vmem %s9, %s609
        %p611 = pneg %p260
        %p612 = pneg %p257
        %p613 = scmp.lt.s32.totalorder %s38, 0
        %s614 = scalar_select %p613, %s38, 0
        %s615 = scalar_lea.vmem %s10, %s614
        %p616 = pneg %p286
        %p617 = pneg %p283
        %s618 = smul.u32 8, %s38
        %p619 = scmp.lt.s32.totalorder %s618, 7
        %s620 = scalar_select %p619, %s618, 7
        %s621 = smul.addr %s620, 4
        %s622 = scalar_lea.vmem %s11, %s621
        %p623 = pneg %p312
        %p624 = pneg %p309
        %p625 = pneg %p333
        %p626 = pneg %p330
        %p627 = pneg %p354
        %p628 = pneg %p351
        %p629 = pneg %p375
        %p630 = pneg %p372
        %p631 = pneg %p396
        %p632 = pneg %p393
        %p633 = pneg %p417
        %p634 = pneg %p414
        %p635 = pneg %p438
        %p636 = pneg %p435
        %p637 = pneg %p459
        %p638 = pneg %p456
        %p639 = pneg %p485
        %p640 = pneg %p482
        %s641 = sand.u32 %s472, 1
        %s642 = scalar_lea.sflag [#allocation8], %s641
        %s643 = sand.u32 %s472, 1
        %s644 = smul.addr %s643, 8
        %s645 = scalar_lea.vmem [#allocation7], %s644
        %p646 = scmp.lt.s32.totalorder %s37, 1
        %s647 = scalar_select %p646, %s37, 1
        %s648 = smul.addr %s647, 8
        %s649 = scalar_lea.vmem %s0, %s648
        %p650 = scmp.lt.s32.totalorder %s38, 0
        %s651 = scalar_select %p650, %s38, 0
        %s652 = smul.addr %s651, 4
        %s653 = scalar_lea.vmem %s9, %s652
        %p654 = scmp.lt.s32.totalorder %s38, 0
        %s655 = scalar_select %p654, %s38, 0
        %s656 = scalar_lea.vmem %s10, %s655
        %s657 = smul.u32 8, %s38
        %p658 = scmp.lt.s32.totalorder %s657, 7
        %s659 = scalar_select %p658, %s657, 7
        %s660 = smul.addr %s659, 4
        %s661 = scalar_lea.vmem %s11, %s660
        %s662 = smul.u32 8, %s38
        %p664 = scmp.eq.s32.totalorder %s38, 0
        // Predicated region
        $region97: #{tpu_custom_call.1} parent=95 // pred_check
          %p665 = pneg %p664
        $region98: #{tpu_custom_call.1} parent=95 // pred_check_branch
          %667 = sbr.rel (%p665) target = $region100
        $region99: #{tpu_custom_call.1} parent=95 // pred_region
          %v668 = vld [vmem:[%s649] sm:$0xff]
          %v669 = vpack.c.bf16 %v668, %v668
          %v670 = vld [vmem:[%s1] sm:$0xf]
          %v671 = vld [vmem:[%s1 + $0x4] sm:$0xf]
          %v672 = vld [vmem:[%s1 + $0x8] sm:$0xf]
          %v673 = vld [vmem:[%s1 + $0xc] sm:$0xf]
          %v674 = vld [vmem:[%s4] sm:$0x1]
          %v676 = vlaneseq
          %v677 = vshrl.u32 %v676, 7
          %v678 = vsub.s32 0, %v677
          %v679 = vrot.slane %v674, %v678
          %v685 = vunpack.c.l.b16 %v670
          %v686 = vunpack.c.l.b16 %v671
          %v687 = vunpack.c.l.b16 %v672
          %v688 = vunpack.c.l.b16 %v673
          %v689 = vpack.c.b16 %v686, %v685
          %v690 = vpack.c.b16 %v688, %v687
          %vm693 = vcmask 261120
          %v695 = vsel %vm693, %v669, 0
          %697 = vmatprep.subr.bf16.mxu0 0
          %698 = vmatpush1.bf16.msra.mxu0 %v689
          %699 = vmatprep.subr.bf16.mxu0 0
          %700 = vmatpush1.bf16.msra.mxu0 %v690
          %701 = vmatprep.subr.bf16.mxu0 0
          %702 = vmatpush1.bf16.msra.mxu0 0
          %703 = vmatprep.subr.bf16.mxu0 0
          %704 = vmatpush1.bf16.msra.mxu0 0
          %705 = vmatprep.subr.bf16.mxu0 0
          %706 = vmatpush1.bf16.msra.mxu0 0
          %707 = vmatprep.subr.bf16.mxu0 0
          %708 = vmatpush1.bf16.msra.mxu0 0
          %709 = vmatprep.subr.bf16.mxu0 0
          %710 = vmatpush1.bf16.msra.mxu0 0
          %711 = vmatprep.subr.bf16.mxu0 0
          %712 = vmatpush1.bf16.msra.mxu0 0
          %713 = vmatprep.subr.bf16.mxu0 0
          %714 = vmatpush1.bf16.msra.mxu0 0
          %715 = vmatprep.subr.bf16.mxu0 0
          %716 = vmatpush1.bf16.msra.mxu0 0
          %717 = vmatprep.subr.bf16.mxu0 0
          %718 = vmatpush1.bf16.msra.mxu0 0
          %719 = vmatprep.subr.bf16.mxu0 0
          %720 = vmatpush1.bf16.msra.mxu0 0
          %721 = vmatprep.subr.bf16.mxu0 0
          %722 = vmatpush1.bf16.msra.mxu0 0
          %723 = vmatprep.subr.bf16.mxu0 0
          %724 = vmatpush1.bf16.msra.mxu0 0
          %725 = vmatprep.subr.bf16.mxu0 0
          %726 = vmatpush1.bf16.msra.mxu0 0
          %727 = vmatprep.subr.bf16.mxu0 0
          %728 = vmatpush1.bf16.msra.mxu0 0
          %729 = vmatprep.mubr.bf16.mxu0 0
          %730 = vmatmul.mubr.bf16.gmra.mrb[0].mxu0 %v695
          %v731 = vpop.f32.mrb[0].mxu0
          %v732 = vadd.f32 %v679, %v731
          %v733 = vpop.f32.mrb[0].mxu0
          %v734 = vpop.f32.mrb[0].mxu0
          %v735 = vpop.f32.mrb[0].mxu0
          %736 = vdwg.mxu0
          %v737 = vld [vmem:[%s2] sm:$0xf]
          %v738 = vld [vmem:[%s2 + $0x4] sm:$0xf]
          %v739 = vld [vmem:[%s2 + $0x8] sm:$0xf]
          %v740 = vld [vmem:[%s2 + $0xc] sm:$0xf]
          %v741 = vld [vmem:[%s5] sm:$0x1]
          %v743 = vlaneseq
          %v744 = vshrl.u32 %v743, 7
          %v745 = vsub.s32 0, %v744
          %v746 = vrot.slane %v741, %v745
          %v752 = vunpack.c.l.b16 %v737
          %v753 = vunpack.c.l.b16 %v738
          %v754 = vunpack.c.l.b16 %v739
          %v755 = vunpack.c.l.b16 %v740
          %v756 = vpack.c.b16 %v753, %v752
          %v757 = vpack.c.b16 %v755, %v754
          %760 = vmatprep.subr.bf16.mxu0 0
          %761 = vmatpush1.bf16.msra.mxu0 %v756
          %762 = vmatprep.subr.bf16.mxu0 0
          %763 = vmatpush1.bf16.msra.mxu0 %v757
          %764 = vmatprep.subr.bf16.mxu0 0
          %765 = vmatpush1.bf16.msra.mxu0 0
          %766 = vmatprep.subr.bf16.mxu0 0
          %767 = vmatpush1.bf16.msra.mxu0 0
          %768 = vmatprep.subr.bf16.mxu0 0
          %769 = vmatpush1.bf16.msra.mxu0 0
          %770 = vmatprep.subr.bf16.mxu0 0
          %771 = vmatpush1.bf16.msra.mxu0 0
          %772 = vmatprep.subr.bf16.mxu0 0
          %773 = vmatpush1.bf16.msra.mxu0 0
          %774 = vmatprep.subr.bf16.mxu0 0
          %775 = vmatpush1.bf16.msra.mxu0 0
          %776 = vmatprep.subr.bf16.mxu0 0
          %777 = vmatpush1.bf16.msra.mxu0 0
          %778 = vmatprep.subr.bf16.mxu0 0
          %779 = vmatpush1.bf16.msra.mxu0 0
          %780 = vmatprep.subr.bf16.mxu0 0
          %781 = vmatpush1.bf16.msra.mxu0 0
          %782 = vmatprep.subr.bf16.mxu0 0
          %783 = vmatpush1.bf16.msra.mxu0 0
          %784 = vmatprep.subr.bf16.mxu0 0
          %785 = vmatpush1.bf16.msra.mxu0 0
          %786 = vmatprep.subr.bf16.mxu0 0
          %787 = vmatpush1.bf16.msra.mxu0 0
          %788 = vmatprep.subr.bf16.mxu0 0
          %789 = vmatpush1.bf16.msra.mxu0 0
          %790 = vmatprep.subr.bf16.mxu0 0
          %791 = vmatpush1.bf16.msra.mxu0 0
          %792 = vmatprep.mubr.bf16.mxu0 0
          %793 = vmatmul.mubr.bf16.gmra.mrb[0].mxu0 %v695
          %v794 = vpop.f32.mrb[0].mxu0
          %v795 = vadd.f32 %v746, %v794
          %v796 = vpop.f32.mrb[0].mxu0
          %v797 = vpop.f32.mrb[0].mxu0
          %v798 = vpop.f32.mrb[0].mxu0
          %799 = vdwg.mxu0
          %v800 = vld [vmem:[%s3] sm:$0xf]
          %v801 = vld [vmem:[%s3 + $0x4] sm:$0xf]
          %v802 = vld [vmem:[%s3 + $0x8] sm:$0xf]
          %v803 = vld [vmem:[%s3 + $0xc] sm:$0xf]
          %v804 = vld [vmem:[%s6] sm:$0x1]
          %v806 = vlaneseq
          %v807 = vshrl.u32 %v806, 7
          %v808 = vsub.s32 0, %v807
          %v809 = vrot.slane %v804, %v808
          %v815 = vunpack.c.l.b16 %v800
          %v816 = vunpack.c.l.b16 %v801
          %v817 = vunpack.c.l.b16 %v802
          %v818 = vunpack.c.l.b16 %v803
          %v819 = vpack.c.b16 %v816, %v815
          %v820 = vpack.c.b16 %v818, %v817
          %823 = vmatprep.subr.bf16.mxu0 0
          %824 = vmatpush1.bf16.msra.mxu0 %v819
          %825 = vmatprep.subr.bf16.mxu0 0
          %826 = vmatpush1.bf16.msra.mxu0 %v820
          %827 = vmatprep.subr.bf16.mxu0 0
          %828 = vmatpush1.bf16.msra.mxu0 0
          %829 = vmatprep.subr.bf16.mxu0 0
          %830 = vmatpush1.bf16.msra.mxu0 0
          %831 = vmatprep.subr.bf16.mxu0 0
          %832 = vmatpush1.bf16.msra.mxu0 0
          %833 = vmatprep.subr.bf16.mxu0 0
          %834 = vmatpush1.bf16.msra.mxu0 0
          %835 = vmatprep.subr.bf16.mxu0 0
          %836 = vmatpush1.bf16.msra.mxu0 0
          %837 = vmatprep.subr.bf16.mxu0 0
          %838 = vmatpush1.bf16.msra.mxu0 0
          %839 = vmatprep.subr.bf16.mxu0 0
          %840 = vmatpush1.bf16.msra.mxu0 0
          %841 = vmatprep.subr.bf16.mxu0 0
          %842 = vmatpush1.bf16.msra.mxu0 0
          %843 = vmatprep.subr.bf16.mxu0 0
          %844 = vmatpush1.bf16.msra.mxu0 0
          %845 = vmatprep.subr.bf16.mxu0 0
          %846 = vmatpush1.bf16.msra.mxu0 0
          %847 = vmatprep.subr.bf16.mxu0 0
          %848 = vmatpush1.bf16.msra.mxu0 0
          %849 = vmatprep.subr.bf16.mxu0 0
          %850 = vmatpush1.bf16.msra.mxu0 0
          %851 = vmatprep.subr.bf16.mxu0 0
          %852 = vmatpush1.bf16.msra.mxu0 0
          %853 = vmatprep.subr.bf16.mxu0 0
          %854 = vmatpush1.bf16.msra.mxu0 0
          %855 = vmatprep.mubr.bf16.mxu0 0
          %856 = vmatmul.mubr.bf16.gmra.mrb[0].mxu0 %v695
          %v857 = vpop.f32.mrb[0].mxu0
          %v858 = vadd.f32 %v809, %v857
          %v859 = vpop.f32.mrb[0].mxu0
          %v860 = vpop.f32.mrb[0].mxu0
          %v861 = vpop.f32.mrb[0].mxu0
          %862 = vdwg.mxu0
          %v863 = vpack.c.bf16 %v732, %v732
          %vm864 = vcmask 60416
          %865 = vst.msk [vmem:[#allocation2] sm:$0xf] %vm864, %v863
          %v866 = vpack.c.bf16 %v795, %v795
          %867 = vst.msk [vmem:[#allocation3] sm:$0xf] %vm864, %v866
          %v868 = vpack.c.bf16 %v858, %v858
          %869 = vst.msk [vmem:[#allocation4] sm:$0xf] %vm864, %v868
          %s870 = scalar_lea.vmem %s1, 16
          %v871 = vld [vmem:[%s870] sm:$0xf]
          %v872 = vld [vmem:[%s870 + $0x4] sm:$0xf]
          %v873 = vld [vmem:[%s870 + $0x8] sm:$0xf]
          %v874 = vld [vmem:[%s870 + $0xc] sm:$0xf]
          %s875 = scalar_lea.vmem %s4, 1
          %v876 = vld [vmem:[%s875] sm:$0x1]
          %v878 = vlaneseq
          %v879 = vshrl.u32 %v878, 7
          %v880 = vsub.s32 0, %v879
          %v881 = vrot.slane %v876, %v880
          %v887 = vunpack.c.l.b16 %v871
          %v888 = vunpack.c.l.b16 %v872
          %v889 = vunpack.c.l.b16 %v873
          %v890 = vunpack.c.l.b16 %v874
          %v891 = vpack.c.b16 %v888, %v887
          %v892 = vpack.c.b16 %v890, %v889
          %895 = vmatprep.subr.bf16.mxu0 0
          %896 = vmatpush1.bf16.msra.mxu0 %v891
          %897 = vmatprep.subr.bf16.mxu0 0
          %898 = vmatpush1.bf16.msra.mxu0 %v892
          %899 = vmatprep.subr.bf16.mxu0 0
          %900 = vmatpush1.bf16.msra.mxu0 0
          %901 = vmatprep.subr.bf16.mxu0 0
          %902 = vmatpush1.bf16.msra.mxu0 0
          %903 = vmatprep.subr.bf16.mxu0 0
          %904 = vmatpush1.bf16.msra.mxu0 0
          %905 = vmatprep.subr.bf16.mxu0 0
          %906 = vmatpush1.bf16.msra.mxu0 0
          %907 = vmatprep.subr.bf16.mxu0 0
          %908 = vmatpush1.bf16.msra.mxu0 0
          %909 = vmatprep.subr.bf16.mxu0 0
          %910 = vmatpush1.bf16.msra.mxu0 0
          %911 = vmatprep.subr.bf16.mxu0 0
          %912 = vmatpush1.bf16.msra.mxu0 0
          %913 = vmatprep.subr.bf16.mxu0 0
          %914 = vmatpush1.bf16.msra.mxu0 0
          %915 = vmatprep.subr.bf16.mxu0 0
          %916 = vmatpush1.bf16.msra.mxu0 0
          %917 = vmatprep.subr.bf16.mxu0 0
          %918 = vmatpush1.bf16.msra.mxu0 0
          %919 = vmatprep.subr.bf16.mxu0 0
          %920 = vmatpush1.bf16.msra.mxu0 0
          %921 = vmatprep.subr.bf16.mxu0 0
          %922 = vmatpush1.bf16.msra.mxu0 0
          %923 = vmatprep.subr.bf16.mxu0 0
          %924 = vmatpush1.bf16.msra.mxu0 0
          %925 = vmatprep.subr.bf16.mxu0 0
          %926 = vmatpush1.bf16.msra.mxu0 0
          %927 = vmatprep.mubr.bf16.mxu0 0
          %928 = vmatmul.mubr.bf16.gmra.mrb[0].mxu0 %v695
          %v929 = vpop.f32.mrb[0].mxu0
          %v930 = vadd.f32 %v881, %v929
          %v931 = vpop.f32.mrb[0].mxu0
          %v932 = vpop.f32.mrb[0].mxu0
          %v933 = vpop.f32.mrb[0].mxu0
          %934 = vdwg.mxu0
          %s935 = scalar_lea.vmem %s2, 16
          %v936 = vld [vmem:[%s935] sm:$0xf]
          %v937 = vld [vmem:[%s935 + $0x4] sm:$0xf]
          %v938 = vld [vmem:[%s935 + $0x8] sm:$0xf]
          %v939 = vld [vmem:[%s935 + $0xc] sm:$0xf]
          %s940 = scalar_lea.vmem %s5, 1
          %v941 = vld [vmem:[%s940] sm:$0x1]
          %v943 = vlaneseq
          %v944 = vshrl.u32 %v943, 7
          %v945 = vsub.s32 0, %v944
          %v946 = vrot.slane %v941, %v945
          %v952 = vunpack.c.l.b16 %v936
          %v953 = vunpack.c.l.b16 %v937
          %v954 = vunpack.c.l.b16 %v938
          %v955 = vunpack.c.l.b16 %v939
          %v956 = vpack.c.b16 %v953, %v952
          %v957 = vpack.c.b16 %v955, %v954
          %960 = vmatprep.subr.bf16.mxu0 0
          %961 = vmatpush1.bf16.msra.mxu0 %v956
          %962 = vmatprep.subr.bf16.mxu0 0
          %963 = vmatpush1.bf16.msra.mxu0 %v957
          %964 = vmatprep.subr.bf16.mxu0 0
          %965 = vmatpush1.bf16.msra.mxu0 0
          %966 = vmatprep.subr.bf16.mxu0 0
          %967 = vmatpush1.bf16.msra.mxu0 0
          %968 = vmatprep.subr.bf16.mxu0 0
          %969 = vmatpush1.bf16.msra.mxu0 0
          %970 = vmatprep.subr.bf16.mxu0 0
          %971 = vmatpush1.bf16.msra.mxu0 0
          %972 = vmatprep.subr.bf16.mxu0 0
          %973 = vmatpush1.bf16.msra.mxu0 0
          %974 = vmatprep.subr.bf16.mxu0 0
          %975 = vmatpush1.bf16.msra.mxu0 0
          %976 = vmatprep.subr.bf16.mxu0 0
          %977 = vmatpush1.bf16.msra.mxu0 0
          %978 = vmatprep.subr.bf16.mxu0 0
          %979 = vmatpush1.bf16.msra.mxu0 0
          %980 = vmatprep.subr.bf16.mxu0 0
          %981 = vmatpush1.bf16.msra.mxu0 0
          %982 = vmatprep.subr.bf16.mxu0 0
          %983 = vmatpush1.bf16.msra.mxu0 0
          %984 = vmatprep.subr.bf16.mxu0 0
          %985 = vmatpush1.bf16.msra.mxu0 0
          %986 = vmatprep.subr.bf16.mxu0 0
          %987 = vmatpush1.bf16.msra.mxu0 0
          %988 = vmatprep.subr.bf16.mxu0 0
          %989 = vmatpush1.bf16.msra.mxu0 0
          %990 = vmatprep.subr.bf16.mxu0 0
          %991 = vmatpush1.bf16.msra.mxu0 0
          %992 = vmatprep.mubr.bf16.mxu0 0
          %993 = vmatmul.mubr.bf16.gmra.mrb[0].mxu0 %v695
          %v994 = vpop.f32.mrb[0].mxu0
          %v995 = vadd.f32 %v946, %v994
          %v996 = vpop.f32.mrb[0].mxu0
          %v997 = vpop.f32.mrb[0].mxu0
          %v998 = vpop.f32.mrb[0].mxu0
          %999 = vdwg.mxu0
          %s1000 = scalar_lea.vmem %s3, 16
          %v1001 = vld [vmem:[%s1000] sm:$0xf]
          %v1002 = vld [vmem:[%s1000 + $0x4] sm:$0xf]
          %v1003 = vld [vmem:[%s1000 + $0x8] sm:$0xf]
          %v1004 = vld [vmem:[%s1000 + $0xc] sm:$0xf]
          %s1005 = scalar_lea.vmem %s6, 1
          %v1006 = vld [vmem:[%s1005] sm:$0x1]
          %v1008 = vlaneseq
          %v1009 = vshrl.u32 %v1008, 7
          %v1010 = vsub.s32 0, %v1009
          %v1011 = vrot.slane %v1006, %v1010
          %v1017 = vunpack.c.l.b16 %v1001
          %v1018 = vunpack.c.l.b16 %v1002
          %v1019 = vunpack.c.l.b16 %v1003
          %v1020 = vunpack.c.l.b16 %v1004
          %v1021 = vpack.c.b16 %v1018, %v1017
          %v1022 = vpack.c.b16 %v1020, %v1019
          %1025 = vmatprep.subr.bf16.mxu0 0
          %1026 = vmatpush1.bf16.msra.mxu0 %v1021
          %1027 = vmatprep.subr.bf16.mxu0 0
          %1028 = vmatpush1.bf16.msra.mxu0 %v1022
          %1029 = vmatprep.subr.bf16.mxu0 0
          %1030 = vmatpush1.bf16.msra.mxu0 0
          %1031 = vmatprep.subr.bf16.mxu0 0
          %1032 = vmatpush1.bf16.msra.mxu0 0
          %1033 = vmatprep.subr.bf16.mxu0 0
          %1034 = vmatpush1.bf16.msra.mxu0 0
          %1035 = vmatprep.subr.bf16.mxu0 0
          %1036 = vmatpush1.bf16.msra.mxu0 0
          %1037 = vmatprep.subr.bf16.mxu0 0
          %1038 = vmatpush1.bf16.msra.mxu0 0
          %1039 = vmatprep.subr.bf16.mxu0 0
          %1040 = vmatpush1.bf16.msra.mxu0 0
          %1041 = vmatprep.subr.bf16.mxu0 0
          %1042 = vmatpush1.bf16.msra.mxu0 0
          %1043 = vmatprep.subr.bf16.mxu0 0
          %1044 = vmatpush1.bf16.msra.mxu0 0
          %1045 = vmatprep.subr.bf16.mxu0 0
          %1046 = vmatpush1.bf16.msra.mxu0 0
          %1047 = vmatprep.subr.bf16.mxu0 0
          %1048 = vmatpush1.bf16.msra.mxu0 0
          %1049 = vmatprep.subr.bf16.mxu0 0
          %1050 = vmatpush1.bf16.msra.mxu0 0
          %1051 = vmatprep.subr.bf16.mxu0 0
          %1052 = vmatpush1.bf16.msra.mxu0 0
          %1053 = vmatprep.subr.bf16.mxu0 0
          %1054 = vmatpush1.bf16.msra.mxu0 0
          %1055 = vmatprep.subr.bf16.mxu0 0
          %1056 = vmatpush1.bf16.msra.mxu0 0
          %1057 = vmatprep.mubr.bf16.mxu0 0
          %1058 = vmatmul.mubr.bf16.gmra.mrb[0].mxu0 %v695
          %v1059 = vpop.f32.mrb[0].mxu0
          %v1060 = vadd.f32 %v1011, %v1059
          %v1061 = vpop.f32.mrb[0].mxu0
          %v1062 = vpop.f32.mrb[0].mxu0
          %v1063 = vpop.f32.mrb[0].mxu0
          %1064 = vdwg.mxu0
          %v1065 = vpack.c.bf16 %v930, %v930
          %s1066 = scalar_lea.vmem [#allocation2], 4
          %1067 = vst.msk [vmem:[%s1066] sm:$0xf] %vm864, %v1065
          %v1068 = vpack.c.bf16 %v995, %v995
          %s1069 = scalar_lea.vmem [#allocation3], 4
          %1070 = vst.msk [vmem:[%s1069] sm:$0xf] %vm864, %v1068
          %v1071 = vpack.c.bf16 %v1060, %v1060
          %s1072 = scalar_lea.vmem [#allocation4], 4
          %1073 = vst.msk [vmem:[%s1072] sm:$0xf] %vm864, %v1071
          %s1074 = scalar_lea.vmem %s1, 32
          %v1075 = vld [vmem:[%s1074] sm:$0xf]
          %v1076 = vld [vmem:[%s1074 + $0x4] sm:$0xf]
          %v1077 = vld [vmem:[%s1074 + $0x8] sm:$0xf]
          %v1078 = vld [vmem:[%s1074 + $0xc] sm:$0xf]
          %s1079 = scalar_lea.vmem %s4, 2
          %v1080 = vld [vmem:[%s1079] sm:$0x1]
          %v1082 = vlaneseq
          %v1083 = vshrl.u32 %v1082, 7
          %v1084 = vsub.s32 0, %v1083
          %v1085 = vrot.slane %v1080, %v1084
          %v1091 = vunpack.c.l.b16 %v1075
          %v1092 = vunpack.c.l.b16 %v1076
          %v1093 = vunpack.c.l.b16 %v1077
          %v1094 = vunpack.c.l.b16 %v1078
          %v1095 = vpack.c.b16 %v1092, %v1091
          %v1096 = vpack.c.b16 %v1094, %v1093
          %1099 = vmatprep.subr.bf16.mxu0 0
          %1100 = vmatpush1.bf16.msra.mxu0 %v1095
          %1101 = vmatprep.subr.bf16.mxu0 0
          %1102 = vmatpush1.bf16.msra.mxu0 %v1096
          %1103 = vmatprep.subr.bf16.mxu0 0
          %1104 = vmatpush1.bf16.msra.mxu0 0
          %1105 = vmatprep.subr.bf16.mxu0 0
          %1106 = vmatpush1.bf16.msra.mxu0 0
          %1107 = vmatprep.subr.bf16.mxu0 0
          %1108 = vmatpush1.bf16.msra.mxu0 0
          %1109 = vmatprep.subr.bf16.mxu0 0
          %1110 = vmatpush1.bf16.msra.mxu0 0
          %1111 = vmatprep.subr.bf16.mxu0 0
          %1112 = vmatpush1.bf16.msra.mxu0 0
          %1113 = vmatprep.subr.bf16.mxu0 0
          %1114 = vmatpush1.bf16.msra.mxu0 0
          %1115 = vmatprep.subr.bf16.mxu0 0
          %1116 = vmatpush1.bf16.msra.mxu0 0
          %1117 = vmatprep.subr.bf16.mxu0 0
          %1118 = vmatpush1.bf16.msra.mxu0 0
          %1119 = vmatprep.subr.bf16.mxu0 0
          %1120 = vmatpush1.bf16.msra.mxu0 0
          %1121 = vmatprep.subr.bf16.mxu0 0
          %1122 = vmatpush1.bf16.msra.mxu0 0
          %1123 = vmatprep.subr.bf16.mxu0 0
          %1124 = vmatpush1.bf16.msra.mxu0 0
          %1125 = vmatprep.subr.bf16.mxu0 0
          %1126 = vmatpush1.bf16.msra.mxu0 0
          %1127 = vmatprep.subr.bf16.mxu0 0
          %1128 = vmatpush1.bf16.msra.mxu0 0
          %1129 = vmatprep.subr.bf16.mxu0 0
          %1130 = vmatpush1.bf16.msra.mxu0 0
          %1131 = vmatprep.mubr.bf16.mxu0 0
          %1132 = vmatmul.mubr.bf16.gmra.mrb[0].mxu0 %v695
          %v1133 = vpop.f32.mrb[0].mxu0
          %v1134 = vadd.f32 %v1085, %v1133
          %v1135 = vpop.f32.mrb[0].mxu0
          %v1136 = vpop.f32.mrb[0].mxu0
          %v1137 = vpop.f32.mrb[0].mxu0
          %1138 = vdwg.mxu0
          %s1139 = scalar_lea.vmem %s2, 32
          %v1140 = vld [vmem:[%s1139] sm:$0xf]
          %v1141 = vld [vmem:[%s1139 + $0x4] sm:$0xf]
          %v1142 = vld [vmem:[%s1139 + $0x8] sm:$0xf]
          %v1143 = vld [vmem:[%s1139 + $0xc] sm:$0xf]
          %s1144 = scalar_lea.vmem %s5, 2
          %v1145 = vld [vmem:[%s1144] sm:$0x1]
          %v1147 = vlaneseq
          %v1148 = vshrl.u32 %v1147, 7
          %v1149 = vsub.s32 0, %v1148
          %v1150 = vrot.slane %v1145, %v1149
          %v1156 = vunpack.c.l.b16 %v1140
          %v1157 = vunpack.c.l.b16 %v1141
          %v1158 = vunpack.c.l.b16 %v1142
          %v1159 = vunpack.c.l.b16 %v1143
          %v1160 = vpack.c.b16 %v1157, %v1156
          %v1161 = vpack.c.b16 %v1159, %v1158
          %1164 = vmatprep.subr.bf16.mxu0 0
          %1165 = vmatpush1.bf16.msra.mxu0 %v1160
          %1166 = vmatprep.subr.bf16.mxu0 0
          %1167 = vmatpush1.bf16.msra.mxu0 %v1161
          %1168 = vmatprep.subr.bf16.mxu0 0
          %1169 = vmatpush1.bf16.msra.mxu0 0
          %1170 = vmatprep.subr.bf16.mxu0 0
          %1171 = vmatpush1.bf16.msra.mxu0 0
          %1172 = vmatprep.subr.bf16.mxu0 0
          %1173 = vmatpush1.bf16.msra.mxu0 0
          %1174 = vmatprep.subr.bf16.mxu0 0
          %1175 = vmatpush1.bf16.msra.mxu0 0
          %1176 = vmatprep.subr.bf16.mxu0 0
          %1177 = vmatpush1.bf16.msra.mxu0 0
          %1178 = vmatprep.subr.bf16.mxu0 0
          %1179 = vmatpush1.bf16.msra.mxu0 0
          %1180 = vmatprep.subr.bf16.mxu0 0
          %1181 = vmatpush1.bf16.msra.mxu0 0
          %1182 = vmatprep.subr.bf16.mxu0 0
          %1183 = vmatpush1.bf16.msra.mxu0 0
          %1184 = vmatprep.subr.bf16.mxu0 0
          %1185 = vmatpush1.bf16.msra.mxu0 0
          %1186 = vmatprep.subr.bf16.mxu0 0
          %1187 = vmatpush1.bf16.msra.mxu0 0
          %1188 = vmatprep.subr.bf16.mxu0 0
          %1189 = vmatpush1.bf16.msra.mxu0 0
          %1190 = vmatprep.subr.bf16.mxu0 0
          %1191 = vmatpush1.bf16.msra.mxu0 0
          %1192 = vmatprep.subr.bf16.mxu0 0
          %1193 = vmatpush1.bf16.msra.mxu0 0
          %1194 = vmatprep.subr.bf16.mxu0 0
          %1195 = vmatpush1.bf16.msra.mxu0 0
          %1196 = vmatprep.mubr.bf16.mxu0 0
          %1197 = vmatmul.mubr.bf16.gmra.mrb[0].mxu0 %v695
          %v1198 = vpop.f32.mrb[0].mxu0
          %v1199 = vadd.f32 %v1150, %v1198
          %v1200 = vpop.f32.mrb[0].mxu0
          %v1201 = vpop.f32.mrb[0].mxu0
          %v1202 = vpop.f32.mrb[0].mxu0
          %1203 = vdwg.mxu0
          %s1204 = scalar_lea.vmem %s3, 32
          %v1205 = vld [vmem:[%s1204] sm:$0xf]
          %v1206 = vld [vmem:[%s1204 + $0x4] sm:$0xf]
          %v1207 = vld [vmem:[%s1204 + $0x8] sm:$0xf]
          %v1208 = vld [vmem:[%s1204 + $0xc] sm:$0xf]
          %s1209 = scalar_lea.vmem %s6, 2
          %v1210 = vld [vmem:[%s1209] sm:$0x1]
          %v1212 = vlaneseq
          %v1213 = vshrl.u32 %v1212, 7
          %v1214 = vsub.s32 0, %v1213
          %v1215 = vrot.slane %v1210, %v1214
          %v1221 = vunpack.c.l.b16 %v1205
          %v1222 = vunpack.c.l.b16 %v1206
          %v1223 = vunpack.c.l.b16 %v1207
          %v1224 = vunpack.c.l.b16 %v1208
          %v1225 = vpack.c.b16 %v1222, %v1221
          %v1226 = vpack.c.b16 %v1224, %v1223
          %1229 = vmatprep.subr.bf16.mxu0 0
          %1230 = vmatpush1.bf16.msra.mxu0 %v1225
          %1231 = vmatprep.subr.bf16.mxu0 0
          %1232 = vmatpush1.bf16.msra.mxu0 %v1226
          %1233 = vmatprep.subr.bf16.mxu0 0
          %1234 = vmatpush1.bf16.msra.mxu0 0
          %1235 = vmatprep.subr.bf16.mxu0 0
          %1236 = vmatpush1.bf16.msra.mxu0 0
          %1237 = vmatprep.subr.bf16.mxu0 0
          %1238 = vmatpush1.bf16.msra.mxu0 0
          %1239 = vmatprep.subr.bf16.mxu0 0
          %1240 = vmatpush1.bf16.msra.mxu0 0
          %1241 = vmatprep.subr.bf16.mxu0 0
          %1242 = vmatpush1.bf16.msra.mxu0 0
          %1243 = vmatprep.subr.bf16.mxu0 0
          %1244 = vmatpush1.bf16.msra.mxu0 0
          %1245 = vmatprep.subr.bf16.mxu0 0
          %1246 = vmatpush1.bf16.msra.mxu0 0
          %1247 = vmatprep.subr.bf16.mxu0 0
          %1248 = vmatpush1.bf16.msra.mxu0 0
          %1249 = vmatprep.subr.bf16.mxu0 0
          %1250 = vmatpush1.bf16.msra.mxu0 0
          %1251 = vmatprep.subr.bf16.mxu0 0
          %1252 = vmatpush1.bf16.msra.mxu0 0
          %1253 = vmatprep.subr.bf16.mxu0 0
          %1254 = vmatpush1.bf16.msra.mxu0 0
          %1255 = vmatprep.subr.bf16.mxu0 0
          %1256 = vmatpush1.bf16.msra.mxu0 0
          %1257 = vmatprep.subr.bf16.mxu0 0
          %1258 = vmatpush1.bf16.msra.mxu0 0
          %1259 = vmatprep.subr.bf16.mxu0 0
          %1260 = vmatpush1.bf16.msra.mxu0 0
          %1261 = vmatprep.mubr.bf16.mxu0 0
          %1262 = vmatmul.mubr.bf16.gmra.mrb[0].mxu0 %v695
          %v1263 = vpop.f32.mrb[0].mxu0
          %v1264 = vadd.f32 %v1215, %v1263
          %v1265 = vpop.f32.mrb[0].mxu0
          %v1266 = vpop.f32.mrb[0].mxu0
          %v1267 = vpop.f32.mrb[0].mxu0
          %1268 = vdwg.mxu0
          %v1269 = vpack.c.bf16 %v1134, %v1134
          %s1270 = scalar_lea.vmem [#allocation2], 8
          %1271 = vst.msk [vmem:[%s1270] sm:$0xf] %vm864, %v1269
          %v1272 = vpack.c.bf16 %v1199, %v1199
          %s1273 = scalar_lea.vmem [#allocation3], 8
          %1274 = vst.msk [vmem:[%s1273] sm:$0xf] %vm864, %v1272
          %v1275 = vpack.c.bf16 %v1264, %v1264
          %s1276 = scalar_lea.vmem [#allocation4], 8
          %1277 = vst.msk [vmem:[%s1276] sm:$0xf] %vm864, %v1275
          %s1278 = scalar_lea.vmem %s1, 48
          %v1279 = vld [vmem:[%s1278] sm:$0xf]
          %v1280 = vld [vmem:[%s1278 + $0x4] sm:$0xf]
          %v1281 = vld [vmem:[%s1278 + $0x8] sm:$0xf]
          %v1282 = vld [vmem:[%s1278 + $0xc] sm:$0xf]
          %s1283 = scalar_lea.vmem %s4, 3
          %v1284 = vld [vmem:[%s1283] sm:$0x1]
          %v1286 = vlaneseq
          %v1287 = vshrl.u32 %v1286, 7
          %v1288 = vsub.s32 0, %v1287
          %v1289 = vrot.slane %v1284, %v1288
          %v1295 = vunpack.c.l.b16 %v1279
          %v1296 = vunpack.c.l.b16 %v1280
          %v1297 = vunpack.c.l.b16 %v1281
          %v1298 = vunpack.c.l.b16 %v1282
          %v1299 = vpack.c.b16 %v1296, %v1295
          %v1300 = vpack.c.b16 %v1298, %v1297
          %1303 = vmatprep.subr.bf16.mxu0 0
          %1304 = vmatpush1.bf16.msra.mxu0 %v1299
          %1305 = vmatprep.subr.bf16.mxu0 0
          %1306 = vmatpush1.bf16.msra.mxu0 %v1300
          %1307 = vmatprep.subr.bf16.mxu0 0
          %1308 = vmatpush1.bf16.msra.mxu0 0
          %1309 = vmatprep.subr.bf16.mxu0 0
          %1310 = vmatpush1.bf16.msra.mxu0 0
          %1311 = vmatprep.subr.bf16.mxu0 0
          %1312 = vmatpush1.bf16.msra.mxu0 0
          %1313 = vmatprep.subr.bf16.mxu0 0
          %1314 = vmatpush1.bf16.msra.mxu0 0
          %1315 = vmatprep.subr.bf16.mxu0 0
          %1316 = vmatpush1.bf16.msra.mxu0 0
          %1317 = vmatprep.subr.bf16.mxu0 0
          %1318 = vmatpush1.bf16.msra.mxu0 0
          %1319 = vmatprep.subr.bf16.mxu0 0
          %1320 = vmatpush1.bf16.msra.mxu0 0
          %1321 = vmatprep.subr.bf16.mxu0 0
          %1322 = vmatpush1.bf16.msra.mxu0 0
          %1323 = vmatprep.subr.bf16.mxu0 0
          %1324 = vmatpush1.bf16.msra.mxu0 0
          %1325 = vmatprep.subr.bf16.mxu0 0
          %1326 = vmatpush1.bf16.msra.mxu0 0
          %1327 = vmatprep.subr.bf16.mxu0 0
          %1328 = vmatpush1.bf16.msra.mxu0 0
          %1329 = vmatprep.subr.bf16.mxu0 0
          %1330 = vmatpush1.bf16.msra.mxu0 0
          %1331 = vmatprep.subr.bf16.mxu0 0
          %1332 = vmatpush1.bf16.msra.mxu0 0
          %1333 = vmatprep.subr.bf16.mxu0 0
          %1334 = vmatpush1.bf16.msra.mxu0 0
          %1335 = vmatprep.mubr.bf16.mxu0 0
          %1336 = vmatmul.mubr.bf16.gmra.mrb[0].mxu0 %v695
          %v1337 = vpop.f32.mrb[0].mxu0
          %v1338 = vadd.f32 %v1289, %v1337
          %v1339 = vpop.f32.mrb[0].mxu0
          %v1340 = vpop.f32.mrb[0].mxu0
          %v1341 = vpop.f32.mrb[0].mxu0
          %1342 = vdwg.mxu0
          %s1343 = scalar_lea.vmem %s2, 48
          %v1344 = vld [vmem:[%s1343] sm:$0xf]
          %v1345 = vld [vmem:[%s1343 + $0x4] sm:$0xf]
          %v1346 = vld [vmem:[%s1343 + $0x8] sm:$0xf]
          %v1347 = vld [vmem:[%s1343 + $0xc] sm:$0xf]
          %s1348 = scalar_lea.vmem %s5, 3
          %v1349 = vld [vmem:[%s1348] sm:$0x1]
          %v1351 = vlaneseq
          %v1352 = vshrl.u32 %v1351, 7
          %v1353 = vsub.s32 0, %v1352
          %v1354 = vrot.slane %v1349, %v1353
          %v1360 = vunpack.c.l.b16 %v1344
          %v1361 = vunpack.c.l.b16 %v1345
          %v1362 = vunpack.c.l.b16 %v1346
          %v1363 = vunpack.c.l.b16 %v1347
          %v1364 = vpack.c.b16 %v1361, %v1360
          %v1365 = vpack.c.b16 %v1363, %v1362
          %1368 = vmatprep.subr.bf16.mxu0 0
          %1369 = vmatpush1.bf16.msra.mxu0 %v1364
          %1370 = vmatprep.subr.bf16.mxu0 0
          %1371 = vmatpush1.bf16.msra.mxu0 %v1365
          %1372 = vmatprep.subr.bf16.mxu0 0
          %1373 = vmatpush1.bf16.msra.mxu0 0
          %1374 = vmatprep.subr.bf16.mxu0 0
          %1375 = vmatpush1.bf16.msra.mxu0 0
          %1376 = vmatprep.subr.bf16.mxu0 0
          %1377 = vmatpush1.bf16.msra.mxu0 0
          %1378 = vmatprep.subr.bf16.mxu0 0
          %1379 = vmatpush1.bf16.msra.mxu0 0
          %1380 = vmatprep.subr.bf16.mxu0 0
          %1381 = vmatpush1.bf16.msra.mxu0 0
          %1382 = vmatprep.subr.bf16.mxu0 0
          %1383 = vmatpush1.bf16.msra.mxu0 0
          %1384 = vmatprep.subr.bf16.mxu0 0
          %1385 = vmatpush1.bf16.msra.mxu0 0
          %1386 = vmatprep.subr.bf16.mxu0 0
          %1387 = vmatpush1.bf16.msra.mxu0 0
          %1388 = vmatprep.subr.bf16.mxu0 0
          %1389 = vmatpush1.bf16.msra.mxu0 0
          %1390 = vmatprep.subr.bf16.mxu0 0
          %1391 = vmatpush1.bf16.msra.mxu0 0
          %1392 = vmatprep.subr.bf16.mxu0 0
          %1393 = vmatpush1.bf16.msra.mxu0 0
          %1394 = vmatprep.subr.bf16.mxu0 0
          %1395 = vmatpush1.bf16.msra.mxu0 0
          %1396 = vmatprep.subr.bf16.mxu0 0
          %1397 = vmatpush1.bf16.msra.mxu0 0
          %1398 = vmatprep.subr.bf16.mxu0 0
          %1399 = vmatpush1.bf16.msra.mxu0 0
          %1400 = vmatprep.mubr.bf16.mxu0 0
          %1401 = vmatmul.mubr.bf16.gmra.mrb[0].mxu0 %v695
          %v1402 = vpop.f32.mrb[0].mxu0
          %v1403 = vadd.f32 %v1354, %v1402
          %v1404 = vpop.f32.mrb[0].mxu0
          %v1405 = vpop.f32.mrb[0].mxu0
          %v1406 = vpop.f32.mrb[0].mxu0
          %1407 = vdwg.mxu0
          %s1408 = scalar_lea.vmem %s3, 48
          %v1409 = vld [vmem:[%s1408] sm:$0xf]
          %v1410 = vld [vmem:[%s1408 + $0x4] sm:$0xf]
          %v1411 = vld [vmem:[%s1408 + $0x8] sm:$0xf]
          %v1412 = vld [vmem:[%s1408 + $0xc] sm:$0xf]
          %s1413 = scalar_lea.vmem %s6, 3
          %v1414 = vld [vmem:[%s1413] sm:$0x1]
          %v1416 = vlaneseq
          %v1417 = vshrl.u32 %v1416, 7
          %v1418 = vsub.s32 0, %v1417
          %v1419 = vrot.slane %v1414, %v1418
          %v1425 = vunpack.c.l.b16 %v1409
          %v1426 = vunpack.c.l.b16 %v1410
          %v1427 = vunpack.c.l.b16 %v1411
          %v1428 = vunpack.c.l.b16 %v1412
          %v1429 = vpack.c.b16 %v1426, %v1425
          %v1430 = vpack.c.b16 %v1428, %v1427
          %1433 = vmatprep.subr.bf16.mxu0 0
          %1434 = vmatpush1.bf16.msra.mxu0 %v1429
          %1435 = vmatprep.subr.bf16.mxu0 0
          %1436 = vmatpush1.bf16.msra.mxu0 %v1430
          %1437 = vmatprep.subr.bf16.mxu0 0
          %1438 = vmatpush1.bf16.msra.mxu0 0
          %1439 = vmatprep.subr.bf16.mxu0 0
          %1440 = vmatpush1.bf16.msra.mxu0 0
          %1441 = vmatprep.subr.bf16.mxu0 0
          %1442 = vmatpush1.bf16.msra.mxu0 0
          %1443 = vmatprep.subr.bf16.mxu0 0
          %1444 = vmatpush1.bf16.msra.mxu0 0
          %1445 = vmatprep.subr.bf16.mxu0 0
          %1446 = vmatpush1.bf16.msra.mxu0 0
          %1447 = vmatprep.subr.bf16.mxu0 0
          %1448 = vmatpush1.bf16.msra.mxu0 0
          %1449 = vmatprep.subr.bf16.mxu0 0
          %1450 = vmatpush1.bf16.msra.mxu0 0
          %1451 = vmatprep.subr.bf16.mxu0 0
          %1452 = vmatpush1.bf16.msra.mxu0 0
          %1453 = vmatprep.subr.bf16.mxu0 0
          %1454 = vmatpush1.bf16.msra.mxu0 0
          %1455 = vmatprep.subr.bf16.mxu0 0
          %1456 = vmatpush1.bf16.msra.mxu0 0
          %1457 = vmatprep.subr.bf16.mxu0 0
          %1458 = vmatpush1.bf16.msra.mxu0 0
          %1459 = vmatprep.subr.bf16.mxu0 0
          %1460 = vmatpush1.bf16.msra.mxu0 0
          %1461 = vmatprep.subr.bf16.mxu0 0
          %1462 = vmatpush1.bf16.msra.mxu0 0
          %1463 = vmatprep.subr.bf16.mxu0 0
          %1464 = vmatpush1.bf16.msra.mxu0 0
          %1465 = vmatprep.mubr.bf16.mxu0 0
          %1466 = vmatmul.mubr.bf16.gmra.mrb[0].mxu0 %v695
          %v1467 = vpop.f32.mrb[0].mxu0
          %v1468 = vadd.f32 %v1419, %v1467
          %v1469 = vpop.f32.mrb[0].mxu0
          %v1470 = vpop.f32.mrb[0].mxu0
          %v1471 = vpop.f32.mrb[0].mxu0
          %1472 = vdwg.mxu0
          %v1473 = vpack.c.bf16 %v1338, %v1338
          %s1474 = scalar_lea.vmem [#allocation2], 12
          %1475 = vst.msk [vmem:[%s1474] sm:$0xf] %vm864, %v1473
          %v1476 = vpack.c.bf16 %v1403, %v1403
          %s1477 = scalar_lea.vmem [#allocation3], 12
          %1478 = vst.msk [vmem:[%s1477] sm:$0xf] %vm864, %v1476
          %v1479 = vpack.c.bf16 %v1468, %v1468
          %s1480 = scalar_lea.vmem [#allocation4], 12
          %1481 = vst.msk [vmem:[%s1480] sm:$0xf] %vm864, %v1479
          %v1482 = vld [vmem:[#allocation2] sm:$0xf]
          %v1483 = vld [vmem:[#allocation2 + $0x4] sm:$0xf]
          %v1484 = vld [vmem:[#allocation2 + $0x8] sm:$0xf]
          %v1485 = vld [vmem:[#allocation2 + $0xc] sm:$0xf]
          %v1486 = vld [vmem:[#allocation3] sm:$0xf]
          %v1487 = vld [vmem:[#allocation3 + $0x4] sm:$0xf]
          %v1488 = vld [vmem:[#allocation3 + $0x8] sm:$0xf]
          %v1489 = vld [vmem:[#allocation3 + $0xc] sm:$0xf]
          %v1490 = vld [vmem:[#allocation4] sm:$0xf]
          %v1491 = vld [vmem:[#allocation4 + $0x4] sm:$0xf]
          %v1492 = vld [vmem:[#allocation4 + $0x8] sm:$0xf]
          %v1493 = vld [vmem:[#allocation4 + $0xc] sm:$0xf]
          %vm1494 = vcmask 64512
          %v1496 = vsel %vm1494, %v1482, 0
          %v1499 = vsel %vm1494, %v1486, 0
          %1501 = vmatprep.subr.bf16.mxu0 0
          %1502 = vmatpush1.bf16.xpose.msra.mxu0 %v1499
          %1503 = vmatprep.subr.bf16.mxu0 0
          %1504 = vmatpush1.bf16.xpose.msra.mxu0 0
          %1505 = vmatprep.subr.bf16.mxu0 0
          %1506 = vmatpush1.bf16.xpose.msra.mxu0 0
          %1507 = vmatprep.subr.bf16.mxu0 0
          %1508 = vmatpush1.bf16.xpose.msra.mxu0 0
          %1509 = vmatprep.subr.bf16.mxu0 0
          %1510 = vmatpush1.bf16.xpose.msra.mxu0 0
          %1511 = vmatprep.subr.bf16.mxu0 0
          %1512 = vmatpush1.bf16.xpose.msra.mxu0 0
          %1513 = vmatprep.subr.bf16.mxu0 0
          %1514 = vmatpush1.bf16.xpose.msra.mxu0 0
          %1515 = vmatprep.subr.bf16.mxu0 0
          %1516 = vmatpush1.bf16.xpose.msra.mxu0 0
          %1517 = vmatprep.subr.bf16.mxu0 0
          %1518 = vmatpush1.bf16.xpose.msra.mxu0 0
          %1519 = vmatprep.subr.bf16.mxu0 0
          %1520 = vmatpush1.bf16.xpose.msra.mxu0 0
          %1521 = vmatprep.subr.bf16.mxu0 0
          %1522 = vmatpush1.bf16.xpose.msra.mxu0 0
          %1523 = vmatprep.subr.bf16.mxu0 0
          %1524 = vmatpush1.bf16.xpose.msra.mxu0 0
          %1525 = vmatprep.subr.bf16.mxu0 0
          %1526 = vmatpush1.bf16.xpose.msra.mxu0 0
          %1527 = vmatprep.subr.bf16.mxu0 0
          %1528 = vmatpush1.bf16.xpose.msra.mxu0 0
          %1529 = vmatprep.subr.bf16.mxu0 0
          %1530 = vmatpush1.bf16.xpose.msra.mxu0 0
          %1531 = vmatprep.subr.bf16.mxu0 0
          %1532 = vmatpush1.bf16.xpose.msra.mxu0 0
          %1533 = vmatprep.mubr.bf16.mxu0 0
          %1534 = vmatmul.mubr.bf16.gmra.mrb[0].mxu0 %v1496
          %v1535 = vpop.f32.mrb[0].mxu0
          %v1536 = vadd.f32 0.0, %v1535
          %v1537 = vpop.f32.mrb[0].mxu0
          %v1538 = vpop.f32.mrb[0].mxu0
          %v1539 = vpop.f32.mrb[0].mxu0
          %1540 = vdwg.mxu0
          %v1542 = vsel %vm1494, %v1483, 0
          %v1545 = vsel %vm1494, %v1487, 0
          %1547 = vmatprep.subr.bf16.mxu0 0
          %1548 = vmatpush1.bf16.xpose.msra.mxu0 %v1545
          %1549 = vmatprep.subr.bf16.mxu0 0
          %1550 = vmatpush1.bf16.xpose.msra.mxu0 0
          %1551 = vmatprep.subr.bf16.mxu0 0
          %1552 = vmatpush1.bf16.xpose.msra.mxu0 0
          %1553 = vmatprep.subr.bf16.mxu0 0
          %1554 = vmatpush1.bf16.xpose.msra.mxu0 0
          %1555 = vmatprep.subr.bf16.mxu0 0
          %1556 = vmatpush1.bf16.xpose.msra.mxu0 0
          %1557 = vmatprep.subr.bf16.mxu0 0
          %1558 = vmatpush1.bf16.xpose.msra.mxu0 0
          %1559 = vmatprep.subr.bf16.mxu0 0
          %1560 = vmatpush1.bf16.xpose.msra.mxu0 0
          %1561 = vmatprep.subr.bf16.mxu0 0
          %1562 = vmatpush1.bf16.xpose.msra.mxu0 0
          %1563 = vmatprep.subr.bf16.mxu0 0
          %1564 = vmatpush1.bf16.xpose.msra.mxu0 0
          %1565 = vmatprep.subr.bf16.mxu0 0
          %1566 = vmatpush1.bf16.xpose.msra.mxu0 0
          %1567 = vmatprep.subr.bf16.mxu0 0
          %1568 = vmatpush1.bf16.xpose.msra.mxu0 0
          %1569 = vmatprep.subr.bf16.mxu0 0
          %1570 = vmatpush1.bf16.xpose.msra.mxu0 0
          %1571 = vmatprep.subr.bf16.mxu0 0
          %1572 = vmatpush1.bf16.xpose.msra.mxu0 0
          %1573 = vmatprep.subr.bf16.mxu0 0
          %1574 = vmatpush1.bf16.xpose.msra.mxu0 0
          %1575 = vmatprep.subr.bf16.mxu0 0
          %1576 = vmatpush1.bf16.xpose.msra.mxu0 0
          %1577 = vmatprep.subr.bf16.mxu0 0
          %1578 = vmatpush1.bf16.xpose.msra.mxu0 0
          %1579 = vmatprep.mubr.bf16.mxu0 0
          %1580 = vmatmul.mubr.bf16.gmra.mrb[0].mxu0 %v1542
          %v1581 = vpop.f32.mrb[0].mxu0
          %v1582 = vadd.f32 0.0, %v1581
          %v1583 = vpop.f32.mrb[0].mxu0
          %v1584 = vpop.f32.mrb[0].mxu0
          %v1585 = vpop.f32.mrb[0].mxu0
          %1586 = vdwg.mxu0
          %v1588 = vsel %vm1494, %v1484, 0
          %v1591 = vsel %vm1494, %v1488, 0
          %1593 = vmatprep.subr.bf16.mxu0 0
          %1594 = vmatpush1.bf16.xpose.msra.mxu0 %v1591
          %1595 = vmatprep.subr.bf16.mxu0 0
          %1596 = vmatpush1.bf16.xpose.msra.mxu0 0
          %1597 = vmatprep.subr.bf16.mxu0 0
          %1598 = vmatpush1.bf16.xpose.msra.mxu0 0
          %1599 = vmatprep.subr.bf16.mxu0 0
          %1600 = vmatpush1.bf16.xpose.msra.mxu0 0
          %1601 = vmatprep.subr.bf16.mxu0 0
          %1602 = vmatpush1.bf16.xpose.msra.mxu0 0
          %1603 = vmatprep.subr.bf16.mxu0 0
          %1604 = vmatpush1.bf16.xpose.msra.mxu0 0
          %1605 = vmatprep.subr.bf16.mxu0 0
          %1606 = vmatpush1.bf16.xpose.msra.mxu0 0
          %1607 = vmatprep.subr.bf16.mxu0 0
          %1608 = vmatpush1.bf16.xpose.msra.mxu0 0
          %1609 = vmatprep.subr.bf16.mxu0 0
          %1610 = vmatpush1.bf16.xpose.msra.mxu0 0
          %1611 = vmatprep.subr.bf16.mxu0 0
          %1612 = vmatpush1.bf16.xpose.msra.mxu0 0
          %1613 = vmatprep.subr.bf16.mxu0 0
          %1614 = vmatpush1.bf16.xpose.msra.mxu0 0
          %1615 = vmatprep.subr.bf16.mxu0 0
          %1616 = vmatpush1.bf16.xpose.msra.mxu0 0
          %1617 = vmatprep.subr.bf16.mxu0 0
          %1618 = vmatpush1.bf16.xpose.msra.mxu0 0
          %1619 = vmatprep.subr.bf16.mxu0 0
          %1620 = vmatpush1.bf16.xpose.msra.mxu0 0
          %1621 = vmatprep.subr.bf16.mxu0 0
          %1622 = vmatpush1.bf16.xpose.msra.mxu0 0
          %1623 = vmatprep.subr.bf16.mxu0 0
          %1624 = vmatpush1.bf16.xpose.msra.mxu0 0
          %1625 = vmatprep.mubr.bf16.mxu0 0
          %1626 = vmatmul.mubr.bf16.gmra.mrb[0].mxu0 %v1588
          %v1627 = vpop.f32.mrb[0].mxu0
          %v1628 = vadd.f32 0.0, %v1627
          %v1629 = vpop.f32.mrb[0].mxu0
          %v1630 = vpop.f32.mrb[0].mxu0
          %v1631 = vpop.f32.mrb[0].mxu0
          %1632 = vdwg.mxu0
          %v1634 = vsel %vm1494, %v1485, 0
          %v1637 = vsel %vm1494, %v1489, 0
          %1639 = vmatprep.subr.bf16.mxu0 0
          %1640 = vmatpush1.bf16.xpose.msra.mxu0 %v1637
          %1641 = vmatprep.subr.bf16.mxu0 0
          %1642 = vmatpush1.bf16.xpose.msra.mxu0 0
          %1643 = vmatprep.subr.bf16.mxu0 0
          %1644 = vmatpush1.bf16.xpose.msra.mxu0 0
          %1645 = vmatprep.subr.bf16.mxu0 0
          %1646 = vmatpush1.bf16.xpose.msra.mxu0 0
          %1647 = vmatprep.subr.bf16.mxu0 0
          %1648 = vmatpush1.bf16.xpose.msra.mxu0 0
          %1649 = vmatprep.subr.bf16.mxu0 0
          %1650 = vmatpush1.bf16.xpose.msra.mxu0 0
          %1651 = vmatprep.subr.bf16.mxu0 0
          %1652 = vmatpush1.bf16.xpose.msra.mxu0 0
          %1653 = vmatprep.subr.bf16.mxu0 0
          %1654 = vmatpush1.bf16.xpose.msra.mxu0 0
          %1655 = vmatprep.subr.bf16.mxu0 0
          %1656 = vmatpush1.bf16.xpose.msra.mxu0 0
          %1657 = vmatprep.subr.bf16.mxu0 0
          %1658 = vmatpush1.bf16.xpose.msra.mxu0 0
          %1659 = vmatprep.subr.bf16.mxu0 0
          %1660 = vmatpush1.bf16.xpose.msra.mxu0 0
          %1661 = vmatprep.subr.bf16.mxu0 0
          %1662 = vmatpush1.bf16.xpose.msra.mxu0 0
          %1663 = vmatprep.subr.bf16.mxu0 0
          %1664 = vmatpush1.bf16.xpose.msra.mxu0 0
          %1665 = vmatprep.subr.bf16.mxu0 0
          %1666 = vmatpush1.bf16.xpose.msra.mxu0 0
          %1667 = vmatprep.subr.bf16.mxu0 0
          %1668 = vmatpush1.bf16.xpose.msra.mxu0 0
          %1669 = vmatprep.subr.bf16.mxu0 0
          %1670 = vmatpush1.bf16.xpose.msra.mxu0 0
          %1671 = vmatprep.mubr.bf16.mxu0 0
          %1672 = vmatmul.mubr.bf16.gmra.mrb[0].mxu0 %v1634
          %v1673 = vpop.f32.mrb[0].mxu0
          %v1674 = vadd.f32 0.0, %v1673
          %v1675 = vpop.f32.mrb[0].mxu0
          %v1676 = vpop.f32.mrb[0].mxu0
          %v1677 = vpop.f32.mrb[0].mxu0
          %1678 = vdwg.mxu0
          %v1679 = vsel %vm1494, %v1536, -inf
          %1680 = vmax.xlane.f32.xlu0 %v1679
          %v1681 = vpop.xlane.xlu0 %1680
          %v1682 = vsel %vm1494, %v1582, -inf
          %1683 = vmax.xlane.f32.xlu0 %v1682
          %v1684 = vpop.xlane.xlu0 %1683
          %v1685 = vsel %vm1494, %v1628, -inf
          %1686 = vmax.xlane.f32.xlu0 %v1685
          %v1687 = vpop.xlane.xlu0 %1686
          %v1688 = vsel %vm1494, %v1674, -inf
          %1689 = vmax.xlane.f32.xlu0 %v1688
          %v1690 = vpop.xlane.xlu0 %1689
          %v1691 = vsub.f32 %v1536, %v1681
          %v1692 = vsub.f32 %v1582, %v1684
          %v1693 = vsub.f32 %v1628, %v1687
          %v1694 = vsub.f32 %v1674, %v1690
          %v1695 = vmul.f32 %v1691, 1.442695
          %v1696 = vpow.pop %v1695
          %v1697 = vmul.f32 %v1692, 1.442695
          %v1698 = vpow.pop %v1697
          %v1699 = vmul.f32 %v1693, 1.442695
          %v1700 = vpow.pop %v1699
          %v1701 = vmul.f32 %v1694, 1.442695
          %v1702 = vpow.pop %v1701
          %v1703 = vsel %vm1494, %v1696, 0.0
          %1704 = vadd.xlane.f32.xlu0 %v1703
          %v1705 = vpop.xlane.xlu0 %1704
          %v1706 = vsel %vm1494, %v1698, 0.0
          %1707 = vadd.xlane.f32.xlu0 %v1706
          %v1708 = vpop.xlane.xlu0 %1707
          %v1709 = vsel %vm1494, %v1700, 0.0
          %1710 = vadd.xlane.f32.xlu0 %v1709
          %v1711 = vpop.xlane.xlu0 %1710
          %v1712 = vsel %vm1494, %v1702, 0.0
          %1713 = vadd.xlane.f32.xlu0 %v1712
          %v1714 = vpop.xlane.xlu0 %1713
          %v1715 = vrcp.pop %v1705
          %v1716 = vrcp.pop %v1708
          %v1717 = vrcp.pop %v1711
          %v1718 = vrcp.pop %v1714
          %v1719 = vmul.f32 %v1696, %v1715
          %v1720 = vmul.f32 %v1698, %v1716
          %v1721 = vmul.f32 %v1700, %v1717
          %v1722 = vmul.f32 %v1702, %v1718
          %v1723 = vpack.c.bf16 %v1719, %v1719
          %v1724 = vpack.c.bf16 %v1720, %v1720
          %v1725 = vpack.c.bf16 %v1721, %v1721
          %v1726 = vpack.c.bf16 %v1722, %v1722
          %v1728 = vsel %vm1494, %v1723, 0
          %vm1730 = vcmask 1043456
          %v1732 = vsel %vm1730, %v1490, 0
          %1734 = vmatprep.subr.bf16.mxu0 0
          %1735 = vmatpush1.bf16.msra.mxu0 %v1732
          %1736 = vmatprep.subr.bf16.mxu0 0
          %1737 = vmatpush1.bf16.msra.mxu0 0
          %1738 = vmatprep.subr.bf16.mxu0 0
          %1739 = vmatpush1.bf16.msra.mxu0 0
          %1740 = vmatprep.subr.bf16.mxu0 0
          %1741 = vmatpush1.bf16.msra.mxu0 0
          %1742 = vmatprep.subr.bf16.mxu0 0
          %1743 = vmatpush1.bf16.msra.mxu0 0
          %1744 = vmatprep.subr.bf16.mxu0 0
          %1745 = vmatpush1.bf16.msra.mxu0 0
          %1746 = vmatprep.subr.bf16.mxu0 0
          %1747 = vmatpush1.bf16.msra.mxu0 0
          %1748 = vmatprep.subr.bf16.mxu0 0
          %1749 = vmatpush1.bf16.msra.mxu0 0
          %1750 = vmatprep.subr.bf16.mxu0 0
          %1751 = vmatpush1.bf16.msra.mxu0 0
          %1752 = vmatprep.subr.bf16.mxu0 0
          %1753 = vmatpush1.bf16.msra.mxu0 0
          %1754 = vmatprep.subr.bf16.mxu0 0
          %1755 = vmatpush1.bf16.msra.mxu0 0
          %1756 = vmatprep.subr.bf16.mxu0 0
          %1757 = vmatpush1.bf16.msra.mxu0 0
          %1758 = vmatprep.subr.bf16.mxu0 0
          %1759 = vmatpush1.bf16.msra.mxu0 0
          %1760 = vmatprep.subr.bf16.mxu0 0
          %1761 = vmatpush1.bf16.msra.mxu0 0
          %1762 = vmatprep.subr.bf16.mxu0 0
          %1763 = vmatpush1.bf16.msra.mxu0 0
          %1764 = vmatprep.subr.bf16.mxu0 0
          %1765 = vmatpush1.bf16.msra.mxu0 0
          %1766 = vmatprep.mubr.bf16.mxu0 0
          %1767 = vmatmul.mubr.bf16.gmra.mrb[0].mxu0 %v1728
          %v1768 = vpop.f32.mrb[0].mxu0
          %v1769 = vadd.f32 0.0, %v1768
          %v1770 = vpop.f32.mrb[0].mxu0
          %v1771 = vpop.f32.mrb[0].mxu0
          %v1772 = vpop.f32.mrb[0].mxu0
          %1773 = vdwg.mxu0
          %v1775 = vsel %vm1494, %v1724, 0
          %v1778 = vsel %vm1730, %v1491, 0
          %1780 = vmatprep.subr.bf16.mxu0 0
          %1781 = vmatpush1.bf16.msra.mxu0 %v1778
          %1782 = vmatprep.subr.bf16.mxu0 0
          %1783 = vmatpush1.bf16.msra.mxu0 0
          %1784 = vmatprep.subr.bf16.mxu0 0
          %1785 = vmatpush1.bf16.msra.mxu0 0
          %1786 = vmatprep.subr.bf16.mxu0 0
          %1787 = vmatpush1.bf16.msra.mxu0 0
          %1788 = vmatprep.subr.bf16.mxu0 0
          %1789 = vmatpush1.bf16.msra.mxu0 0
          %1790 = vmatprep.subr.bf16.mxu0 0
          %1791 = vmatpush1.bf16.msra.mxu0 0
          %1792 = vmatprep.subr.bf16.mxu0 0
          %1793 = vmatpush1.bf16.msra.mxu0 0
          %1794 = vmatprep.subr.bf16.mxu0 0
          %1795 = vmatpush1.bf16.msra.mxu0 0
          %1796 = vmatprep.subr.bf16.mxu0 0
          %1797 = vmatpush1.bf16.msra.mxu0 0
          %1798 = vmatprep.subr.bf16.mxu0 0
          %1799 = vmatpush1.bf16.msra.mxu0 0
          %1800 = vmatprep.subr.bf16.mxu0 0
          %1801 = vmatpush1.bf16.msra.mxu0 0
          %1802 = vmatprep.subr.bf16.mxu0 0
          %1803 = vmatpush1.bf16.msra.mxu0 0
          %1804 = vmatprep.subr.bf16.mxu0 0
          %1805 = vmatpush1.bf16.msra.mxu0 0
          %1806 = vmatprep.subr.bf16.mxu0 0
          %1807 = vmatpush1.bf16.msra.mxu0 0
          %1808 = vmatprep.subr.bf16.mxu0 0
          %1809 = vmatpush1.bf16.msra.mxu0 0
          %1810 = vmatprep.subr.bf16.mxu0 0
          %1811 = vmatpush1.bf16.msra.mxu0 0
          %1812 = vmatprep.mubr.bf16.mxu0 0
          %1813 = vmatmul.mubr.bf16.gmra.mrb[0].mxu0 %v1775
          %v1814 = vpop.f32.mrb[0].mxu0
          %v1815 = vadd.f32 0.0, %v1814
          %v1816 = vpop.f32.mrb[0].mxu0
          %v1817 = vpop.f32.mrb[0].mxu0
          %v1818 = vpop.f32.mrb[0].mxu0
          %1819 = vdwg.mxu0
          %v1821 = vsel %vm1494, %v1725, 0
          %v1824 = vsel %vm1730, %v1492, 0
          %1826 = vmatprep.subr.bf16.mxu0 0
          %1827 = vmatpush1.bf16.msra.mxu0 %v1824
          %1828 = vmatprep.subr.bf16.mxu0 0
          %1829 = vmatpush1.bf16.msra.mxu0 0
          %1830 = vmatprep.subr.bf16.mxu0 0
          %1831 = vmatpush1.bf16.msra.mxu0 0
          %1832 = vmatprep.subr.bf16.mxu0 0
          %1833 = vmatpush1.bf16.msra.mxu0 0
          %1834 = vmatprep.subr.bf16.mxu0 0
          %1835 = vmatpush1.bf16.msra.mxu0 0
          %1836 = vmatprep.subr.bf16.mxu0 0
          %1837 = vmatpush1.bf16.msra.mxu0 0
          %1838 = vmatprep.subr.bf16.mxu0 0
          %1839 = vmatpush1.bf16.msra.mxu0 0
          %1840 = vmatprep.subr.bf16.mxu0 0
          %1841 = vmatpush1.bf16.msra.mxu0 0
          %1842 = vmatprep.subr.bf16.mxu0 0
          %1843 = vmatpush1.bf16.msra.mxu0 0
          %1844 = vmatprep.subr.bf16.mxu0 0
          %1845 = vmatpush1.bf16.msra.mxu0 0
          %1846 = vmatprep.subr.bf16.mxu0 0
          %1847 = vmatpush1.bf16.msra.mxu0 0
          %1848 = vmatprep.subr.bf16.mxu0 0
          %1849 = vmatpush1.bf16.msra.mxu0 0
          %1850 = vmatprep.subr.bf16.mxu0 0
          %1851 = vmatpush1.bf16.msra.mxu0 0
          %1852 = vmatprep.subr.bf16.mxu0 0
          %1853 = vmatpush1.bf16.msra.mxu0 0
          %1854 = vmatprep.subr.bf16.mxu0 0
          %1855 = vmatpush1.bf16.msra.mxu0 0
          %1856 = vmatprep.subr.bf16.mxu0 0
          %1857 = vmatpush1.bf16.msra.mxu0 0
          %1858 = vmatprep.mubr.bf16.mxu0 0
          %1859 = vmatmul.mubr.bf16.gmra.mrb[0].mxu0 %v1821
          %v1860 = vpop.f32.mrb[0].mxu0
          %v1861 = vadd.f32 0.0, %v1860
          %v1862 = vpop.f32.mrb[0].mxu0
          %v1863 = vpop.f32.mrb[0].mxu0
          %v1864 = vpop.f32.mrb[0].mxu0
          %1865 = vdwg.mxu0
          %v1867 = vsel %vm1494, %v1726, 0
          %v1870 = vsel %vm1730, %v1493, 0
          %1872 = vmatprep.subr.bf16.mxu0 0
          %1873 = vmatpush1.bf16.msra.mxu0 %v1870
          %1874 = vmatprep.subr.bf16.mxu0 0
          %1875 = vmatpush1.bf16.msra.mxu0 0
          %1876 = vmatprep.subr.bf16.mxu0 0
          %1877 = vmatpush1.bf16.msra.mxu0 0
          %1878 = vmatprep.subr.bf16.mxu0 0
          %1879 = vmatpush1.bf16.msra.mxu0 0
          %1880 = vmatprep.subr.bf16.mxu0 0
          %1881 = vmatpush1.bf16.msra.mxu0 0
          %1882 = vmatprep.subr.bf16.mxu0 0
          %1883 = vmatpush1.bf16.msra.mxu0 0
          %1884 = vmatprep.subr.bf16.mxu0 0
          %1885 = vmatpush1.bf16.msra.mxu0 0
          %1886 = vmatprep.subr.bf16.mxu0 0
          %1887 = vmatpush1.bf16.msra.mxu0 0
          %1888 = vmatprep.subr.bf16.mxu0 0
          %1889 = vmatpush1.bf16.msra.mxu0 0
          %1890 = vmatprep.subr.bf16.mxu0 0
          %1891 = vmatpush1.bf16.msra.mxu0 0
          %1892 = vmatprep.subr.bf16.mxu0 0
          %1893 = vmatpush1.bf16.msra.mxu0 0
          %1894 = vmatprep.subr.bf16.mxu0 0
          %1895 = vmatpush1.bf16.msra.mxu0 0
          %1896 = vmatprep.subr.bf16.mxu0 0
          %1897 = vmatpush1.bf16.msra.mxu0 0
          %1898 = vmatprep.subr.bf16.mxu0 0
          %1899 = vmatpush1.bf16.msra.mxu0 0
          %1900 = vmatprep.subr.bf16.mxu0 0
          %1901 = vmatpush1.bf16.msra.mxu0 0
          %1902 = vmatprep.subr.bf16.mxu0 0
          %1903 = vmatpush1.bf16.msra.mxu0 0
          %1904 = vmatprep.mubr.bf16.mxu0 0
          %1905 = vmatmul.mubr.bf16.gmra.mrb[0].mxu0 %v1867
          %v1906 = vpop.f32.mrb[0].mxu0
          %v1907 = vadd.f32 0.0, %v1906
          %v1908 = vpop.f32.mrb[0].mxu0
          %v1909 = vpop.f32.mrb[0].mxu0
          %v1910 = vpop.f32.mrb[0].mxu0
          %1911 = vdwg.mxu0
          %v1912 = vpack.c.bf16 %v1769, %v1769
          %v1913 = vpack.c.bf16 %v1815, %v1815
          %v1914 = vpack.c.bf16 %v1861, %v1861
          %v1915 = vpack.c.bf16 %v1907, %v1907
          %v1916 = vld [vmem:[%s7] sm:$0xf]
          %v1917 = vld [vmem:[%s7 + $0x4] sm:$0xf]
          %v1918 = vld [vmem:[%s7 + $0x8] sm:$0xf]
          %v1919 = vld [vmem:[%s7 + $0xc] sm:$0xf]
          %v1921 = vsel %vm1494, %v1912, 0
          %v1924 = vsel %vm1730, %v1916, 0
          %1926 = vmatprep.subr.bf16.mxu0 0
          %1927 = vmatpush1.bf16.msra.mxu0 %v1924
          %1928 = vmatprep.subr.bf16.mxu0 0
          %1929 = vmatpush1.bf16.msra.mxu0 0
          %1930 = vmatprep.subr.bf16.mxu0 0
          %1931 = vmatpush1.bf16.msra.mxu0 0
          %1932 = vmatprep.subr.bf16.mxu0 0
          %1933 = vmatpush1.bf16.msra.mxu0 0
          %1934 = vmatprep.subr.bf16.mxu0 0
          %1935 = vmatpush1.bf16.msra.mxu0 0
          %1936 = vmatprep.subr.bf16.mxu0 0
          %1937 = vmatpush1.bf16.msra.mxu0 0
          %1938 = vmatprep.subr.bf16.mxu0 0
          %1939 = vmatpush1.bf16.msra.mxu0 0
          %1940 = vmatprep.subr.bf16.mxu0 0
          %1941 = vmatpush1.bf16.msra.mxu0 0
          %1942 = vmatprep.subr.bf16.mxu0 0
          %1943 = vmatpush1.bf16.msra.mxu0 0
          %1944 = vmatprep.subr.bf16.mxu0 0
          %1945 = vmatpush1.bf16.msra.mxu0 0
          %1946 = vmatprep.subr.bf16.mxu0 0
          %1947 = vmatpush1.bf16.msra.mxu0 0
          %1948 = vmatprep.subr.bf16.mxu0 0
          %1949 = vmatpush1.bf16.msra.mxu0 0
          %1950 = vmatprep.subr.bf16.mxu0 0
          %1951 = vmatpush1.bf16.msra.mxu0 0
          %1952 = vmatprep.subr.bf16.mxu0 0
          %1953 = vmatpush1.bf16.msra.mxu0 0
          %1954 = vmatprep.subr.bf16.mxu0 0
          %1955 = vmatpush1.bf16.msra.mxu0 0
          %1956 = vmatprep.subr.bf16.mxu0 0
          %1957 = vmatpush1.bf16.msra.mxu0 0
          %1958 = vmatprep.mubr.bf16.mxu0 0
          %1959 = vmatmul.mubr.bf16.gmra.mrb[0].mxu0 %v1921
          %v1960 = vpop.f32.mrb[0].mxu0
          %v1961 = vadd.f32 0.0, %v1960
          %v1962 = vpop.f32.mrb[0].mxu0
          %v1963 = vpop.f32.mrb[0].mxu0
          %v1964 = vpop.f32.mrb[0].mxu0
          %1965 = vdwg.mxu0
          %v1967 = vsel %vm1494, %v1913, 0
          %v1970 = vsel %vm1730, %v1917, 0
          %1972 = vmatprep.subr.bf16.mxu0 0
          %1973 = vmatpush1.bf16.msra.mxu0 %v1970
          %1974 = vmatprep.subr.bf16.mxu0 0
          %1975 = vmatpush1.bf16.msra.mxu0 0
          %1976 = vmatprep.subr.bf16.mxu0 0
          %1977 = vmatpush1.bf16.msra.mxu0 0
          %1978 = vmatprep.subr.bf16.mxu0 0
          %1979 = vmatpush1.bf16.msra.mxu0 0
          %1980 = vmatprep.subr.bf16.mxu0 0
          %1981 = vmatpush1.bf16.msra.mxu0 0
          %1982 = vmatprep.subr.bf16.mxu0 0
          %1983 = vmatpush1.bf16.msra.mxu0 0
          %1984 = vmatprep.subr.bf16.mxu0 0
          %1985 = vmatpush1.bf16.msra.mxu0 0
          %1986 = vmatprep.subr.bf16.mxu0 0
          %1987 = vmatpush1.bf16.msra.mxu0 0
          %1988 = vmatprep.subr.bf16.mxu0 0
          %1989 = vmatpush1.bf16.msra.mxu0 0
          %1990 = vmatprep.subr.bf16.mxu0 0
          %1991 = vmatpush1.bf16.msra.mxu0 0
          %1992 = vmatprep.subr.bf16.mxu0 0
          %1993 = vmatpush1.bf16.msra.mxu0 0
          %1994 = vmatprep.subr.bf16.mxu0 0
          %1995 = vmatpush1.bf16.msra.mxu0 0
          %1996 = vmatprep.subr.bf16.mxu0 0
          %1997 = vmatpush1.bf16.msra.mxu0 0
          %1998 = vmatprep.subr.bf16.mxu0 0
          %1999 = vmatpush1.bf16.msra.mxu0 0
          %2000 = vmatprep.subr.bf16.mxu0 0
          %2001 = vmatpush1.bf16.msra.mxu0 0
          %2002 = vmatprep.subr.bf16.mxu0 0
          %2003 = vmatpush1.bf16.msra.mxu0 0
          %2004 = vmatprep.mubr.bf16.mxu0 0
          %2005 = vmatmul.mubr.bf16.gmra.mrb[0].mxu0 %v1967
          %v2006 = vpop.f32.mrb[0].mxu0
          %v2007 = vadd.f32 0.0, %v2006
          %v2008 = vpop.f32.mrb[0].mxu0
          %v2009 = vpop.f32.mrb[0].mxu0
          %v2010 = vpop.f32.mrb[0].mxu0
          %2011 = vdwg.mxu0
          %v2013 = vsel %vm1494, %v1914, 0
          %v2016 = vsel %vm1730, %v1918, 0
          %2018 = vmatprep.subr.bf16.mxu0 0
          %2019 = vmatpush1.bf16.msra.mxu0 %v2016
          %2020 = vmatprep.subr.bf16.mxu0 0
          %2021 = vmatpush1.bf16.msra.mxu0 0
          %2022 = vmatprep.subr.bf16.mxu0 0
          %2023 = vmatpush1.bf16.msra.mxu0 0
          %2024 = vmatprep.subr.bf16.mxu0 0
          %2025 = vmatpush1.bf16.msra.mxu0 0
          %2026 = vmatprep.subr.bf16.mxu0 0
          %2027 = vmatpush1.bf16.msra.mxu0 0
          %2028 = vmatprep.subr.bf16.mxu0 0
          %2029 = vmatpush1.bf16.msra.mxu0 0
          %2030 = vmatprep.subr.bf16.mxu0 0
          %2031 = vmatpush1.bf16.msra.mxu0 0
          %2032 = vmatprep.subr.bf16.mxu0 0
          %2033 = vmatpush1.bf16.msra.mxu0 0
          %2034 = vmatprep.subr.bf16.mxu0 0
          %2035 = vmatpush1.bf16.msra.mxu0 0
          %2036 = vmatprep.subr.bf16.mxu0 0
          %2037 = vmatpush1.bf16.msra.mxu0 0
          %2038 = vmatprep.subr.bf16.mxu0 0
          %2039 = vmatpush1.bf16.msra.mxu0 0
          %2040 = vmatprep.subr.bf16.mxu0 0
          %2041 = vmatpush1.bf16.msra.mxu0 0
          %2042 = vmatprep.subr.bf16.mxu0 0
          %2043 = vmatpush1.bf16.msra.mxu0 0
          %2044 = vmatprep.subr.bf16.mxu0 0
          %2045 = vmatpush1.bf16.msra.mxu0 0
          %2046 = vmatprep.subr.bf16.mxu0 0
          %2047 = vmatpush1.bf16.msra.mxu0 0
          %2048 = vmatprep.subr.bf16.mxu0 0
          %2049 = vmatpush1.bf16.msra.mxu0 0
          %2050 = vmatprep.mubr.bf16.mxu0 0
          %2051 = vmatmul.mubr.bf16.gmra.mrb[0].mxu0 %v2013
          %v2052 = vpop.f32.mrb[0].mxu0
          %v2053 = vadd.f32 0.0, %v2052
          %v2054 = vpop.f32.mrb[0].mxu0
          %v2055 = vpop.f32.mrb[0].mxu0
          %v2056 = vpop.f32.mrb[0].mxu0
          %2057 = vdwg.mxu0
          %v2059 = vsel %vm1494, %v1915, 0
          %v2062 = vsel %vm1730, %v1919, 0
          %2064 = vmatprep.subr.bf16.mxu0 0
          %2065 = vmatpush1.bf16.msra.mxu0 %v2062
          %2066 = vmatprep.subr.bf16.mxu0 0
          %2067 = vmatpush1.bf16.msra.mxu0 0
          %2068 = vmatprep.subr.bf16.mxu0 0
          %2069 = vmatpush1.bf16.msra.mxu0 0
          %2070 = vmatprep.subr.bf16.mxu0 0
          %2071 = vmatpush1.bf16.msra.mxu0 0
          %2072 = vmatprep.subr.bf16.mxu0 0
          %2073 = vmatpush1.bf16.msra.mxu0 0
          %2074 = vmatprep.subr.bf16.mxu0 0
          %2075 = vmatpush1.bf16.msra.mxu0 0
          %2076 = vmatprep.subr.bf16.mxu0 0
          %2077 = vmatpush1.bf16.msra.mxu0 0
          %2078 = vmatprep.subr.bf16.mxu0 0
          %2079 = vmatpush1.bf16.msra.mxu0 0
          %2080 = vmatprep.subr.bf16.mxu0 0
          %2081 = vmatpush1.bf16.msra.mxu0 0
          %2082 = vmatprep.subr.bf16.mxu0 0
          %2083 = vmatpush1.bf16.msra.mxu0 0
          %2084 = vmatprep.subr.bf16.mxu0 0
          %2085 = vmatpush1.bf16.msra.mxu0 0
          %2086 = vmatprep.subr.bf16.mxu0 0
          %2087 = vmatpush1.bf16.msra.mxu0 0
          %2088 = vmatprep.subr.bf16.mxu0 0
          %2089 = vmatpush1.bf16.msra.mxu0 0
          %2090 = vmatprep.subr.bf16.mxu0 0
          %2091 = vmatpush1.bf16.msra.mxu0 0
          %2092 = vmatprep.subr.bf16.mxu0 0
          %2093 = vmatpush1.bf16.msra.mxu0 0
          %2094 = vmatprep.subr.bf16.mxu0 0
          %2095 = vmatpush1.bf16.msra.mxu0 0
          %2096 = vmatprep.mubr.bf16.mxu0 0
          %2097 = vmatmul.mubr.bf16.gmra.mrb[0].mxu0 %v2059
          %v2098 = vpop.f32.mrb[0].mxu0
          %v2099 = vadd.f32 0.0, %v2098
          %v2100 = vpop.f32.mrb[0].mxu0
          %v2101 = vpop.f32.mrb[0].mxu0
          %v2102 = vpop.f32.mrb[0].mxu0
          %2103 = vdwg.mxu0
          %v2104 = vsel %vm693, %v1961, 0.0
          %v2105 = vsel %vm693, %v2007, 0.0
          %v2106 = vadd.f32 %v2104, %v2105
          %v2107 = vsel %vm693, %v2053, 0.0
          %v2108 = vadd.f32 %v2106, %v2107
          %v2109 = vsel %vm693, %v2099, 0.0
          %v2110 = vadd.f32 %v2108, %v2109
          %v2111 = vld [vmem:[%s8] sm:$0x1]
          %v2113 = vlaneseq
          %v2114 = vshrl.u32 %v2113, 7
          %v2115 = vsub.s32 0, %v2114
          %v2116 = vrot.slane %v2111, %v2115
          %v2118 = vadd.f32 %v2110, %v2116
          %v2119 = vadd.f32 %v668, %v2118
          %v2120 = vld [vmem:[%s13] sm:$0x1]
          %v2121 = vld [vmem:[%s14] sm:$0x1]
          %v2122 = vsel %vm693, %v2119, 0.0
          %2123 = vadd.xlane.f32.xlu0 %v2122
          %v2124 = vpop.xlane.xlu0 %2123
          %v2125 = vrcp.pop 32.0
          %v2126 = vmul.f32 %v2124, %v2125
          %v2127 = vsub.f32 %v2119, %v2126
          %v2128 = vmul.f32 %v2127, %v2127
          %v2129 = vsel %vm693, %v2128, 0.0
          %2130 = vadd.xlane.f32.xlu0 %v2129
          %v2131 = vpop.xlane.xlu0 %2130
          %v2132 = vmul.f32 %v2131, %v2125
          %v2133 = vadd.f32 %v2132, 1e-05
          %v2134 = vrsqrt.pop %v2133
          %v2135 = vmul.f32 %v2127, %v2134
          %v2137 = vlaneseq
          %v2138 = vshrl.u32 %v2137, 7
          %v2139 = vsub.s32 0, %v2138
          %v2140 = vrot.slane %v2120, %v2139
          %v2142 = vmul.f32 %v2135, %v2140
          %v2144 = vlaneseq
          %v2145 = vshrl.u32 %v2144, 7
          %v2146 = vsub.s32 0, %v2145
          %v2147 = vrot.slane %v2121, %v2146
          %v2149 = vadd.f32 %v2142, %v2147
          %2150 = vst.msk [vmem:[#allocation5] sm:$0xff] %vm693, %v2149
          %2151 = vst.msk [vmem:[#allocation6] sm:$0xff] %vm693, 0.0
        $region100: #{tpu_custom_call.1} parent=95 // pred_fallthru
          _
        %v2152 = vld [vmem:[#allocation5] sm:$0xff]
        %v2153 = vpack.c.bf16 %v2152, %v2152
        %v2154 = vld [vmem:[%s653] sm:$0xf]
        %v2155 = vld [vmem:[%s653 + $0x4] sm:$0xf]
        %v2156 = vld [vmem:[%s653 + $0x8] sm:$0xf]
        %v2157 = vld [vmem:[%s653 + $0xc] sm:$0xf]
        %v2158 = vld [vmem:[%s656] sm:$0x1]
        %v2160 = vlaneseq
        %v2161 = vshrl.u32 %v2160, 7
        %v2162 = vsub.s32 0, %v2161
        %v2163 = vrot.slane %v2158, %v2162
        %v2169 = vunpack.c.l.b16 %v2154
        %v2170 = vunpack.c.l.b16 %v2155
        %v2171 = vunpack.c.l.b16 %v2156
        %v2172 = vunpack.c.l.b16 %v2157
        %v2173 = vpack.c.b16 %v2170, %v2169
        %v2174 = vpack.c.b16 %v2172, %v2171
        %vm2177 = vcmask 261120
        %v2179 = vsel %vm2177, %v2153, 0
        %2181 = vmatprep.subr.bf16.mxu0 0
        %2182 = vmatpush1.bf16.msra.mxu0 %v2173
        %2183 = vmatprep.subr.bf16.mxu0 0
        %2184 = vmatpush1.bf16.msra.mxu0 %v2174
        %2185 = vmatprep.subr.bf16.mxu0 0
        %2186 = vmatpush1.bf16.msra.mxu0 0
        %2187 = vmatprep.subr.bf16.mxu0 0
        %2188 = vmatpush1.bf16.msra.mxu0 0
        %2189 = vmatprep.subr.bf16.mxu0 0
        %2190 = vmatpush1.bf16.msra.mxu0 0
        %2191 = vmatprep.subr.bf16.mxu0 0
        %2192 = vmatpush1.bf16.msra.mxu0 0
        %2193 = vmatprep.subr.bf16.mxu0 0
        %2194 = vmatpush1.bf16.msra.mxu0 0
        %2195 = vmatprep.subr.bf16.mxu0 0
        %2196 = vmatpush1.bf16.msra.mxu0 0
        %2197 = vmatprep.subr.bf16.mxu0 0
        %2198 = vmatpush1.bf16.msra.mxu0 0
        %2199 = vmatprep.subr.bf16.mxu0 0
        %2200 = vmatpush1.bf16.msra.mxu0 0
        %2201 = vmatprep.subr.bf16.mxu0 0
        %2202 = vmatpush1.bf16.msra.mxu0 0
        %2203 = vmatprep.subr.bf16.mxu0 0
        %2204 = vmatpush1.bf16.msra.mxu0 0
        %2205 = vmatprep.subr.bf16.mxu0 0
        %2206 = vmatpush1.bf16.msra.mxu0 0
        %2207 = vmatprep.subr.bf16.mxu0 0
        %2208 = vmatpush1.bf16.msra.mxu0 0
        %2209 = vmatprep.subr.bf16.mxu0 0
        %2210 = vmatpush1.bf16.msra.mxu0 0
        %2211 = vmatprep.subr.bf16.mxu0 0
        %2212 = vmatpush1.bf16.msra.mxu0 0
        %2213 = vmatprep.mubr.bf16.mxu0 0
        %2214 = vmatmul.mubr.bf16.gmra.mrb[0].mxu0 %v2179
        %v2215 = vpop.f32.mrb[0].mxu0
        %v2216 = vadd.f32 %v2163, %v2215
        %v2217 = vpop.f32.mrb[0].mxu0
        %v2218 = vpop.f32.mrb[0].mxu0
        %v2219 = vpop.f32.mrb[0].mxu0
        %2220 = vdwg.mxu0
        %v2221 = vmax.f32 %v2216, 0.0
        %v2222 = vpack.c.bf16 %v2221, %v2221
        %v2223 = vld [vmem:[#allocation6] sm:$0xff]
        %v2224 = vld [vmem:[%s661] sm:$0xf]
        %v2225 = vld [vmem:[%s661 + $0x4] sm:$0xf]
        %v2226 = vld [vmem:[%s661 + $0x8] sm:$0xf]
        %v2227 = vld [vmem:[%s661 + $0xc] sm:$0xf]
        %v2228 = vld [vmem:[%s661 + $0x10] sm:$0xf]
        %v2229 = vld [vmem:[%s661 + $0x14] sm:$0xf]
        %v2230 = vld [vmem:[%s661 + $0x18] sm:$0xf]
        %v2231 = vld [vmem:[%s661 + $0x1c] sm:$0xf]
        %v2240 = vunpack.c.l.b16 %v2224
        %v2241 = vunpack.c.l.b16 %v2225
        %v2242 = vunpack.c.l.b16 %v2226
        %v2243 = vunpack.c.l.b16 %v2227
        %v2244 = vunpack.c.l.b16 %v2228
        %v2245 = vunpack.c.l.b16 %v2229
        %v2246 = vunpack.c.l.b16 %v2230
        %v2247 = vunpack.c.l.b16 %v2231
        %v2248 = vpack.c.b16 %v2241, %v2240
        %v2249 = vpack.c.b16 %v2243, %v2242
        %v2250 = vpack.c.b16 %v2245, %v2244
        %v2251 = vpack.c.b16 %v2247, %v2246
        %vm2256 = vcmask 523264
        %v2258 = vsel %vm2256, %v2222, 0
        %2260 = vmatprep.subr.bf16.mxu0 0
        %2261 = vmatpush1.bf16.msra.mxu0 %v2248
        %2262 = vmatprep.subr.bf16.mxu0 0
        %2263 = vmatpush1.bf16.msra.mxu0 %v2249
        %2264 = vmatprep.subr.bf16.mxu0 0
        %2265 = vmatpush1.bf16.msra.mxu0 %v2250
        %2266 = vmatprep.subr.bf16.mxu0 0
        %2267 = vmatpush1.bf16.msra.mxu0 %v2251
        %2268 = vmatprep.subr.bf16.mxu0 0
        %2269 = vmatpush1.bf16.msra.mxu0 0
        %2270 = vmatprep.subr.bf16.mxu0 0
        %2271 = vmatpush1.bf16.msra.mxu0 0
        %2272 = vmatprep.subr.bf16.mxu0 0
        %2273 = vmatpush1.bf16.msra.mxu0 0
        %2274 = vmatprep.subr.bf16.mxu0 0
        %2275 = vmatpush1.bf16.msra.mxu0 0
        %2276 = vmatprep.subr.bf16.mxu0 0
        %2277 = vmatpush1.bf16.msra.mxu0 0
        %2278 = vmatprep.subr.bf16.mxu0 0
        %2279 = vmatpush1.bf16.msra.mxu0 0
        %2280 = vmatprep.subr.bf16.mxu0 0
        %2281 = vmatpush1.bf16.msra.mxu0 0
        %2282 = vmatprep.subr.bf16.mxu0 0
        %2283 = vmatpush1.bf16.msra.mxu0 0
        %2284 = vmatprep.subr.bf16.mxu0 0
        %2285 = vmatpush1.bf16.msra.mxu0 0
        %2286 = vmatprep.subr.bf16.mxu0 0
        %2287 = vmatpush1.bf16.msra.mxu0 0
        %2288 = vmatprep.subr.bf16.mxu0 0
        %2289 = vmatpush1.bf16.msra.mxu0 0
        %2290 = vmatprep.subr.bf16.mxu0 0
        %2291 = vmatpush1.bf16.msra.mxu0 0
        %2292 = vmatprep.mubr.bf16.mxu0 0
        %2293 = vmatmul.mubr.bf16.gmra.mrb[0].mxu0 %v2258
        %v2294 = vpop.f32.mrb[0].mxu0
        %v2295 = vadd.f32 0.0, %v2294
        %v2296 = vpop.f32.mrb[0].mxu0
        %v2297 = vpop.f32.mrb[0].mxu0
        %v2298 = vpop.f32.mrb[0].mxu0
        %2299 = vdwg.mxu0
        %v2300 = vadd.f32 %v2223, %v2295
        %2301 = vst.msk [vmem:[#allocation6] sm:$0xff] %vm2177, %v2300
        // Predicated region
        $region101: #{tpu_custom_call.1} parent=95 // pred_check
          %p2302 = pneg %p664
        $region102: #{tpu_custom_call.1} parent=95 // pred_check_branch
          %2304 = sbr.rel (%p2302) target = $region104
        $region103: #{tpu_custom_call.1} parent=95 // pred_region
          %v2305 = vld [vmem:[%s649] sm:$0xff]
          %v2306 = vld [vmem:[#allocation6] sm:$0xff]
          %v2307 = vld [vmem:[%s12] sm:$0x1]
          %v2309 = vlaneseq
          %v2310 = vshrl.u32 %v2309, 7
          %v2311 = vsub.s32 0, %v2310
          %v2312 = vrot.slane %v2307, %v2311
          %v2314 = vadd.f32 %v2306, %v2312
          %v2315 = vld [vmem:[#allocation5] sm:$0xff]
          %v2316 = vadd.f32 %v2315, %v2314
          %v2317 = vld [vmem:[%s15] sm:$0x1]
          %v2318 = vld [vmem:[%s16] sm:$0x1]
          %v2319 = vsel %vm2177, %v2316, 0.0
          %2320 = vadd.xlane.f32.xlu0 %v2319
          %v2321 = vpop.xlane.xlu0 %2320
          %v2322 = vrcp.pop 32.0
          %v2323 = vmul.f32 %v2321, %v2322
          %v2324 = vsub.f32 %v2316, %v2323
          %v2325 = vmul.f32 %v2324, %v2324
          %v2326 = vsel %vm2177, %v2325, 0.0
          %2327 = vadd.xlane.f32.xlu0 %v2326
          %v2328 = vpop.xlane.xlu0 %2327
          %v2329 = vmul.f32 %v2328, %v2322
          %v2330 = vadd.f32 %v2329, 1e-05
          %v2331 = vrsqrt.pop %v2330
          %v2332 = vmul.f32 %v2324, %v2331
          %v2334 = vlaneseq
          %v2335 = vshrl.u32 %v2334, 7
          %v2336 = vsub.s32 0, %v2335
          %v2337 = vrot.slane %v2317, %v2336
          %v2339 = vmul.f32 %v2332, %v2337
          %v2341 = vlaneseq
          %v2342 = vshrl.u32 %v2341, 7
          %v2343 = vsub.s32 0, %v2342
          %v2344 = vrot.slane %v2318, %v2343
          %v2346 = vadd.f32 %v2339, %v2344
          %v2347 = vadd.f32 %v2305, %v2346
          %v2348 = vld [vmem:[%s17] sm:$0x1]
          %v2349 = vld [vmem:[%s18] sm:$0x1]
          %v2350 = vsel %vm2177, %v2347, 0.0
          %2351 = vadd.xlane.f32.xlu0 %v2350
          %v2352 = vpop.xlane.xlu0 %2351
          %v2353 = vmul.f32 %v2352, %v2322
          %v2354 = vsub.f32 %v2347, %v2353
          %v2355 = vmul.f32 %v2354, %v2354
          %v2356 = vsel %vm2177, %v2355, 0.0
          %2357 = vadd.xlane.f32.xlu0 %v2356
          %v2358 = vpop.xlane.xlu0 %2357
          %v2359 = vmul.f32 %v2358, %v2322
          %v2360 = vadd.f32 %v2359, 1e-05
          %v2361 = vrsqrt.pop %v2360
          %v2362 = vmul.f32 %v2354, %v2361
          %v2364 = vlaneseq
          %v2365 = vshrl.u32 %v2364, 7
          %v2366 = vsub.s32 0, %v2365
          %v2367 = vrot.slane %v2348, %v2366
          %v2369 = vmul.f32 %v2362, %v2367
          %v2371 = vlaneseq
          %v2372 = vshrl.u32 %v2371, 7
          %v2373 = vsub.s32 0, %v2372
          %v2374 = vrot.slane %v2349, %v2373
          %v2376 = vadd.f32 %v2369, %v2374
          %2377 = vst.msk [vmem:[%s645] sm:$0xff] %vm2177, %v2376
        $region104: #{tpu_custom_call.1} parent=95 // pred_fallthru
          _
        %s2378 = sand.u32 %s472, 1
        %s2379 = scalar_lea.sflag [#allocation8], %s2378
        %s2380 = sand.u32 %s472, 1
        %s2381 = smul.addr %s2380, 8
        %s2382 = scalar_lea.vmem [#allocation7], %s2381
        // Predicated region
        $region105: #{tpu_custom_call.1} parent=95 // pred_check
          %p2383 = pneg %p482
        $region106: #{tpu_custom_call.1} parent=95 // pred_check_branch
          %2385 = sbr.rel (%p2383) target = $region108
        $region107: #{tpu_custom_call.1} parent=95 // pred_region
          %s2387 = ssub.s32 128, 128
          %2388 = vsyncadd %s2379, %s2387
          %s2389 = smul.addr %s37, 128
          %s2390 = scalar_lea.hbm %s19, %s2389
          %s2392 = sshll.u32 %s2382, 4
          %s2393 = int_to_ptr.vmem [resolvable:$true] %s2392
          %2395 = dma.vmem_to_hbm [thread:$0]  %s2393, 128, %s2390, %s2379
        $region108: #{tpu_custom_call.1} parent=95 // pred_fallthru
          _
      $region96: #{tpu_custom_call.1} parent=5 // pred_fallthru
        _
      %p2396 = scmp.le.s32.totalorder 2, %s28
      // Predicated region
      $region109: #{tpu_custom_call.1} parent=5 // pred_check
        %p2397 = pneg %p2396
      $region110: #{tpu_custom_call.1} parent=5 // pred_check_branch
        %2399 = sbr.rel (%p2397) target = $region112
      $region111: #{tpu_custom_call.1} parent=5 // pred_region
        %s2400 = ssub.s32 %s28, 2
        // Predicated region
        $region113: #{tpu_custom_call.1} parent=111 // pred_check
          %p2401 = pneg %p488
        $region114: #{tpu_custom_call.1} parent=111 // pred_check_branch
          %2403 = sbr.rel (%p2401) target = $region116
        $region115: #{tpu_custom_call.1} parent=111 // pred_region
          %s2404 = sand.u32 %s473, 1
          %s2405 = scalar_lea.sflag [#allocation8], %s2404
          %s2406 = sand.u32 %s473, 1
          %s2407 = smul.addr %s2406, 8
          %s2408 = scalar_lea.vmem [#allocation7], %s2407
          %2409 = dma.done %s2405, 128
        $region116: #{tpu_custom_call.1} parent=111 // pred_fallthru
          _
      $region112: #{tpu_custom_call.1} parent=5 // pred_fallthru
        _
    $region6: #{tpu_custom_call.1} parent=1 // loop_footer
      %s32 = sadd.s32 1, %s28
    $region7: #{tpu_custom_call.1} parent=1 // loop_footer_branch
      %27 = sbr.rel target = $region3
    $region8: #{tpu_custom_call.1} parent=1 // loop_exit
      _
    %2410 = vsyncpa [#allocation8], 1
    %s2411 = scalar_lea.sflag [#allocation8], 1
    %2412 = vsyncpa %s2411, 1

// kernel: tpu_custom_call.1
$region0: #{tpu_custom_call.1}
  #allocation0 [shape = 'u32[]', space=smem, size = 0x4, offset = 0x4, fixed_abs, tag = 'smem constant byte address 0x4 - core index']
  #allocation1 [shape = 'u32[144,128]{1,0:T(1,128)}', space=vmem, size = 0x12000, scoped, tag = 'internal scratch']
  #allocation2 [shape = 'bf16[4,1,8,8]{3,2,1,0:T(8,128)(2,1)}', space=vmem, size = 0x2000, scoped, tag = 'scratch operand']
  #allocation3 [shape = 'bf16[4,1,8,8]{3,2,1,0:T(8,128)(2,1)}', space=vmem, size = 0x2000, scoped, tag = 'scratch operand']
  #allocation4 [shape = 'bf16[4,1,8,8]{3,2,1,0:T(8,128)(2,1)}', space=vmem, size = 0x2000, scoped, tag = 'scratch operand']
  #allocation5 [shape = 'f32[8,32]{1,0:T(8,128)}', space=vmem, size = 0x1000, scoped, tag = 'scratch operand']
  #allocation6 [shape = 'f32[8,32]{1,0:T(8,128)}', space=vmem, size = 0x1000, scoped, tag = 'scratch operand']
  %s0 = inlined_call_operand.vmem [shape: f32[2,8,32], index: 0, kind: input, shape index: {}]
  %s1 = inlined_call_operand.vmem [shape: bf16[4,32,8], index: 1, kind: input, shape index: {}]
  %s2 = inlined_call_operand.vmem [shape: bf16[4,32,8], index: 2, kind: input, shape index: {}]
  %s3 = inlined_call_operand.vmem [shape: bf16[4,32,8], index: 3, kind: input, shape index: {}]
  %s4 = inlined_call_operand.vmem [shape: f32[4,1,8], index: 4, kind: input, shape index: {}]
  %s5 = inlined_call_operand.vmem [shape: f32[4,1,8], index: 5, kind: input, shape index: {}]
  %s6 = inlined_call_operand.vmem [shape: f32[4,1,8], index: 6, kind: input, shape index: {}]
  %s7 = inlined_call_operand.vmem [shape: bf16[4,8,32], index: 7, kind: input, shape index: {}]
  %s8 = inlined_call_operand.vmem [shape: f32[1,32], index: 8, kind: input, shape index: {}]
  %s9 = inlined_call_operand.vmem [shape: bf16[32,64], index: 9, kind: input, shape index: {}]
  %s10 = inlined_call_operand.vmem [shape: f32[1,64], index: 10, kind: input, shape index: {}]
  %s11 = inlined_call_operand.vmem [shape: bf16[64,32], index: 11, kind: input, shape index: {}]
  %s12 = inlined_call_operand.vmem [shape: f32[1,32], index: 12, kind: input, shape index: {}]
  %s13 = inlined_call_operand.vmem [shape: f32[1,32], index: 13, kind: input, shape index: {}]
  %s14 = inlined_call_operand.vmem [shape: f32[1,32], index: 14, kind: input, shape index: {}]
  %s15 = inlined_call_operand.vmem [shape: f32[1,32], index: 15, kind: input, shape index: {}]
  %s16 = inlined_call_operand.vmem [shape: f32[1,32], index: 16, kind: input, shape index: {}]
  %s17 = inlined_call_operand.vmem [shape: f32[1,32], index: 17, kind: input, shape index: {}]
  %s18 = inlined_call_operand.vmem [shape: f32[1,32], index: 18, kind: input, shape index: {}]
  %s19 = inlined_call_operand.hbm [shape: f32[2,8,32], index: 19, kind: output, shape index: {}]
  %s20 = sld [smem:[#allocation0]]
  $region117: #{tpu_custom_call.1} parent=0
    _
  %s22 = ssub.s32 1, %s20
  %s23 = scalar_select 0, %s22, %s20
  $region1: #{tpu_custom_call.1} parent=0
    #allocation7 [shape = 'u8[8192]{0}', space=vmem, size = 0x2000, scoped, tag = 'output window, operand 0']
    #allocation8 [shape = 's32[2]{0}', space=sflag, size = 0x8, scoped, tag = 'scoped memory for tpu_custom_call.1']
    %24 = vsyncpa [#allocation8], 0
    %s25 = scalar_lea.sflag [#allocation8], 1
    %26 = vsyncpa %s25, 0
    loop: start=0, step=1, limit=4
    $region2: #{tpu_custom_call.1} parent=1 // loop_pre_header
      _
    $region3: #{tpu_custom_call.1} parent=1 // loop_header
      %s28 = sphi 0, %s32
      %p29 = scmp.ge.s32.totalorder %s28, 4
      %s35 = sphi 0, %s47
      %s36 = sphi 0, %s43
      %s37 = sphi 0, %s35
      %s38 = sphi 0, %s36
      %s39 = sphi 0, %s37
      %s40 = sphi 0, %s38
      %s50 = sphi 0, %s52
      %s53 = sphi 0, %s50
      %s54 = sphi 0, %s53
      %s70 = sphi 0, %s54
      %s74 = sphi 0, %s74
      %s76 = sphi 0, %s74
      %s77 = sphi 0, %s76
      %s91 = sphi 0, %s77
      %s95 = sphi 0, %s95
      %s97 = sphi 0, %s95
      %s98 = sphi 0, %s97
      %s112 = sphi 0, %s98
      %s116 = sphi 0, %s116
      %s118 = sphi 0, %s116
      %s119 = sphi 0, %s118
      %s133 = sphi 0, %s119
      %s137 = sphi 0, %s137
      %s139 = sphi 0, %s137
      %s140 = sphi 0, %s139
      %s154 = sphi 0, %s140
      %s158 = sphi 0, %s158
      %s160 = sphi 0, %s158
      %s161 = sphi 0, %s160
      %s175 = sphi 0, %s161
      %s179 = sphi 0, %s179
      %s181 = sphi 0, %s179
      %s182 = sphi 0, %s181
      %s196 = sphi 0, %s182
      %s200 = sphi 0, %s200
      %s202 = sphi 0, %s200
      %s203 = sphi 0, %s202
      %s217 = sphi 0, %s203
      %s221 = sphi 0, %s221
      %s223 = sphi 0, %s221
      %s224 = sphi 0, %s223
      %s238 = sphi 0, %s224
      %s244 = sphi 0, %s246
      %s247 = sphi 0, %s244
      %s248 = sphi 0, %s247
      %s264 = sphi 0, %s248
      %s270 = sphi 0, %s272
      %s273 = sphi 0, %s270
      %s274 = sphi 0, %s273
      %s290 = sphi 0, %s274
      %s296 = sphi 0, %s298
      %s299 = sphi 0, %s296
      %s300 = sphi 0, %s299
      %s316 = sphi 0, %s300
      %s320 = sphi 0, %s320
      %s322 = sphi 0, %s320
      %s323 = sphi 0, %s322
      %s337 = sphi 0, %s323
      %s341 = sphi 0, %s341
      %s343 = sphi 0, %s341
      %s344 = sphi 0, %s343
      %s358 = sphi 0, %s344
      %s362 = sphi 0, %s362
      %s364 = sphi 0, %s362
      %s365 = sphi 0, %s364
      %s379 = sphi 0, %s365
      %s383 = sphi 0, %s383
      %s385 = sphi 0, %s383
      %s386 = sphi 0, %s385
      %s400 = sphi 0, %s386
      %s404 = sphi 0, %s404
      %s406 = sphi 0, %s404
      %s407 = sphi 0, %s406
      %s421 = sphi 0, %s407
      %s425 = sphi 0, %s425
      %s427 = sphi 0, %s425
      %s428 = sphi 0, %s427
      %s442 = sphi 0, %s428
      %s446 = sphi 0, %s446
      %s448 = sphi 0, %s446
      %s449 = sphi 0, %s448
      %s463 = sphi 0, %s449
      %s469 = sphi 0, %s471
      %s472 = sphi 0, %s469
      %s473 = sphi 0, %s472
      %s489 = sphi 0, %s473
    $region4: #{tpu_custom_call.1} parent=1 // loop_header_branch
      %31 = sbr.rel (%p29) target = $region8
    $region5: #{tpu_custom_call.1} parent=1 // loop_body
      %s33 = ssub.s32 %s28, 1
      %s34 = ssub.s32 %s28, 2
      %s41 = sadd.s32 1, %s36
      %p42 = scmp.ge.s32.totalorder %s41, 1
      %s43 = scalar_select %p42, 0, %s41
      %s44 = sadd.s32 1, %s35
      %s45 = scalar_select %p42, %s44, %s35
      %p46 = scmp.ge.s32.totalorder %s45, 2
      %s47 = scalar_select %p46, 0, %s45
      %s48 = ssub.s32 %s35, %s47
      %p49 = scmp.eq.s32.totalorder %s48, 0
      %s51 = sadd.s32 %s50, 1
      %s52 = scalar_select %p49, %s50, %s51
      %p55 = pneg %p49
      %p56 = scmp.eq.s32.totalorder %s28, 1
      %p57 = por %p55, %p56
      %p58 = scmp.ne.s32.totalorder %s50, %s53
      %p59 = scmp.eq.s32.totalorder %s28, 0
      %p60 = por %p58, %p59
      %p61 = scmp.ne.s32.totalorder %s50, %s53
      %p62 = scmp.eq.s32.totalorder %s33, 1
      %p63 = por %p61, %p62
      %p64 = scmp.ne.s32.totalorder %s53, %s54
      %p65 = scmp.eq.s32.totalorder %s33, 0
      %p66 = por %p64, %p65
      %p67 = scmp.ne.s32.totalorder %s53, %s54
      %p68 = scmp.eq.s32.totalorder %s34, 1
      %p69 = por %p67, %p68
      %p71 = scmp.ne.s32.totalorder %s54, %s70
      %p72 = scmp.eq.s32.totalorder %s34, 0
      %p73 = por %p71, %p72
      %s75 = sadd.s32 %s74, 1
      %p78 = scmp.eq.s32.totalorder %s28, 1
      %p79 = scmp.ne.s32.totalorder %s74, %s76
      %p80 = scmp.eq.s32.totalorder %s28, 0
      %p81 = por %p79, %p80
      %p82 = scmp.ne.s32.totalorder %s74, %s76
      %p83 = scmp.eq.s32.totalorder %s33, 1
      %p84 = por %p82, %p83
      %p85 = scmp.ne.s32.totalorder %s76, %s77
      %p86 = scmp.eq.s32.totalorder %s33, 0
      %p87 = por %p85, %p86
      %p88 = scmp.ne.s32.totalorder %s76, %s77
      %p89 = scmp.eq.s32.totalorder %s34, 1
      %p90 = por %p88, %p89
      %p92 = scmp.ne.s32.totalorder %s77, %s91
      %p93 = scmp.eq.s32.totalorder %s34, 0
      %p94 = por %p92, %p93
      %s96 = sadd.s32 %s95, 1
      %p99 = scmp.eq.s32.totalorder %s28, 1
      %p100 = scmp.ne.s32.totalorder %s95, %s97
      %p101 = scmp.eq.s32.totalorder %s28, 0
      %p102 = por %p100, %p101
      %p103 = scmp.ne.s32.totalorder %s95, %s97
      %p104 = scmp.eq.s32.totalorder %s33, 1
      %p105 = por %p103, %p104
      %p106 = scmp.ne.s32.totalorder %s97, %s98
      %p107 = scmp.eq.s32.totalorder %s33, 0
      %p108 = por %p106, %p107
      %p109 = scmp.ne.s32.totalorder %s97, %s98
      %p110 = scmp.eq.s32.totalorder %s34, 1
      %p111 = por %p109, %p110
      %p113 = scmp.ne.s32.totalorder %s98, %s112
      %p114 = scmp.eq.s32.totalorder %s34, 0
      %p115 = por %p113, %p114
      %s117 = sadd.s32 %s116, 1
      %p120 = scmp.eq.s32.totalorder %s28, 1
      %p121 = scmp.ne.s32.totalorder %s116, %s118
      %p122 = scmp.eq.s32.totalorder %s28, 0
      %p123 = por %p121, %p122
      %p124 = scmp.ne.s32.totalorder %s116, %s118
      %p125 = scmp.eq.s32.totalorder %s33, 1
      %p126 = por %p124, %p125
      %p127 = scmp.ne.s32.totalorder %s118, %s119
      %p128 = scmp.eq.s32.totalorder %s33, 0
      %p129 = por %p127, %p128
      %p130 = scmp.ne.s32.totalorder %s118, %s119
      %p131 = scmp.eq.s32.totalorder %s34, 1
      %p132 = por %p130, %p131
      %p134 = scmp.ne.s32.totalorder %s119, %s133
      %p135 = scmp.eq.s32.totalorder %s34, 0
      %p136 = por %p134, %p135
      %s138 = sadd.s32 %s137, 1
      %p141 = scmp.eq.s32.totalorder %s28, 1
      %p142 = scmp.ne.s32.totalorder %s137, %s139
      %p143 = scmp.eq.s32.totalorder %s28, 0
      %p144 = por %p142, %p143
      %p145 = scmp.ne.s32.totalorder %s137, %s139
      %p146 = scmp.eq.s32.totalorder %s33, 1
      %p147 = por %p145, %p146
      %p148 = scmp.ne.s32.totalorder %s139, %s140
      %p149 = scmp.eq.s32.totalorder %s33, 0
      %p150 = por %p148, %p149
      %p151 = scmp.ne.s32.totalorder %s139, %s140
      %p152 = scmp.eq.s32.totalorder %s34, 1
      %p153 = por %p151, %p152
      %p155 = scmp.ne.s32.totalorder %s140, %s154
      %p156 = scmp.eq.s32.totalorder %s34, 0
      %p157 = por %p155, %p156
      %s159 = sadd.s32 %s158, 1
      %p162 = scmp.eq.s32.totalorder %s28, 1
      %p163 = scmp.ne.s32.totalorder %s158, %s160
      %p164 = scmp.eq.s32.totalorder %s28, 0
      %p165 = por %p163, %p164
      %p166 = scmp.ne.s32.totalorder %s158, %s160
      %p167 = scmp.eq.s32.totalorder %s33, 1
      %p168 = por %p166, %p167
      %p169 = scmp.ne.s32.totalorder %s160, %s161
      %p170 = scmp.eq.s32.totalorder %s33, 0
      %p171 = por %p169, %p170
      %p172 = scmp.ne.s32.totalorder %s160, %s161
      %p173 = scmp.eq.s32.totalorder %s34, 1
      %p174 = por %p172, %p173
      %p176 = scmp.ne.s32.totalorder %s161, %s175
      %p177 = scmp.eq.s32.totalorder %s34, 0
      %p178 = por %p176, %p177
      %s180 = sadd.s32 %s179, 1
      %p183 = scmp.eq.s32.totalorder %s28, 1
      %p184 = scmp.ne.s32.totalorder %s179, %s181
      %p185 = scmp.eq.s32.totalorder %s28, 0
      %p186 = por %p184, %p185
      %p187 = scmp.ne.s32.totalorder %s179, %s181
      %p188 = scmp.eq.s32.totalorder %s33, 1
      %p189 = por %p187, %p188
      %p190 = scmp.ne.s32.totalorder %s181, %s182
      %p191 = scmp.eq.s32.totalorder %s33, 0
      %p192 = por %p190, %p191
      %p193 = scmp.ne.s32.totalorder %s181, %s182
      %p194 = scmp.eq.s32.totalorder %s34, 1
      %p195 = por %p193, %p194
      %p197 = scmp.ne.s32.totalorder %s182, %s196
      %p198 = scmp.eq.s32.totalorder %s34, 0
      %p199 = por %p197, %p198
      %s201 = sadd.s32 %s200, 1
      %p204 = scmp.eq.s32.totalorder %s28, 1
      %p205 = scmp.ne.s32.totalorder %s200, %s202
      %p206 = scmp.eq.s32.totalorder %s28, 0
      %p207 = por %p205, %p206
      %p208 = scmp.ne.s32.totalorder %s200, %s202
      %p209 = scmp.eq.s32.totalorder %s33, 1
      %p210 = por %p208, %p209
      %p211 = scmp.ne.s32.totalorder %s202, %s203
      %p212 = scmp.eq.s32.totalorder %s33, 0
      %p213 = por %p211, %p212
      %p214 = scmp.ne.s32.totalorder %s202, %s203
      %p215 = scmp.eq.s32.totalorder %s34, 1
      %p216 = por %p214, %p215
      %p218 = scmp.ne.s32.totalorder %s203, %s217
      %p219 = scmp.eq.s32.totalorder %s34, 0
      %p220 = por %p218, %p219
      %s222 = sadd.s32 %s221, 1
      %p225 = scmp.eq.s32.totalorder %s28, 1
      %p226 = scmp.ne.s32.totalorder %s221, %s223
      %p227 = scmp.eq.s32.totalorder %s28, 0
      %p228 = por %p226, %p227
      %p229 = scmp.ne.s32.totalorder %s221, %s223
      %p230 = scmp.eq.s32.totalorder %s33, 1
      %p231 = por %p229, %p230
      %p232 = scmp.ne.s32.totalorder %s223, %s224
      %p233 = scmp.eq.s32.totalorder %s33, 0
      %p234 = por %p232, %p233
      %p235 = scmp.ne.s32.totalorder %s223, %s224
      %p236 = scmp.eq.s32.totalorder %s34, 1
      %p237 = por %p235, %p236
      %p239 = scmp.ne.s32.totalorder %s224, %s238
      %p240 = scmp.eq.s32.totalorder %s34, 0
      %p241 = por %p239, %p240
      %s242 = ssub.s32 %s36, %s43
      %p243 = scmp.eq.s32.totalorder %s242, 0
      %s245 = sadd.s32 %s244, 1
      %s246 = scalar_select %p243, %s244, %s245
      %p249 = pneg %p243
      %p250 = scmp.eq.s32.totalorder %s28, 1
      %p251 = por %p249, %p250
      %p252 = scmp.ne.s32.totalorder %s244, %s247
      %p253 = scmp.eq.s32.totalorder %s28, 0
      %p254 = por %p252, %p253
      %p255 = scmp.ne.s32.totalorder %s244, %s247
      %p256 = scmp.eq.s32.totalorder %s33, 1
      %p257 = por %p255, %p256
      %p258 = scmp.ne.s32.totalorder %s247, %s248
      %p259 = scmp.eq.s32.totalorder %s33, 0
      %p260 = por %p258, %p259
      %p261 = scmp.ne.s32.totalorder %s247, %s248
      %p262 = scmp.eq.s32.totalorder %s34, 1
      %p263 = por %p261, %p262
      %p265 = scmp.ne.s32.totalorder %s248, %s264
      %p266 = scmp.eq.s32.totalorder %s34, 0
      %p267 = por %p265, %p266
      %s268 = ssub.s32 %s36, %s43
      %p269 = scmp.eq.s32.totalorder %s268, 0
      %s271 = sadd.s32 %s270, 1
      %s272 = scalar_select %p269, %s270, %s271
      %p275 = pneg %p269
      %p276 = scmp.eq.s32.totalorder %s28, 1
      %p277 = por %p275, %p276
      %p278 = scmp.ne.s32.totalorder %s270, %s273
      %p279 = scmp.eq.s32.totalorder %s28, 0
      %p280 = por %p278, %p279
      %p281 = scmp.ne.s32.totalorder %s270, %s273
      %p282 = scmp.eq.s32.totalorder %s33, 1
      %p283 = por %p281, %p282
      %p284 = scmp.ne.s32.totalorder %s273, %s274
      %p285 = scmp.eq.s32.totalorder %s33, 0
      %p286 = por %p284, %p285
      %p287 = scmp.ne.s32.totalorder %s273, %s274
      %p288 = scmp.eq.s32.totalorder %s34, 1
      %p289 = por %p287, %p288
      %p291 = scmp.ne.s32.totalorder %s274, %s290
      %p292 = scmp.eq.s32.totalorder %s34, 0
      %p293 = por %p291, %p292
      %s294 = ssub.s32 %s36, %s43
      %p295 = scmp.eq.s32.totalorder %s294, 0
      %s297 = sadd.s32 %s296, 1
      %s298 = scalar_select %p295, %s296, %s297
      %p301 = pneg %p295
      %p302 = scmp.eq.s32.totalorder %s28, 1
      %p303 = por %p301, %p302
      %p304 = scmp.ne.s32.totalorder %s296, %s299
      %p305 = scmp.eq.s32.totalorder %s28, 0
      %p306 = por %p304, %p305
      %p307 = scmp.ne.s32.totalorder %s296, %s299
      %p308 = scmp.eq.s32.totalorder %s33, 1
      %p309 = por %p307, %p308
      %p310 = scmp.ne.s32.totalorder %s299, %s300
      %p311 = scmp.eq.s32.totalorder %s33, 0
      %p312 = por %p310, %p311
      %p313 = scmp.ne.s32.totalorder %s299, %s300
      %p314 = scmp.eq.s32.totalorder %s34, 1
      %p315 = por %p313, %p314
      %p317 = scmp.ne.s32.totalorder %s300, %s316
      %p318 = scmp.eq.s32.totalorder %s34, 0
      %p319 = por %p317, %p318
      %s321 = sadd.s32 %s320, 1
      %p324 = scmp.eq.s32.totalorder %s28, 1
      %p325 = scmp.ne.s32.totalorder %s320, %s322
      %p326 = scmp.eq.s32.totalorder %s28, 0
      %p327 = por %p325, %p326
      %p328 = scmp.ne.s32.totalorder %s320, %s322
      %p329 = scmp.eq.s32.totalorder %s33, 1
      %p330 = por %p328, %p329
      %p331 = scmp.ne.s32.totalorder %s322, %s323
      %p332 = scmp.eq.s32.totalorder %s33, 0
      %p333 = por %p331, %p332
      %p334 = scmp.ne.s32.totalorder %s322, %s323
      %p335 = scmp.eq.s32.totalorder %s34, 1
      %p336 = por %p334, %p335
      %p338 = scmp.ne.s32.totalorder %s323, %s337
      %p339 = scmp.eq.s32.totalorder %s34, 0
      %p340 = por %p338, %p339
      %s342 = sadd.s32 %s341, 1
      %p345 = scmp.eq.s32.totalorder %s28, 1
      %p346 = scmp.ne.s32.totalorder %s341, %s343
      %p347 = scmp.eq.s32.totalorder %s28, 0
      %p348 = por %p346, %p347
      %p349 = scmp.ne.s32.totalorder %s341, %s343
      %p350 = scmp.eq.s32.totalorder %s33, 1
      %p351 = por %p349, %p350
      %p352 = scmp.ne.s32.totalorder %s343, %s344
      %p353 = scmp.eq.s32.totalorder %s33, 0
      %p354 = por %p352, %p353
      %p355 = scmp.ne.s32.totalorder %s343, %s344
      %p356 = scmp.eq.s32.totalorder %s34, 1
      %p357 = por %p355, %p356
      %p359 = scmp.ne.s32.totalorder %s344, %s358
      %p360 = scmp.eq.s32.totalorder %s34, 0
      %p361 = por %p359, %p360
      %s363 = sadd.s32 %s362, 1
      %p366 = scmp.eq.s32.totalorder %s28, 1
      %p367 = scmp.ne.s32.totalorder %s362, %s364
      %p368 = scmp.eq.s32.totalorder %s28, 0
      %p369 = por %p367, %p368
      %p370 = scmp.ne.s32.totalorder %s362, %s364
      %p371 = scmp.eq.s32.totalorder %s33, 1
      %p372 = por %p370, %p371
      %p373 = scmp.ne.s32.totalorder %s364, %s365
      %p374 = scmp.eq.s32.totalorder %s33, 0
      %p375 = por %p373, %p374
      %p376 = scmp.ne.s32.totalorder %s364, %s365
      %p377 = scmp.eq.s32.totalorder %s34, 1
      %p378 = por %p376, %p377
      %p380 = scmp.ne.s32.totalorder %s365, %s379
      %p381 = scmp.eq.s32.totalorder %s34, 0
      %p382 = por %p380, %p381
      %s384 = sadd.s32 %s383, 1
      %p387 = scmp.eq.s32.totalorder %s28, 1
      %p388 = scmp.ne.s32.totalorder %s383, %s385
      %p389 = scmp.eq.s32.totalorder %s28, 0
      %p390 = por %p388, %p389
      %p391 = scmp.ne.s32.totalorder %s383, %s385
      %p392 = scmp.eq.s32.totalorder %s33, 1
      %p393 = por %p391, %p392
      %p394 = scmp.ne.s32.totalorder %s385, %s386
      %p395 = scmp.eq.s32.totalorder %s33, 0
      %p396 = por %p394, %p395
      %p397 = scmp.ne.s32.totalorder %s385, %s386
      %p398 = scmp.eq.s32.totalorder %s34, 1
      %p399 = por %p397, %p398
      %p401 = scmp.ne.s32.totalorder %s386, %s400
      %p402 = scmp.eq.s32.totalorder %s34, 0
      %p403 = por %p401, %p402
      %s405 = sadd.s32 %s404, 1
      %p408 = scmp.eq.s32.totalorder %s28, 1
      %p409 = scmp.ne.s32.totalorder %s404, %s406
      %p410 = scmp.eq.s32.totalorder %s28, 0
      %p411 = por %p409, %p410
      %p412 = scmp.ne.s32.totalorder %s404, %s406
      %p413 = scmp.eq.s32.totalorder %s33, 1
      %p414 = por %p412, %p413
      %p415 = scmp.ne.s32.totalorder %s406, %s407
      %p416 = scmp.eq.s32.totalorder %s33, 0
      %p417 = por %p415, %p416
      %p418 = scmp.ne.s32.totalorder %s406, %s407
      %p419 = scmp.eq.s32.totalorder %s34, 1
      %p420 = por %p418, %p419
      %p422 = scmp.ne.s32.totalorder %s407, %s421
      %p423 = scmp.eq.s32.totalorder %s34, 0
      %p424 = por %p422, %p423
      %s426 = sadd.s32 %s425, 1
      %p429 = scmp.eq.s32.totalorder %s28, 1
      %p430 = scmp.ne.s32.totalorder %s425, %s427
      %p431 = scmp.eq.s32.totalorder %s28, 0
      %p432 = por %p430, %p431
      %p433 = scmp.ne.s32.totalorder %s425, %s427
      %p434 = scmp.eq.s32.totalorder %s33, 1
      %p435 = por %p433, %p434
      %p436 = scmp.ne.s32.totalorder %s427, %s428
      %p437 = scmp.eq.s32.totalorder %s33, 0
      %p438 = por %p436, %p437
      %p439 = scmp.ne.s32.totalorder %s427, %s428
      %p440 = scmp.eq.s32.totalorder %s34, 1
      %p441 = por %p439, %p440
      %p443 = scmp.ne.s32.totalorder %s428, %s442
      %p444 = scmp.eq.s32.totalorder %s34, 0
      %p445 = por %p443, %p444
      %s447 = sadd.s32 %s446, 1
      %p450 = scmp.eq.s32.totalorder %s28, 1
      %p451 = scmp.ne.s32.totalorder %s446, %s448
      %p452 = scmp.eq.s32.totalorder %s28, 0
      %p453 = por %p451, %p452
      %p454 = scmp.ne.s32.totalorder %s446, %s448
      %p455 = scmp.eq.s32.totalorder %s33, 1
      %p456 = por %p454, %p455
      %p457 = scmp.ne.s32.totalorder %s448, %s449
      %p458 = scmp.eq.s32.totalorder %s33, 0
      %p459 = por %p457, %p458
      %p460 = scmp.ne.s32.totalorder %s448, %s449
      %p461 = scmp.eq.s32.totalorder %s34, 1
      %p462 = por %p460, %p461
      %p464 = scmp.ne.s32.totalorder %s449, %s463
      %p465 = scmp.eq.s32.totalorder %s34, 0
      %p466 = por %p464, %p465
      %s467 = ssub.s32 %s35, %s47
      %p468 = scmp.eq.s32.totalorder %s467, 0
      %s470 = sadd.s32 %s469, 1
      %s471 = scalar_select %p468, %s469, %s470
      %p474 = pneg %p468
      %p475 = scmp.eq.s32.totalorder %s28, 1
      %p476 = por %p474, %p475
      %p477 = scmp.ne.s32.totalorder %s469, %s472
      %p478 = scmp.eq.s32.totalorder %s28, 0
      %p479 = por %p477, %p478
      %p480 = scmp.ne.s32.totalorder %s469, %s472
      %p481 = scmp.eq.s32.totalorder %s33, 1
      %p482 = por %p480, %p481
      %p483 = scmp.ne.s32.totalorder %s472, %s473
      %p484 = scmp.eq.s32.totalorder %s33, 0
      %p485 = por %p483, %p484
      %p486 = scmp.ne.s32.totalorder %s472, %s473
      %p487 = scmp.eq.s32.totalorder %s34, 1
      %p488 = por %p486, %p487
      %p490 = scmp.ne.s32.totalorder %s473, %s489
      %p491 = scmp.eq.s32.totalorder %s34, 0
      %p492 = por %p490, %p491
      %p493 = scmp.le.s32.totalorder 1, %s28
      %p494 = scmp.lt.s32.totalorder %s28, 3
      %p495 = pnand %p493, %p494
      %p496 = pneg %p495
      // Predicated region
      $region9: #{tpu_custom_call.1} parent=5 // pred_check
        _
      $region10: #{tpu_custom_call.1} parent=5 // pred_check_branch
        %498 = sbr.rel (%p495) target = $region12
      $region11: #{tpu_custom_call.1} parent=5 // pred_region
        %s499 = ssub.s32 %s28, 1
        // Predicated region
        $region13: #{tpu_custom_call.1} parent=11 // pred_check
          %p500 = pneg %p87
        $region14: #{tpu_custom_call.1} parent=11 // pred_check_branch
          %502 = sbr.rel (%p500) target = $region16
        $region15: #{tpu_custom_call.1} parent=11 // pred_region
          _
        $region16: #{tpu_custom_call.1} parent=11 // pred_fallthru
          _
        // Predicated region
        $region17: #{tpu_custom_call.1} parent=11 // pred_check
          %p503 = pneg %p108
        $region18: #{tpu_custom_call.1} parent=11 // pred_check_branch
          %505 = sbr.rel (%p503) target = $region20
        $region19: #{tpu_custom_call.1} parent=11 // pred_region
          _
        $region20: #{tpu_custom_call.1} parent=11 // pred_fallthru
          _
        // Predicated region
        $region21: #{tpu_custom_call.1} parent=11 // pred_check
          %p506 = pneg %p129
        $region22: #{tpu_custom_call.1} parent=11 // pred_check_branch
          %508 = sbr.rel (%p506) target = $region24
        $region23: #{tpu_custom_call.1} parent=11 // pred_region
          _
        $region24: #{tpu_custom_call.1} parent=11 // pred_fallthru
          _
        // Predicated region
        $region25: #{tpu_custom_call.1} parent=11 // pred_check
          %p509 = pneg %p150
        $region26: #{tpu_custom_call.1} parent=11 // pred_check_branch
          %511 = sbr.rel (%p509) target = $region28
        $region27: #{tpu_custom_call.1} parent=11 // pred_region
          _
        $region28: #{tpu_custom_call.1} parent=11 // pred_fallthru
          _
        // Predicated region
        $region29: #{tpu_custom_call.1} parent=11 // pred_check
          %p512 = pneg %p171
        $region30: #{tpu_custom_call.1} parent=11 // pred_check_branch
          %514 = sbr.rel (%p512) target = $region32
        $region31: #{tpu_custom_call.1} parent=11 // pred_region
          _
        $region32: #{tpu_custom_call.1} parent=11 // pred_fallthru
          _
        // Predicated region
        $region33: #{tpu_custom_call.1} parent=11 // pred_check
          %p515 = pneg %p192
        $region34: #{tpu_custom_call.1} parent=11 // pred_check_branch
          %517 = sbr.rel (%p515) target = $region36
        $region35: #{tpu_custom_call.1} parent=11 // pred_region
          _
        $region36: #{tpu_custom_call.1} parent=11 // pred_fallthru
          _
        // Predicated region
        $region37: #{tpu_custom_call.1} parent=11 // pred_check
          %p518 = pneg %p213
        $region38: #{tpu_custom_call.1} parent=11 // pred_check_branch
          %520 = sbr.rel (%p518) target = $region40
        $region39: #{tpu_custom_call.1} parent=11 // pred_region
          _
        $region40: #{tpu_custom_call.1} parent=11 // pred_fallthru
          _
        // Predicated region
        $region41: #{tpu_custom_call.1} parent=11 // pred_check
          %p521 = pneg %p234
        $region42: #{tpu_custom_call.1} parent=11 // pred_check_branch
          %523 = sbr.rel (%p521) target = $region44
        $region43: #{tpu_custom_call.1} parent=11 // pred_region
          _
        $region44: #{tpu_custom_call.1} parent=11 // pred_fallthru
          _
        // Predicated region
        $region45: #{tpu_custom_call.1} parent=11 // pred_check
          %p524 = pneg %p260
        $region46: #{tpu_custom_call.1} parent=11 // pred_check_branch
          %526 = sbr.rel (%p524) target = $region48
        $region47: #{tpu_custom_call.1} parent=11 // pred_region
          %p527 = scmp.lt.s32.totalorder %s38, 0
          %s528 = scalar_select %p527, %s38, 0
          %s529 = smul.addr %s528, 4
          %s530 = scalar_lea.vmem %s9, %s529
        $region48: #{tpu_custom_call.1} parent=11 // pred_fallthru
          _
        // Predicated region
        $region49: #{tpu_custom_call.1} parent=11 // pred_check
          %p531 = pneg %p286
        $region50: #{tpu_custom_call.1} parent=11 // pred_check_branch
          %533 = sbr.rel (%p531) target = $region52
        $region51: #{tpu_custom_call.1} parent=11 // pred_region
          %p534 = scmp.lt.s32.totalorder %s38, 0
          %s535 = scalar_select %p534, %s38, 0
          %s536 = scalar_lea.vmem %s10, %s535
        $region52: #{tpu_custom_call.1} parent=11 // pred_fallthru
          _
        // Predicated region
        $region53: #{tpu_custom_call.1} parent=11 // pred_check
          %p537 = pneg %p312
        $region54: #{tpu_custom_call.1} parent=11 // pred_check_branch
          %539 = sbr.rel (%p537) target = $region56
        $region55: #{tpu_custom_call.1} parent=11 // pred_region
          %s540 = smul.u32 8, %s38
          %p541 = scmp.lt.s32.totalorder %s540, 7
          %s542 = scalar_select %p541, %s540, 7
          %s543 = smul.addr %s542, 4
          %s544 = scalar_lea.vmem %s11, %s543
          %s545 = smul.u32 8, %s38
        $region56: #{tpu_custom_call.1} parent=11 // pred_fallthru
          _
        // Predicated region
        $region57: #{tpu_custom_call.1} parent=11 // pred_check
          %p546 = pneg %p333
        $region58: #{tpu_custom_call.1} parent=11 // pred_check_branch
          %548 = sbr.rel (%p546) target = $region60
        $region59: #{tpu_custom_call.1} parent=11 // pred_region
          _
        $region60: #{tpu_custom_call.1} parent=11 // pred_fallthru
          _
        // Predicated region
        $region61: #{tpu_custom_call.1} parent=11 // pred_check
          %p549 = pneg %p354
        $region62: #{tpu_custom_call.1} parent=11 // pred_check_branch
          %551 = sbr.rel (%p549) target = $region64
        $region63: #{tpu_custom_call.1} parent=11 // pred_region
          _
        $region64: #{tpu_custom_call.1} parent=11 // pred_fallthru
          _
        // Predicated region
        $region65: #{tpu_custom_call.1} parent=11 // pred_check
          %p552 = pneg %p375
        $region66: #{tpu_custom_call.1} parent=11 // pred_check_branch
          %554 = sbr.rel (%p552) target = $region68
        $region67: #{tpu_custom_call.1} parent=11 // pred_region
          _
        $region68: #{tpu_custom_call.1} parent=11 // pred_fallthru
          _
        // Predicated region
        $region69: #{tpu_custom_call.1} parent=11 // pred_check
          %p555 = pneg %p396
        $region70: #{tpu_custom_call.1} parent=11 // pred_check_branch
          %557 = sbr.rel (%p555) target = $region72
        $region71: #{tpu_custom_call.1} parent=11 // pred_region
          _
        $region72: #{tpu_custom_call.1} parent=11 // pred_fallthru
          _
        // Predicated region
        $region73: #{tpu_custom_call.1} parent=11 // pred_check
          %p558 = pneg %p417
        $region74: #{tpu_custom_call.1} parent=11 // pred_check_branch
          %560 = sbr.rel (%p558) target = $region76
        $region75: #{tpu_custom_call.1} parent=11 // pred_region
          _
        $region76: #{tpu_custom_call.1} parent=11 // pred_fallthru
          _
        // Predicated region
        $region77: #{tpu_custom_call.1} parent=11 // pred_check
          %p561 = pneg %p438
        $region78: #{tpu_custom_call.1} parent=11 // pred_check_branch
          %563 = sbr.rel (%p561) target = $region80
        $region79: #{tpu_custom_call.1} parent=11 // pred_region
          _
        $region80: #{tpu_custom_call.1} parent=11 // pred_fallthru
          _
        // Predicated region
        $region81: #{tpu_custom_call.1} parent=11 // pred_check
          %p564 = pneg %p459
        $region82: #{tpu_custom_call.1} parent=11 // pred_check_branch
          %566 = sbr.rel (%p564) target = $region84
        $region83: #{tpu_custom_call.1} parent=11 // pred_region
          _
        $region84: #{tpu_custom_call.1} parent=11 // pred_fallthru
          _
      $region12: #{tpu_custom_call.1} parent=5 // pred_fallthru
        _
      %p567 = scmp.lt.s32.totalorder %s28, 2
      // Predicated region
      $region85: #{tpu_custom_call.1} parent=5 // pred_check
        %p568 = pneg %p567
      $region86: #{tpu_custom_call.1} parent=5 // pred_check_branch
        %570 = sbr.rel (%p568) target = $region88
      $region87: #{tpu_custom_call.1} parent=5 // pred_region
        // Predicated region
        $region89: #{tpu_custom_call.1} parent=87 // pred_check
          %p571 = pneg %p60
        $region90: #{tpu_custom_call.1} parent=87 // pred_check_branch
          %573 = sbr.rel (%p571) target = $region92
        $region91: #{tpu_custom_call.1} parent=87 // pred_region
          %p574 = scmp.lt.s32.totalorder %s35, 1
          %s575 = scalar_select %p574, %s35, 1
          %s576 = smul.addr %s575, 8
          %s577 = scalar_lea.vmem %s0, %s576
        $region92: #{tpu_custom_call.1} parent=87 // pred_fallthru
          _
      $region88: #{tpu_custom_call.1} parent=5 // pred_fallthru
        _
      %p578 = scmp.le.s32.totalorder 1, %s28
      %p579 = scmp.lt.s32.totalorder %s28, 3
      %p580 = pnand %p578, %p579
      %p581 = pneg %p580
      // Predicated region
      $region93: #{tpu_custom_call.1} parent=5 // pred_check
        _
      $region94: #{tpu_custom_call.1} parent=5 // pred_check_branch
        %583 = sbr.rel (%p580) target = $region96
      $region95: #{tpu_custom_call.1} parent=5 // pred_region
        %s584 = ssub.s32 %s28, 1
        %p585 = scmp.lt.s32.totalorder %s37, 1
        %s586 = scalar_select %p585, %s37, 1
        %s587 = smul.addr %s586, 8
        %s588 = scalar_lea.vmem %s0, %s587
        %p589 = pneg %p66
        %p590 = pneg %p63
        %p591 = pneg %p87
        %p592 = pneg %p84
        %p593 = pneg %p108
        %p594 = pneg %p105
        %p595 = pneg %p129
        %p596 = pneg %p126
        %p597 = pneg %p150
        %p598 = pneg %p147
        %p599 = pneg %p171
        %p600 = pneg %p168
        %p601 = pneg %p192
        %p602 = pneg %p189
        %p603 = pneg %p213
        %p604 = pneg %p210
        %p605 = pneg %p234
        %p606 = pneg %p231
        %p607 = scmp.lt.s32.totalorder %s38, 0
        %s608 = scalar_select %p607, %s38, 0
        %s609 = smul.addr %s608, 4
        %s610 = scalar_lea.vmem %s9, %s609
        %p611 = pneg %p260
        %p612 = pneg %p257
        %p613 = scmp.lt.s32.totalorder %s38, 0
        %s614 = scalar_select %p613, %s38, 0
        %s615 = scalar_lea.vmem %s10, %s614
        %p616 = pneg %p286
        %p617 = pneg %p283
        %s618 = smul.u32 8, %s38
        %p619 = scmp.lt.s32.totalorder %s618, 7
        %s620 = scalar_select %p619, %s618, 7
        %s621 = smul.addr %s620, 4
        %s622 = scalar_lea.vmem %s11, %s621
        %p623 = pneg %p312
        %p624 = pneg %p309
        %p625 = pneg %p333
        %p626 = pneg %p330
        %p627 = pneg %p354
        %p628 = pneg %p351
        %p629 = pneg %p375
        %p630 = pneg %p372
        %p631 = pneg %p396
        %p632 = pneg %p393
        %p633 = pneg %p417
        %p634 = pneg %p414
        %p635 = pneg %p438
        %p636 = pneg %p435
        %p637 = pneg %p459
        %p638 = pneg %p456
        %p639 = pneg %p485
        %p640 = pneg %p482
        %s641 = sand.u32 %s472, 1
        %s642 = scalar_lea.sflag [#allocation8], %s641
        %s643 = sand.u32 %s472, 1
        %s644 = smul.addr %s643, 8
        %s645 = scalar_lea.vmem [#allocation7], %s644
        %p646 = scmp.lt.s32.totalorder %s37, 1
        %s647 = scalar_select %p646, %s37, 1
        %s648 = smul.addr %s647, 8
        %s649 = scalar_lea.vmem %s0, %s648
        %p650 = scmp.lt.s32.totalorder %s38, 0
        %s651 = scalar_select %p650, %s38, 0
        %s652 = smul.addr %s651, 4
        %s653 = scalar_lea.vmem %s9, %s652
        %p654 = scmp.lt.s32.totalorder %s38, 0
        %s655 = scalar_select %p654, %s38, 0
        %s656 = scalar_lea.vmem %s10, %s655
        %s657 = smul.u32 8, %s38
        %p658 = scmp.lt.s32.totalorder %s657, 7
        %s659 = scalar_select %p658, %s657, 7
        %s660 = smul.addr %s659, 4
        %s661 = scalar_lea.vmem %s11, %s660
        %s662 = smul.u32 8, %s38
        %p664 = scmp.eq.s32.totalorder %s38, 0
        // Predicated region
        $region97: #{tpu_custom_call.1} parent=95 // pred_check
          %p665 = pneg %p664
        $region98: #{tpu_custom_call.1} parent=95 // pred_check_branch
          %667 = sbr.rel (%p665) target = $region100
        $region99: #{tpu_custom_call.1} parent=95 // pred_region
          %v668 = vld [vmem:[%s649] sm:$0xff]
          %v669 = vpack.c.bf16 %v668, %v668
          %v670 = vld [vmem:[%s1] sm:$0xf]
          %v671 = vld [vmem:[%s1 + $0x4] sm:$0xf]
          %v672 = vld [vmem:[%s1 + $0x8] sm:$0xf]
          %v673 = vld [vmem:[%s1 + $0xc] sm:$0xf]
          %v674 = vld [vmem:[%s4] sm:$0x1]
          %v676 = vlaneseq
          %v677 = vshrl.u32 %v676, 7
          %v678 = vsub.s32 0, %v677
          %v679 = vrot.slane %v674, %v678
          %v685 = vunpack.c.l.b16 %v670
          %v686 = vunpack.c.l.b16 %v671
          %v687 = vunpack.c.l.b16 %v672
          %v688 = vunpack.c.l.b16 %v673
          %v689 = vpack.c.b16 %v686, %v685
          %v690 = vpack.c.b16 %v688, %v687
          %vm693 = vcmask 261120
          %v695 = vsel %vm693, %v669, 0
          %697 = vmatprep.subr.bf16.mxu0 0
          %698 = vmatpush1.bf16.msra.mxu0 %v689
          %699 = vmatprep.subr.bf16.mxu0 0
          %700 = vmatpush1.bf16.msra.mxu0 %v690
          %701 = vmatprep.subr.bf16.mxu0 0
          %702 = vmatpush1.bf16.msra.mxu0 0
          %703 = vmatprep.subr.bf16.mxu0 0
          %704 = vmatpush1.bf16.msra.mxu0 0
          %705 = vmatprep.subr.bf16.mxu0 0
          %706 = vmatpush1.bf16.msra.mxu0 0
          %707 = vmatprep.subr.bf16.mxu0 0
          %708 = vmatpush1.bf16.msra.mxu0 0
          %709 = vmatprep.subr.bf16.mxu0 0
          %710 = vmatpush1.bf16.msra.mxu0 0
          %711 = vmatprep.subr.bf16.mxu0 0
          %712 = vmatpush1.bf16.msra.mxu0 0
          %713 = vmatprep.subr.bf16.mxu0 0
          %714 = vmatpush1.bf16.msra.mxu0 0
          %715 = vmatprep.subr.bf16.mxu0 0
          %716 = vmatpush1.bf16.msra.mxu0 0
          %717 = vmatprep.subr.bf16.mxu0 0
          %718 = vmatpush1.bf16.msra.mxu0 0
          %719 = vmatprep.subr.bf16.mxu0 0
          %720 = vmatpush1.bf16.msra.mxu0 0
          %721 = vmatprep.subr.bf16.mxu0 0
          %722 = vmatpush1.bf16.msra.mxu0 0
          %723 = vmatprep.subr.bf16.mxu0 0
          %724 = vmatpush1.bf16.msra.mxu0 0
          %725 = vmatprep.subr.bf16.mxu0 0
          %726 = vmatpush1.bf16.msra.mxu0 0
          %727 = vmatprep.subr.bf16.mxu0 0
          %728 = vmatpush1.bf16.msra.mxu0 0
          %729 = vmatprep.mubr.bf16.mxu0 0
          %730 = vmatmul.mubr.bf16.gmra.mrb[0].mxu0 %v695
          %v731 = vpop.f32.mrb[0].mxu0
          %v732 = vadd.f32 %v679, %v731
          %v733 = vpop.f32.mrb[0].mxu0
          %v734 = vpop.f32.mrb[0].mxu0
          %v735 = vpop.f32.mrb[0].mxu0
          %736 = vdwg.mxu0
          %v737 = vld [vmem:[%s2] sm:$0xf]
          %v738 = vld [vmem:[%s2 + $0x4] sm:$0xf]
          %v739 = vld [vmem:[%s2 + $0x8] sm:$0xf]
          %v740 = vld [vmem:[%s2 + $0xc] sm:$0xf]
          %v741 = vld [vmem:[%s5] sm:$0x1]
          %v743 = vlaneseq
          %v744 = vshrl.u32 %v743, 7
          %v745 = vsub.s32 0, %v744
          %v746 = vrot.slane %v741, %v745
          %v752 = vunpack.c.l.b16 %v737
          %v753 = vunpack.c.l.b16 %v738
          %v754 = vunpack.c.l.b16 %v739
          %v755 = vunpack.c.l.b16 %v740
          %v756 = vpack.c.b16 %v753, %v752
          %v757 = vpack.c.b16 %v755, %v754
          %760 = vmatprep.subr.bf16.mxu0 0
          %761 = vmatpush1.bf16.msra.mxu0 %v756
          %762 = vmatprep.subr.bf16.mxu0 0
          %763 = vmatpush1.bf16.msra.mxu0 %v757
          %764 = vmatprep.subr.bf16.mxu0 0
          %765 = vmatpush1.bf16.msra.mxu0 0
          %766 = vmatprep.subr.bf16.mxu0 0
          %767 = vmatpush1.bf16.msra.mxu0 0
          %768 = vmatprep.subr.bf16.mxu0 0
          %769 = vmatpush1.bf16.msra.mxu0 0
          %770 = vmatprep.subr.bf16.mxu0 0
          %771 = vmatpush1.bf16.msra.mxu0 0
          %772 = vmatprep.subr.bf16.mxu0 0
          %773 = vmatpush1.bf16.msra.mxu0 0
          %774 = vmatprep.subr.bf16.mxu0 0
          %775 = vmatpush1.bf16.msra.mxu0 0
          %776 = vmatprep.subr.bf16.mxu0 0
          %777 = vmatpush1.bf16.msra.mxu0 0
          %778 = vmatprep.subr.bf16.mxu0 0
          %779 = vmatpush1.bf16.msra.mxu0 0
          %780 = vmatprep.subr.bf16.mxu0 0
          %781 = vmatpush1.bf16.msra.mxu0 0
          %782 = vmatprep.subr.bf16.mxu0 0
          %783 = vmatpush1.bf16.msra.mxu0 0
          %784 = vmatprep.subr.bf16.mxu0 0
          %785 = vmatpush1.bf16.msra.mxu0 0
          %786 = vmatprep.subr.bf16.mxu0 0
          %787 = vmatpush1.bf16.msra.mxu0 0
          %788 = vmatprep.subr.bf16.mxu0 0
          %789 = vmatpush1.bf16.msra.mxu0 0
          %790 = vmatprep.subr.bf16.mxu0 0
          %791 = vmatpush1.bf16.msra.mxu0 0
          %792 = vmatprep.mubr.bf16.mxu0 0
          %793 = vmatmul.mubr.bf16.gmra.mrb[0].mxu0 %v695
          %v794 = vpop.f32.mrb[0].mxu0
          %v795 = vadd.f32 %v746, %v794
          %v796 = vpop.f32.mrb[0].mxu0
          %v797 = vpop.f32.mrb[0].mxu0
          %v798 = vpop.f32.mrb[0].mxu0
          %799 = vdwg.mxu0
          %v800 = vld [vmem:[%s3] sm:$0xf]
          %v801 = vld [vmem:[%s3 + $0x4] sm:$0xf]
          %v802 = vld [vmem:[%s3 + $0x8] sm:$0xf]
          %v803 = vld [vmem:[%s3 + $0xc] sm:$0xf]
          %v804 = vld [vmem:[%s6] sm:$0x1]
          %v806 = vlaneseq
          %v807 = vshrl.u32 %v806, 7
          %v808 = vsub.s32 0, %v807
          %v809 = vrot.slane %v804, %v808
          %v815 = vunpack.c.l.b16 %v800
          %v816 = vunpack.c.l.b16 %v801
          %v817 = vunpack.c.l.b16 %v802
          %v818 = vunpack.c.l.b16 %v803
          %v819 = vpack.c.b16 %v816, %v815
          %v820 = vpack.c.b16 %v818, %v817
          %823 = vmatprep.subr.bf16.mxu0 0
          %824 = vmatpush1.bf16.msra.mxu0 %v819
          %825 = vmatprep.subr.bf16.mxu0 0
          %826 = vmatpush1.bf16.msra.mxu0 %v820
          %827 = vmatprep.subr.bf16.mxu0 0
          %828 = vmatpush1.bf16.msra.mxu0 0
          %829 = vmatprep.subr.bf16.mxu0 0
          %830 = vmatpush1.bf16.msra.mxu0 0
          %831 = vmatprep.subr.bf16.mxu0 0
          %832 = vmatpush1.bf16.msra.mxu0 0
          %833 = vmatprep.subr.bf16.mxu0 0
          %834 = vmatpush1.bf16.msra.mxu0 0
          %835 = vmatprep.subr.bf16.mxu0 0
          %836 = vmatpush1.bf16.msra.mxu0 0
          %837 = vmatprep.subr.bf16.mxu0 0
          %838 = vmatpush1.bf16.msra.mxu0 0
          %839 = vmatprep.subr.bf16.mxu0 0
          %840 = vmatpush1.bf16.msra.mxu0 0
          %841 = vmatprep.subr.bf16.mxu0 0
          %842 = vmatpush1.bf16.msra.mxu0 0
          %843 = vmatprep.subr.bf16.mxu0 0
          %844 = vmatpush1.bf16.msra.mxu0 0
          %845 = vmatprep.subr.bf16.mxu0 0
          %846 = vmatpush1.bf16.msra.mxu0 0
          %847 = vmatprep.subr.bf16.mxu0 0
          %848 = vmatpush1.bf16.msra.mxu0 0
          %849 = vmatprep.subr.bf16.mxu0 0
          %850 = vmatpush1.bf16.msra.mxu0 0
          %851 = vmatprep.subr.bf16.mxu0 0
          %852 = vmatpush1.bf16.msra.mxu0 0
          %853 = vmatprep.subr.bf16.mxu0 0
          %854 = vmatpush1.bf16.msra.mxu0 0
          %855 = vmatprep.mubr.bf16.mxu0 0
          %856 = vmatmul.mubr.bf16.gmra.mrb[0].mxu0 %v695
          %v857 = vpop.f32.mrb[0].mxu0
          %v858 = vadd.f32 %v809, %v857
          %v859 = vpop.f32.mrb[0].mxu0
          %v860 = vpop.f32.mrb[0].mxu0
          %v861 = vpop.f32.mrb[0].mxu0
          %862 = vdwg.mxu0
          %v863 = vpack.c.bf16 %v732, %v732
          %vm864 = vcmask 60416
          %865 = vst.msk [vmem:[#allocation2] sm:$0xf] %vm864, %v863
          %v866 = vpack.c.bf16 %v795, %v795
          %867 = vst.msk [vmem:[#allocation3] sm:$0xf] %vm864, %v866
          %v868 = vpack.c.bf16 %v858, %v858
          %869 = vst.msk [vmem:[#allocation4] sm:$0xf] %vm864, %v868
          %s870 = scalar_lea.vmem %s1, 16
          %v871 = vld [vmem:[%s870] sm:$0xf]
          %v872 = vld [vmem:[%s870 + $0x4] sm:$0xf]
          %v873 = vld [vmem:[%s870 + $0x8] sm:$0xf]
          %v874 = vld [vmem:[%s870 + $0xc] sm:$0xf]
          %s875 = scalar_lea.vmem %s4, 1
          %v876 = vld [vmem:[%s875] sm:$0x1]
          %v878 = vlaneseq
          %v879 = vshrl.u32 %v878, 7
          %v880 = vsub.s32 0, %v879
          %v881 = vrot.slane %v876, %v880
          %v887 = vunpack.c.l.b16 %v871
          %v888 = vunpack.c.l.b16 %v872
          %v889 = vunpack.c.l.b16 %v873
          %v890 = vunpack.c.l.b16 %v874
          %v891 = vpack.c.b16 %v888, %v887
          %v892 = vpack.c.b16 %v890, %v889
          %895 = vmatprep.subr.bf16.mxu0 0
          %896 = vmatpush1.bf16.msra.mxu0 %v891
          %897 = vmatprep.subr.bf16.mxu0 0
          %898 = vmatpush1.bf16.msra.mxu0 %v892
          %899 = vmatprep.subr.bf16.mxu0 0
          %900 = vmatpush1.bf16.msra.mxu0 0
          %901 = vmatprep.subr.bf16.mxu0 0
          %902 = vmatpush1.bf16.msra.mxu0 0
          %903 = vmatprep.subr.bf16.mxu0 0
          %904 = vmatpush1.bf16.msra.mxu0 0
          %905 = vmatprep.subr.bf16.mxu0 0
          %906 = vmatpush1.bf16.msra.mxu0 0
          %907 = vmatprep.subr.bf16.mxu0 0
          %908 = vmatpush1.bf16.msra.mxu0 0
          %909 = vmatprep.subr.bf16.mxu0 0
          %910 = vmatpush1.bf16.msra.mxu0 0
          %911 = vmatprep.subr.bf16.mxu0 0
          %912 = vmatpush1.bf16.msra.mxu0 0
          %913 = vmatprep.subr.bf16.mxu0 0
          %914 = vmatpush1.bf16.msra.mxu0 0
          %915 = vmatprep.subr.bf16.mxu0 0
          %916 = vmatpush1.bf16.msra.mxu0 0
          %917 = vmatprep.subr.bf16.mxu0 0
          %918 = vmatpush1.bf16.msra.mxu0 0
          %919 = vmatprep.subr.bf16.mxu0 0
          %920 = vmatpush1.bf16.msra.mxu0 0
          %921 = vmatprep.subr.bf16.mxu0 0
          %922 = vmatpush1.bf16.msra.mxu0 0
          %923 = vmatprep.subr.bf16.mxu0 0
          %924 = vmatpush1.bf16.msra.mxu0 0
          %925 = vmatprep.subr.bf16.mxu0 0
          %926 = vmatpush1.bf16.msra.mxu0 0
          %927 = vmatprep.mubr.bf16.mxu0 0
          %928 = vmatmul.mubr.bf16.gmra.mrb[0].mxu0 %v695
          %v929 = vpop.f32.mrb[0].mxu0
          %v930 = vadd.f32 %v881, %v929
          %v931 = vpop.f32.mrb[0].mxu0
          %v932 = vpop.f32.mrb[0].mxu0
          %v933 = vpop.f32.mrb[0].mxu0
          %934 = vdwg.mxu0
          %s935 = scalar_lea.vmem %s2, 16
          %v936 = vld [vmem:[%s935] sm:$0xf]
          %v937 = vld [vmem:[%s935 + $0x4] sm:$0xf]
          %v938 = vld [vmem:[%s935 + $0x8] sm:$0xf]
          %v939 = vld [vmem:[%s935 + $0xc] sm:$0xf]
          %s940 = scalar_lea.vmem %s5, 1
          %v941 = vld [vmem:[%s940] sm:$0x1]
          %v943 = vlaneseq
          %v944 = vshrl.u32 %v943, 7
          %v945 = vsub.s32 0, %v944
          %v946 = vrot.slane %v941, %v945
          %v952 = vunpack.c.l.b16 %v936
          %v953 = vunpack.c.l.b16 %v937
          %v954 = vunpack.c.l.b16 %v938
          %v955 = vunpack.c.l.b16 %v939
          %v956 = vpack.c.b16 %v953, %v952
          %v957 = vpack.c.b16 %v955, %v954
          %960 = vmatprep.subr.bf16.mxu0 0
          %961 = vmatpush1.bf16.msra.mxu0 %v956
          %962 = vmatprep.subr.bf16.mxu0 0
          %963 = vmatpush1.bf16.msra.mxu0 %v957
          %964 = vmatprep.subr.bf16.mxu0 0
          %965 = vmatpush1.bf16.msra.mxu0 0
          %966 = vmatprep.subr.bf16.mxu0 0
          %967 = vmatpush1.bf16.msra.mxu0 0
          %968 = vmatprep.subr.bf16.mxu0 0
          %969 = vmatpush1.bf16.msra.mxu0 0
          %970 = vmatprep.subr.bf16.mxu0 0
          %971 = vmatpush1.bf16.msra.mxu0 0
          %972 = vmatprep.subr.bf16.mxu0 0
          %973 = vmatpush1.bf16.msra.mxu0 0
          %974 = vmatprep.subr.bf16.mxu0 0
          %975 = vmatpush1.bf16.msra.mxu0 0
          %976 = vmatprep.subr.bf16.mxu0 0
          %977 = vmatpush1.bf16.msra.mxu0 0
          %978 = vmatprep.subr.bf16.mxu0 0
          %979 = vmatpush1.bf16.msra.mxu0 0
          %980 = vmatprep.subr.bf16.mxu0 0
          %981 = vmatpush1.bf16.msra.mxu0 0
          %982 = vmatprep.subr.bf16.mxu0 0
          %983 = vmatpush1.bf16.msra.mxu0 0
          %984 = vmatprep.subr.bf16.mxu0 0
          %985 = vmatpush1.bf16.msra.mxu0 0
          %986 = vmatprep.subr.bf16.mxu0 0
          %987 = vmatpush1.bf16.msra.mxu0 0
          %988 = vmatprep.subr.bf16.mxu0 0
          %989 = vmatpush1.bf16.msra.mxu0 0
          %990 = vmatprep.subr.bf16.mxu0 0
          %991 = vmatpush1.bf16.msra.mxu0 0
          %992 = vmatprep.mubr.bf16.mxu0 0
          %993 = vmatmul.mubr.bf16.gmra.mrb[0].mxu0 %v695
          %v994 = vpop.f32.mrb[0].mxu0
          %v995 = vadd.f32 %v946, %v994
          %v996 = vpop.f32.mrb[0].mxu0
          %v997 = vpop.f32.mrb[0].mxu0
          %v998 = vpop.f32.mrb[0].mxu0
          %999 = vdwg.mxu0
          %s1000 = scalar_lea.vmem %s3, 16
          %v1001 = vld [vmem:[%s1000] sm:$0xf]
          %v1002 = vld [vmem:[%s1000 + $0x4] sm:$0xf]
          %v1003 = vld [vmem:[%s1000 + $0x8] sm:$0xf]
          %v1004 = vld [vmem:[%s1000 + $0xc] sm:$0xf]
          %s1005 = scalar_lea.vmem %s6, 1
          %v1006 = vld [vmem:[%s1005] sm:$0x1]
          %v1008 = vlaneseq
          %v1009 = vshrl.u32 %v1008, 7
          %v1010 = vsub.s32 0, %v1009
          %v1011 = vrot.slane %v1006, %v1010
          %v1017 = vunpack.c.l.b16 %v1001
          %v1018 = vunpack.c.l.b16 %v1002
          %v1019 = vunpack.c.l.b16 %v1003
          %v1020 = vunpack.c.l.b16 %v1004
          %v1021 = vpack.c.b16 %v1018, %v1017
          %v1022 = vpack.c.b16 %v1020, %v1019
          %1025 = vmatprep.subr.bf16.mxu0 0
          %1026 = vmatpush1.bf16.msra.mxu0 %v1021
          %1027 = vmatprep.subr.bf16.mxu0 0
          %1028 = vmatpush1.bf16.msra.mxu0 %v1022
          %1029 = vmatprep.subr.bf16.mxu0 0
          %1030 = vmatpush1.bf16.msra.mxu0 0
          %1031 = vmatprep.subr.bf16.mxu0 0
          %1032 = vmatpush1.bf16.msra.mxu0 0
          %1033 = vmatprep.subr.bf16.mxu0 0
          %1034 = vmatpush1.bf16.msra.mxu0 0
          %1035 = vmatprep.subr.bf16.mxu0 0
          %1036 = vmatpush1.bf16.msra.mxu0 0
          %1037 = vmatprep.subr.bf16.mxu0 0
          %1038 = vmatpush1.bf16.msra.mxu0 0
          %1039 = vmatprep.subr.bf16.mxu0 0
          %1040 = vmatpush1.bf16.msra.mxu0 0
          %1041 = vmatprep.subr.bf16.mxu0 0
          %1042 = vmatpush1.bf16.msra.mxu0 0
          %1043 = vmatprep.subr.bf16.mxu0 0
          %1044 = vmatpush1.bf16.msra.mxu0 0
          %1045 = vmatprep.subr.bf16.mxu0 0
          %1046 = vmatpush1.bf16.msra.mxu0 0
          %1047 = vmatprep.subr.bf16.mxu0 0
          %1048 = vmatpush1.bf16.msra.mxu0 0
          %1049 = vmatprep.subr.bf16.mxu0 0
          %1050 = vmatpush1.bf16.msra.mxu0 0
          %1051 = vmatprep.subr.bf16.mxu0 0
          %1052 = vmatpush1.bf16.msra.mxu0 0
          %1053 = vmatprep.subr.bf16.mxu0 0
          %1054 = vmatpush1.bf16.msra.mxu0 0
          %1055 = vmatprep.subr.bf16.mxu0 0
          %1056 = vmatpush1.bf16.msra.mxu0 0
          %1057 = vmatprep.mubr.bf16.mxu0 0
          %1058 = vmatmul.mubr.bf16.gmra.mrb[0].mxu0 %v695
          %v1059 = vpop.f32.mrb[0].mxu0
          %v1060 = vadd.f32 %v1011, %v1059
          %v1061 = vpop.f32.mrb[0].mxu0
          %v1062 = vpop.f32.mrb[0].mxu0
          %v1063 = vpop.f32.mrb[0].mxu0
          %1064 = vdwg.mxu0
          %v1065 = vpack.c.bf16 %v930, %v930
          %s1066 = scalar_lea.vmem [#allocation2], 4
          %1067 = vst.msk [vmem:[%s1066] sm:$0xf] %vm864, %v1065
          %v1068 = vpack.c.bf16 %v995, %v995
          %s1069 = scalar_lea.vmem [#allocation3], 4
          %1070 = vst.msk [vmem:[%s1069] sm:$0xf] %vm864, %v1068
          %v1071 = vpack.c.bf16 %v1060, %v1060
          %s1072 = scalar_lea.vmem [#allocation4], 4
          %1073 = vst.msk [vmem:[%s1072] sm:$0xf] %vm864, %v1071
          %s1074 = scalar_lea.vmem %s1, 32
          %v1075 = vld [vmem:[%s1074] sm:$0xf]
          %v1076 = vld [vmem:[%s1074 + $0x4] sm:$0xf]
          %v1077 = vld [vmem:[%s1074 + $0x8] sm:$0xf]
          %v1078 = vld [vmem:[%s1074 + $0xc] sm:$0xf]
          %s1079 = scalar_lea.vmem %s4, 2
          %v1080 = vld [vmem:[%s1079] sm:$0x1]
          %v1082 = vlaneseq
          %v1083 = vshrl.u32 %v1082, 7
          %v1084 = vsub.s32 0, %v1083
          %v1085 = vrot.slane %v1080, %v1084
          %v1091 = vunpack.c.l.b16 %v1075
          %v1092 = vunpack.c.l.b16 %v1076
          %v1093 = vunpack.c.l.b16 %v1077
          %v1094 = vunpack.c.l.b16 %v1078
          %v1095 = vpack.c.b16 %v1092, %v1091
          %v1096 = vpack.c.b16 %v1094, %v1093
          %1099 = vmatprep.subr.bf16.mxu0 0
          %1100 = vmatpush1.bf16.msra.mxu0 %v1095
          %1101 = vmatprep.subr.bf16.mxu0 0
          %1102 = vmatpush1.bf16.msra.mxu0 %v1096
          %1103 = vmatprep.subr.bf16.mxu0 0
          %1104 = vmatpush1.bf16.msra.mxu0 0
          %1105 = vmatprep.subr.bf16.mxu0 0
          %1106 = vmatpush1.bf16.msra.mxu0 0
          %1107 = vmatprep.subr.bf16.mxu0 0
          %1108 = vmatpush1.bf16.msra.mxu0 0
          %1109 = vmatprep.subr.bf16.mxu0 0
          %1110 = vmatpush1.bf16.msra.mxu0 0
          %1111 = vmatprep.subr.bf16.mxu0 0
          %1112 = vmatpush1.bf16.msra.mxu0 0
          %1113 = vmatprep.subr.bf16.mxu0 0
          %1114 = vmatpush1.bf16.msra.mxu0 0
          %1115 = vmatprep.subr.bf16.mxu0 0
          %1116 = vmatpush1.bf16.msra.mxu0 0
          %1117 = vmatprep.subr.bf16.mxu0 0
          %1118 = vmatpush1.bf16.msra.mxu0 0
          %1119 = vmatprep.subr.bf16.mxu0 0
          %1120 = vmatpush1.bf16.msra.mxu0 0
          %1121 = vmatprep.subr.bf16.mxu0 0
          %1122 = vmatpush1.bf16.msra.mxu0 0
          %1123 = vmatprep.subr.bf16.mxu0 0
          %1124 = vmatpush1.bf16.msra.mxu0 0
          %1125 = vmatprep.subr.bf16.mxu0 0
          %1126 = vmatpush1.bf16.msra.mxu0 0
          %1127 = vmatprep.subr.bf16.mxu0 0
          %1128 = vmatpush1.bf16.msra.mxu0 0
          %1129 = vmatprep.subr.bf16.mxu0 0
          %1130 = vmatpush1.bf16.msra.mxu0 0
          %1131 = vmatprep.mubr.bf16.mxu0 0
          %1132 = vmatmul.mubr.bf16.gmra.mrb[0].mxu0 %v695
          %v1133 = vpop.f32.mrb[0].mxu0
          %v1134 = vadd.f32 %v1085, %v1133
          %v1135 = vpop.f32.mrb[0].mxu0
          %v1136 = vpop.f32.mrb[0].mxu0
          %v1137 = vpop.f32.mrb[0].mxu0
          %1138 = vdwg.mxu0
          %s1139 = scalar_lea.vmem %s2, 32
          %v1140 = vld [vmem:[%s1139] sm:$0xf]
          %v1141 = vld [vmem:[%s1139 + $0x4] sm:$0xf]
          %v1142 = vld [vmem:[%s1139 + $0x8] sm:$0xf]
          %v1143 = vld [vmem:[%s1139 + $0xc] sm:$0xf]
          %s1144 = scalar_lea.vmem %s5, 2
          %v1145 = vld [vmem:[%s1144] sm:$0x1]
          %v1147 = vlaneseq
          %v1148 = vshrl.u32 %v1147, 7
          %v1149 = vsub.s32 0, %v1148
          %v1150 = vrot.slane %v1145, %v1149
          %v1156 = vunpack.c.l.b16 %v1140
          %v1157 = vunpack.c.l.b16 %v1141
          %v1158 = vunpack.c.l.b16 %v1142
          %v1159 = vunpack.c.l.b16 %v1143
          %v1160 = vpack.c.b16 %v1157, %v1156
          %v1161 = vpack.c.b16 %v1159, %v1158
          %1164 = vmatprep.subr.bf16.mxu0 0
          %1165 = vmatpush1.bf16.msra.mxu0 %v1160
          %1166 = vmatprep.subr.bf16.mxu0 0
          %1167 = vmatpush1.bf16.msra.mxu0 %v1161
          %1168 = vmatprep.subr.bf16.mxu0 0
          %1169 = vmatpush1.bf16.msra.mxu0 0
          %1170 = vmatprep.subr.bf16.mxu0 0
          %1171 = vmatpush1.bf16.msra.mxu0 0
          %1172 = vmatprep.subr.bf16.mxu0 0
          %1173 = vmatpush1.bf16.msra.mxu0 0
          %1174 = vmatprep.subr.bf16.mxu0 0
          %1175 = vmatpush1.bf16.msra.mxu0 0
          %1176 = vmatprep.subr.bf16.mxu0 0
          %1177 = vmatpush1.bf16.msra.mxu0 0
          %1178 = vmatprep.subr.bf16.mxu0 0
          %1179 = vmatpush1.bf16.msra.mxu0 0
          %1180 = vmatprep.subr.bf16.mxu0 0
          %1181 = vmatpush1.bf16.msra.mxu0 0
          %1182 = vmatprep.subr.bf16.mxu0 0
          %1183 = vmatpush1.bf16.msra.mxu0 0
          %1184 = vmatprep.subr.bf16.mxu0 0
          %1185 = vmatpush1.bf16.msra.mxu0 0
          %1186 = vmatprep.subr.bf16.mxu0 0
          %1187 = vmatpush1.bf16.msra.mxu0 0
          %1188 = vmatprep.subr.bf16.mxu0 0
          %1189 = vmatpush1.bf16.msra.mxu0 0
          %1190 = vmatprep.subr.bf16.mxu0 0
          %1191 = vmatpush1.bf16.msra.mxu0 0
          %1192 = vmatprep.subr.bf16.mxu0 0
          %1193 = vmatpush1.bf16.msra.mxu0 0
          %1194 = vmatprep.subr.bf16.mxu0 0
          %1195 = vmatpush1.bf16.msra.mxu0 0
          %1196 = vmatprep.mubr.bf16.mxu0 0
          %1197 = vmatmul.mubr.bf16.gmra.mrb[0].mxu0 %v695
          %v1198 = vpop.f32.mrb[0].mxu0
          %v1199 = vadd.f32 %v1150, %v1198
          %v1200 = vpop.f32.mrb[0].mxu0
          %v1201 = vpop.f32.mrb[0].mxu0
          %v1202 = vpop.f32.mrb[0].mxu0
          %1203 = vdwg.mxu0
          %s1204 = scalar_lea.vmem %s3, 32
          %v1205 = vld [vmem:[%s1204] sm:$0xf]
          %v1206 = vld [vmem:[%s1204 + $0x4] sm:$0xf]
          %v1207 = vld [vmem:[%s1204 + $0x8] sm:$0xf]
          %v1208 = vld [vmem:[%s1204 + $0xc] sm:$0xf]
          %s1209 = scalar_lea.vmem %s6, 2
          %v1210 = vld [vmem:[%s1209] sm:$0x1]
          %v1212 = vlaneseq
          %v1213 = vshrl.u32 %v1212, 7
          %v1214 = vsub.s32 0, %v1213
          %v1215 = vrot.slane %v1210, %v1214
          %v1221 = vunpack.c.l.b16 %v1205
          %v1222 = vunpack.c.l.b16 %v1206
          %v1223 = vunpack.c.l.b16 %v1207
          %v1224 = vunpack.c.l.b16 %v1208
          %v1225 = vpack.c.b16 %v1222, %v1221
          %v1226 = vpack.c.b16 %v1224, %v1223
          %1229 = vmatprep.subr.bf16.mxu0 0
          %1230 = vmatpush1.bf16.msra.mxu0 %v1225
          %1231 = vmatprep.subr.bf16.mxu0 0
          %1232 = vmatpush1.bf16.msra.mxu0 %v1226
          %1233 = vmatprep.subr.bf16.mxu0 0
          %1234 = vmatpush1.bf16.msra.mxu0 0
          %1235 = vmatprep.subr.bf16.mxu0 0
          %1236 = vmatpush1.bf16.msra.mxu0 0
          %1237 = vmatprep.subr.bf16.mxu0 0
          %1238 = vmatpush1.bf16.msra.mxu0 0
          %1239 = vmatprep.subr.bf16.mxu0 0
          %1240 = vmatpush1.bf16.msra.mxu0 0
          %1241 = vmatprep.subr.bf16.mxu0 0
          %1242 = vmatpush1.bf16.msra.mxu0 0
          %1243 = vmatprep.subr.bf16.mxu0 0
          %1244 = vmatpush1.bf16.msra.mxu0 0
          %1245 = vmatprep.subr.bf16.mxu0 0
          %1246 = vmatpush1.bf16.msra.mxu0 0
          %1247 = vmatprep.subr.bf16.mxu0 0
          %1248 = vmatpush1.bf16.msra.mxu0 0
          %1249 = vmatprep.subr.bf16.mxu0 0
          %1250 = vmatpush1.bf16.msra.mxu0 0
          %1251 = vmatprep.subr.bf16.mxu0 0
          %1252 = vmatpush1.bf16.msra.mxu0 0
          %1253 = vmatprep.subr.bf16.mxu0 0
          %1254 = vmatpush1.bf16.msra.mxu0 0
          %1255 = vmatprep.subr.bf16.mxu0 0
          %1256 = vmatpush1.bf16.msra.mxu0 0
          %1257 = vmatprep.subr.bf16.mxu0 0
          %1258 = vmatpush1.bf16.msra.mxu0 0
          %1259 = vmatprep.subr.bf16.mxu0 0
          %1260 = vmatpush1.bf16.msra.mxu0 0
          %1261 = vmatprep.mubr.bf16.mxu0 0
          %1262 = vmatmul.mubr.bf16.gmra.mrb[0].mxu0 %v695
          %v1263 = vpop.f32.mrb[0].mxu0
          %v1264 = vadd.f32 %v1215, %v1263
          %v1265 = vpop.f32.mrb[0].mxu0
          %v1266 = vpop.f32.mrb[0].mxu0
          %v1267 = vpop.f32.mrb[0].mxu0
          %1268 = vdwg.mxu0
          %v1269 = vpack.c.bf16 %v1134, %v1134
          %s1270 = scalar_lea.vmem [#allocation2], 8
          %1271 = vst.msk [vmem:[%s1270] sm:$0xf] %vm864, %v1269
          %v1272 = vpack.c.bf16 %v1199, %v1199
          %s1273 = scalar_lea.vmem [#allocation3], 8
          %1274 = vst.msk [vmem:[%s1273] sm:$0xf] %vm864, %v1272
          %v1275 = vpack.c.bf16 %v1264, %v1264
          %s1276 = scalar_lea.vmem [#allocation4], 8
          %1277 = vst.msk [vmem:[%s1276] sm:$0xf] %vm864, %v1275
          %s1278 = scalar_lea.vmem %s1, 48
          %v1279 = vld [vmem:[%s1278] sm:$0xf]
          %v1280 = vld [vmem:[%s1278 + $0x4] sm:$0xf]
          %v1281 = vld [vmem:[%s1278 + $0x8] sm:$0xf]
          %v1282 = vld [vmem:[%s1278 + $0xc] sm:$0xf]
          %s1283 = scalar_lea.vmem %s4, 3
          %v1284 = vld [vmem:[%s1283] sm:$0x1]
          %v1286 = vlaneseq
          %v1287 = vshrl.u32 %v1286, 7
          %v1288 = vsub.s32 0, %v1287
          %v1289 = vrot.slane %v1284, %v1288
          %v1295 = vunpack.c.l.b16 %v1279
          %v1296 = vunpack.c.l.b16 %v1280
          %v1297 = vunpack.c.l.b16 %v1281
          %v1298 = vunpack.c.l.b16 %v1282
          %v1299 = vpack.c.b16 %v1296, %v1295
          %v1300 = vpack.c.b16 %v1298, %v1297
          %1303 = vmatprep.subr.bf16.mxu0 0
          %1304 = vmatpush1.bf16.msra.mxu0 %v1299
          %1305 = vmatprep.subr.bf16.mxu0 0
          %1306 = vmatpush1.bf16.msra.mxu0 %v1300
          %1307 = vmatprep.subr.bf16.mxu0 0
          %1308 = vmatpush1.bf16.msra.mxu0 0
          %1309 = vmatprep.subr.bf16.mxu0 0
          %1310 = vmatpush1.bf16.msra.mxu0 0
          %1311 = vmatprep.subr.bf16.mxu0 0
          %1312 = vmatpush1.bf16.msra.mxu0 0
          %1313 = vmatprep.subr.bf16.mxu0 0
          %1314 = vmatpush1.bf16.msra.mxu0 0
          %1315 = vmatprep.subr.bf16.mxu0 0
          %1316 = vmatpush1.bf16.msra.mxu0 0
          %1317 = vmatprep.subr.bf16.mxu0 0
          %1318 = vmatpush1.bf16.msra.mxu0 0
          %1319 = vmatprep.subr.bf16.mxu0 0
          %1320 = vmatpush1.bf16.msra.mxu0 0
          %1321 = vmatprep.subr.bf16.mxu0 0
          %1322 = vmatpush1.bf16.msra.mxu0 0
          %1323 = vmatprep.subr.bf16.mxu0 0
          %1324 = vmatpush1.bf16.msra.mxu0 0
          %1325 = vmatprep.subr.bf16.mxu0 0
          %1326 = vmatpush1.bf16.msra.mxu0 0
          %1327 = vmatprep.subr.bf16.mxu0 0
          %1328 = vmatpush1.bf16.msra.mxu0 0
          %1329 = vmatprep.subr.bf16.mxu0 0
          %1330 = vmatpush1.bf16.msra.mxu0 0
          %1331 = vmatprep.subr.bf16.mxu0 0
          %1332 = vmatpush1.bf16.msra.mxu0 0
          %1333 = vmatprep.subr.bf16.mxu0 0
          %1334 = vmatpush1.bf16.msra.mxu0 0
          %1335 = vmatprep.mubr.bf16.mxu0 0
          %1336 = vmatmul.mubr.bf16.gmra.mrb[0].mxu0 %v695
          %v1337 = vpop.f32.mrb[0].mxu0
          %v1338 = vadd.f32 %v1289, %v1337
          %v1339 = vpop.f32.mrb[0].mxu0
          %v1340 = vpop.f32.mrb[0].mxu0
          %v1341 = vpop.f32.mrb[0].mxu0
          %1342 = vdwg.mxu0
          %s1343 = scalar_lea.vmem %s2, 48
          %v1344 = vld [vmem:[%s1343] sm:$0xf]
          %v1345 = vld [vmem:[%s1343 + $0x4] sm:$0xf]
          %v1346 = vld [vmem:[%s1343 + $0x8] sm:$0xf]
          %v1347 = vld [vmem:[%s1343 + $0xc] sm:$0xf]
          %s1348 = scalar_lea.vmem %s5, 3
          %v1349 = vld [vmem:[%s1348] sm:$0x1]
          %v1351 = vlaneseq
          %v1352 = vshrl.u32 %v1351, 7
          %v1353 = vsub.s32 0, %v1352
          %v1354 = vrot.slane %v1349, %v1353
          %v1360 = vunpack.c.l.b16 %v1344
          %v1361 = vunpack.c.l.b16 %v1345
          %v1362 = vunpack.c.l.b16 %v1346
          %v1363 = vunpack.c.l.b16 %v1347
          %v1364 = vpack.c.b16 %v1361, %v1360
          %v1365 = vpack.c.b16 %v1363, %v1362
          %1368 = vmatprep.subr.bf16.mxu0 0
          %1369 = vmatpush1.bf16.msra.mxu0 %v1364
          %1370 = vmatprep.subr.bf16.mxu0 0
          %1371 = vmatpush1.bf16.msra.mxu0 %v1365
          %1372 = vmatprep.subr.bf16.mxu0 0
          %1373 = vmatpush1.bf16.msra.mxu0 0
          %1374 = vmatprep.subr.bf16.mxu0 0
          %1375 = vmatpush1.bf16.msra.mxu0 0
          %1376 = vmatprep.subr.bf16.mxu0 0
          %1377 = vmatpush1.bf16.msra.mxu0 0
          %1378 = vmatprep.subr.bf16.mxu0 0
          %1379 = vmatpush1.bf16.msra.mxu0 0
          %1380 = vmatprep.subr.bf16.mxu0 0
          %1381 = vmatpush1.bf16.msra.mxu0 0
          %1382 = vmatprep.subr.bf16.mxu0 0
          %1383 = vmatpush1.bf16.msra.mxu0 0
          %1384 = vmatprep.subr.bf16.mxu0 0
          %1385 = vmatpush1.bf16.msra.mxu0 0
          %1386 = vmatprep.subr.bf16.mxu0 0
          %1387 = vmatpush1.bf16.msra.mxu0 0
          %1388 = vmatprep.subr.bf16.mxu0 0
          %1389 = vmatpush1.bf16.msra.mxu0 0
          %1390 = vmatprep.subr.bf16.mxu0 0
          %1391 = vmatpush1.bf16.msra.mxu0 0
          %1392 = vmatprep.subr.bf16.mxu0 0
          %1393 = vmatpush1.bf16.msra.mxu0 0
          %1394 = vmatprep.subr.bf16.mxu0 0
          %1395 = vmatpush1.bf16.msra.mxu0 0
          %1396 = vmatprep.subr.bf16.mxu0 0
          %1397 = vmatpush1.bf16.msra.mxu0 0
          %1398 = vmatprep.subr.bf16.mxu0 0
          %1399 = vmatpush1.bf16.msra.mxu0 0
          %1400 = vmatprep.mubr.bf16.mxu0 0
          %1401 = vmatmul.mubr.bf16.gmra.mrb[0].mxu0 %v695
          %v1402 = vpop.f32.mrb[0].mxu0
          %v1403 = vadd.f32 %v1354, %v1402
          %v1404 = vpop.f32.mrb[0].mxu0
          %v1405 = vpop.f32.mrb[0].mxu0
          %v1406 = vpop.f32.mrb[0].mxu0
          %1407 = vdwg.mxu0
          %s1408 = scalar_lea.vmem %s3, 48
          %v1409 = vld [vmem:[%s1408] sm:$0xf]
          %v1410 = vld [vmem:[%s1408 + $0x4] sm:$0xf]
          %v1411 = vld [vmem:[%s1408 + $0x8] sm:$0xf]
          %v1412 = vld [vmem:[%s1408 + $0xc] sm:$0xf]
          %s1413 = scalar_lea.vmem %s6, 3
          %v1414 = vld [vmem:[%s1413] sm:$0x1]
          %v1416 = vlaneseq
          %v1417 = vshrl.u32 %v1416, 7
          %v1418 = vsub.s32 0, %v1417
          %v1419 = vrot.slane %v1414, %v1418
          %v1425 = vunpack.c.l.b16 %v1409
          %v1426 = vunpack.c.l.b16 %v1410
          %v1427 = vunpack.c.l.b16 %v1411
          %v1428 = vunpack.c.l.b16 %v1412
          %v1429 = vpack.c.b16 %v1426, %v1425
          %v1430 = vpack.c.b16 %v1428, %v1427
          %1433 = vmatprep.subr.bf16.mxu0 0
          %1434 = vmatpush1.bf16.msra.mxu0 %v1429
          %1435 = vmatprep.subr.bf16.mxu0 0
          %1436 = vmatpush1.bf16.msra.mxu0 %v1430
          %1437 = vmatprep.subr.bf16.mxu0 0
          %1438 = vmatpush1.bf16.msra.mxu0 0
          %1439 = vmatprep.subr.bf16.mxu0 0
          %1440 = vmatpush1.bf16.msra.mxu0 0
          %1441 = vmatprep.subr.bf16.mxu0 0
          %1442 = vmatpush1.bf16.msra.mxu0 0
          %1443 = vmatprep.subr.bf16.mxu0 0
          %1444 = vmatpush1.bf16.msra.mxu0 0
          %1445 = vmatprep.subr.bf16.mxu0 0
          %1446 = vmatpush1.bf16.msra.mxu0 0
          %1447 = vmatprep.subr.bf16.mxu0 0
          %1448 = vmatpush1.bf16.msra.mxu0 0
          %1449 = vmatprep.subr.bf16.mxu0 0
          %1450 = vmatpush1.bf16.msra.mxu0 0
          %1451 = vmatprep.subr.bf16.mxu0 0
          %1452 = vmatpush1.bf16.msra.mxu0 0
          %1453 = vmatprep.subr.bf16.mxu0 0
          %1454 = vmatpush1.bf16.msra.mxu0 0
          %1455 = vmatprep.subr.bf16.mxu0 0
          %1456 = vmatpush1.bf16.msra.mxu0 0
          %1457 = vmatprep.subr.bf16.mxu0 0
          %1458 = vmatpush1.bf16.msra.mxu0 0
          %1459 = vmatprep.subr.bf16.mxu0 0
          %1460 = vmatpush1.bf16.msra.mxu0 0
          %1461 = vmatprep.subr.bf16.mxu0 0
          %1462 = vmatpush1.bf16.msra.mxu0 0
          %1463 = vmatprep.subr.bf16.mxu0 0
          %1464 = vmatpush1.bf16.msra.mxu0 0
          %1465 = vmatprep.mubr.bf16.mxu0 0
          %1466 = vmatmul.mubr.bf16.gmra.mrb[0].mxu0 %v695
          %v1467 = vpop.f32.mrb[0].mxu0
          %v1468 = vadd.f32 %v1419, %v1467
          %v1469 = vpop.f32.mrb[0].mxu0
          %v1470 = vpop.f32.mrb[0].mxu0
          %v1471 = vpop.f32.mrb[0].mxu0
          %1472 = vdwg.mxu0
          %v1473 = vpack.c.bf16 %v1338, %v1338
          %s1474 = scalar_lea.vmem [#allocation2], 12
          %1475 = vst.msk [vmem:[%s1474] sm:$0xf] %vm864, %v1473
          %v1476 = vpack.c.bf16 %v1403, %v1403
          %s1477 = scalar_lea.vmem [#allocation3], 12
          %1478 = vst.msk [vmem:[%s1477] sm:$0xf] %vm864, %v1476
          %v1479 = vpack.c.bf16 %v1468, %v1468
          %s1480 = scalar_lea.vmem [#allocation4], 12
          %1481 = vst.msk [vmem:[%s1480] sm:$0xf] %vm864, %v1479
          %v1482 = vld [vmem:[#allocation2] sm:$0xf]
          %v1483 = vld [vmem:[#allocation2 + $0x4] sm:$0xf]
          %v1484 = vld [vmem:[#allocation2 + $0x8] sm:$0xf]
          %v1485 = vld [vmem:[#allocation2 + $0xc] sm:$0xf]
          %v1486 = vld [vmem:[#allocation3] sm:$0xf]
          %v1487 = vld [vmem:[#allocation3 + $0x4] sm:$0xf]
          %v1488 = vld [vmem:[#allocation3 + $0x8] sm:$0xf]
          %v1489 = vld [vmem:[#allocation3 + $0xc] sm:$0xf]
          %v1490 = vld [vmem:[#allocation4] sm:$0xf]
          %v1491 = vld [vmem:[#allocation4 + $0x4] sm:$0xf]
          %v1492 = vld [vmem:[#allocation4 + $0x8] sm:$0xf]
          %v1493 = vld [vmem:[#allocation4 + $0xc] sm:$0xf]
          %vm1494 = vcmask 64512
          %v1496 = vsel %vm1494, %v1482, 0
          %v1499 = vsel %vm1494, %v1486, 0
          %1501 = vmatprep.subr.bf16.mxu0 0
          %1502 = vmatpush1.bf16.xpose.msra.mxu0 %v1499
          %1503 = vmatprep.subr.bf16.mxu0 0
          %1504 = vmatpush1.bf16.xpose.msra.mxu0 0
          %1505 = vmatprep.subr.bf16.mxu0 0
          %1506 = vmatpush1.bf16.xpose.msra.mxu0 0
          %1507 = vmatprep.subr.bf16.mxu0 0
          %1508 = vmatpush1.bf16.xpose.msra.mxu0 0
          %1509 = vmatprep.subr.bf16.mxu0 0
          %1510 = vmatpush1.bf16.xpose.msra.mxu0 0
          %1511 = vmatprep.subr.bf16.mxu0 0
          %1512 = vmatpush1.bf16.xpose.msra.mxu0 0
          %1513 = vmatprep.subr.bf16.mxu0 0
          %1514 = vmatpush1.bf16.xpose.msra.mxu0 0
          %1515 = vmatprep.subr.bf16.mxu0 0
          %1516 = vmatpush1.bf16.xpose.msra.mxu0 0
          %1517 = vmatprep.subr.bf16.mxu0 0
          %1518 = vmatpush1.bf16.xpose.msra.mxu0 0
          %1519 = vmatprep.subr.bf16.mxu0 0
          %1520 = vmatpush1.bf16.xpose.msra.mxu0 0
          %1521 = vmatprep.subr.bf16.mxu0 0
          %1522 = vmatpush1.bf16.xpose.msra.mxu0 0
          %1523 = vmatprep.subr.bf16.mxu0 0
          %1524 = vmatpush1.bf16.xpose.msra.mxu0 0
          %1525 = vmatprep.subr.bf16.mxu0 0
          %1526 = vmatpush1.bf16.xpose.msra.mxu0 0
          %1527 = vmatprep.subr.bf16.mxu0 0
          %1528 = vmatpush1.bf16.xpose.msra.mxu0 0
          %1529 = vmatprep.subr.bf16.mxu0 0
          %1530 = vmatpush1.bf16.xpose.msra.mxu0 0
          %1531 = vmatprep.subr.bf16.mxu0 0
          %1532 = vmatpush1.bf16.xpose.msra.mxu0 0
          %1533 = vmatprep.mubr.bf16.mxu0 0
          %1534 = vmatmul.mubr.bf16.gmra.mrb[0].mxu0 %v1496
          %v1535 = vpop.f32.mrb[0].mxu0
          %v1536 = vadd.f32 0.0, %v1535
          %v1537 = vpop.f32.mrb[0].mxu0
          %v1538 = vpop.f32.mrb[0].mxu0
          %v1539 = vpop.f32.mrb[0].mxu0
          %1540 = vdwg.mxu0
          %v1542 = vsel %vm1494, %v1483, 0
          %v1545 = vsel %vm1494, %v1487, 0
          %1547 = vmatprep.subr.bf16.mxu0 0
          %1548 = vmatpush1.bf16.xpose.msra.mxu0 %v1545
          %1549 = vmatprep.subr.bf16.mxu0 0
          %1550 = vmatpush1.bf16.xpose.msra.mxu0 0
          %1551 = vmatprep.subr.bf16.mxu0 0
          %1552 = vmatpush1.bf16.xpose.msra.mxu0 0
          %1553 = vmatprep.subr.bf16.mxu0 0
          %1554 = vmatpush1.bf16.xpose.msra.mxu0 0
          %1555 = vmatprep.subr.bf16.mxu0 0
          %1556 = vmatpush1.bf16.xpose.msra.mxu0 0
          %1557 = vmatprep.subr.bf16.mxu0 0
          %1558 = vmatpush1.bf16.xpose.msra.mxu0 0
          %1559 = vmatprep.subr.bf16.mxu0 0
          %1560 = vmatpush1.bf16.xpose.msra.mxu0 0
          %1561 = vmatprep.subr.bf16.mxu0 0
          %1562 = vmatpush1.bf16.xpose.msra.mxu0 0
          %1563 = vmatprep.subr.bf16.mxu0 0
          %1564 = vmatpush1.bf16.xpose.msra.mxu0 0
          %1565 = vmatprep.subr.bf16.mxu0 0
          %1566 = vmatpush1.bf16.xpose.msra.mxu0 0
          %1567 = vmatprep.subr.bf16.mxu0 0
          %1568 = vmatpush1.bf16.xpose.msra.mxu0 0
          %1569 = vmatprep.subr.bf16.mxu0 0
          %1570 = vmatpush1.bf16.xpose.msra.mxu0 0
          %1571 = vmatprep.subr.bf16.mxu0 0
          %1572 = vmatpush1.bf16.xpose.msra.mxu0 0
          %1573 = vmatprep.subr.bf16.mxu0 0
          %1574 = vmatpush1.bf16.xpose.msra.mxu0 0
          %1575 = vmatprep.subr.bf16.mxu0 0
          %1576 = vmatpush1.bf16.xpose.msra.mxu0 0
          %1577 = vmatprep.subr.bf16.mxu0 0
          %1578 = vmatpush1.bf16.xpose.msra.mxu0 0
          %1579 = vmatprep.mubr.bf16.mxu0 0
          %1580 = vmatmul.mubr.bf16.gmra.mrb[0].mxu0 %v1542
          %v1581 = vpop.f32.mrb[0].mxu0
          %v1582 = vadd.f32 0.0, %v1581
          %v1583 = vpop.f32.mrb[0].mxu0
          %v1584 = vpop.f32.mrb[0].mxu0
          %v1585 = vpop.f32.mrb[0].mxu0
          %1586 = vdwg.mxu0
          %v1588 = vsel %vm1494, %v1484, 0
          %v1591 = vsel %vm1494, %v1488, 0
          %1593 = vmatprep.subr.bf16.mxu0 0
          %1594 = vmatpush1.bf16.xpose.msra.mxu0 %v1591
          %1595 = vmatprep.subr.bf16.mxu0 0
          %1596 = vmatpush1.bf16.xpose.msra.mxu0 0
          %1597 = vmatprep.subr.bf16.mxu0 0
          %1598 = vmatpush1.bf16.xpose.msra.mxu0 0
          %1599 = vmatprep.subr.bf16.mxu0 0
          %1600 = vmatpush1.bf16.xpose.msra.mxu0 0
          %1601 = vmatprep.subr.bf16.mxu0 0
          %1602 = vmatpush1.bf16.xpose.msra.mxu0 0
          %1603 = vmatprep.subr.bf16.mxu0 0
          %1604 = vmatpush1.bf16.xpose.msra.mxu0 0
          %1605 = vmatprep.subr.bf16.mxu0 0
          %1606 = vmatpush1.bf16.xpose.msra.mxu0 0
          %1607 = vmatprep.subr.bf16.mxu0 0
          %1608 = vmatpush1.bf16.xpose.msra.mxu0 0
          %1609 = vmatprep.subr.bf16.mxu0 0
          %1610 = vmatpush1.bf16.xpose.msra.mxu0 0
          %1611 = vmatprep.subr.bf16.mxu0 0
          %1612 = vmatpush1.bf16.xpose.msra.mxu0 0
          %1613 = vmatprep.subr.bf16.mxu0 0
          %1614 = vmatpush1.bf16.xpose.msra.mxu0 0
          %1615 = vmatprep.subr.bf16.mxu0 0
          %1616 = vmatpush1.bf16.xpose.msra.mxu0 0
          %1617 = vmatprep.subr.bf16.mxu0 0
          %1618 = vmatpush1.bf16.xpose.msra.mxu0 0
          %1619 = vmatprep.subr.bf16.mxu0 0
          %1620 = vmatpush1.bf16.xpose.msra.mxu0 0
          %1621 = vmatprep.subr.bf16.mxu0 0
          %1622 = vmatpush1.bf16.xpose.msra.mxu0 0
          %1623 = vmatprep.subr.bf16.mxu0 0
          %1624 = vmatpush1.bf16.xpose.msra.mxu0 0
          %1625 = vmatprep.mubr.bf16.mxu0 0
          %1626 = vmatmul.mubr.bf16.gmra.mrb[0].mxu0 %v1588
          %v1627 = vpop.f32.mrb[0].mxu0
          %v1628 = vadd.f32 0.0, %v1627
          %v1629 = vpop.f32.mrb[0].mxu0
          %v1630 = vpop.f32.mrb[0].mxu0
          %v1631 = vpop.f32.mrb[0].mxu0
          %1632 = vdwg.mxu0
          %v1634 = vsel %vm1494, %v1485, 0
          %v1637 = vsel %vm1494, %v1489, 0
          %1639 = vmatprep.subr.bf16.mxu0 0
          %1640 = vmatpush1.bf16.xpose.msra.mxu0 %v1637
          %1641 = vmatprep.subr.bf16.mxu0 0
          %1642 = vmatpush1.bf16.xpose.msra.mxu0 0
          %1643 = vmatprep.subr.bf16.mxu0 0
          %1644 = vmatpush1.bf16.xpose.msra.mxu0 0
          %1645 = vmatprep.subr.bf16.mxu0 0
          %1646 = vmatpush1.bf16.xpose.msra.mxu0 0
          %1647 = vmatprep.subr.bf16.mxu0 0
          %1648 = vmatpush1.bf16.xpose.msra.mxu0 0
          %1649 = vmatprep.subr.bf16.mxu0 0
          %1650 = vmatpush1.bf16.xpose.msra.mxu0 0
          %1651 = vmatprep.subr.bf16.mxu0 0
          %1652 = vmatpush1.bf16.xpose.msra.mxu0 0
          %1653 = vmatprep.subr.bf16.mxu0 0
          %1654 = vmatpush1.bf16.xpose.msra.mxu0 0
          %1655 = vmatprep.subr.bf16.mxu0 0
          %1656 = vmatpush1.bf16.xpose.msra.mxu0 0
          %1657 = vmatprep.subr.bf16.mxu0 0
          %1658 = vmatpush1.bf16.xpose.msra.mxu0 0
          %1659 = vmatprep.subr.bf16.mxu0 0
          %1660 = vmatpush1.bf16.xpose.msra.mxu0 0
          %1661 = vmatprep.subr.bf16.mxu0 0
          %1662 = vmatpush1.bf16.xpose.msra.mxu0 0
          %1663 = vmatprep.subr.bf16.mxu0 0
          %1664 = vmatpush1.bf16.xpose.msra.mxu0 0
          %1665 = vmatprep.subr.bf16.mxu0 0
          %1666 = vmatpush1.bf16.xpose.msra.mxu0 0
          %1667 = vmatprep.subr.bf16.mxu0 0
          %1668 = vmatpush1.bf16.xpose.msra.mxu0 0
          %1669 = vmatprep.subr.bf16.mxu0 0
          %1670 = vmatpush1.bf16.xpose.msra.mxu0 0
          %1671 = vmatprep.mubr.bf16.mxu0 0
          %1672 = vmatmul.mubr.bf16.gmra.mrb[0].mxu0 %v1634
          %v1673 = vpop.f32.mrb[0].mxu0
          %v1674 = vadd.f32 0.0, %v1673
          %v1675 = vpop.f32.mrb[0].mxu0
          %v1676 = vpop.f32.mrb[0].mxu0
          %v1677 = vpop.f32.mrb[0].mxu0
          %1678 = vdwg.mxu0
          %v1679 = vsel %vm1494, %v1536, -inf
          %1680 = vmax.xlane.f32.xlu0 %v1679
          %v1681 = vpop.xlane.xlu0 %1680
          %v1682 = vsel %vm1494, %v1582, -inf
          %1683 = vmax.xlane.f32.xlu0 %v1682
          %v1684 = vpop.xlane.xlu0 %1683
          %v1685 = vsel %vm1494, %v1628, -inf
          %1686 = vmax.xlane.f32.xlu0 %v1685
          %v1687 = vpop.xlane.xlu0 %1686
          %v1688 = vsel %vm1494, %v1674, -inf
          %1689 = vmax.xlane.f32.xlu0 %v1688
          %v1690 = vpop.xlane.xlu0 %1689
          %v1691 = vsub.f32 %v1536, %v1681
          %v1692 = vsub.f32 %v1582, %v1684
          %v1693 = vsub.f32 %v1628, %v1687
          %v1694 = vsub.f32 %v1674, %v1690
          %v1695 = vmul.f32 %v1691, 1.442695
          %v1696 = vpow.pop %v1695
          %v1697 = vmul.f32 %v1692, 1.442695
          %v1698 = vpow.pop %v1697
          %v1699 = vmul.f32 %v1693, 1.442695
          %v1700 = vpow.pop %v1699
          %v1701 = vmul.f32 %v1694, 1.442695
          %v1702 = vpow.pop %v1701
          %v1703 = vsel %vm1494, %v1696, 0.0
          %1704 = vadd.xlane.f32.xlu0 %v1703
          %v1705 = vpop.xlane.xlu0 %1704
          %v1706 = vsel %vm1494, %v1698, 0.0
          %1707 = vadd.xlane.f32.xlu0 %v1706
          %v1708 = vpop.xlane.xlu0 %1707
          %v1709 = vsel %vm1494, %v1700, 0.0
          %1710 = vadd.xlane.f32.xlu0 %v1709
          %v1711 = vpop.xlane.xlu0 %1710
          %v1712 = vsel %vm1494, %v1702, 0.0
          %1713 = vadd.xlane.f32.xlu0 %v1712
          %v1714 = vpop.xlane.xlu0 %1713
          %v1715 = vrcp.pop %v1705
          %v1716 = vrcp.pop %v1708
          %v1717 = vrcp.pop %v1711
          %v1718 = vrcp.pop %v1714
          %v1719 = vmul.f32 %v1696, %v1715
          %v1720 = vmul.f32 %v1698, %v1716
          %v1721 = vmul.f32 %v1700, %v1717
          %v1722 = vmul.f32 %v1702, %v1718
          %v1723 = vpack.c.bf16 %v1719, %v1719
          %v1724 = vpack.c.bf16 %v1720, %v1720
          %v1725 = vpack.c.bf16 %v1721, %v1721
          %v1726 = vpack.c.bf16 %v1722, %v1722
          %v1728 = vsel %vm1494, %v1723, 0
          %vm1730 = vcmask 1043456
          %v1732 = vsel %vm1730, %v1490, 0
          %1734 = vmatprep.subr.bf16.mxu0 0
          %1735 = vmatpush1.bf16.msra.mxu0 %v1732
          %1736 = vmatprep.subr.bf16.mxu0 0
          %1737 = vmatpush1.bf16.msra.mxu0 0
          %1738 = vmatprep.subr.bf16.mxu0 0
          %1739 = vmatpush1.bf16.msra.mxu0 0
          %1740 = vmatprep.subr.bf16.mxu0 0
          %1741 = vmatpush1.bf16.msra.mxu0 0
          %1742 = vmatprep.subr.bf16.mxu0 0
          %1743 = vmatpush1.bf16.msra.mxu0 0
          %1744 = vmatprep.subr.bf16.mxu0 0
          %1745 = vmatpush1.bf16.msra.mxu0 0
          %1746 = vmatprep.subr.bf16.mxu0 0
          %1747 = vmatpush1.bf16.msra.mxu0 0
          %1748 = vmatprep.subr.bf16.mxu0 0
          %1749 = vmatpush1.bf16.msra.mxu0 0
          %1750 = vmatprep.subr.bf16.mxu0 0
          %1751 = vmatpush1.bf16.msra.mxu0 0
          %1752 = vmatprep.subr.bf16.mxu0 0
          %1753 = vmatpush1.bf16.msra.mxu0 0
          %1754 = vmatprep.subr.bf16.mxu0 0
          %1755 = vmatpush1.bf16.msra.mxu0 0
          %1756 = vmatprep.subr.bf16.mxu0 0
          %1757 = vmatpush1.bf16.msra.mxu0 0
          %1758 = vmatprep.subr.bf16.mxu0 0
          %1759 = vmatpush1.bf16.msra.mxu0 0
          %1760 = vmatprep.subr.bf16.mxu0 0
          %1761 = vmatpush1.bf16.msra.mxu0 0
          %1762 = vmatprep.subr.bf16.mxu0 0
          %1763 = vmatpush1.bf16.msra.mxu0 0
          %1764 = vmatprep.subr.bf16.mxu0 0
          %1765 = vmatpush1.bf16.msra.mxu0 0
          %1766 = vmatprep.mubr.bf16.mxu0 0
          %1767 = vmatmul.mubr.bf16.gmra.mrb[0].mxu0 %v1728
          %v1768 = vpop.f32.mrb[0].mxu0
          %v1769 = vadd.f32 0.0, %v1768
          %v1770 = vpop.f32.mrb[0].mxu0
          %v1771 = vpop.f32.mrb[0].mxu0
          %v1772 = vpop.f32.mrb[0].mxu0
          %1773 = vdwg.mxu0
          %v1775 = vsel %vm1494, %v1724, 0
          %v1778 = vsel %vm1730, %v1491, 0
          %1780 = vmatprep.subr.bf16.mxu0 0
          %1781 = vmatpush1.bf16.msra.mxu0 %v1778
          %1782 = vmatprep.subr.bf16.mxu0 0
          %1783 = vmatpush1.bf16.msra.mxu0 0
          %1784 = vmatprep.subr.bf16.mxu0 0
          %1785 = vmatpush1.bf16.msra.mxu0 0
          %1786 = vmatprep.subr.bf16.mxu0 0
          %1787 = vmatpush1.bf16.msra.mxu0 0
          %1788 = vmatprep.subr.bf16.mxu0 0
          %1789 = vmatpush1.bf16.msra.mxu0 0
          %1790 = vmatprep.subr.bf16.mxu0 0
          %1791 = vmatpush1.bf16.msra.mxu0 0
          %1792 = vmatprep.subr.bf16.mxu0 0
          %1793 = vmatpush1.bf16.msra.mxu0 0
          %1794 = vmatprep.subr.bf16.mxu0 0
          %1795 = vmatpush1.bf16.msra.mxu0 0
          %1796 = vmatprep.subr.bf16.mxu0 0
          %1797 = vmatpush1.bf16.msra.mxu0 0
          %1798 = vmatprep.subr.bf16.mxu0 0
          %1799 = vmatpush1.bf16.msra.mxu0 0
          %1800 = vmatprep.subr.bf16.mxu0 0
          %1801 = vmatpush1.bf16.msra.mxu0 0
          %1802 = vmatprep.subr.bf16.mxu0 0
          %1803 = vmatpush1.bf16.msra.mxu0 0
          %1804 = vmatprep.subr.bf16.mxu0 0
          %1805 = vmatpush1.bf16.msra.mxu0 0
          %1806 = vmatprep.subr.bf16.mxu0 0
          %1807 = vmatpush1.bf16.msra.mxu0 0
          %1808 = vmatprep.subr.bf16.mxu0 0
          %1809 = vmatpush1.bf16.msra.mxu0 0
          %1810 = vmatprep.subr.bf16.mxu0 0
          %1811 = vmatpush1.bf16.msra.mxu0 0
          %1812 = vmatprep.mubr.bf16.mxu0 0
          %1813 = vmatmul.mubr.bf16.gmra.mrb[0].mxu0 %v1775
          %v1814 = vpop.f32.mrb[0].mxu0
          %v1815 = vadd.f32 0.0, %v1814
          %v1816 = vpop.f32.mrb[0].mxu0
          %v1817 = vpop.f32.mrb[0].mxu0
          %v1818 = vpop.f32.mrb[0].mxu0
          %1819 = vdwg.mxu0
          %v1821 = vsel %vm1494, %v1725, 0
          %v1824 = vsel %vm1730, %v1492, 0
          %1826 = vmatprep.subr.bf16.mxu0 0
          %1827 = vmatpush1.bf16.msra.mxu0 %v1824
          %1828 = vmatprep.subr.bf16.mxu0 0
          %1829 = vmatpush1.bf16.msra.mxu0 0
          %1830 = vmatprep.subr.bf16.mxu0 0
          %1831 = vmatpush1.bf16.msra.mxu0 0
          %1832 = vmatprep.subr.bf16.mxu0 0
          %1833 = vmatpush1.bf16.msra.mxu0 0
          %1834 = vmatprep.subr.bf16.mxu0 0
          %1835 = vmatpush1.bf16.msra.mxu0 0
          %1836 = vmatprep.subr.bf16.mxu0 0
          %1837 = vmatpush1.bf16.msra.mxu0 0
          %1838 = vmatprep.subr.bf16.mxu0 0
          %1839 = vmatpush1.bf16.msra.mxu0 0
          %1840 = vmatprep.subr.bf16.mxu0 0
          %1841 = vmatpush1.bf16.msra.mxu0 0
          %1842 = vmatprep.subr.bf16.mxu0 0
          %1843 = vmatpush1.bf16.msra.mxu0 0
          %1844 = vmatprep.subr.bf16.mxu0 0
          %1845 = vmatpush1.bf16.msra.mxu0 0
          %1846 = vmatprep.subr.bf16.mxu0 0
          %1847 = vmatpush1.bf16.msra.mxu0 0
          %1848 = vmatprep.subr.bf16.mxu0 0
          %1849 = vmatpush1.bf16.msra.mxu0 0
          %1850 = vmatprep.subr.bf16.mxu0 0
          %1851 = vmatpush1.bf16.msra.mxu0 0
          %1852 = vmatprep.subr.bf16.mxu0 0
          %1853 = vmatpush1.bf16.msra.mxu0 0
          %1854 = vmatprep.subr.bf16.mxu0 0
          %1855 = vmatpush1.bf16.msra.mxu0 0
          %1856 = vmatprep.subr.bf16.mxu0 0
          %1857 = vmatpush1.bf16.msra.mxu0 0
          %1858 = vmatprep.mubr.bf16.mxu0 0
          %1859 = vmatmul.mubr.bf16.gmra.mrb[0].mxu0 %v1821
          %v1860 = vpop.f32.mrb[0].mxu0
          %v1861 = vadd.f32 0.0, %v1860
          %v1862 = vpop.f32.mrb[0].mxu0
          %v1863 = vpop.f32.mrb[0].mxu0
          %v1864 = vpop.f32.mrb[0].mxu0
          %1865 = vdwg.mxu0
          %v1867 = vsel %vm1494, %v1726, 0
          %v1870 = vsel %vm1730, %v1493, 0
          %1872 = vmatprep.subr.bf16.mxu0 0
          %1873 = vmatpush1.bf16.msra.mxu0 %v1870
          %1874 = vmatprep.subr.bf16.mxu0 0
          %1875 = vmatpush1.bf16.msra.mxu0 0
          %1876 = vmatprep.subr.bf16.mxu0 0
          %1877 = vmatpush1.bf16.msra.mxu0 0
          %1878 = vmatprep.subr.bf16.mxu0 0
          %1879 = vmatpush1.bf16.msra.mxu0 0
          %1880 = vmatprep.subr.bf16.mxu0 0
          %1881 = vmatpush1.bf16.msra.mxu0 0
          %1882 = vmatprep.subr.bf16.mxu0 0
          %1883 = vmatpush1.bf16.msra.mxu0 0
          %1884 = vmatprep.subr.bf16.mxu0 0
          %1885 = vmatpush1.bf16.msra.mxu0 0
          %1886 = vmatprep.subr.bf16.mxu0 0
          %1887 = vmatpush1.bf16.msra.mxu0 0
          %1888 = vmatprep.subr.bf16.mxu0 0
          %1889 = vmatpush1.bf16.msra.mxu0 0
          %1890 = vmatprep.subr.bf16.mxu0 0
          %1891 = vmatpush1.bf16.msra.mxu0 0
          %1892 = vmatprep.subr.bf16.mxu0 0
          %1893 = vmatpush1.bf16.msra.mxu0 0
          %1894 = vmatprep.subr.bf16.mxu0 0
          %1895 = vmatpush1.bf16.msra.mxu0 0
          %1896 = vmatprep.subr.bf16.mxu0 0
          %1897 = vmatpush1.bf16.msra.mxu0 0
          %1898 = vmatprep.subr.bf16.mxu0 0
          %1899 = vmatpush1.bf16.msra.mxu0 0
          %1900 = vmatprep.subr.bf16.mxu0 0
          %1901 = vmatpush1.bf16.msra.mxu0 0
          %1902 = vmatprep.subr.bf16.mxu0 0
          %1903 = vmatpush1.bf16.msra.mxu0 0
          %1904 = vmatprep.mubr.bf16.mxu0 0
          %1905 = vmatmul.mubr.bf16.gmra.mrb[0].mxu0 %v1867
          %v1906 = vpop.f32.mrb[0].mxu0
          %v1907 = vadd.f32 0.0, %v1906
          %v1908 = vpop.f32.mrb[0].mxu0
          %v1909 = vpop.f32.mrb[0].mxu0
          %v1910 = vpop.f32.mrb[0].mxu0
          %1911 = vdwg.mxu0
          %v1912 = vpack.c.bf16 %v1769, %v1769
          %v1913 = vpack.c.bf16 %v1815, %v1815
          %v1914 = vpack.c.bf16 %v1861, %v1861
          %v1915 = vpack.c.bf16 %v1907, %v1907
          %v1916 = vld [vmem:[%s7] sm:$0xf]
          %v1917 = vld [vmem:[%s7 + $0x4] sm:$0xf]
          %v1918 = vld [vmem:[%s7 + $0x8] sm:$0xf]
          %v1919 = vld [vmem:[%s7 + $0xc] sm:$0xf]
          %v1921 = vsel %vm1494, %v1912, 0
          %v1924 = vsel %vm1730, %v1916, 0
          %1926 = vmatprep.subr.bf16.mxu0 0
          %1927 = vmatpush1.bf16.msra.mxu0 %v1924
          %1928 = vmatprep.subr.bf16.mxu0 0
          %1929 = vmatpush1.bf16.msra.mxu0 0
          %1930 = vmatprep.subr.bf16.mxu0 0
          %1931 = vmatpush1.bf16.msra.mxu0 0
          %1932 = vmatprep.subr.bf16.mxu0 0
          %1933 = vmatpush1.bf16.msra.mxu0 0
          %1934 = vmatprep.subr.bf16.mxu0 0
          %1935 = vmatpush1.bf16.msra.mxu0 0
          %1936 = vmatprep.subr.bf16.mxu0 0
          %1937 = vmatpush1.bf16.msra.mxu0 0
          %1938 = vmatprep.subr.bf16.mxu0 0
          %1939 = vmatpush1.bf16.msra.mxu0 0
          %1940 = vmatprep.subr.bf16.mxu0 0
          %1941 = vmatpush1.bf16.msra.mxu0 0
          %1942 = vmatprep.subr.bf16.mxu0 0
          %1943 = vmatpush1.bf16.msra.mxu0 0
          %1944 = vmatprep.subr.bf16.mxu0 0
          %1945 = vmatpush1.bf16.msra.mxu0 0
          %1946 = vmatprep.subr.bf16.mxu0 0
          %1947 = vmatpush1.bf16.msra.mxu0 0
          %1948 = vmatprep.subr.bf16.mxu0 0
          %1949 = vmatpush1.bf16.msra.mxu0 0
          %1950 = vmatprep.subr.bf16.mxu0 0
          %1951 = vmatpush1.bf16.msra.mxu0 0
          %1952 = vmatprep.subr.bf16.mxu0 0
          %1953 = vmatpush1.bf16.msra.mxu0 0
          %1954 = vmatprep.subr.bf16.mxu0 0
          %1955 = vmatpush1.bf16.msra.mxu0 0
          %1956 = vmatprep.subr.bf16.mxu0 0
          %1957 = vmatpush1.bf16.msra.mxu0 0
          %1958 = vmatprep.mubr.bf16.mxu0 0
          %1959 = vmatmul.mubr.bf16.gmra.mrb[0].mxu0 %v1921
          %v1960 = vpop.f32.mrb[0].mxu0
          %v1961 = vadd.f32 0.0, %v1960
          %v1962 = vpop.f32.mrb[0].mxu0
          %v1963 = vpop.f32.mrb[0].mxu0
          %v1964 = vpop.f32.mrb[0].mxu0
          %1965 = vdwg.mxu0
          %v1967 = vsel %vm1494, %v1913, 0
          %v1970 = vsel %vm1730, %v1917, 0
          %1972 = vmatprep.subr.bf16.mxu0 0
          %1973 = vmatpush1.bf16.msra.mxu0 %v1970
          %1974 = vmatprep.subr.bf16.mxu0 0
          %1975 = vmatpush1.bf16.msra.mxu0 0
          %1976 = vmatprep.subr.bf16.mxu0 0
          %1977 = vmatpush1.bf16.msra.mxu0 0
          %1978 = vmatprep.subr.bf16.mxu0 0
          %1979 = vmatpush1.bf16.msra.mxu0 0
          %1980 = vmatprep.subr.bf16.mxu0 0
          %1981 = vmatpush1.bf16.msra.mxu0 0
          %1982 = vmatprep.subr.bf16.mxu0 0
          %1983 = vmatpush1.bf16.msra.mxu0 0
          %1984 = vmatprep.subr.bf16.mxu0 0
          %1985 = vmatpush1.bf16.msra.mxu0 0
          %1986 = vmatprep.subr.bf16.mxu0 0
          %1987 = vmatpush1.bf16.msra.mxu0 0
          %1988 = vmatprep.subr.bf16.mxu0 0
          %1989 = vmatpush1.bf16.msra.mxu0 0
          %1990 = vmatprep.subr.bf16.mxu0 0
          %1991 = vmatpush1.bf16.msra.mxu0 0
          %1992 = vmatprep.subr.bf16.mxu0 0
          %1993 = vmatpush1.bf16.msra.mxu0 0
          %1994 = vmatprep.subr.bf16.mxu0 0
          %1995 = vmatpush1.bf16.msra.mxu0 0
          %1996 = vmatprep.subr.bf16.mxu0 0
          %1997 = vmatpush1.bf16.msra.mxu0 0
          %1998 = vmatprep.subr.bf16.mxu0 0
          %1999 = vmatpush1.bf16.msra.mxu0 0
          %2000 = vmatprep.subr.bf16.mxu0 0
          %2001 = vmatpush1.bf16.msra.mxu0 0
          %2002 = vmatprep.subr.bf16.mxu0 0
          %2003 = vmatpush1.bf16.msra.mxu0 0
          %2004 = vmatprep.mubr.bf16.mxu0 0
          %2005 = vmatmul.mubr.bf16.gmra.mrb[0].mxu0 %v1967
          %v2006 = vpop.f32.mrb[0].mxu0
          %v2007 = vadd.f32 0.0, %v2006
          %v2008 = vpop.f32.mrb[0].mxu0
          %v2009 = vpop.f32.mrb[0].mxu0
          %v2010 = vpop.f32.mrb[0].mxu0
          %2011 = vdwg.mxu0
          %v2013 = vsel %vm1494, %v1914, 0
          %v2016 = vsel %vm1730, %v1918, 0
          %2018 = vmatprep.subr.bf16.mxu0 0
          %2019 = vmatpush1.bf16.msra.mxu0 %v2016
          %2020 = vmatprep.subr.bf16.mxu0 0
          %2021 = vmatpush1.bf16.msra.mxu0 0
          %2022 = vmatprep.subr.bf16.mxu0 0
          %2023 = vmatpush1.bf16.msra.mxu0 0
          %2024 = vmatprep.subr.bf16.mxu0 0
          %2025 = vmatpush1.bf16.msra.mxu0 0
          %2026 = vmatprep.subr.bf16.mxu0 0
          %2027 = vmatpush1.bf16.msra.mxu0 0
          %2028 = vmatprep.subr.bf16.mxu0 0
          %2029 = vmatpush1.bf16.msra.mxu0 0
          %2030 = vmatprep.subr.bf16.mxu0 0
          %2031 = vmatpush1.bf16.msra.mxu0 0
          %2032 = vmatprep.subr.bf16.mxu0 0
          %2033 = vmatpush1.bf16.msra.mxu0 0
          %2034 = vmatprep.subr.bf16.mxu0 0
          %2035 = vmatpush1.bf16.msra.mxu0 0
          %2036 = vmatprep.subr.bf16.mxu0 0
          %2037 = vmatpush1.bf16.msra.mxu0 0
          %2038 = vmatprep.subr.bf16.mxu0 0
          %2039 = vmatpush1.bf16.msra.mxu0 0
          %2040 = vmatprep.subr.bf16.mxu0 0
          %2041 = vmatpush1.bf16.msra.mxu0 0
          %2042 = vmatprep.subr.bf16.mxu0 0
          %2043 = vmatpush1.bf16.msra.mxu0 0
          %2044 = vmatprep.subr.bf16.mxu0 0
          %2045 = vmatpush1.bf16.msra.mxu0 0
          %2046 = vmatprep.subr.bf16.mxu0 0
          %2047 = vmatpush1.bf16.msra.mxu0 0
          %2048 = vmatprep.subr.bf16.mxu0 0
          %2049 = vmatpush1.bf16.msra.mxu0 0
          %2050 = vmatprep.mubr.bf16.mxu0 0
          %2051 = vmatmul.mubr.bf16.gmra.mrb[0].mxu0 %v2013
          %v2052 = vpop.f32.mrb[0].mxu0
          %v2053 = vadd.f32 0.0, %v2052
          %v2054 = vpop.f32.mrb[0].mxu0
          %v2055 = vpop.f32.mrb[0].mxu0
          %v2056 = vpop.f32.mrb[0].mxu0
          %2057 = vdwg.mxu0
          %v2059 = vsel %vm1494, %v1915, 0
          %v2062 = vsel %vm1730, %v1919, 0
          %2064 = vmatprep.subr.bf16.mxu0 0
          %2065 = vmatpush1.bf16.msra.mxu0 %v2062
          %2066 = vmatprep.subr.bf16.mxu0 0
          %2067 = vmatpush1.bf16.msra.mxu0 0
          %2068 = vmatprep.subr.bf16.mxu0 0
          %2069 = vmatpush1.bf16.msra.mxu0 0
          %2070 = vmatprep.subr.bf16.mxu0 0
          %2071 = vmatpush1.bf16.msra.mxu0 0
          %2072 = vmatprep.subr.bf16.mxu0 0
          %2073 = vmatpush1.bf16.msra.mxu0 0
          %2074 = vmatprep.subr.bf16.mxu0 0
          %2075 = vmatpush1.bf16.msra.mxu0 0
          %2076 = vmatprep.subr.bf16.mxu0 0
          %2077 = vmatpush1.bf16.msra.mxu0 0
          %2078 = vmatprep.subr.bf16.mxu0 0
          %2079 = vmatpush1.bf16.msra.mxu0 0
          %2080 = vmatprep.subr.bf16.mxu0 0
          %2081 = vmatpush1.bf16.msra.mxu0 0
          %2082 = vmatprep.subr.bf16.mxu0 0
          %2083 = vmatpush1.bf16.msra.mxu0 0
          %2084 = vmatprep.subr.bf16.mxu0 0
          %2085 = vmatpush1.bf16.msra.mxu0 0
          %2086 = vmatprep.subr.bf16.mxu0 0
          %2087 = vmatpush1.bf16.msra.mxu0 0
          %2088 = vmatprep.subr.bf16.mxu0 0
          %2089 = vmatpush1.bf16.msra.mxu0 0
          %2090 = vmatprep.subr.bf16.mxu0 0
          %2091 = vmatpush1.bf16.msra.mxu0 0
          %2092 = vmatprep.subr.bf16.mxu0 0
          %2093 = vmatpush1.bf16.msra.mxu0 0
          %2094 = vmatprep.subr.bf16.mxu0 0
          %2095 = vmatpush1.bf16.msra.mxu0 0
          %2096 = vmatprep.mubr.bf16.mxu0 0
          %2097 = vmatmul.mubr.bf16.gmra.mrb[0].mxu0 %v2059
          %v2098 = vpop.f32.mrb[0].mxu0
          %v2099 = vadd.f32 0.0, %v2098
          %v2100 = vpop.f32.mrb[0].mxu0
          %v2101 = vpop.f32.mrb[0].mxu0
          %v2102 = vpop.f32.mrb[0].mxu0
          %2103 = vdwg.mxu0
          %v2104 = vsel %vm693, %v1961, 0.0
          %v2105 = vsel %vm693, %v2007, 0.0
          %v2106 = vadd.f32 %v2104, %v2105
          %v2107 = vsel %vm693, %v2053, 0.0
          %v2108 = vadd.f32 %v2106, %v2107
          %v2109 = vsel %vm693, %v2099, 0.0
          %v2110 = vadd.f32 %v2108, %v2109
          %v2111 = vld [vmem:[%s8] sm:$0x1]
          %v2113 = vlaneseq
          %v2114 = vshrl.u32 %v2113, 7
          %v2115 = vsub.s32 0, %v2114
          %v2116 = vrot.slane %v2111, %v2115
          %v2118 = vadd.f32 %v2110, %v2116
          %v2119 = vadd.f32 %v668, %v2118
          %v2120 = vld [vmem:[%s13] sm:$0x1]
          %v2121 = vld [vmem:[%s14] sm:$0x1]
          %v2122 = vsel %vm693, %v2119, 0.0
          %2123 = vadd.xlane.f32.xlu0 %v2122
          %v2124 = vpop.xlane.xlu0 %2123
          %v2125 = vrcp.pop 32.0
          %v2126 = vmul.f32 %v2124, %v2125
          %v2127 = vsub.f32 %v2119, %v2126
          %v2128 = vmul.f32 %v2127, %v2127
          %v2129 = vsel %vm693, %v2128, 0.0
          %2130 = vadd.xlane.f32.xlu0 %v2129
          %v2131 = vpop.xlane.xlu0 %2130
          %v2132 = vmul.f32 %v2131, %v2125
          %v2133 = vadd.f32 %v2132, 1e-05
          %v2134 = vrsqrt.pop %v2133
          %v2135 = vmul.f32 %v2127, %v2134
          %v2137 = vlaneseq
          %v2138 = vshrl.u32 %v2137, 7
          %v2139 = vsub.s32 0, %v2138
          %v2140 = vrot.slane %v2120, %v2139
          %v2142 = vmul.f32 %v2135, %v2140
          %v2144 = vlaneseq
          %v2145 = vshrl.u32 %v2144, 7
          %v2146 = vsub.s32 0, %v2145
          %v2147 = vrot.slane %v2121, %v2146
          %v2149 = vadd.f32 %v2142, %v2147
          %2150 = vst.msk [vmem:[#allocation5] sm:$0xff] %vm693, %v2149
          %2151 = vst.msk [vmem:[#allocation6] sm:$0xff] %vm693, 0.0
        $region100: #{tpu_custom_call.1} parent=95 // pred_fallthru
          _
        %v2152 = vld [vmem:[#allocation5] sm:$0xff]
        %v2153 = vpack.c.bf16 %v2152, %v2152
        %v2154 = vld [vmem:[%s653] sm:$0xf]
        %v2155 = vld [vmem:[%s653 + $0x4] sm:$0xf]
        %v2156 = vld [vmem:[%s653 + $0x8] sm:$0xf]
        %v2157 = vld [vmem:[%s653 + $0xc] sm:$0xf]
        %v2158 = vld [vmem:[%s656] sm:$0x1]
        %v2160 = vlaneseq
        %v2161 = vshrl.u32 %v2160, 7
        %v2162 = vsub.s32 0, %v2161
        %v2163 = vrot.slane %v2158, %v2162
        %v2169 = vunpack.c.l.b16 %v2154
        %v2170 = vunpack.c.l.b16 %v2155
        %v2171 = vunpack.c.l.b16 %v2156
        %v2172 = vunpack.c.l.b16 %v2157
        %v2173 = vpack.c.b16 %v2170, %v2169
        %v2174 = vpack.c.b16 %v2172, %v2171
        %vm2177 = vcmask 261120
        %v2179 = vsel %vm2177, %v2153, 0
        %2181 = vmatprep.subr.bf16.mxu0 0
        %2182 = vmatpush1.bf16.msra.mxu0 %v2173
        %2183 = vmatprep.subr.bf16.mxu0 0
        %2184 = vmatpush1.bf16.msra.mxu0 %v2174
        %2185 = vmatprep.subr.bf16.mxu0 0
        %2186 = vmatpush1.bf16.msra.mxu0 0
        %2187 = vmatprep.subr.bf16.mxu0 0
        %2188 = vmatpush1.bf16.msra.mxu0 0
        %2189 = vmatprep.subr.bf16.mxu0 0
        %2190 = vmatpush1.bf16.msra.mxu0 0
        %2191 = vmatprep.subr.bf16.mxu0 0
        %2192 = vmatpush1.bf16.msra.mxu0 0
        %2193 = vmatprep.subr.bf16.mxu0 0
        %2194 = vmatpush1.bf16.msra.mxu0 0
        %2195 = vmatprep.subr.bf16.mxu0 0
        %2196 = vmatpush1.bf16.msra.mxu0 0
        %2197 = vmatprep.subr.bf16.mxu0 0
        %2198 = vmatpush1.bf16.msra.mxu0 0
        %2199 = vmatprep.subr.bf16.mxu0 0
        %2200 = vmatpush1.bf16.msra.mxu0 0
        %2201 = vmatprep.subr.bf16.mxu0 0
        %2202 = vmatpush1.bf16.msra.mxu0 0
        %2203 = vmatprep.subr.bf16.mxu0 0
        %2204 = vmatpush1.bf16.msra.mxu0 0
        %2205 = vmatprep.subr.bf16.mxu0 0
        %2206 = vmatpush1.bf16.msra.mxu0 0
        %2207 = vmatprep.subr.bf16.mxu0 0
        %2208 = vmatpush1.bf16.msra.mxu0 0
        %2209 = vmatprep.subr.bf16.mxu0 0
        %2210 = vmatpush1.bf16.msra.mxu0 0
        %2211 = vmatprep.subr.bf16.mxu0 0
        %2212 = vmatpush1.bf16.msra.mxu0 0
        %2213 = vmatprep.mubr.bf16.mxu0 0
        %2214 = vmatmul.mubr.bf16.gmra.mrb[0].mxu0 %v2179
        %v2215 = vpop.f32.mrb[0].mxu0
        %v2216 = vadd.f32 %v2163, %v2215
        %v2217 = vpop.f32.mrb[0].mxu0
        %v2218 = vpop.f32.mrb[0].mxu0
        %v2219 = vpop.f32.mrb[0].mxu0
        %2220 = vdwg.mxu0
        %v2221 = vmax.f32 %v2216, 0.0
        %v2222 = vpack.c.bf16 %v2221, %v2221
        %v2223 = vld [vmem:[#allocation6] sm:$0xff]
        %v2224 = vld [vmem:[%s661] sm:$0xf]
        %v2225 = vld [vmem:[%s661 + $0x4] sm:$0xf]
        %v2226 = vld [vmem:[%s661 + $0x8] sm:$0xf]
        %v2227 = vld [vmem:[%s661 + $0xc] sm:$0xf]
        %v2228 = vld [vmem:[%s661 + $0x10] sm:$0xf]
        %v2229 = vld [vmem:[%s661 + $0x14] sm:$0xf]
        %v2230 = vld [vmem:[%s661 + $0x18] sm:$0xf]
        %v2231 = vld [vmem:[%s661 + $0x1c] sm:$0xf]
        %v2240 = vunpack.c.l.b16 %v2224
        %v2241 = vunpack.c.l.b16 %v2225
        %v2242 = vunpack.c.l.b16 %v2226
        %v2243 = vunpack.c.l.b16 %v2227
        %v2244 = vunpack.c.l.b16 %v2228
        %v2245 = vunpack.c.l.b16 %v2229
        %v2246 = vunpack.c.l.b16 %v2230
        %v2247 = vunpack.c.l.b16 %v2231
        %v2248 = vpack.c.b16 %v2241, %v2240
        %v2249 = vpack.c.b16 %v2243, %v2242
        %v2250 = vpack.c.b16 %v2245, %v2244
        %v2251 = vpack.c.b16 %v2247, %v2246
        %vm2256 = vcmask 523264
        %v2258 = vsel %vm2256, %v2222, 0
        %2260 = vmatprep.subr.bf16.mxu0 0
        %2261 = vmatpush1.bf16.msra.mxu0 %v2248
        %2262 = vmatprep.subr.bf16.mxu0 0
        %2263 = vmatpush1.bf16.msra.mxu0 %v2249
        %2264 = vmatprep.subr.bf16.mxu0 0
        %2265 = vmatpush1.bf16.msra.mxu0 %v2250
        %2266 = vmatprep.subr.bf16.mxu0 0
        %2267 = vmatpush1.bf16.msra.mxu0 %v2251
        %2268 = vmatprep.subr.bf16.mxu0 0
        %2269 = vmatpush1.bf16.msra.mxu0 0
        %2270 = vmatprep.subr.bf16.mxu0 0
        %2271 = vmatpush1.bf16.msra.mxu0 0
        %2272 = vmatprep.subr.bf16.mxu0 0
        %2273 = vmatpush1.bf16.msra.mxu0 0
        %2274 = vmatprep.subr.bf16.mxu0 0
        %2275 = vmatpush1.bf16.msra.mxu0 0
        %2276 = vmatprep.subr.bf16.mxu0 0
        %2277 = vmatpush1.bf16.msra.mxu0 0
        %2278 = vmatprep.subr.bf16.mxu0 0
        %2279 = vmatpush1.bf16.msra.mxu0 0
        %2280 = vmatprep.subr.bf16.mxu0 0
        %2281 = vmatpush1.bf16.msra.mxu0 0
        %2282 = vmatprep.subr.bf16.mxu0 0
        %2283 = vmatpush1.bf16.msra.mxu0 0
        %2284 = vmatprep.subr.bf16.mxu0 0
        %2285 = vmatpush1.bf16.msra.mxu0 0
        %2286 = vmatprep.subr.bf16.mxu0 0
        %2287 = vmatpush1.bf16.msra.mxu0 0
        %2288 = vmatprep.subr.bf16.mxu0 0
        %2289 = vmatpush1.bf16.msra.mxu0 0
        %2290 = vmatprep.subr.bf16.mxu0 0
        %2291 = vmatpush1.bf16.msra.mxu0 0
        %2292 = vmatprep.mubr.bf16.mxu0 0
        %2293 = vmatmul.mubr.bf16.gmra.mrb[0].mxu0 %v2258
        %v2294 = vpop.f32.mrb[0].mxu0
        %v2295 = vadd.f32 0.0, %v2294
        %v2296 = vpop.f32.mrb[0].mxu0
        %v2297 = vpop.f32.mrb[0].mxu0
        %v2298 = vpop.f32.mrb[0].mxu0
        %2299 = vdwg.mxu0
        %v2300 = vadd.f32 %v2223, %v2295
        %2301 = vst.msk [vmem:[#allocation6] sm:$0xff] %vm2177, %v2300
        // Predicated region
        $region101: #{tpu_custom_call.1} parent=95 // pred_check
          %p2302 = pneg %p664
        $region102: #{tpu_custom_call.1} parent=95 // pred_check_branch
          %2304 = sbr.rel (%p2302) target = $region104
        $region103: #{tpu_custom_call.1} parent=95 // pred_region
          %v2305 = vld [vmem:[%s649] sm:$0xff]
          %v2306 = vld [vmem:[#allocation6] sm:$0xff]
          %v2307 = vld [vmem:[%s12] sm:$0x1]
          %v2309 = vlaneseq
          %v2310 = vshrl.u32 %v2309, 7
          %v2311 = vsub.s32 0, %v2310
          %v2312 = vrot.slane %v2307, %v2311
          %v2314 = vadd.f32 %v2306, %v2312
          %v2315 = vld [vmem:[#allocation5] sm:$0xff]
          %v2316 = vadd.f32 %v2315, %v2314
          %v2317 = vld [vmem:[%s15] sm:$0x1]
          %v2318 = vld [vmem:[%s16] sm:$0x1]
          %v2319 = vsel %vm2177, %v2316, 0.0
          %2320 = vadd.xlane.f32.xlu0 %v2319
          %v2321 = vpop.xlane.xlu0 %2320
          %v2322 = vrcp.pop 32.0
          %v2323 = vmul.f32 %v2321, %v2322
          %v2324 = vsub.f32 %v2316, %v2323
          %v2325 = vmul.f32 %v2324, %v2324
          %v2326 = vsel %vm2177, %v2325, 0.0
          %2327 = vadd.xlane.f32.xlu0 %v2326
          %v2328 = vpop.xlane.xlu0 %2327
          %v2329 = vmul.f32 %v2328, %v2322
          %v2330 = vadd.f32 %v2329, 1e-05
          %v2331 = vrsqrt.pop %v2330
          %v2332 = vmul.f32 %v2324, %v2331
          %v2334 = vlaneseq
          %v2335 = vshrl.u32 %v2334, 7
          %v2336 = vsub.s32 0, %v2335
          %v2337 = vrot.slane %v2317, %v2336
          %v2339 = vmul.f32 %v2332, %v2337
          %v2341 = vlaneseq
          %v2342 = vshrl.u32 %v2341, 7
          %v2343 = vsub.s32 0, %v2342
          %v2344 = vrot.slane %v2318, %v2343
          %v2346 = vadd.f32 %v2339, %v2344
          %v2347 = vadd.f32 %v2305, %v2346
          %v2348 = vld [vmem:[%s17] sm:$0x1]
          %v2349 = vld [vmem:[%s18] sm:$0x1]
          %v2350 = vsel %vm2177, %v2347, 0.0
          %2351 = vadd.xlane.f32.xlu0 %v2350
          %v2352 = vpop.xlane.xlu0 %2351
          %v2353 = vmul.f32 %v2352, %v2322
          %v2354 = vsub.f32 %v2347, %v2353
          %v2355 = vmul.f32 %v2354, %v2354
          %v2356 = vsel %vm2177, %v2355, 0.0
          %2357 = vadd.xlane.f32.xlu0 %v2356
          %v2358 = vpop.xlane.xlu0 %2357
          %v2359 = vmul.f32 %v2358, %v2322
          %v2360 = vadd.f32 %v2359, 1e-05
          %v2361 = vrsqrt.pop %v2360
          %v2362 = vmul.f32 %v2354, %v2361
          %v2364 = vlaneseq
          %v2365 = vshrl.u32 %v2364, 7
          %v2366 = vsub.s32 0, %v2365
          %v2367 = vrot.slane %v2348, %v2366
          %v2369 = vmul.f32 %v2362, %v2367
          %v2371 = vlaneseq
          %v2372 = vshrl.u32 %v2371, 7
          %v2373 = vsub.s32 0, %v2372
          %v2374 = vrot.slane %v2349, %v2373
          %v2376 = vadd.f32 %v2369, %v2374
          %2377 = vst.msk [vmem:[%s645] sm:$0xff] %vm2177, %v2376
        $region104: #{tpu_custom_call.1} parent=95 // pred_fallthru
          _
        %s2378 = sand.u32 %s472, 1
        %s2379 = scalar_lea.sflag [#allocation8], %s2378
        %s2380 = sand.u32 %s472, 1
        %s2381 = smul.addr %s2380, 8
        %s2382 = scalar_lea.vmem [#allocation7], %s2381
        // Predicated region
        $region105: #{tpu_custom_call.1} parent=95 // pred_check
          %p2383 = pneg %p482
        $region106: #{tpu_custom_call.1} parent=95 // pred_check_branch
          %2385 = sbr.rel (%p2383) target = $region108
        $region107: #{tpu_custom_call.1} parent=95 // pred_region
          %s2387 = ssub.s32 128, 128
          %2388 = vsyncadd %s2379, %s2387
          %s2389 = smul.addr %s37, 128
          %s2390 = scalar_lea.hbm %s19, %s2389
          %s2392 = sshll.u32 %s2382, 4
          %s2393 = int_to_ptr.vmem [resolvable:$true] %s2392
          %2395 = dma.vmem_to_hbm [thread:$0]  %s2393, 128, %s2390, %s2379
        $region108: #{tpu_custom_call.1} parent=95 // pred_fallthru
          _
      $region96: #{tpu_custom_call.1} parent=5 // pred_fallthru
        _
      %p2396 = scmp.le.s32.totalorder 2, %s28
      // Predicated region
      $region109: #{tpu_custom_call.1} parent=5 // pred_check
        %p2397 = pneg %p2396
      $region110: #{tpu_custom_call.1} parent=5 // pred_check_branch
        %2399 = sbr.rel (%p2397) target = $region112
      $region111: #{tpu_custom_call.1} parent=5 // pred_region
        %s2400 = ssub.s32 %s28, 2
        // Predicated region
        $region113: #{tpu_custom_call.1} parent=111 // pred_check
          %p2401 = pneg %p488
        $region114: #{tpu_custom_call.1} parent=111 // pred_check_branch
          %2403 = sbr.rel (%p2401) target = $region116
        $region115: #{tpu_custom_call.1} parent=111 // pred_region
          %s2404 = sand.u32 %s473, 1
          %s2405 = scalar_lea.sflag [#allocation8], %s2404
          %s2406 = sand.u32 %s473, 1
          %s2407 = smul.addr %s2406, 8
          %s2408 = scalar_lea.vmem [#allocation7], %s2407
          %2409 = dma.done %s2405, 128
        $region116: #{tpu_custom_call.1} parent=111 // pred_fallthru
          _
      $region112: #{tpu_custom_call.1} parent=5 // pred_fallthru
        _
    $region6: #{tpu_custom_call.1} parent=1 // loop_footer
      %s32 = sadd.s32 1, %s28
    $region7: #{tpu_custom_call.1} parent=1 // loop_footer_branch
      %27 = sbr.rel target = $region3
    $region8: #{tpu_custom_call.1} parent=1 // loop_exit
      _
    %2410 = vsyncpa [#allocation8], 1
    %s2411 = scalar_lea.sflag [#allocation8], 1
    %2412 = vsyncpa %s2411, 1

</llo_original>
